<compile_context>
chip_gen: v5e
topology: v5e:2x2
jax: 0.10.0
libtpu: 0.0.40
codegen_flags: <defaults>
</compile_context>

<pallas_src>
import math

import jax
import jax.numpy as jnp
from jax.experimental import pallas as pl
from jax.experimental.pallas import tpu as pltpu

EPS = 1e-5  # LayerNorm / BatchNorm eps (PyTorch defaults)


def _layer_norm(x, gamma, beta):
    mu = jnp.mean(x, axis=-1, keepdims=True)
    var = jnp.mean(jnp.square(x - mu), axis=-1, keepdims=True)
    return (x - mu) * jax.lax.rsqrt(var + EPS) * gamma + beta


def _vmem_limit_bytes():
    """Generation-aware VMEM budget: 3/4 of physical VMEM, capped at 96 MiB."""
    cap = 128 * 1024 * 1024
    try:
        cap = int(pltpu.get_tpu_info().vmem_capacity_bytes)
    except Exception:
        try:
            if "v7" in jax.devices()[0].device_kind.lower():
                cap = 64 * 1024 * 1024
        except Exception:
            pass
    return int(min(cap - cap // 4, 96 * 1024 * 1024))


# ----------------------------------------------------------------------------
# Fused Conformer-layer kernel (one batch element per grid step).
# ----------------------------------------------------------------------------
def _make_layer_kernel(T, D, F, H, K):
    hd = D // H
    P = (K - 1) // 2

    def kernel(lens_ref,                      # scalar prefetch (SMEM): (B,) valid lengths
               x_ref,
               # FFN1
               f1g, f1b, f1w1, f1b1, f1w2, f1b2,
               # Self-attention (heads fused along the D output dim)
               ag, ab, wq, bq, wk, bk, wv, bv, wo, bo,
               # Convolution module
               cg, cb, cw1a, cb1a, cw1g, cb1g, cwdw, cbdw,
               bnw, bnb, bnm, bnv, cw2, cb2,
               # FFN2
               f2g, f2b, f2w1, f2b1, f2w2, f2b2,
               # Final LayerNorm
               lg, lb,
               o_ref,
               ctx_ref):                      # VMEM scratch: (T, D) f32 attention context
        bidx = pl.program_id(0)
        x = x_ref[0]                          # (T, D) f32

        # Additive key-padding mask rebuilt in-kernel from the SMEM length
        # scalar (replaces a (1,1,T) non-lane-aligned mask DMA per grid step).
        valid_len = lens_ref[bidx]
        key_pos = jax.lax.broadcasted_iota(jnp.int32, (1, T), 1)
        kp_mask = jnp.where(key_pos < valid_len,
                            jnp.float32(0.0), jnp.float32(-1e30))   # (1, T)

        def ffn(xin, g, beta, w1, b1, w2, b2):
            h = _layer_norm(xin, g[...], beta[...]).astype(jnp.bfloat16)
            h = jnp.dot(h, w1[...], preferred_element_type=jnp.float32) + b1[...]
            h = h * jax.nn.sigmoid(h)         # SiLU (f32)
            h = jnp.dot(h.astype(jnp.bfloat16), w2[...],
                        preferred_element_type=jnp.float32) + b2[...]
            return xin + 0.5 * h

        # ---- FFN1 (half residual) ----
        x = ffn(x, f1g, f1b, f1w1, f1b1, f1w2, f1b2)

        # ---- Self-attention (+ residual) ----
        xln = _layer_norm(x, ag[...], ab[...]).astype(jnp.bfloat16)
        # wq / bq are pre-scaled by 1/sqrt(head_dim) on the host.
        q = jnp.dot(xln, wq[...], preferred_element_type=jnp.float32) + bq[...]
        k = jnp.dot(xln, wk[...], preferred_element_type=jnp.float32) + bk[...]
        v = jnp.dot(xln, wv[...], preferred_element_type=jnp.float32) + bv[...]
        qb = q.astype(jnp.bfloat16)
        kb = k.astype(jnp.bfloat16)
        vb = v.astype(jnp.bfloat16)

        # Per-head score/context math writes straight into the VMEM scratch
        # (no lane concatenate; only one (T,T) tile live at a time).
        for h in range(H):
            sl = slice(h * hd, (h + 1) * hd)
            s = jax.lax.dot_general(qb[:, sl], kb[:, sl],
                                    (((1,), (1,)), ((), ())),
                                    preferred_element_type=jnp.float32) + kp_mask
            s = s - jnp.max(s, axis=-1, keepdims=True)
            p = jnp.exp(s)
            p = p * pl.reciprocal(jnp.sum(p, axis=-1, keepdims=True), approx=True)
            ctx_ref[:, sl] = jnp.dot(p.astype(jnp.bfloat16), vb[:, sl],
                                     preferred_element_type=jnp.float32)
        x = x + jnp.dot(ctx_ref[...].astype(jnp.bfloat16), wo[...],
                        preferred_element_type=jnp.float32) + bo[...]

        # ---- Convolution module (+ residual) ----
        cln = _layer_norm(x, cg[...], cb[...]).astype(jnp.bfloat16)
        a = jnp.dot(cln, cw1a[...], preferred_element_type=jnp.float32) + cb1a[...]
        gate = jnp.dot(cln, cw1g[...], preferred_element_type=jnp.float32) + cb1g[...]
        glu = a * jax.nn.sigmoid(gate)                   # GLU over channels (f32)

        # Depthwise conv along T with SAME zero padding: XLU rolls plus a
        # single compare per off-centre tap (only |off| edge rows need zeroing).
        row = jax.lax.broadcasted_iota(jnp.int32, (T, 1), 0)
        acc = glu * cwdw[P]                              # centre tap: never padded
        for kk in range(K):
            off = kk - P
            if off == 0:
                continue
            tap = pltpu.roll(glu, shift=(-off) % T, axis=0)
            valid = (row >= -off) if off < 0 else (row < T - off)
            acc = acc + jnp.where(valid, tap * cwdw[kk], 0.0)
        acc = acc + cbdw[...]

        # BatchNorm1d (eval / running stats) + SiLU + pointwise conv out.
        bn = (acc - bnm[...]) * jax.lax.rsqrt(bnv[...] + EPS) * bnw[...] + bnb[...]
        s2 = bn * jax.nn.sigmoid(bn)
        x = x + jnp.dot(s2.astype(jnp.bfloat16), cw2[...],
                        preferred_element_type=jnp.float32) + cb2[...]

        # ---- FFN2 (half residual) + final LayerNorm (fused) ----
        x = ffn(x, f2g, f2b, f2w1, f2b1, f2w2, f2b2)
        o_ref[0] = _layer_norm(x, lg[...], lb[...])

    return kernel


def make_layer(B, T, D, F, H, K, example_params, *, single_buffer_weights):
    """Builds the single fused pallas_call for one Conformer layer."""
    x_map = lambda b, lens: (b, 0, 0)

    def w_spec(p):
        # Constant-index weight blocks: fetched once, never re-DMA'd.  With
        # single_buffer_weights they also get ONE VMEM buffer instead of the
        # default double buffer (halves the weight VMEM footprint on v7x).
        idx = (lambda b, lens: (0, 0)) if p.ndim == 2 else (lambda b, lens: (0, 0, 0))
        if single_buffer_weights:
            return pl.BlockSpec(p.shape, idx, pipeline_mode=pl.Buffered(1))
        return pl.BlockSpec(p.shape, idx)

    in_specs = [pl.BlockSpec((1, T, D), x_map)] + [w_spec(p) for p in example_params]

    # Advisory cost estimate for XLA scheduling around the custom call.
    flops = B * (8 * T * D * F             # two FFNs
                 + 14 * T * D * D          # q/k/v/out + 3 pointwise convs
                 + 4 * T * T * D           # attention scores + context
                 + 2 * K * T * D)          # depthwise taps
    transcendentals = B * (2 * T * F + H * T * T + 2 * T * D)
    param_bytes = sum(int(p.size) * p.dtype.itemsize for p in example_params)
    bytes_accessed = 2 * B * T * D * 4 + B * 4 + param_bytes

    grid_spec = pltpu.PrefetchScalarGridSpec(
        num_scalar_prefetch=1,             # per-batch valid lengths -> SMEM
        grid=(B,),
        in_specs=in_specs,
        out_specs=pl.BlockSpec((1, T, D), x_map),
        scratch_shapes=[pltpu.VMEM((T, D), jnp.float32)],   # attention context
    )
    return pl.pallas_call(
        _make_layer_kernel(T, D, F, H, K),
        out_shape=jax.ShapeDtypeStruct((B, T, D), jnp.float32),
        grid_spec=grid_spec,
        compiler_params=pltpu.CompilerParams(
            dimension_semantics=("parallel",),
            vmem_limit_bytes=_vmem_limit_bytes()),
        cost_estimate=pl.CostEstimate(
            flops=int(flops), transcendentals=int(transcendentals),
            bytes_accessed=int(bytes_accessed)),
    )


# ----------------------------------------------------------------------------
# Deterministic synthetic parameters (math layout = (in, out); matmul weights
# stored bf16, biases / LN / BN / depthwise weights kept f32).
# ----------------------------------------------------------------------------
def _init_layer(key, D, F, H, K):
    ks = iter(jax.random.split(key, 48))
    qscale = 1.0 / math.sqrt(D // H)

    def bf(shape, s=0.05):
        return (s * jax.random.normal(next(ks), shape)).astype(jnp.bfloat16)

    def f32(shape, s=0.05):
        return (s * jax.random.normal(next(ks), shape)).astype(jnp.float32)

    def ln_pair():
        g = (1.0 + 0.02 * jax.random.normal(next(ks), (1, D))).astype(jnp.float32)
        b = (0.02 * jax.random.normal(next(ks), (1, D))).astype(jnp.float32)
        return g, b

    ffn1 = (*ln_pair(), bf((D, F)), f32((1, F)), bf((F, D)), f32((1, D)))

    a_ln = ln_pair()
    # Host-side fold of the 1/sqrt(head_dim) attention scale into Wq / bq.
    wq = (qscale * 0.05 * jax.random.normal(next(ks), (D, D))).astype(jnp.bfloat16)
    bq = (qscale * 0.05 * jax.random.normal(next(ks), (1, D))).astype(jnp.float32)
    attn = (*a_ln, wq, bq,
            bf((D, D)), f32((1, D)),      # Wk, bk
            bf((D, D)), f32((1, D)),      # Wv, bv
            bf((D, D)), f32((1, D)))      # Wo, bo

    bn_w = (1.0 + 0.02 * jax.random.normal(next(ks), (1, D))).astype(jnp.float32)
    bn_b = f32((1, D), 0.02)
    bn_m = f32((1, D), 0.02)
    bn_v = (1.0 + 0.1 * jnp.abs(jax.random.normal(next(ks), (1, D)))).astype(jnp.float32)
    conv = (*ln_pair(),
            bf((D, D)), f32((1, D)),      # pointwise conv 1, GLU value half
            bf((D, D)), f32((1, D)),      # pointwise conv 1, GLU gate half
            f32((K, 1, D)), f32((1, D)),  # depthwise conv weight (f32 VPU taps), bias
            bn_w, bn_b, bn_m, bn_v,       # BatchNorm1d (eval-mode running stats)
            bf((D, D)), f32((1, D)))      # pointwise conv 2
    ffn2 = (*ln_pair(), bf((D, F)), f32((1, F)), bf((F, D)), f32((1, D)))
    final_ln = ln_pair()
    return (*ffn1, *attn, *conv, *ffn2, *final_ln)


# ----------------------------------------------------------------------------
# Conformer wrapper
# ----------------------------------------------------------------------------
class PallasConformer:
    def __init__(self, input_dim, num_heads, ffn_dim, num_layers,
                 depthwise_conv_kernel_size, B, T, key):
        assert input_dim % num_heads == 0
        assert (depthwise_conv_kernel_size - 1) % 2 == 0
        self.D, self.B, self.T = input_dim, B, T
        self.layers = [
            _init_layer(k, input_dim, ffn_dim, num_heads, depthwise_conv_kernel_size)
            for k in jax.random.split(key, num_layers)
        ]
        self.layer_call = self._build_layer_call(
            B, T, input_dim, ffn_dim, num_heads, depthwise_conv_kernel_size)
        self._fwd = jax.jit(self._forward)

    def _build_layer_call(self, B, T, D, F, H, K):
        # Prefer single-buffered weight operands (halves weight VMEM); fall
        # back to default double-buffering if pipeline_mode=pl.Buffered(1) is
        # not supported by the installed JAX / Mosaic.
        dummy_len = jnp.zeros((B,), jnp.int32)
        dummy_x = jnp.zeros((B, T, D), jnp.float32)
        last_err = None
        for single_buf in (True, False):
            try:
                call = make_layer(B, T, D, F, H, K, self.layers[0],
                                  single_buffer_weights=single_buf)
                jax.block_until_ready(call(dummy_len, dummy_x, *self.layers[0]))
                return call
            except Exception as e:           # version-dependent feature support
                last_err = e
        raise last_err

    def _forward(self, inp, masks, layers):
        # encoder_padding_mask = ~masks[..., 0].bool(): True where padded.  The
        # a2vqvae masks are length-style prefix masks, so reduce them to a
        # per-batch valid length (int32 scalar prefetch) and rebuild the
        # additive key mask in-kernel from an iota.
        # TODO(synk): arbitrary (non-prefix) key_padding_mask patterns would
        #             need the explicit mask-DMA path instead.
        lengths = jnp.sum(masks[..., 0] > 0, axis=-1).astype(jnp.int32)
        # PyTorch shuffles (B,T,D)<->(T,B,D)<->(B,D,T); per-batch processing in
        # (B,T,D) is mathematically identical.
        x = inp.astype(jnp.float32)
        for p in layers:
            x = self.layer_call(lengths, x, *p)   # one fused kernel per layer
        return x

    def __call__(self, inp, masks):
        return self._fwd(inp, masks, self.layers)


if __name__ == "__main__":
    D, H, F, L, K = 32, 4, 64, 2, 7
    B, T = 2, 8

    key = jax.random.PRNGKey(0)
    kx, kp = jax.random.split(key)
    x = jax.random.normal(kx, (B, T, D), jnp.float32)
    lengths = jnp.array([T, 5], jnp.int32)
    masks = (jnp.arange(T)[None, :] < lengths[:, None]).astype(jnp.float32)[..., None]  # (B, T, 1)

    model = PallasConformer(input_dim=D, num_heads=H, ffn_dim=F, num_layers=L,
                            depthwise_conv_kernel_size=K, B=B, T=T, key=kp)
    out = model(x, masks)
    jax.block_until_ready(out)
    assert out.shape == (B, T, D)
    assert bool(jnp.all(jnp.isfinite(out)))
    print("KERNEL_OK")
</pallas_src>

<mosaic_0001>
module attributes {stable_mosaic.version = 11 : i64} {
  func.func @kernel(%arg0: i32, %arg1: memref<2xi32, #tpu.memory_space<smem>>, %arg2: memref<1x8x32xf32, #tpu.memory_space<vmem>>, %arg3: memref<1x32xf32, #tpu.memory_space<vmem>>, %arg4: memref<1x32xf32, #tpu.memory_space<vmem>>, %arg5: memref<32x64xbf16, #tpu.memory_space<vmem>>, %arg6: memref<1x64xf32, #tpu.memory_space<vmem>>, %arg7: memref<64x32xbf16, #tpu.memory_space<vmem>>, %arg8: memref<1x32xf32, #tpu.memory_space<vmem>>, %arg9: memref<1x32xf32, #tpu.memory_space<vmem>>, %arg10: memref<1x32xf32, #tpu.memory_space<vmem>>, %arg11: memref<32x32xbf16, #tpu.memory_space<vmem>>, %arg12: memref<1x32xf32, #tpu.memory_space<vmem>>, %arg13: memref<32x32xbf16, #tpu.memory_space<vmem>>, %arg14: memref<1x32xf32, #tpu.memory_space<vmem>>, %arg15: memref<32x32xbf16, #tpu.memory_space<vmem>>, %arg16: memref<1x32xf32, #tpu.memory_space<vmem>>, %arg17: memref<32x32xbf16, #tpu.memory_space<vmem>>, %arg18: memref<1x32xf32, #tpu.memory_space<vmem>>, %arg19: memref<1x32xf32, #tpu.memory_space<vmem>>, %arg20: memref<1x32xf32, #tpu.memory_space<vmem>>, %arg21: memref<32x32xbf16, #tpu.memory_space<vmem>>, %arg22: memref<1x32xf32, #tpu.memory_space<vmem>>, %arg23: memref<32x32xbf16, #tpu.memory_space<vmem>>, %arg24: memref<1x32xf32, #tpu.memory_space<vmem>>, %arg25: memref<7x1x32xf32, #tpu.memory_space<vmem>>, %arg26: memref<1x32xf32, #tpu.memory_space<vmem>>, %arg27: memref<1x32xf32, #tpu.memory_space<vmem>>, %arg28: memref<1x32xf32, #tpu.memory_space<vmem>>, %arg29: memref<1x32xf32, #tpu.memory_space<vmem>>, %arg30: memref<1x32xf32, #tpu.memory_space<vmem>>, %arg31: memref<32x32xbf16, #tpu.memory_space<vmem>>, %arg32: memref<1x32xf32, #tpu.memory_space<vmem>>, %arg33: memref<1x32xf32, #tpu.memory_space<vmem>>, %arg34: memref<1x32xf32, #tpu.memory_space<vmem>>, %arg35: memref<32x64xbf16, #tpu.memory_space<vmem>>, %arg36: memref<1x64xf32, #tpu.memory_space<vmem>>, %arg37: memref<64x32xbf16, #tpu.memory_space<vmem>>, %arg38: memref<1x32xf32, #tpu.memory_space<vmem>>, %arg39: memref<1x32xf32, #tpu.memory_space<vmem>>, %arg40: memref<1x32xf32, #tpu.memory_space<vmem>>, %arg41: memref<1x8x32xf32, #tpu.memory_space<vmem>>, %arg42: memref<8x32xf32, #tpu.memory_space<vmem>>) attributes {dimension_semantics = [#tpu.dimension_semantics<parallel>], iteration_bounds = array<i64: 2>, scalar_prefetch = 1 : i64, scratch_operands = 1 : i64, tpu.core_type = #tpu.core_type<tc>, window_params = [{transform_indices = @transform_0, window_bounds = array<i64: 1, 8, 32>}, {pipeline_mode = #tpu.pipeline_mode<synchronous>, transform_indices = @transform_1, window_bounds = array<i64: 1, 32>}, {pipeline_mode = #tpu.pipeline_mode<synchronous>, transform_indices = @transform_2, window_bounds = array<i64: 1, 32>}, {pipeline_mode = #tpu.pipeline_mode<synchronous>, transform_indices = @transform_3, window_bounds = array<i64: 32, 64>}, {pipeline_mode = #tpu.pipeline_mode<synchronous>, transform_indices = @transform_4, window_bounds = array<i64: 1, 64>}, {pipeline_mode = #tpu.pipeline_mode<synchronous>, transform_indices = @transform_5, window_bounds = array<i64: 64, 32>}, {pipeline_mode = #tpu.pipeline_mode<synchronous>, transform_indices = @transform_6, window_bounds = array<i64: 1, 32>}, {pipeline_mode = #tpu.pipeline_mode<synchronous>, transform_indices = @transform_7, window_bounds = array<i64: 1, 32>}, {pipeline_mode = #tpu.pipeline_mode<synchronous>, transform_indices = @transform_8, window_bounds = array<i64: 1, 32>}, {pipeline_mode = #tpu.pipeline_mode<synchronous>, transform_indices = @transform_9, window_bounds = array<i64: 32, 32>}, {pipeline_mode = #tpu.pipeline_mode<synchronous>, transform_indices = @transform_10, window_bounds = array<i64: 1, 32>}, {pipeline_mode = #tpu.pipeline_mode<synchronous>, transform_indices = @transform_11, window_bounds = array<i64: 32, 32>}, {pipeline_mode = #tpu.pipeline_mode<synchronous>, transform_indices = @transform_12, window_bounds = array<i64: 1, 32>}, {pipeline_mode = #tpu.pipeline_mode<synchronous>, transform_indices = @transform_13, window_bounds = array<i64: 32, 32>}, {pipeline_mode = #tpu.pipeline_mode<synchronous>, transform_indices = @transform_14, window_bounds = array<i64: 1, 32>}, {pipeline_mode = #tpu.pipeline_mode<synchronous>, transform_indices = @transform_15, window_bounds = array<i64: 32, 32>}, {pipeline_mode = #tpu.pipeline_mode<synchronous>, transform_indices = @transform_16, window_bounds = array<i64: 1, 32>}, {pipeline_mode = #tpu.pipeline_mode<synchronous>, transform_indices = @transform_17, window_bounds = array<i64: 1, 32>}, {pipeline_mode = #tpu.pipeline_mode<synchronous>, transform_indices = @transform_18, window_bounds = array<i64: 1, 32>}, {pipeline_mode = #tpu.pipeline_mode<synchronous>, transform_indices = @transform_19, window_bounds = array<i64: 32, 32>}, {pipeline_mode = #tpu.pipeline_mode<synchronous>, transform_indices = @transform_20, window_bounds = array<i64: 1, 32>}, {pipeline_mode = #tpu.pipeline_mode<synchronous>, transform_indices = @transform_21, window_bounds = array<i64: 32, 32>}, {pipeline_mode = #tpu.pipeline_mode<synchronous>, transform_indices = @transform_22, window_bounds = array<i64: 1, 32>}, {pipeline_mode = #tpu.pipeline_mode<synchronous>, transform_indices = @transform_23, window_bounds = array<i64: 7, 1, 32>}, {pipeline_mode = #tpu.pipeline_mode<synchronous>, transform_indices = @transform_24, window_bounds = array<i64: 1, 32>}, {pipeline_mode = #tpu.pipeline_mode<synchronous>, transform_indices = @transform_25, window_bounds = array<i64: 1, 32>}, {pipeline_mode = #tpu.pipeline_mode<synchronous>, transform_indices = @transform_26, window_bounds = array<i64: 1, 32>}, {pipeline_mode = #tpu.pipeline_mode<synchronous>, transform_indices = @transform_27, window_bounds = array<i64: 1, 32>}, {pipeline_mode = #tpu.pipeline_mode<synchronous>, transform_indices = @transform_28, window_bounds = array<i64: 1, 32>}, {pipeline_mode = #tpu.pipeline_mode<synchronous>, transform_indices = @transform_29, window_bounds = array<i64: 32, 32>}, {pipeline_mode = #tpu.pipeline_mode<synchronous>, transform_indices = @transform_30, window_bounds = array<i64: 1, 32>}, {pipeline_mode = #tpu.pipeline_mode<synchronous>, transform_indices = @transform_31, window_bounds = array<i64: 1, 32>}, {pipeline_mode = #tpu.pipeline_mode<synchronous>, transform_indices = @transform_32, window_bounds = array<i64: 1, 32>}, {pipeline_mode = #tpu.pipeline_mode<synchronous>, transform_indices = @transform_33, window_bounds = array<i64: 32, 64>}, {pipeline_mode = #tpu.pipeline_mode<synchronous>, transform_indices = @transform_34, window_bounds = array<i64: 1, 64>}, {pipeline_mode = #tpu.pipeline_mode<synchronous>, transform_indices = @transform_35, window_bounds = array<i64: 64, 32>}, {pipeline_mode = #tpu.pipeline_mode<synchronous>, transform_indices = @transform_36, window_bounds = array<i64: 1, 32>}, {pipeline_mode = #tpu.pipeline_mode<synchronous>, transform_indices = @transform_37, window_bounds = array<i64: 1, 32>}, {pipeline_mode = #tpu.pipeline_mode<synchronous>, transform_indices = @transform_38, window_bounds = array<i64: 1, 32>}, {transform_indices = @transform_39, window_bounds = array<i64: 1, 8, 32>}]} {
    %c0 = arith.constant 0 : index
    %c0_0 = arith.constant 0 : index
    %c0_1 = arith.constant 0 : index
    %0 = vector.load %arg2[%c0, %c0_0, %c0_1] : memref<1x8x32xf32, #tpu.memory_space<vmem>>, vector<1x8x32xf32>
    %1 = vector.shape_cast %0 : vector<1x8x32xf32> to vector<8x32xf32>
    %2 = arith.index_cast %arg0 : i32 to index
    %3 = memref.load %arg1[%2] : memref<2xi32, #tpu.memory_space<smem>>
    %4 = tpu.iota {dimensions = array<i32: 1>} : vector<1x8xi32>
    %5 = vector.broadcast %3 : i32 to vector<1x8xi32>
    %6 = arith.cmpi slt, %4, %5 : vector<1x8xi32>
    %cst = arith.constant 0.000000e+00 : f32
    %cst_2 = arith.constant -1.000000e+30 : f32
    %7 = vector.broadcast %cst : f32 to vector<1x8xf32>
    %8 = vector.broadcast %cst_2 : f32 to vector<1x8xf32>
    %9 = arith.select %6, %7, %8 : vector<1x8xi1>, vector<1x8xf32>
    %c0_3 = arith.constant 0 : index
    %c0_4 = arith.constant 0 : index
    %10 = vector.load %arg3[%c0_3, %c0_4] : memref<1x32xf32, #tpu.memory_space<vmem>>, vector<1x32xf32>
    %c0_5 = arith.constant 0 : index
    %c0_6 = arith.constant 0 : index
    %11 = vector.load %arg4[%c0_5, %c0_6] : memref<1x32xf32, #tpu.memory_space<vmem>>, vector<1x32xf32>
    %cst_7 = arith.constant dense<0.000000e+00> : vector<8xf32>
    %12 = vector.multi_reduction <add>, %1, %cst_7 [1] : vector<8x32xf32> to vector<8xf32>
    %13 = vector.shape_cast %12 : vector<8xf32> to vector<8x1xf32>
    %cst_8 = arith.constant 3.200000e+01 : f32
    %14 = vector.broadcast %cst_8 : f32 to vector<8x1xf32>
    %15 = arith.divf %13, %14 : vector<8x1xf32>
    %16 = vector.broadcast %15 : vector<8x1xf32> to vector<8x32xf32>
    %17 = arith.subf %1, %16 : vector<8x32xf32>
    %18 = arith.mulf %17, %17 : vector<8x32xf32>
    %cst_9 = arith.constant dense<0.000000e+00> : vector<8xf32>
    %19 = vector.multi_reduction <add>, %18, %cst_9 [1] : vector<8x32xf32> to vector<8xf32>
    %20 = vector.shape_cast %19 : vector<8xf32> to vector<8x1xf32>
    %cst_10 = arith.constant 3.200000e+01 : f32
    %21 = vector.broadcast %cst_10 : f32 to vector<8x1xf32>
    %22 = arith.divf %20, %21 : vector<8x1xf32>
    %23 = vector.broadcast %15 : vector<8x1xf32> to vector<8x32xf32>
    %24 = arith.subf %1, %23 : vector<8x32xf32>
    %cst_11 = arith.constant 9.99999974E-6 : f32
    %25 = vector.broadcast %cst_11 : f32 to vector<8x1xf32>
    %26 = arith.addf %22, %25 : vector<8x1xf32>
    %27 = math.rsqrt %26 : vector<8x1xf32>
    %28 = vector.broadcast %27 : vector<8x1xf32> to vector<8x32xf32>
    %29 = arith.mulf %24, %28 : vector<8x32xf32>
    %30 = vector.broadcast %10 : vector<1x32xf32> to vector<8x32xf32>
    %31 = arith.mulf %29, %30 : vector<8x32xf32>
    %32 = vector.broadcast %11 : vector<1x32xf32> to vector<8x32xf32>
    %33 = arith.addf %31, %32 : vector<8x32xf32>
    %34 = arith.truncf %33 : vector<8x32xf32> to vector<8x32xbf16>
    %c0_12 = arith.constant 0 : index
    %c0_13 = arith.constant 0 : index
    %35 = vector.load %arg5[%c0_12, %c0_13] : memref<32x64xbf16, #tpu.memory_space<vmem>>, vector<32x64xbf16>
    %cst_14 = arith.constant dense<0.000000e+00> : vector<8x64xf32>
    %36 = tpu.matmul %34, %35, %cst_14 {dimension_numbers = #tpu.dot_dimension_numbers<[1], [0], [0], [1], [0, 0, 1, 1], [], []>} : vector<8x32xbf16>, vector<32x64xbf16>, vector<8x64xf32> -> vector<8x64xf32>
    %c0_15 = arith.constant 0 : index
    %c0_16 = arith.constant 0 : index
    %37 = vector.load %arg6[%c0_15, %c0_16] : memref<1x64xf32, #tpu.memory_space<vmem>>, vector<1x64xf32>
    %38 = vector.broadcast %37 : vector<1x64xf32> to vector<8x64xf32>
    %39 = arith.addf %36, %38 : vector<8x64xf32>
    %40 = arith.negf %39 : vector<8x64xf32>
    %41 = math.exp %40 : vector<8x64xf32>
    %cst_17 = arith.constant 1.000000e+00 : f32
    %42 = vector.broadcast %cst_17 : f32 to vector<8x64xf32>
    %43 = arith.addf %42, %41 : vector<8x64xf32>
    %44 = arith.divf %42, %43 : vector<8x64xf32>
    %45 = arith.mulf %39, %44 : vector<8x64xf32>
    %46 = arith.truncf %45 : vector<8x64xf32> to vector<8x64xbf16>
    %c0_18 = arith.constant 0 : index
    %c0_19 = arith.constant 0 : index
    %47 = vector.load %arg7[%c0_18, %c0_19] : memref<64x32xbf16, #tpu.memory_space<vmem>>, vector<64x32xbf16>
    %cst_20 = arith.constant dense<0.000000e+00> : vector<8x32xf32>
    %48 = tpu.matmul %46, %47, %cst_20 {dimension_numbers = #tpu.dot_dimension_numbers<[1], [0], [0], [1], [0, 0, 1, 1], [], []>} : vector<8x64xbf16>, vector<64x32xbf16>, vector<8x32xf32> -> vector<8x32xf32>
    %c0_21 = arith.constant 0 : index
    %c0_22 = arith.constant 0 : index
    %49 = vector.load %arg8[%c0_21, %c0_22] : memref<1x32xf32, #tpu.memory_space<vmem>>, vector<1x32xf32>
    %50 = vector.broadcast %49 : vector<1x32xf32> to vector<8x32xf32>
    %51 = arith.addf %48, %50 : vector<8x32xf32>
    %cst_23 = arith.constant 5.000000e-01 : f32
    %52 = vector.broadcast %cst_23 : f32 to vector<8x32xf32>
    %53 = arith.mulf %52, %51 : vector<8x32xf32>
    %54 = arith.addf %1, %53 : vector<8x32xf32>
    %c0_24 = arith.constant 0 : index
    %c0_25 = arith.constant 0 : index
    %55 = vector.load %arg9[%c0_24, %c0_25] : memref<1x32xf32, #tpu.memory_space<vmem>>, vector<1x32xf32>
    %c0_26 = arith.constant 0 : index
    %c0_27 = arith.constant 0 : index
    %56 = vector.load %arg10[%c0_26, %c0_27] : memref<1x32xf32, #tpu.memory_space<vmem>>, vector<1x32xf32>
    %cst_28 = arith.constant dense<0.000000e+00> : vector<8xf32>
    %57 = vector.multi_reduction <add>, %54, %cst_28 [1] : vector<8x32xf32> to vector<8xf32>
    %58 = vector.shape_cast %57 : vector<8xf32> to vector<8x1xf32>
    %cst_29 = arith.constant 3.200000e+01 : f32
    %59 = vector.broadcast %cst_29 : f32 to vector<8x1xf32>
    %60 = arith.divf %58, %59 : vector<8x1xf32>
    %61 = vector.broadcast %60 : vector<8x1xf32> to vector<8x32xf32>
    %62 = arith.subf %54, %61 : vector<8x32xf32>
    %63 = arith.mulf %62, %62 : vector<8x32xf32>
    %cst_30 = arith.constant dense<0.000000e+00> : vector<8xf32>
    %64 = vector.multi_reduction <add>, %63, %cst_30 [1] : vector<8x32xf32> to vector<8xf32>
    %65 = vector.shape_cast %64 : vector<8xf32> to vector<8x1xf32>
    %cst_31 = arith.constant 3.200000e+01 : f32
    %66 = vector.broadcast %cst_31 : f32 to vector<8x1xf32>
    %67 = arith.divf %65, %66 : vector<8x1xf32>
    %68 = vector.broadcast %60 : vector<8x1xf32> to vector<8x32xf32>
    %69 = arith.subf %54, %68 : vector<8x32xf32>
    %cst_32 = arith.constant 9.99999974E-6 : f32
    %70 = vector.broadcast %cst_32 : f32 to vector<8x1xf32>
    %71 = arith.addf %67, %70 : vector<8x1xf32>
    %72 = math.rsqrt %71 : vector<8x1xf32>
    %73 = vector.broadcast %72 : vector<8x1xf32> to vector<8x32xf32>
    %74 = arith.mulf %69, %73 : vector<8x32xf32>
    %75 = vector.broadcast %55 : vector<1x32xf32> to vector<8x32xf32>
    %76 = arith.mulf %74, %75 : vector<8x32xf32>
    %77 = vector.broadcast %56 : vector<1x32xf32> to vector<8x32xf32>
    %78 = arith.addf %76, %77 : vector<8x32xf32>
    %79 = arith.truncf %78 : vector<8x32xf32> to vector<8x32xbf16>
    %c0_33 = arith.constant 0 : index
    %c0_34 = arith.constant 0 : index
    %80 = vector.load %arg11[%c0_33, %c0_34] : memref<32x32xbf16, #tpu.memory_space<vmem>>, vector<32x32xbf16>
    %cst_35 = arith.constant dense<0.000000e+00> : vector<8x32xf32>
    %81 = tpu.matmul %79, %80, %cst_35 {dimension_numbers = #tpu.dot_dimension_numbers<[1], [0], [0], [1], [0, 0, 1, 1], [], []>} : vector<8x32xbf16>, vector<32x32xbf16>, vector<8x32xf32> -> vector<8x32xf32>
    %c0_36 = arith.constant 0 : index
    %c0_37 = arith.constant 0 : index
    %82 = vector.load %arg12[%c0_36, %c0_37] : memref<1x32xf32, #tpu.memory_space<vmem>>, vector<1x32xf32>
    %83 = vector.broadcast %82 : vector<1x32xf32> to vector<8x32xf32>
    %84 = arith.addf %81, %83 : vector<8x32xf32>
    %c0_38 = arith.constant 0 : index
    %c0_39 = arith.constant 0 : index
    %85 = vector.load %arg13[%c0_38, %c0_39] : memref<32x32xbf16, #tpu.memory_space<vmem>>, vector<32x32xbf16>
    %cst_40 = arith.constant dense<0.000000e+00> : vector<8x32xf32>
    %86 = tpu.matmul %79, %85, %cst_40 {dimension_numbers = #tpu.dot_dimension_numbers<[1], [0], [0], [1], [0, 0, 1, 1], [], []>} : vector<8x32xbf16>, vector<32x32xbf16>, vector<8x32xf32> -> vector<8x32xf32>
    %c0_41 = arith.constant 0 : index
    %c0_42 = arith.constant 0 : index
    %87 = vector.load %arg14[%c0_41, %c0_42] : memref<1x32xf32, #tpu.memory_space<vmem>>, vector<1x32xf32>
    %88 = vector.broadcast %87 : vector<1x32xf32> to vector<8x32xf32>
    %89 = arith.addf %86, %88 : vector<8x32xf32>
    %c0_43 = arith.constant 0 : index
    %c0_44 = arith.constant 0 : index
    %90 = vector.load %arg15[%c0_43, %c0_44] : memref<32x32xbf16, #tpu.memory_space<vmem>>, vector<32x32xbf16>
    %cst_45 = arith.constant dense<0.000000e+00> : vector<8x32xf32>
    %91 = tpu.matmul %79, %90, %cst_45 {dimension_numbers = #tpu.dot_dimension_numbers<[1], [0], [0], [1], [0, 0, 1, 1], [], []>} : vector<8x32xbf16>, vector<32x32xbf16>, vector<8x32xf32> -> vector<8x32xf32>
    %c0_46 = arith.constant 0 : index
    %c0_47 = arith.constant 0 : index
    %92 = vector.load %arg16[%c0_46, %c0_47] : memref<1x32xf32, #tpu.memory_space<vmem>>, vector<1x32xf32>
    %93 = vector.broadcast %92 : vector<1x32xf32> to vector<8x32xf32>
    %94 = arith.addf %91, %93 : vector<8x32xf32>
    %95 = arith.truncf %84 : vector<8x32xf32> to vector<8x32xbf16>
    %96 = arith.truncf %89 : vector<8x32xf32> to vector<8x32xbf16>
    %97 = arith.truncf %94 : vector<8x32xf32> to vector<8x32xbf16>
    %98 = vector.extract_strided_slice %95 {offsets = [0, 0], sizes = [8, 8], strides = [1, 1]} : vector<8x32xbf16> to vector<8x8xbf16>
    %99 = vector.extract_strided_slice %96 {offsets = [0, 0], sizes = [8, 8], strides = [1, 1]} : vector<8x32xbf16> to vector<8x8xbf16>
    %cst_48 = arith.constant dense<0.000000e+00> : vector<8x8xf32>
    %100 = tpu.matmul %98, %99, %cst_48 {dimension_numbers = #tpu.dot_dimension_numbers<[1], [1], [0], [0], [0, 0, 1, 0], [], []>} : vector<8x8xbf16>, vector<8x8xbf16>, vector<8x8xf32> -> vector<8x8xf32>
    %101 = vector.broadcast %9 : vector<1x8xf32> to vector<8x8xf32>
    %102 = arith.addf %100, %101 : vector<8x8xf32>
    %cst_49 = arith.constant dense<0xFF800000> : vector<8xf32>
    %103 = vector.multi_reduction <maximumf>, %102, %cst_49 [1] : vector<8x8xf32> to vector<8xf32>
    %104 = vector.shape_cast %103 : vector<8xf32> to vector<8x1xf32>
    %105 = vector.broadcast %104 : vector<8x1xf32> to vector<8x8xf32>
    %106 = arith.subf %102, %105 : vector<8x8xf32>
    %107 = math.exp %106 : vector<8x8xf32>
    %cst_50 = arith.constant dense<0.000000e+00> : vector<8xf32>
    %108 = vector.multi_reduction <add>, %107, %cst_50 [1] : vector<8x8xf32> to vector<8xf32>
    %109 = vector.shape_cast %108 : vector<8xf32> to vector<8x1xf32>
    %110 = tpu.reciprocal %109 {approx = true} : vector<8x1xf32> -> vector<8x1xf32>
    %111 = vector.broadcast %110 : vector<8x1xf32> to vector<8x8xf32>
    %112 = arith.mulf %107, %111 : vector<8x8xf32>
    %113 = arith.truncf %112 : vector<8x8xf32> to vector<8x8xbf16>
    %114 = vector.extract_strided_slice %97 {offsets = [0, 0], sizes = [8, 8], strides = [1, 1]} : vector<8x32xbf16> to vector<8x8xbf16>
    %cst_51 = arith.constant dense<0.000000e+00> : vector<8x8xf32>
    %115 = tpu.matmul %113, %114, %cst_51 {dimension_numbers = #tpu.dot_dimension_numbers<[1], [0], [0], [1], [0, 0, 1, 1], [], []>} : vector<8x8xbf16>, vector<8x8xbf16>, vector<8x8xf32> -> vector<8x8xf32>
    %c0_52 = arith.constant 0 : index
    %c0_53 = arith.constant 0 : index
    %116 = vector.load %arg42[%c0_52, %c0_53] : memref<8x32xf32, #tpu.memory_space<vmem>>, vector<8x8xf32>
    tpu.vector_store %arg42[%c0_52, %c0_53], %115 {strides = array<i32>} : memref<8x32xf32, #tpu.memory_space<vmem>>, vector<8x8xf32>,
    %117 = vector.extract_strided_slice %95 {offsets = [0, 8], sizes = [8, 8], strides = [1, 1]} : vector<8x32xbf16> to vector<8x8xbf16>
    %118 = vector.extract_strided_slice %96 {offsets = [0, 8], sizes = [8, 8], strides = [1, 1]} : vector<8x32xbf16> to vector<8x8xbf16>
    %cst_54 = arith.constant dense<0.000000e+00> : vector<8x8xf32>
    %119 = tpu.matmul %117, %118, %cst_54 {dimension_numbers = #tpu.dot_dimension_numbers<[1], [1], [0], [0], [0, 0, 1, 0], [], []>} : vector<8x8xbf16>, vector<8x8xbf16>, vector<8x8xf32> -> vector<8x8xf32>
    %120 = vector.broadcast %9 : vector<1x8xf32> to vector<8x8xf32>
    %121 = arith.addf %119, %120 : vector<8x8xf32>
    %cst_55 = arith.constant dense<0xFF800000> : vector<8xf32>
    %122 = vector.multi_reduction <maximumf>, %121, %cst_55 [1] : vector<8x8xf32> to vector<8xf32>
    %123 = vector.shape_cast %122 : vector<8xf32> to vector<8x1xf32>
    %124 = vector.broadcast %123 : vector<8x1xf32> to vector<8x8xf32>
    %125 = arith.subf %121, %124 : vector<8x8xf32>
    %126 = math.exp %125 : vector<8x8xf32>
    %cst_56 = arith.constant dense<0.000000e+00> : vector<8xf32>
    %127 = vector.multi_reduction <add>, %126, %cst_56 [1] : vector<8x8xf32> to vector<8xf32>
    %128 = vector.shape_cast %127 : vector<8xf32> to vector<8x1xf32>
    %129 = tpu.reciprocal %128 {approx = true} : vector<8x1xf32> -> vector<8x1xf32>
    %130 = vector.broadcast %129 : vector<8x1xf32> to vector<8x8xf32>
    %131 = arith.mulf %126, %130 : vector<8x8xf32>
    %132 = arith.truncf %131 : vector<8x8xf32> to vector<8x8xbf16>
    %133 = vector.extract_strided_slice %97 {offsets = [0, 8], sizes = [8, 8], strides = [1, 1]} : vector<8x32xbf16> to vector<8x8xbf16>
    %cst_57 = arith.constant dense<0.000000e+00> : vector<8x8xf32>
    %134 = tpu.matmul %132, %133, %cst_57 {dimension_numbers = #tpu.dot_dimension_numbers<[1], [0], [0], [1], [0, 0, 1, 1], [], []>} : vector<8x8xbf16>, vector<8x8xbf16>, vector<8x8xf32> -> vector<8x8xf32>
    %c0_58 = arith.constant 0 : index
    %c8 = arith.constant 8 : index
    %135 = vector.load %arg42[%c0_58, %c8] : memref<8x32xf32, #tpu.memory_space<vmem>>, vector<8x8xf32>
    tpu.vector_store %arg42[%c0_58, %c8], %134 {strides = array<i32>} : memref<8x32xf32, #tpu.memory_space<vmem>>, vector<8x8xf32>,
    %136 = vector.extract_strided_slice %95 {offsets = [0, 16], sizes = [8, 8], strides = [1, 1]} : vector<8x32xbf16> to vector<8x8xbf16>
    %137 = vector.extract_strided_slice %96 {offsets = [0, 16], sizes = [8, 8], strides = [1, 1]} : vector<8x32xbf16> to vector<8x8xbf16>
    %cst_59 = arith.constant dense<0.000000e+00> : vector<8x8xf32>
    %138 = tpu.matmul %136, %137, %cst_59 {dimension_numbers = #tpu.dot_dimension_numbers<[1], [1], [0], [0], [0, 0, 1, 0], [], []>} : vector<8x8xbf16>, vector<8x8xbf16>, vector<8x8xf32> -> vector<8x8xf32>
    %139 = vector.broadcast %9 : vector<1x8xf32> to vector<8x8xf32>
    %140 = arith.addf %138, %139 : vector<8x8xf32>
    %cst_60 = arith.constant dense<0xFF800000> : vector<8xf32>
    %141 = vector.multi_reduction <maximumf>, %140, %cst_60 [1] : vector<8x8xf32> to vector<8xf32>
    %142 = vector.shape_cast %141 : vector<8xf32> to vector<8x1xf32>
    %143 = vector.broadcast %142 : vector<8x1xf32> to vector<8x8xf32>
    %144 = arith.subf %140, %143 : vector<8x8xf32>
    %145 = math.exp %144 : vector<8x8xf32>
    %cst_61 = arith.constant dense<0.000000e+00> : vector<8xf32>
    %146 = vector.multi_reduction <add>, %145, %cst_61 [1] : vector<8x8xf32> to vector<8xf32>
    %147 = vector.shape_cast %146 : vector<8xf32> to vector<8x1xf32>
    %148 = tpu.reciprocal %147 {approx = true} : vector<8x1xf32> -> vector<8x1xf32>
    %149 = vector.broadcast %148 : vector<8x1xf32> to vector<8x8xf32>
    %150 = arith.mulf %145, %149 : vector<8x8xf32>
    %151 = arith.truncf %150 : vector<8x8xf32> to vector<8x8xbf16>
    %152 = vector.extract_strided_slice %97 {offsets = [0, 16], sizes = [8, 8], strides = [1, 1]} : vector<8x32xbf16> to vector<8x8xbf16>
    %cst_62 = arith.constant dense<0.000000e+00> : vector<8x8xf32>
    %153 = tpu.matmul %151, %152, %cst_62 {dimension_numbers = #tpu.dot_dimension_numbers<[1], [0], [0], [1], [0, 0, 1, 1], [], []>} : vector<8x8xbf16>, vector<8x8xbf16>, vector<8x8xf32> -> vector<8x8xf32>
    %c0_63 = arith.constant 0 : index
    %c16 = arith.constant 16 : index
    %154 = vector.load %arg42[%c0_63, %c16] : memref<8x32xf32, #tpu.memory_space<vmem>>, vector<8x8xf32>
    tpu.vector_store %arg42[%c0_63, %c16], %153 {strides = array<i32>} : memref<8x32xf32, #tpu.memory_space<vmem>>, vector<8x8xf32>,
    %155 = vector.extract_strided_slice %95 {offsets = [0, 24], sizes = [8, 8], strides = [1, 1]} : vector<8x32xbf16> to vector<8x8xbf16>
    %156 = vector.extract_strided_slice %96 {offsets = [0, 24], sizes = [8, 8], strides = [1, 1]} : vector<8x32xbf16> to vector<8x8xbf16>
    %cst_64 = arith.constant dense<0.000000e+00> : vector<8x8xf32>
    %157 = tpu.matmul %155, %156, %cst_64 {dimension_numbers = #tpu.dot_dimension_numbers<[1], [1], [0], [0], [0, 0, 1, 0], [], []>} : vector<8x8xbf16>, vector<8x8xbf16>, vector<8x8xf32> -> vector<8x8xf32>
    %158 = vector.broadcast %9 : vector<1x8xf32> to vector<8x8xf32>
    %159 = arith.addf %157, %158 : vector<8x8xf32>
    %cst_65 = arith.constant dense<0xFF800000> : vector<8xf32>
    %160 = vector.multi_reduction <maximumf>, %159, %cst_65 [1] : vector<8x8xf32> to vector<8xf32>
    %161 = vector.shape_cast %160 : vector<8xf32> to vector<8x1xf32>
    %162 = vector.broadcast %161 : vector<8x1xf32> to vector<8x8xf32>
    %163 = arith.subf %159, %162 : vector<8x8xf32>
    %164 = math.exp %163 : vector<8x8xf32>
    %cst_66 = arith.constant dense<0.000000e+00> : vector<8xf32>
    %165 = vector.multi_reduction <add>, %164, %cst_66 [1] : vector<8x8xf32> to vector<8xf32>
    %166 = vector.shape_cast %165 : vector<8xf32> to vector<8x1xf32>
    %167 = tpu.reciprocal %166 {approx = true} : vector<8x1xf32> -> vector<8x1xf32>
    %168 = vector.broadcast %167 : vector<8x1xf32> to vector<8x8xf32>
    %169 = arith.mulf %164, %168 : vector<8x8xf32>
    %170 = arith.truncf %169 : vector<8x8xf32> to vector<8x8xbf16>
    %171 = vector.extract_strided_slice %97 {offsets = [0, 24], sizes = [8, 8], strides = [1, 1]} : vector<8x32xbf16> to vector<8x8xbf16>
    %cst_67 = arith.constant dense<0.000000e+00> : vector<8x8xf32>
    %172 = tpu.matmul %170, %171, %cst_67 {dimension_numbers = #tpu.dot_dimension_numbers<[1], [0], [0], [1], [0, 0, 1, 1], [], []>} : vector<8x8xbf16>, vector<8x8xbf16>, vector<8x8xf32> -> vector<8x8xf32>
    %c0_68 = arith.constant 0 : index
    %c24 = arith.constant 24 : index
    %173 = vector.load %arg42[%c0_68, %c24] : memref<8x32xf32, #tpu.memory_space<vmem>>, vector<8x8xf32>
    tpu.vector_store %arg42[%c0_68, %c24], %172 {strides = array<i32>} : memref<8x32xf32, #tpu.memory_space<vmem>>, vector<8x8xf32>,
    %c0_69 = arith.constant 0 : index
    %c0_70 = arith.constant 0 : index
    %174 = vector.load %arg42[%c0_69, %c0_70] : memref<8x32xf32, #tpu.memory_space<vmem>>, vector<8x32xf32>
    %175 = arith.truncf %174 : vector<8x32xf32> to vector<8x32xbf16>
    %c0_71 = arith.constant 0 : index
    %c0_72 = arith.constant 0 : index
    %176 = vector.load %arg17[%c0_71, %c0_72] : memref<32x32xbf16, #tpu.memory_space<vmem>>, vector<32x32xbf16>
    %cst_73 = arith.constant dense<0.000000e+00> : vector<8x32xf32>
    %177 = tpu.matmul %175, %176, %cst_73 {dimension_numbers = #tpu.dot_dimension_numbers<[1], [0], [0], [1], [0, 0, 1, 1], [], []>} : vector<8x32xbf16>, vector<32x32xbf16>, vector<8x32xf32> -> vector<8x32xf32>
    %178 = arith.addf %54, %177 : vector<8x32xf32>
    %c0_74 = arith.constant 0 : index
    %c0_75 = arith.constant 0 : index
    %179 = vector.load %arg18[%c0_74, %c0_75] : memref<1x32xf32, #tpu.memory_space<vmem>>, vector<1x32xf32>
    %180 = vector.broadcast %179 : vector<1x32xf32> to vector<8x32xf32>
    %181 = arith.addf %178, %180 : vector<8x32xf32>
    %c0_76 = arith.constant 0 : index
    %c0_77 = arith.constant 0 : index
    %182 = vector.load %arg19[%c0_76, %c0_77] : memref<1x32xf32, #tpu.memory_space<vmem>>, vector<1x32xf32>
    %c0_78 = arith.constant 0 : index
    %c0_79 = arith.constant 0 : index
    %183 = vector.load %arg20[%c0_78, %c0_79] : memref<1x32xf32, #tpu.memory_space<vmem>>, vector<1x32xf32>
    %cst_80 = arith.constant dense<0.000000e+00> : vector<8xf32>
    %184 = vector.multi_reduction <add>, %181, %cst_80 [1] : vector<8x32xf32> to vector<8xf32>
    %185 = vector.shape_cast %184 : vector<8xf32> to vector<8x1xf32>
    %cst_81 = arith.constant 3.200000e+01 : f32
    %186 = vector.broadcast %cst_81 : f32 to vector<8x1xf32>
    %187 = arith.divf %185, %186 : vector<8x1xf32>
    %188 = vector.broadcast %187 : vector<8x1xf32> to vector<8x32xf32>
    %189 = arith.subf %181, %188 : vector<8x32xf32>
    %190 = arith.mulf %189, %189 : vector<8x32xf32>
    %cst_82 = arith.constant dense<0.000000e+00> : vector<8xf32>
    %191 = vector.multi_reduction <add>, %190, %cst_82 [1] : vector<8x32xf32> to vector<8xf32>
    %192 = vector.shape_cast %191 : vector<8xf32> to vector<8x1xf32>
    %cst_83 = arith.constant 3.200000e+01 : f32
    %193 = vector.broadcast %cst_83 : f32 to vector<8x1xf32>
    %194 = arith.divf %192, %193 : vector<8x1xf32>
    %195 = vector.broadcast %187 : vector<8x1xf32> to vector<8x32xf32>
    %196 = arith.subf %181, %195 : vector<8x32xf32>
    %cst_84 = arith.constant 9.99999974E-6 : f32
    %197 = vector.broadcast %cst_84 : f32 to vector<8x1xf32>
    %198 = arith.addf %194, %197 : vector<8x1xf32>
    %199 = math.rsqrt %198 : vector<8x1xf32>
    %200 = vector.broadcast %199 : vector<8x1xf32> to vector<8x32xf32>
    %201 = arith.mulf %196, %200 : vector<8x32xf32>
    %202 = vector.broadcast %182 : vector<1x32xf32> to vector<8x32xf32>
    %203 = arith.mulf %201, %202 : vector<8x32xf32>
    %204 = vector.broadcast %183 : vector<1x32xf32> to vector<8x32xf32>
    %205 = arith.addf %203, %204 : vector<8x32xf32>
    %206 = arith.truncf %205 : vector<8x32xf32> to vector<8x32xbf16>
    %c0_85 = arith.constant 0 : index
    %c0_86 = arith.constant 0 : index
    %207 = vector.load %arg21[%c0_85, %c0_86] : memref<32x32xbf16, #tpu.memory_space<vmem>>, vector<32x32xbf16>
    %cst_87 = arith.constant dense<0.000000e+00> : vector<8x32xf32>
    %208 = tpu.matmul %206, %207, %cst_87 {dimension_numbers = #tpu.dot_dimension_numbers<[1], [0], [0], [1], [0, 0, 1, 1], [], []>} : vector<8x32xbf16>, vector<32x32xbf16>, vector<8x32xf32> -> vector<8x32xf32>
    %c0_88 = arith.constant 0 : index
    %c0_89 = arith.constant 0 : index
    %209 = vector.load %arg22[%c0_88, %c0_89] : memref<1x32xf32, #tpu.memory_space<vmem>>, vector<1x32xf32>
    %210 = vector.broadcast %209 : vector<1x32xf32> to vector<8x32xf32>
    %211 = arith.addf %208, %210 : vector<8x32xf32>
    %c0_90 = arith.constant 0 : index
    %c0_91 = arith.constant 0 : index
    %212 = vector.load %arg23[%c0_90, %c0_91] : memref<32x32xbf16, #tpu.memory_space<vmem>>, vector<32x32xbf16>
    %cst_92 = arith.constant dense<0.000000e+00> : vector<8x32xf32>
    %213 = tpu.matmul %206, %212, %cst_92 {dimension_numbers = #tpu.dot_dimension_numbers<[1], [0], [0], [1], [0, 0, 1, 1], [], []>} : vector<8x32xbf16>, vector<32x32xbf16>, vector<8x32xf32> -> vector<8x32xf32>
    %c0_93 = arith.constant 0 : index
    %c0_94 = arith.constant 0 : index
    %214 = vector.load %arg24[%c0_93, %c0_94] : memref<1x32xf32, #tpu.memory_space<vmem>>, vector<1x32xf32>
    %215 = vector.broadcast %214 : vector<1x32xf32> to vector<8x32xf32>
    %216 = arith.addf %213, %215 : vector<8x32xf32>
    %217 = arith.negf %216 : vector<8x32xf32>
    %218 = math.exp %217 : vector<8x32xf32>
    %cst_95 = arith.constant 1.000000e+00 : f32
    %219 = vector.broadcast %cst_95 : f32 to vector<8x32xf32>
    %220 = arith.addf %219, %218 : vector<8x32xf32>
    %221 = arith.divf %219, %220 : vector<8x32xf32>
    %222 = arith.mulf %211, %221 : vector<8x32xf32>
    %223 = tpu.iota {dimensions = array<i32: 0>} : vector<8x1xi32>
    %c3 = arith.constant 3 : index
    %c0_96 = arith.constant 0 : index
    %c0_97 = arith.constant 0 : index
    %224 = vector.load %arg25[%c3, %c0_96, %c0_97] : memref<7x1x32xf32, #tpu.memory_space<vmem>>, vector<1x1x32xf32>
    %225 = vector.shape_cast %224 : vector<1x1x32xf32> to vector<1x32xf32>
    %226 = vector.broadcast %225 : vector<1x32xf32> to vector<8x32xf32>
    %227 = arith.mulf %222, %226 : vector<8x32xf32>
    %c3_i32 = arith.constant 3 : i32
    %228 = tpu.dynamic_rotate %222 by %c3_i32 dim 0 : vector<8x32xf32>, i32 -> vector<8x32xf32>
    %c3_i32_98 = arith.constant 3 : i32
    %229 = vector.broadcast %c3_i32_98 : i32 to vector<8x1xi32>
    %230 = arith.cmpi sge, %223, %229 : vector<8x1xi32>
    %c0_99 = arith.constant 0 : index
    %c0_100 = arith.constant 0 : index
    %c0_101 = arith.constant 0 : index
    %231 = vector.load %arg25[%c0_99, %c0_100, %c0_101] : memref<7x1x32xf32, #tpu.memory_space<vmem>>, vector<1x1x32xf32>
    %232 = vector.shape_cast %231 : vector<1x1x32xf32> to vector<1x32xf32>
    %233 = vector.broadcast %232 : vector<1x32xf32> to vector<8x32xf32>
    %234 = arith.mulf %228, %233 : vector<8x32xf32>
    %cst_102 = arith.constant 0.000000e+00 : f32
    %235 = vector.shape_cast %230 : vector<8x1xi1> to vector<8x1xi1>
    %236 = vector.broadcast %235 : vector<8x1xi1> to vector<8x32xi1>
    %237 = vector.broadcast %cst_102 : f32 to vector<8x32xf32>
    %238 = arith.select %236, %234, %237 : vector<8x32xi1>, vector<8x32xf32>
    %239 = arith.addf %227, %238 : vector<8x32xf32>
    %c2_i32 = arith.constant 2 : i32
    %240 = tpu.dynamic_rotate %222 by %c2_i32 dim 0 : vector<8x32xf32>, i32 -> vector<8x32xf32>
    %c2_i32_103 = arith.constant 2 : i32
    %241 = vector.broadcast %c2_i32_103 : i32 to vector<8x1xi32>
    %242 = arith.cmpi sge, %223, %241 : vector<8x1xi32>
    %c1 = arith.constant 1 : index
    %c0_104 = arith.constant 0 : index
    %c0_105 = arith.constant 0 : index
    %243 = vector.load %arg25[%c1, %c0_104, %c0_105] : memref<7x1x32xf32, #tpu.memory_space<vmem>>, vector<1x1x32xf32>
    %244 = vector.shape_cast %243 : vector<1x1x32xf32> to vector<1x32xf32>
    %245 = vector.broadcast %244 : vector<1x32xf32> to vector<8x32xf32>
    %246 = arith.mulf %240, %245 : vector<8x32xf32>
    %cst_106 = arith.constant 0.000000e+00 : f32
    %247 = vector.shape_cast %242 : vector<8x1xi1> to vector<8x1xi1>
    %248 = vector.broadcast %247 : vector<8x1xi1> to vector<8x32xi1>
    %249 = vector.broadcast %cst_106 : f32 to vector<8x32xf32>
    %250 = arith.select %248, %246, %249 : vector<8x32xi1>, vector<8x32xf32>
    %251 = arith.addf %239, %250 : vector<8x32xf32>
    %c1_i32 = arith.constant 1 : i32
    %252 = tpu.dynamic_rotate %222 by %c1_i32 dim 0 : vector<8x32xf32>, i32 -> vector<8x32xf32>
    %c1_i32_107 = arith.constant 1 : i32
    %253 = vector.broadcast %c1_i32_107 : i32 to vector<8x1xi32>
    %254 = arith.cmpi sge, %223, %253 : vector<8x1xi32>
    %c2 = arith.constant 2 : index
    %c0_108 = arith.constant 0 : index
    %c0_109 = arith.constant 0 : index
    %255 = vector.load %arg25[%c2, %c0_108, %c0_109] : memref<7x1x32xf32, #tpu.memory_space<vmem>>, vector<1x1x32xf32>
    %256 = vector.shape_cast %255 : vector<1x1x32xf32> to vector<1x32xf32>
    %257 = vector.broadcast %256 : vector<1x32xf32> to vector<8x32xf32>
    %258 = arith.mulf %252, %257 : vector<8x32xf32>
    %cst_110 = arith.constant 0.000000e+00 : f32
    %259 = vector.shape_cast %254 : vector<8x1xi1> to vector<8x1xi1>
    %260 = vector.broadcast %259 : vector<8x1xi1> to vector<8x32xi1>
    %261 = vector.broadcast %cst_110 : f32 to vector<8x32xf32>
    %262 = arith.select %260, %258, %261 : vector<8x32xi1>, vector<8x32xf32>
    %263 = arith.addf %251, %262 : vector<8x32xf32>
    %c7_i32 = arith.constant 7 : i32
    %264 = tpu.dynamic_rotate %222 by %c7_i32 dim 0 : vector<8x32xf32>, i32 -> vector<8x32xf32>
    %c7_i32_111 = arith.constant 7 : i32
    %265 = vector.broadcast %c7_i32_111 : i32 to vector<8x1xi32>
    %266 = arith.cmpi slt, %223, %265 : vector<8x1xi32>
    %c4 = arith.constant 4 : index
    %c0_112 = arith.constant 0 : index
    %c0_113 = arith.constant 0 : index
    %267 = vector.load %arg25[%c4, %c0_112, %c0_113] : memref<7x1x32xf32, #tpu.memory_space<vmem>>, vector<1x1x32xf32>
    %268 = vector.shape_cast %267 : vector<1x1x32xf32> to vector<1x32xf32>
    %269 = vector.broadcast %268 : vector<1x32xf32> to vector<8x32xf32>
    %270 = arith.mulf %264, %269 : vector<8x32xf32>
    %cst_114 = arith.constant 0.000000e+00 : f32
    %271 = vector.shape_cast %266 : vector<8x1xi1> to vector<8x1xi1>
    %272 = vector.broadcast %271 : vector<8x1xi1> to vector<8x32xi1>
    %273 = vector.broadcast %cst_114 : f32 to vector<8x32xf32>
    %274 = arith.select %272, %270, %273 : vector<8x32xi1>, vector<8x32xf32>
    %275 = arith.addf %263, %274 : vector<8x32xf32>
    %c6_i32 = arith.constant 6 : i32
    %276 = tpu.dynamic_rotate %222 by %c6_i32 dim 0 : vector<8x32xf32>, i32 -> vector<8x32xf32>
    %c6_i32_115 = arith.constant 6 : i32
    %277 = vector.broadcast %c6_i32_115 : i32 to vector<8x1xi32>
    %278 = arith.cmpi slt, %223, %277 : vector<8x1xi32>
    %c5 = arith.constant 5 : index
    %c0_116 = arith.constant 0 : index
    %c0_117 = arith.constant 0 : index
    %279 = vector.load %arg25[%c5, %c0_116, %c0_117] : memref<7x1x32xf32, #tpu.memory_space<vmem>>, vector<1x1x32xf32>
    %280 = vector.shape_cast %279 : vector<1x1x32xf32> to vector<1x32xf32>
    %281 = vector.broadcast %280 : vector<1x32xf32> to vector<8x32xf32>
    %282 = arith.mulf %276, %281 : vector<8x32xf32>
    %cst_118 = arith.constant 0.000000e+00 : f32
    %283 = vector.shape_cast %278 : vector<8x1xi1> to vector<8x1xi1>
    %284 = vector.broadcast %283 : vector<8x1xi1> to vector<8x32xi1>
    %285 = vector.broadcast %cst_118 : f32 to vector<8x32xf32>
    %286 = arith.select %284, %282, %285 : vector<8x32xi1>, vector<8x32xf32>
    %287 = arith.addf %275, %286 : vector<8x32xf32>
    %c5_i32 = arith.constant 5 : i32
    %288 = tpu.dynamic_rotate %222 by %c5_i32 dim 0 : vector<8x32xf32>, i32 -> vector<8x32xf32>
    %c5_i32_119 = arith.constant 5 : i32
    %289 = vector.broadcast %c5_i32_119 : i32 to vector<8x1xi32>
    %290 = arith.cmpi slt, %223, %289 : vector<8x1xi32>
    %c6 = arith.constant 6 : index
    %c0_120 = arith.constant 0 : index
    %c0_121 = arith.constant 0 : index
    %291 = vector.load %arg25[%c6, %c0_120, %c0_121] : memref<7x1x32xf32, #tpu.memory_space<vmem>>, vector<1x1x32xf32>
    %292 = vector.shape_cast %291 : vector<1x1x32xf32> to vector<1x32xf32>
    %293 = vector.broadcast %292 : vector<1x32xf32> to vector<8x32xf32>
    %294 = arith.mulf %288, %293 : vector<8x32xf32>
    %cst_122 = arith.constant 0.000000e+00 : f32
    %295 = vector.shape_cast %290 : vector<8x1xi1> to vector<8x1xi1>
    %296 = vector.broadcast %295 : vector<8x1xi1> to vector<8x32xi1>
    %297 = vector.broadcast %cst_122 : f32 to vector<8x32xf32>
    %298 = arith.select %296, %294, %297 : vector<8x32xi1>, vector<8x32xf32>
    %299 = arith.addf %287, %298 : vector<8x32xf32>
    %c0_123 = arith.constant 0 : index
    %c0_124 = arith.constant 0 : index
    %300 = vector.load %arg26[%c0_123, %c0_124] : memref<1x32xf32, #tpu.memory_space<vmem>>, vector<1x32xf32>
    %301 = vector.broadcast %300 : vector<1x32xf32> to vector<8x32xf32>
    %302 = arith.addf %299, %301 : vector<8x32xf32>
    %c0_125 = arith.constant 0 : index
    %c0_126 = arith.constant 0 : index
    %303 = vector.load %arg29[%c0_125, %c0_126] : memref<1x32xf32, #tpu.memory_space<vmem>>, vector<1x32xf32>
    %304 = vector.broadcast %303 : vector<1x32xf32> to vector<8x32xf32>
    %305 = arith.subf %302, %304 : vector<8x32xf32>
    %c0_127 = arith.constant 0 : index
    %c0_128 = arith.constant 0 : index
    %306 = vector.load %arg30[%c0_127, %c0_128] : memref<1x32xf32, #tpu.memory_space<vmem>>, vector<1x32xf32>
    %cst_129 = arith.constant 9.99999974E-6 : f32
    %307 = vector.broadcast %cst_129 : f32 to vector<1x32xf32>
    %308 = arith.addf %306, %307 : vector<1x32xf32>
    %309 = math.rsqrt %308 : vector<1x32xf32>
    %310 = vector.broadcast %309 : vector<1x32xf32> to vector<8x32xf32>
    %311 = arith.mulf %305, %310 : vector<8x32xf32>
    %c0_130 = arith.constant 0 : index
    %c0_131 = arith.constant 0 : index
    %312 = vector.load %arg27[%c0_130, %c0_131] : memref<1x32xf32, #tpu.memory_space<vmem>>, vector<1x32xf32>
    %313 = vector.broadcast %312 : vector<1x32xf32> to vector<8x32xf32>
    %314 = arith.mulf %311, %313 : vector<8x32xf32>
    %c0_132 = arith.constant 0 : index
    %c0_133 = arith.constant 0 : index
    %315 = vector.load %arg28[%c0_132, %c0_133] : memref<1x32xf32, #tpu.memory_space<vmem>>, vector<1x32xf32>
    %316 = vector.broadcast %315 : vector<1x32xf32> to vector<8x32xf32>
    %317 = arith.addf %314, %316 : vector<8x32xf32>
    %318 = arith.negf %317 : vector<8x32xf32>
    %319 = math.exp %318 : vector<8x32xf32>
    %cst_134 = arith.constant 1.000000e+00 : f32
    %320 = vector.broadcast %cst_134 : f32 to vector<8x32xf32>
    %321 = arith.addf %320, %319 : vector<8x32xf32>
    %322 = arith.divf %320, %321 : vector<8x32xf32>
    %323 = arith.mulf %317, %322 : vector<8x32xf32>
    %324 = arith.truncf %323 : vector<8x32xf32> to vector<8x32xbf16>
    %c0_135 = arith.constant 0 : index
    %c0_136 = arith.constant 0 : index
    %325 = vector.load %arg31[%c0_135, %c0_136] : memref<32x32xbf16, #tpu.memory_space<vmem>>, vector<32x32xbf16>
    %cst_137 = arith.constant dense<0.000000e+00> : vector<8x32xf32>
    %326 = tpu.matmul %324, %325, %cst_137 {dimension_numbers = #tpu.dot_dimension_numbers<[1], [0], [0], [1], [0, 0, 1, 1], [], []>} : vector<8x32xbf16>, vector<32x32xbf16>, vector<8x32xf32> -> vector<8x32xf32>
    %327 = arith.addf %181, %326 : vector<8x32xf32>
    %c0_138 = arith.constant 0 : index
    %c0_139 = arith.constant 0 : index
    %328 = vector.load %arg32[%c0_138, %c0_139] : memref<1x32xf32, #tpu.memory_space<vmem>>, vector<1x32xf32>
    %329 = vector.broadcast %328 : vector<1x32xf32> to vector<8x32xf32>
    %330 = arith.addf %327, %329 : vector<8x32xf32>
    %c0_140 = arith.constant 0 : index
    %c0_141 = arith.constant 0 : index
    %331 = vector.load %arg33[%c0_140, %c0_141] : memref<1x32xf32, #tpu.memory_space<vmem>>, vector<1x32xf32>
    %c0_142 = arith.constant 0 : index
    %c0_143 = arith.constant 0 : index
    %332 = vector.load %arg34[%c0_142, %c0_143] : memref<1x32xf32, #tpu.memory_space<vmem>>, vector<1x32xf32>
    %cst_144 = arith.constant dense<0.000000e+00> : vector<8xf32>
    %333 = vector.multi_reduction <add>, %330, %cst_144 [1] : vector<8x32xf32> to vector<8xf32>
    %334 = vector.shape_cast %333 : vector<8xf32> to vector<8x1xf32>
    %cst_145 = arith.constant 3.200000e+01 : f32
    %335 = vector.broadcast %cst_145 : f32 to vector<8x1xf32>
    %336 = arith.divf %334, %335 : vector<8x1xf32>
    %337 = vector.broadcast %336 : vector<8x1xf32> to vector<8x32xf32>
    %338 = arith.subf %330, %337 : vector<8x32xf32>
    %339 = arith.mulf %338, %338 : vector<8x32xf32>
    %cst_146 = arith.constant dense<0.000000e+00> : vector<8xf32>
    %340 = vector.multi_reduction <add>, %339, %cst_146 [1] : vector<8x32xf32> to vector<8xf32>
    %341 = vector.shape_cast %340 : vector<8xf32> to vector<8x1xf32>
    %cst_147 = arith.constant 3.200000e+01 : f32
    %342 = vector.broadcast %cst_147 : f32 to vector<8x1xf32>
    %343 = arith.divf %341, %342 : vector<8x1xf32>
    %344 = vector.broadcast %336 : vector<8x1xf32> to vector<8x32xf32>
    %345 = arith.subf %330, %344 : vector<8x32xf32>
    %cst_148 = arith.constant 9.99999974E-6 : f32
    %346 = vector.broadcast %cst_148 : f32 to vector<8x1xf32>
    %347 = arith.addf %343, %346 : vector<8x1xf32>
    %348 = math.rsqrt %347 : vector<8x1xf32>
    %349 = vector.broadcast %348 : vector<8x1xf32> to vector<8x32xf32>
    %350 = arith.mulf %345, %349 : vector<8x32xf32>
    %351 = vector.broadcast %331 : vector<1x32xf32> to vector<8x32xf32>
    %352 = arith.mulf %350, %351 : vector<8x32xf32>
    %353 = vector.broadcast %332 : vector<1x32xf32> to vector<8x32xf32>
    %354 = arith.addf %352, %353 : vector<8x32xf32>
    %355 = arith.truncf %354 : vector<8x32xf32> to vector<8x32xbf16>
    %c0_149 = arith.constant 0 : index
    %c0_150 = arith.constant 0 : index
    %356 = vector.load %arg35[%c0_149, %c0_150] : memref<32x64xbf16, #tpu.memory_space<vmem>>, vector<32x64xbf16>
    %cst_151 = arith.constant dense<0.000000e+00> : vector<8x64xf32>
    %357 = tpu.matmul %355, %356, %cst_151 {dimension_numbers = #tpu.dot_dimension_numbers<[1], [0], [0], [1], [0, 0, 1, 1], [], []>} : vector<8x32xbf16>, vector<32x64xbf16>, vector<8x64xf32> -> vector<8x64xf32>
    %c0_152 = arith.constant 0 : index
    %c0_153 = arith.constant 0 : index
    %358 = vector.load %arg36[%c0_152, %c0_153] : memref<1x64xf32, #tpu.memory_space<vmem>>, vector<1x64xf32>
    %359 = vector.broadcast %358 : vector<1x64xf32> to vector<8x64xf32>
    %360 = arith.addf %357, %359 : vector<8x64xf32>
    %361 = arith.negf %360 : vector<8x64xf32>
    %362 = math.exp %361 : vector<8x64xf32>
    %cst_154 = arith.constant 1.000000e+00 : f32
    %363 = vector.broadcast %cst_154 : f32 to vector<8x64xf32>
    %364 = arith.addf %363, %362 : vector<8x64xf32>
    %365 = arith.divf %363, %364 : vector<8x64xf32>
    %366 = arith.mulf %360, %365 : vector<8x64xf32>
    %367 = arith.truncf %366 : vector<8x64xf32> to vector<8x64xbf16>
    %c0_155 = arith.constant 0 : index
    %c0_156 = arith.constant 0 : index
    %368 = vector.load %arg37[%c0_155, %c0_156] : memref<64x32xbf16, #tpu.memory_space<vmem>>, vector<64x32xbf16>
    %cst_157 = arith.constant dense<0.000000e+00> : vector<8x32xf32>
    %369 = tpu.matmul %367, %368, %cst_157 {dimension_numbers = #tpu.dot_dimension_numbers<[1], [0], [0], [1], [0, 0, 1, 1], [], []>} : vector<8x64xbf16>, vector<64x32xbf16>, vector<8x32xf32> -> vector<8x32xf32>
    %c0_158 = arith.constant 0 : index
    %c0_159 = arith.constant 0 : index
    %370 = vector.load %arg38[%c0_158, %c0_159] : memref<1x32xf32, #tpu.memory_space<vmem>>, vector<1x32xf32>
    %371 = vector.broadcast %370 : vector<1x32xf32> to vector<8x32xf32>
    %372 = arith.addf %369, %371 : vector<8x32xf32>
    %cst_160 = arith.constant 5.000000e-01 : f32
    %373 = vector.broadcast %cst_160 : f32 to vector<8x32xf32>
    %374 = arith.mulf %373, %372 : vector<8x32xf32>
    %375 = arith.addf %330, %374 : vector<8x32xf32>
    %c0_161 = arith.constant 0 : index
    %c0_162 = arith.constant 0 : index
    %376 = vector.load %arg39[%c0_161, %c0_162] : memref<1x32xf32, #tpu.memory_space<vmem>>, vector<1x32xf32>
    %c0_163 = arith.constant 0 : index
    %c0_164 = arith.constant 0 : index
    %377 = vector.load %arg40[%c0_163, %c0_164] : memref<1x32xf32, #tpu.memory_space<vmem>>, vector<1x32xf32>
    %cst_165 = arith.constant dense<0.000000e+00> : vector<8xf32>
    %378 = vector.multi_reduction <add>, %375, %cst_165 [1] : vector<8x32xf32> to vector<8xf32>
    %379 = vector.shape_cast %378 : vector<8xf32> to vector<8x1xf32>
    %cst_166 = arith.constant 3.200000e+01 : f32
    %380 = vector.broadcast %cst_166 : f32 to vector<8x1xf32>
    %381 = arith.divf %379, %380 : vector<8x1xf32>
    %382 = vector.broadcast %381 : vector<8x1xf32> to vector<8x32xf32>
    %383 = arith.subf %375, %382 : vector<8x32xf32>
    %384 = arith.mulf %383, %383 : vector<8x32xf32>
    %cst_167 = arith.constant dense<0.000000e+00> : vector<8xf32>
    %385 = vector.multi_reduction <add>, %384, %cst_167 [1] : vector<8x32xf32> to vector<8xf32>
    %386 = vector.shape_cast %385 : vector<8xf32> to vector<8x1xf32>
    %cst_168 = arith.constant 3.200000e+01 : f32
    %387 = vector.broadcast %cst_168 : f32 to vector<8x1xf32>
    %388 = arith.divf %386, %387 : vector<8x1xf32>
    %389 = vector.broadcast %381 : vector<8x1xf32> to vector<8x32xf32>
    %390 = arith.subf %375, %389 : vector<8x32xf32>
    %cst_169 = arith.constant 9.99999974E-6 : f32
    %391 = vector.broadcast %cst_169 : f32 to vector<8x1xf32>
    %392 = arith.addf %388, %391 : vector<8x1xf32>
    %393 = math.rsqrt %392 : vector<8x1xf32>
    %394 = vector.broadcast %393 : vector<8x1xf32> to vector<8x32xf32>
    %395 = arith.mulf %390, %394 : vector<8x32xf32>
    %396 = vector.broadcast %376 : vector<1x32xf32> to vector<8x32xf32>
    %397 = arith.mulf %395, %396 : vector<8x32xf32>
    %398 = vector.broadcast %377 : vector<1x32xf32> to vector<8x32xf32>
    %399 = arith.addf %397, %398 : vector<8x32xf32>
    %c0_170 = arith.constant 0 : index
    %c0_171 = arith.constant 0 : index
    %c0_172 = arith.constant 0 : index
    %400 = vector.load %arg41[%c0_170, %c0_171, %c0_172] : memref<1x8x32xf32, #tpu.memory_space<vmem>>, vector<1x8x32xf32>
    %401 = vector.shape_cast %400 : vector<1x8x32xf32> to vector<8x32xf32>
    %402 = vector.shape_cast %399 : vector<8x32xf32> to vector<1x8x32xf32>
    tpu.vector_store %arg41[%c0_170, %c0_171, %c0_172], %402 {strides = array<i32>} : memref<1x8x32xf32, #tpu.memory_space<vmem>>, vector<1x8x32xf32>,
    return
  }
  func.func @transform_0(%arg0: i32, %arg1: memref<2xi32, #tpu.memory_space<smem>>) -> (i32, i32, i32) {
    %c0_i32 = arith.constant 0 : i32
    %c0_i32_0 = arith.constant 0 : i32
    %c0_i32_1 = arith.constant 0 : i32
    return %arg0, %c0_i32, %c0_i32_0 : i32, i32, i32
  }
  func.func @transform_1(%arg0: i32, %arg1: memref<2xi32, #tpu.memory_space<smem>>) -> (i32, i32) {
    %c0_i32 = arith.constant 0 : i32
    %c0_i32_0 = arith.constant 0 : i32
    %c0_i32_1 = arith.constant 0 : i32
    return %c0_i32, %c0_i32_0 : i32, i32
  }
  func.func @transform_2(%arg0: i32, %arg1: memref<2xi32, #tpu.memory_space<smem>>) -> (i32, i32) {
    %c0_i32 = arith.constant 0 : i32
    %c0_i32_0 = arith.constant 0 : i32
    %c0_i32_1 = arith.constant 0 : i32
    return %c0_i32, %c0_i32_0 : i32, i32
  }
  func.func @transform_3(%arg0: i32, %arg1: memref<2xi32, #tpu.memory_space<smem>>) -> (i32, i32) {
    %c0_i32 = arith.constant 0 : i32
    %c0_i32_0 = arith.constant 0 : i32
    %c0_i32_1 = arith.constant 0 : i32
    return %c0_i32, %c0_i32_0 : i32, i32
  }
  func.func @transform_4(%arg0: i32, %arg1: memref<2xi32, #tpu.memory_space<smem>>) -> (i32, i32) {
    %c0_i32 = arith.constant 0 : i32
    %c0_i32_0 = arith.constant 0 : i32
    %c0_i32_1 = arith.constant 0 : i32
    return %c0_i32, %c0_i32_0 : i32, i32
  }
  func.func @transform_5(%arg0: i32, %arg1: memref<2xi32, #tpu.memory_space<smem>>) -> (i32, i32) {
    %c0_i32 = arith.constant 0 : i32
    %c0_i32_0 = arith.constant 0 : i32
    %c0_i32_1 = arith.constant 0 : i32
    return %c0_i32, %c0_i32_0 : i32, i32
  }
  func.func @transform_6(%arg0: i32, %arg1: memref<2xi32, #tpu.memory_space<smem>>) -> (i32, i32) {
    %c0_i32 = arith.constant 0 : i32
    %c0_i32_0 = arith.constant 0 : i32
    %c0_i32_1 = arith.constant 0 : i32
    return %c0_i32, %c0_i32_0 : i32, i32
  }
  func.func @transform_7(%arg0: i32, %arg1: memref<2xi32, #tpu.memory_space<smem>>) -> (i32, i32) {
    %c0_i32 = arith.constant 0 : i32
    %c0_i32_0 = arith.constant 0 : i32
    %c0_i32_1 = arith.constant 0 : i32
    return %c0_i32, %c0_i32_0 : i32, i32
  }
  func.func @transform_8(%arg0: i32, %arg1: memref<2xi32, #tpu.memory_space<smem>>) -> (i32, i32) {
    %c0_i32 = arith.constant 0 : i32
    %c0_i32_0 = arith.constant 0 : i32
    %c0_i32_1 = arith.constant 0 : i32
    return %c0_i32, %c0_i32_0 : i32, i32
  }
  func.func @transform_9(%arg0: i32, %arg1: memref<2xi32, #tpu.memory_space<smem>>) -> (i32, i32) {
    %c0_i32 = arith.constant 0 : i32
    %c0_i32_0 = arith.constant 0 : i32
    %c0_i32_1 = arith.constant 0 : i32
    return %c0_i32, %c0_i32_0 : i32, i32
  }
  func.func @transform_10(%arg0: i32, %arg1: memref<2xi32, #tpu.memory_space<smem>>) -> (i32, i32) {
    %c0_i32 = arith.constant 0 : i32
    %c0_i32_0 = arith.constant 0 : i32
    %c0_i32_1 = arith.constant 0 : i32
    return %c0_i32, %c0_i32_0 : i32, i32
  }
  func.func @transform_11(%arg0: i32, %arg1: memref<2xi32, #tpu.memory_space<smem>>) -> (i32, i32) {
    %c0_i32 = arith.constant 0 : i32
    %c0_i32_0 = arith.constant 0 : i32
    %c0_i32_1 = arith.constant 0 : i32
    return %c0_i32, %c0_i32_0 : i32, i32
  }
  func.func @transform_12(%arg0: i32, %arg1: memref<2xi32, #tpu.memory_space<smem>>) -> (i32, i32) {
    %c0_i32 = arith.constant 0 : i32
    %c0_i32_0 = arith.constant 0 : i32
    %c0_i32_1 = arith.constant 0 : i32
    return %c0_i32, %c0_i32_0 : i32, i32
  }
  func.func @transform_13(%arg0: i32, %arg1: memref<2xi32, #tpu.memory_space<smem>>) -> (i32, i32) {
    %c0_i32 = arith.constant 0 : i32
    %c0_i32_0 = arith.constant 0 : i32
    %c0_i32_1 = arith.constant 0 : i32
    return %c0_i32, %c0_i32_0 : i32, i32
  }
  func.func @transform_14(%arg0: i32, %arg1: memref<2xi32, #tpu.memory_space<smem>>) -> (i32, i32) {
    %c0_i32 = arith.constant 0 : i32
    %c0_i32_0 = arith.constant 0 : i32
    %c0_i32_1 = arith.constant 0 : i32
    return %c0_i32, %c0_i32_0 : i32, i32
  }
  func.func @transform_15(%arg0: i32, %arg1: memref<2xi32, #tpu.memory_space<smem>>) -> (i32, i32) {
    %c0_i32 = arith.constant 0 : i32
    %c0_i32_0 = arith.constant 0 : i32
    %c0_i32_1 = arith.constant 0 : i32
    return %c0_i32, %c0_i32_0 : i32, i32
  }
  func.func @transform_16(%arg0: i32, %arg1: memref<2xi32, #tpu.memory_space<smem>>) -> (i32, i32) {
    %c0_i32 = arith.constant 0 : i32
    %c0_i32_0 = arith.constant 0 : i32
    %c0_i32_1 = arith.constant 0 : i32
    return %c0_i32, %c0_i32_0 : i32, i32
  }
  func.func @transform_17(%arg0: i32, %arg1: memref<2xi32, #tpu.memory_space<smem>>) -> (i32, i32) {
    %c0_i32 = arith.constant 0 : i32
    %c0_i32_0 = arith.constant 0 : i32
    %c0_i32_1 = arith.constant 0 : i32
    return %c0_i32, %c0_i32_0 : i32, i32
  }
  func.func @transform_18(%arg0: i32, %arg1: memref<2xi32, #tpu.memory_space<smem>>) -> (i32, i32) {
    %c0_i32 = arith.constant 0 : i32
    %c0_i32_0 = arith.constant 0 : i32
    %c0_i32_1 = arith.constant 0 : i32
    return %c0_i32, %c0_i32_0 : i32, i32
  }
  func.func @transform_19(%arg0: i32, %arg1: memref<2xi32, #tpu.memory_space<smem>>) -> (i32, i32) {
    %c0_i32 = arith.constant 0 : i32
    %c0_i32_0 = arith.constant 0 : i32
    %c0_i32_1 = arith.constant 0 : i32
    return %c0_i32, %c0_i32_0 : i32, i32
  }
  func.func @transform_20(%arg0: i32, %arg1: memref<2xi32, #tpu.memory_space<smem>>) -> (i32, i32) {
    %c0_i32 = arith.constant 0 : i32
    %c0_i32_0 = arith.constant 0 : i32
    %c0_i32_1 = arith.constant 0 : i32
    return %c0_i32, %c0_i32_0 : i32, i32
  }
  func.func @transform_21(%arg0: i32, %arg1: memref<2xi32, #tpu.memory_space<smem>>) -> (i32, i32) {
    %c0_i32 = arith.constant 0 : i32
    %c0_i32_0 = arith.constant 0 : i32
    %c0_i32_1 = arith.constant 0 : i32
    return %c0_i32, %c0_i32_0 : i32, i32
  }
  func.func @transform_22(%arg0: i32, %arg1: memref<2xi32, #tpu.memory_space<smem>>) -> (i32, i32) {
    %c0_i32 = arith.constant 0 : i32
    %c0_i32_0 = arith.constant 0 : i32
    %c0_i32_1 = arith.constant 0 : i32
    return %c0_i32, %c0_i32_0 : i32, i32
  }
  func.func @transform_23(%arg0: i32, %arg1: memref<2xi32, #tpu.memory_space<smem>>) -> (i32, i32, i32) {
    %c0_i32 = arith.constant 0 : i32
    %c0_i32_0 = arith.constant 0 : i32
    %c0_i32_1 = arith.constant 0 : i32
    %c0_i32_2 = arith.constant 0 : i32
    return %c0_i32, %c0_i32_0, %c0_i32_1 : i32, i32, i32
  }
  func.func @transform_24(%arg0: i32, %arg1: memref<2xi32, #tpu.memory_space<smem>>) -> (i32, i32) {
    %c0_i32 = arith.constant 0 : i32
    %c0_i32_0 = arith.constant 0 : i32
    %c0_i32_1 = arith.constant 0 : i32
    return %c0_i32, %c0_i32_0 : i32, i32
  }
  func.func @transform_25(%arg0: i32, %arg1: memref<2xi32, #tpu.memory_space<smem>>) -> (i32, i32) {
    %c0_i32 = arith.constant 0 : i32
    %c0_i32_0 = arith.constant 0 : i32
    %c0_i32_1 = arith.constant 0 : i32
    return %c0_i32, %c0_i32_0 : i32, i32
  }
  func.func @transform_26(%arg0: i32, %arg1: memref<2xi32, #tpu.memory_space<smem>>) -> (i32, i32) {
    %c0_i32 = arith.constant 0 : i32
    %c0_i32_0 = arith.constant 0 : i32
    %c0_i32_1 = arith.constant 0 : i32
    return %c0_i32, %c0_i32_0 : i32, i32
  }
  func.func @transform_27(%arg0: i32, %arg1: memref<2xi32, #tpu.memory_space<smem>>) -> (i32, i32) {
    %c0_i32 = arith.constant 0 : i32
    %c0_i32_0 = arith.constant 0 : i32
    %c0_i32_1 = arith.constant 0 : i32
    return %c0_i32, %c0_i32_0 : i32, i32
  }
  func.func @transform_28(%arg0: i32, %arg1: memref<2xi32, #tpu.memory_space<smem>>) -> (i32, i32) {
    %c0_i32 = arith.constant 0 : i32
    %c0_i32_0 = arith.constant 0 : i32
    %c0_i32_1 = arith.constant 0 : i32
    return %c0_i32, %c0_i32_0 : i32, i32
  }
  func.func @transform_29(%arg0: i32, %arg1: memref<2xi32, #tpu.memory_space<smem>>) -> (i32, i32) {
    %c0_i32 = arith.constant 0 : i32
    %c0_i32_0 = arith.constant 0 : i32
    %c0_i32_1 = arith.constant 0 : i32
    return %c0_i32, %c0_i32_0 : i32, i32
  }
  func.func @transform_30(%arg0: i32, %arg1: memref<2xi32, #tpu.memory_space<smem>>) -> (i32, i32) {
    %c0_i32 = arith.constant 0 : i32
    %c0_i32_0 = arith.constant 0 : i32
    %c0_i32_1 = arith.constant 0 : i32
    return %c0_i32, %c0_i32_0 : i32, i32
  }
  func.func @transform_31(%arg0: i32, %arg1: memref<2xi32, #tpu.memory_space<smem>>) -> (i32, i32) {
    %c0_i32 = arith.constant 0 : i32
    %c0_i32_0 = arith.constant 0 : i32
    %c0_i32_1 = arith.constant 0 : i32
    return %c0_i32, %c0_i32_0 : i32, i32
  }
  func.func @transform_32(%arg0: i32, %arg1: memref<2xi32, #tpu.memory_space<smem>>) -> (i32, i32) {
    %c0_i32 = arith.constant 0 : i32
    %c0_i32_0 = arith.constant 0 : i32
    %c0_i32_1 = arith.constant 0 : i32
    return %c0_i32, %c0_i32_0 : i32, i32
  }
  func.func @transform_33(%arg0: i32, %arg1: memref<2xi32, #tpu.memory_space<smem>>) -> (i32, i32) {
    %c0_i32 = arith.constant 0 : i32
    %c0_i32_0 = arith.constant 0 : i32
    %c0_i32_1 = arith.constant 0 : i32
    return %c0_i32, %c0_i32_0 : i32, i32
  }
  func.func @transform_34(%arg0: i32, %arg1: memref<2xi32, #tpu.memory_space<smem>>) -> (i32, i32) {
    %c0_i32 = arith.constant 0 : i32
    %c0_i32_0 = arith.constant 0 : i32
    %c0_i32_1 = arith.constant 0 : i32
    return %c0_i32, %c0_i32_0 : i32, i32
  }
  func.func @transform_35(%arg0: i32, %arg1: memref<2xi32, #tpu.memory_space<smem>>) -> (i32, i32) {
    %c0_i32 = arith.constant 0 : i32
    %c0_i32_0 = arith.constant 0 : i32
    %c0_i32_1 = arith.constant 0 : i32
    return %c0_i32, %c0_i32_0 : i32, i32
  }
  func.func @transform_36(%arg0: i32, %arg1: memref<2xi32, #tpu.memory_space<smem>>) -> (i32, i32) {
    %c0_i32 = arith.constant 0 : i32
    %c0_i32_0 = arith.constant 0 : i32
    %c0_i32_1 = arith.constant 0 : i32
    return %c0_i32, %c0_i32_0 : i32, i32
  }
  func.func @transform_37(%arg0: i32, %arg1: memref<2xi32, #tpu.memory_space<smem>>) -> (i32, i32) {
    %c0_i32 = arith.constant 0 : i32
    %c0_i32_0 = arith.constant 0 : i32
    %c0_i32_1 = arith.constant 0 : i32
    return %c0_i32, %c0_i32_0 : i32, i32
  }
  func.func @transform_38(%arg0: i32, %arg1: memref<2xi32, #tpu.memory_space<smem>>) -> (i32, i32) {
    %c0_i32 = arith.constant 0 : i32
    %c0_i32_0 = arith.constant 0 : i32
    %c0_i32_1 = arith.constant 0 : i32
    return %c0_i32, %c0_i32_0 : i32, i32
  }
  func.func @transform_39(%arg0: i32, %arg1: memref<2xi32, #tpu.memory_space<smem>>) -> (i32, i32, i32) {
    %c0_i32 = arith.constant 0 : i32
    %c0_i32_0 = arith.constant 0 : i32
    %c0_i32_1 = arith.constant 0 : i32
    return %arg0, %c0_i32, %c0_i32_0 : i32, i32, i32
  }
}

module attributes {stable_mosaic.version = 11 : i64} {
  func.func @kernel(%arg0: i32, %arg1: memref<2xi32, #tpu.memory_space<smem>>, %arg2: memref<1x8x32xf32, #tpu.memory_space<vmem>>, %arg3: memref<1x32xf32, #tpu.memory_space<vmem>>, %arg4: memref<1x32xf32, #tpu.memory_space<vmem>>, %arg5: memref<32x64xbf16, #tpu.memory_space<vmem>>, %arg6: memref<1x64xf32, #tpu.memory_space<vmem>>, %arg7: memref<64x32xbf16, #tpu.memory_space<vmem>>, %arg8: memref<1x32xf32, #tpu.memory_space<vmem>>, %arg9: memref<1x32xf32, #tpu.memory_space<vmem>>, %arg10: memref<1x32xf32, #tpu.memory_space<vmem>>, %arg11: memref<32x32xbf16, #tpu.memory_space<vmem>>, %arg12: memref<1x32xf32, #tpu.memory_space<vmem>>, %arg13: memref<32x32xbf16, #tpu.memory_space<vmem>>, %arg14: memref<1x32xf32, #tpu.memory_space<vmem>>, %arg15: memref<32x32xbf16, #tpu.memory_space<vmem>>, %arg16: memref<1x32xf32, #tpu.memory_space<vmem>>, %arg17: memref<32x32xbf16, #tpu.memory_space<vmem>>, %arg18: memref<1x32xf32, #tpu.memory_space<vmem>>, %arg19: memref<1x32xf32, #tpu.memory_space<vmem>>, %arg20: memref<1x32xf32, #tpu.memory_space<vmem>>, %arg21: memref<32x32xbf16, #tpu.memory_space<vmem>>, %arg22: memref<1x32xf32, #tpu.memory_space<vmem>>, %arg23: memref<32x32xbf16, #tpu.memory_space<vmem>>, %arg24: memref<1x32xf32, #tpu.memory_space<vmem>>, %arg25: memref<7x1x32xf32, #tpu.memory_space<vmem>>, %arg26: memref<1x32xf32, #tpu.memory_space<vmem>>, %arg27: memref<1x32xf32, #tpu.memory_space<vmem>>, %arg28: memref<1x32xf32, #tpu.memory_space<vmem>>, %arg29: memref<1x32xf32, #tpu.memory_space<vmem>>, %arg30: memref<1x32xf32, #tpu.memory_space<vmem>>, %arg31: memref<32x32xbf16, #tpu.memory_space<vmem>>, %arg32: memref<1x32xf32, #tpu.memory_space<vmem>>, %arg33: memref<1x32xf32, #tpu.memory_space<vmem>>, %arg34: memref<1x32xf32, #tpu.memory_space<vmem>>, %arg35: memref<32x64xbf16, #tpu.memory_space<vmem>>, %arg36: memref<1x64xf32, #tpu.memory_space<vmem>>, %arg37: memref<64x32xbf16, #tpu.memory_space<vmem>>, %arg38: memref<1x32xf32, #tpu.memory_space<vmem>>, %arg39: memref<1x32xf32, #tpu.memory_space<vmem>>, %arg40: memref<1x32xf32, #tpu.memory_space<vmem>>, %arg41: memref<1x8x32xf32, #tpu.memory_space<vmem>>, %arg42: memref<8x32xf32, #tpu.memory_space<vmem>>) attributes {dimension_semantics = [#tpu.dimension_semantics<parallel>], iteration_bounds = array<i64: 2>, scalar_prefetch = 1 : i64, scratch_operands = 1 : i64, tpu.core_type = #tpu.core_type<tc>, window_params = [{transform_indices = @transform_0, window_bounds = array<i64: 1, 8, 32>}, {pipeline_mode = #tpu.pipeline_mode<synchronous>, transform_indices = @transform_1, window_bounds = array<i64: 1, 32>}, {pipeline_mode = #tpu.pipeline_mode<synchronous>, transform_indices = @transform_2, window_bounds = array<i64: 1, 32>}, {pipeline_mode = #tpu.pipeline_mode<synchronous>, transform_indices = @transform_3, window_bounds = array<i64: 32, 64>}, {pipeline_mode = #tpu.pipeline_mode<synchronous>, transform_indices = @transform_4, window_bounds = array<i64: 1, 64>}, {pipeline_mode = #tpu.pipeline_mode<synchronous>, transform_indices = @transform_5, window_bounds = array<i64: 64, 32>}, {pipeline_mode = #tpu.pipeline_mode<synchronous>, transform_indices = @transform_6, window_bounds = array<i64: 1, 32>}, {pipeline_mode = #tpu.pipeline_mode<synchronous>, transform_indices = @transform_7, window_bounds = array<i64: 1, 32>}, {pipeline_mode = #tpu.pipeline_mode<synchronous>, transform_indices = @transform_8, window_bounds = array<i64: 1, 32>}, {pipeline_mode = #tpu.pipeline_mode<synchronous>, transform_indices = @transform_9, window_bounds = array<i64: 32, 32>}, {pipeline_mode = #tpu.pipeline_mode<synchronous>, transform_indices = @transform_10, window_bounds = array<i64: 1, 32>}, {pipeline_mode = #tpu.pipeline_mode<synchronous>, transform_indices = @transform_11, window_bounds = array<i64: 32, 32>}, {pipeline_mode = #tpu.pipeline_mode<synchronous>, transform_indices = @transform_12, window_bounds = array<i64: 1, 32>}, {pipeline_mode = #tpu.pipeline_mode<synchronous>, transform_indices = @transform_13, window_bounds = array<i64: 32, 32>}, {pipeline_mode = #tpu.pipeline_mode<synchronous>, transform_indices = @transform_14, window_bounds = array<i64: 1, 32>}, {pipeline_mode = #tpu.pipeline_mode<synchronous>, transform_indices = @transform_15, window_bounds = array<i64: 32, 32>}, {pipeline_mode = #tpu.pipeline_mode<synchronous>, transform_indices = @transform_16, window_bounds = array<i64: 1, 32>}, {pipeline_mode = #tpu.pipeline_mode<synchronous>, transform_indices = @transform_17, window_bounds = array<i64: 1, 32>}, {pipeline_mode = #tpu.pipeline_mode<synchronous>, transform_indices = @transform_18, window_bounds = array<i64: 1, 32>}, {pipeline_mode = #tpu.pipeline_mode<synchronous>, transform_indices = @transform_19, window_bounds = array<i64: 32, 32>}, {pipeline_mode = #tpu.pipeline_mode<synchronous>, transform_indices = @transform_20, window_bounds = array<i64: 1, 32>}, {pipeline_mode = #tpu.pipeline_mode<synchronous>, transform_indices = @transform_21, window_bounds = array<i64: 32, 32>}, {pipeline_mode = #tpu.pipeline_mode<synchronous>, transform_indices = @transform_22, window_bounds = array<i64: 1, 32>}, {pipeline_mode = #tpu.pipeline_mode<synchronous>, transform_indices = @transform_23, window_bounds = array<i64: 7, 1, 32>}, {pipeline_mode = #tpu.pipeline_mode<synchronous>, transform_indices = @transform_24, window_bounds = array<i64: 1, 32>}, {pipeline_mode = #tpu.pipeline_mode<synchronous>, transform_indices = @transform_25, window_bounds = array<i64: 1, 32>}, {pipeline_mode = #tpu.pipeline_mode<synchronous>, transform_indices = @transform_26, window_bounds = array<i64: 1, 32>}, {pipeline_mode = #tpu.pipeline_mode<synchronous>, transform_indices = @transform_27, window_bounds = array<i64: 1, 32>}, {pipeline_mode = #tpu.pipeline_mode<synchronous>, transform_indices = @transform_28, window_bounds = array<i64: 1, 32>}, {pipeline_mode = #tpu.pipeline_mode<synchronous>, transform_indices = @transform_29, window_bounds = array<i64: 32, 32>}, {pipeline_mode = #tpu.pipeline_mode<synchronous>, transform_indices = @transform_30, window_bounds = array<i64: 1, 32>}, {pipeline_mode = #tpu.pipeline_mode<synchronous>, transform_indices = @transform_31, window_bounds = array<i64: 1, 32>}, {pipeline_mode = #tpu.pipeline_mode<synchronous>, transform_indices = @transform_32, window_bounds = array<i64: 1, 32>}, {pipeline_mode = #tpu.pipeline_mode<synchronous>, transform_indices = @transform_33, window_bounds = array<i64: 32, 64>}, {pipeline_mode = #tpu.pipeline_mode<synchronous>, transform_indices = @transform_34, window_bounds = array<i64: 1, 64>}, {pipeline_mode = #tpu.pipeline_mode<synchronous>, transform_indices = @transform_35, window_bounds = array<i64: 64, 32>}, {pipeline_mode = #tpu.pipeline_mode<synchronous>, transform_indices = @transform_36, window_bounds = array<i64: 1, 32>}, {pipeline_mode = #tpu.pipeline_mode<synchronous>, transform_indices = @transform_37, window_bounds = array<i64: 1, 32>}, {pipeline_mode = #tpu.pipeline_mode<synchronous>, transform_indices = @transform_38, window_bounds = array<i64: 1, 32>}, {transform_indices = @transform_39, window_bounds = array<i64: 1, 8, 32>}]} {
    %c0 = arith.constant 0 : index
    %c0_0 = arith.constant 0 : index
    %c0_1 = arith.constant 0 : index
    %0 = vector.load %arg2[%c0, %c0_0, %c0_1] : memref<1x8x32xf32, #tpu.memory_space<vmem>>, vector<1x8x32xf32>
    %1 = vector.shape_cast %0 : vector<1x8x32xf32> to vector<8x32xf32>
    %2 = arith.index_cast %arg0 : i32 to index
    %3 = memref.load %arg1[%2] : memref<2xi32, #tpu.memory_space<smem>>
    %4 = tpu.iota {dimensions = array<i32: 1>} : vector<1x8xi32>
    %5 = vector.broadcast %3 : i32 to vector<1x8xi32>
    %6 = arith.cmpi slt, %4, %5 : vector<1x8xi32>
    %cst = arith.constant 0.000000e+00 : f32
    %cst_2 = arith.constant -1.000000e+30 : f32
    %7 = vector.broadcast %cst : f32 to vector<1x8xf32>
    %8 = vector.broadcast %cst_2 : f32 to vector<1x8xf32>
    %9 = arith.select %6, %7, %8 : vector<1x8xi1>, vector<1x8xf32>
    %c0_3 = arith.constant 0 : index
    %c0_4 = arith.constant 0 : index
    %10 = vector.load %arg3[%c0_3, %c0_4] : memref<1x32xf32, #tpu.memory_space<vmem>>, vector<1x32xf32>
    %c0_5 = arith.constant 0 : index
    %c0_6 = arith.constant 0 : index
    %11 = vector.load %arg4[%c0_5, %c0_6] : memref<1x32xf32, #tpu.memory_space<vmem>>, vector<1x32xf32>
    %cst_7 = arith.constant dense<0.000000e+00> : vector<8xf32>
    %12 = vector.multi_reduction <add>, %1, %cst_7 [1] : vector<8x32xf32> to vector<8xf32>
    %13 = vector.shape_cast %12 : vector<8xf32> to vector<8x1xf32>
    %cst_8 = arith.constant 3.200000e+01 : f32
    %14 = vector.broadcast %cst_8 : f32 to vector<8x1xf32>
    %15 = arith.divf %13, %14 : vector<8x1xf32>
    %16 = vector.broadcast %15 : vector<8x1xf32> to vector<8x32xf32>
    %17 = arith.subf %1, %16 : vector<8x32xf32>
    %18 = arith.mulf %17, %17 : vector<8x32xf32>
    %cst_9 = arith.constant dense<0.000000e+00> : vector<8xf32>
    %19 = vector.multi_reduction <add>, %18, %cst_9 [1] : vector<8x32xf32> to vector<8xf32>
    %20 = vector.shape_cast %19 : vector<8xf32> to vector<8x1xf32>
    %cst_10 = arith.constant 3.200000e+01 : f32
    %21 = vector.broadcast %cst_10 : f32 to vector<8x1xf32>
    %22 = arith.divf %20, %21 : vector<8x1xf32>
    %23 = vector.broadcast %15 : vector<8x1xf32> to vector<8x32xf32>
    %24 = arith.subf %1, %23 : vector<8x32xf32>
    %cst_11 = arith.constant 9.99999974E-6 : f32
    %25 = vector.broadcast %cst_11 : f32 to vector<8x1xf32>
    %26 = arith.addf %22, %25 : vector<8x1xf32>
    %27 = math.rsqrt %26 : vector<8x1xf32>
    %28 = vector.broadcast %27 : vector<8x1xf32> to vector<8x32xf32>
    %29 = arith.mulf %24, %28 : vector<8x32xf32>
    %30 = vector.broadcast %10 : vector<1x32xf32> to vector<8x32xf32>
    %31 = arith.mulf %29, %30 : vector<8x32xf32>
    %32 = vector.broadcast %11 : vector<1x32xf32> to vector<8x32xf32>
    %33 = arith.addf %31, %32 : vector<8x32xf32>
    %34 = arith.truncf %33 : vector<8x32xf32> to vector<8x32xbf16>
    %c0_12 = arith.constant 0 : index
    %c0_13 = arith.constant 0 : index
    %35 = vector.load %arg5[%c0_12, %c0_13] : memref<32x64xbf16, #tpu.memory_space<vmem>>, vector<32x64xbf16>
    %cst_14 = arith.constant dense<0.000000e+00> : vector<8x64xf32>
    %36 = tpu.matmul %34, %35, %cst_14 {dimension_numbers = #tpu.dot_dimension_numbers<[1], [0], [0], [1], [0, 0, 1, 1], [], []>} : vector<8x32xbf16>, vector<32x64xbf16>, vector<8x64xf32> -> vector<8x64xf32>
    %c0_15 = arith.constant 0 : index
    %c0_16 = arith.constant 0 : index
    %37 = vector.load %arg6[%c0_15, %c0_16] : memref<1x64xf32, #tpu.memory_space<vmem>>, vector<1x64xf32>
    %38 = vector.broadcast %37 : vector<1x64xf32> to vector<8x64xf32>
    %39 = arith.addf %36, %38 : vector<8x64xf32>
    %40 = arith.negf %39 : vector<8x64xf32>
    %41 = math.exp %40 : vector<8x64xf32>
    %cst_17 = arith.constant 1.000000e+00 : f32
    %42 = vector.broadcast %cst_17 : f32 to vector<8x64xf32>
    %43 = arith.addf %42, %41 : vector<8x64xf32>
    %44 = arith.divf %42, %43 : vector<8x64xf32>
    %45 = arith.mulf %39, %44 : vector<8x64xf32>
    %46 = arith.truncf %45 : vector<8x64xf32> to vector<8x64xbf16>
    %c0_18 = arith.constant 0 : index
    %c0_19 = arith.constant 0 : index
    %47 = vector.load %arg7[%c0_18, %c0_19] : memref<64x32xbf16, #tpu.memory_space<vmem>>, vector<64x32xbf16>
    %cst_20 = arith.constant dense<0.000000e+00> : vector<8x32xf32>
    %48 = tpu.matmul %46, %47, %cst_20 {dimension_numbers = #tpu.dot_dimension_numbers<[1], [0], [0], [1], [0, 0, 1, 1], [], []>} : vector<8x64xbf16>, vector<64x32xbf16>, vector<8x32xf32> -> vector<8x32xf32>
    %c0_21 = arith.constant 0 : index
    %c0_22 = arith.constant 0 : index
    %49 = vector.load %arg8[%c0_21, %c0_22] : memref<1x32xf32, #tpu.memory_space<vmem>>, vector<1x32xf32>
    %50 = vector.broadcast %49 : vector<1x32xf32> to vector<8x32xf32>
    %51 = arith.addf %48, %50 : vector<8x32xf32>
    %cst_23 = arith.constant 5.000000e-01 : f32
    %52 = vector.broadcast %cst_23 : f32 to vector<8x32xf32>
    %53 = arith.mulf %52, %51 : vector<8x32xf32>
    %54 = arith.addf %1, %53 : vector<8x32xf32>
    %c0_24 = arith.constant 0 : index
    %c0_25 = arith.constant 0 : index
    %55 = vector.load %arg9[%c0_24, %c0_25] : memref<1x32xf32, #tpu.memory_space<vmem>>, vector<1x32xf32>
    %c0_26 = arith.constant 0 : index
    %c0_27 = arith.constant 0 : index
    %56 = vector.load %arg10[%c0_26, %c0_27] : memref<1x32xf32, #tpu.memory_space<vmem>>, vector<1x32xf32>
    %cst_28 = arith.constant dense<0.000000e+00> : vector<8xf32>
    %57 = vector.multi_reduction <add>, %54, %cst_28 [1] : vector<8x32xf32> to vector<8xf32>
    %58 = vector.shape_cast %57 : vector<8xf32> to vector<8x1xf32>
    %cst_29 = arith.constant 3.200000e+01 : f32
    %59 = vector.broadcast %cst_29 : f32 to vector<8x1xf32>
    %60 = arith.divf %58, %59 : vector<8x1xf32>
    %61 = vector.broadcast %60 : vector<8x1xf32> to vector<8x32xf32>
    %62 = arith.subf %54, %61 : vector<8x32xf32>
    %63 = arith.mulf %62, %62 : vector<8x32xf32>
    %cst_30 = arith.constant dense<0.000000e+00> : vector<8xf32>
    %64 = vector.multi_reduction <add>, %63, %cst_30 [1] : vector<8x32xf32> to vector<8xf32>
    %65 = vector.shape_cast %64 : vector<8xf32> to vector<8x1xf32>
    %cst_31 = arith.constant 3.200000e+01 : f32
    %66 = vector.broadcast %cst_31 : f32 to vector<8x1xf32>
    %67 = arith.divf %65, %66 : vector<8x1xf32>
    %68 = vector.broadcast %60 : vector<8x1xf32> to vector<8x32xf32>
    %69 = arith.subf %54, %68 : vector<8x32xf32>
    %cst_32 = arith.constant 9.99999974E-6 : f32
    %70 = vector.broadcast %cst_32 : f32 to vector<8x1xf32>
    %71 = arith.addf %67, %70 : vector<8x1xf32>
    %72 = math.rsqrt %71 : vector<8x1xf32>
    %73 = vector.broadcast %72 : vector<8x1xf32> to vector<8x32xf32>
    %74 = arith.mulf %69, %73 : vector<8x32xf32>
    %75 = vector.broadcast %55 : vector<1x32xf32> to vector<8x32xf32>
    %76 = arith.mulf %74, %75 : vector<8x32xf32>
    %77 = vector.broadcast %56 : vector<1x32xf32> to vector<8x32xf32>
    %78 = arith.addf %76, %77 : vector<8x32xf32>
    %79 = arith.truncf %78 : vector<8x32xf32> to vector<8x32xbf16>
    %c0_33 = arith.constant 0 : index
    %c0_34 = arith.constant 0 : index
    %80 = vector.load %arg11[%c0_33, %c0_34] : memref<32x32xbf16, #tpu.memory_space<vmem>>, vector<32x32xbf16>
    %cst_35 = arith.constant dense<0.000000e+00> : vector<8x32xf32>
    %81 = tpu.matmul %79, %80, %cst_35 {dimension_numbers = #tpu.dot_dimension_numbers<[1], [0], [0], [1], [0, 0, 1, 1], [], []>} : vector<8x32xbf16>, vector<32x32xbf16>, vector<8x32xf32> -> vector<8x32xf32>
    %c0_36 = arith.constant 0 : index
    %c0_37 = arith.constant 0 : index
    %82 = vector.load %arg12[%c0_36, %c0_37] : memref<1x32xf32, #tpu.memory_space<vmem>>, vector<1x32xf32>
    %83 = vector.broadcast %82 : vector<1x32xf32> to vector<8x32xf32>
    %84 = arith.addf %81, %83 : vector<8x32xf32>
    %c0_38 = arith.constant 0 : index
    %c0_39 = arith.constant 0 : index
    %85 = vector.load %arg13[%c0_38, %c0_39] : memref<32x32xbf16, #tpu.memory_space<vmem>>, vector<32x32xbf16>
    %cst_40 = arith.constant dense<0.000000e+00> : vector<8x32xf32>
    %86 = tpu.matmul %79, %85, %cst_40 {dimension_numbers = #tpu.dot_dimension_numbers<[1], [0], [0], [1], [0, 0, 1, 1], [], []>} : vector<8x32xbf16>, vector<32x32xbf16>, vector<8x32xf32> -> vector<8x32xf32>
    %c0_41 = arith.constant 0 : index
    %c0_42 = arith.constant 0 : index
    %87 = vector.load %arg14[%c0_41, %c0_42] : memref<1x32xf32, #tpu.memory_space<vmem>>, vector<1x32xf32>
    %88 = vector.broadcast %87 : vector<1x32xf32> to vector<8x32xf32>
    %89 = arith.addf %86, %88 : vector<8x32xf32>
    %c0_43 = arith.constant 0 : index
    %c0_44 = arith.constant 0 : index
    %90 = vector.load %arg15[%c0_43, %c0_44] : memref<32x32xbf16, #tpu.memory_space<vmem>>, vector<32x32xbf16>
    %cst_45 = arith.constant dense<0.000000e+00> : vector<8x32xf32>
    %91 = tpu.matmul %79, %90, %cst_45 {dimension_numbers = #tpu.dot_dimension_numbers<[1], [0], [0], [1], [0, 0, 1, 1], [], []>} : vector<8x32xbf16>, vector<32x32xbf16>, vector<8x32xf32> -> vector<8x32xf32>
    %c0_46 = arith.constant 0 : index
    %c0_47 = arith.constant 0 : index
    %92 = vector.load %arg16[%c0_46, %c0_47] : memref<1x32xf32, #tpu.memory_space<vmem>>, vector<1x32xf32>
    %93 = vector.broadcast %92 : vector<1x32xf32> to vector<8x32xf32>
    %94 = arith.addf %91, %93 : vector<8x32xf32>
    %95 = arith.truncf %84 : vector<8x32xf32> to vector<8x32xbf16>
    %96 = arith.truncf %89 : vector<8x32xf32> to vector<8x32xbf16>
    %97 = arith.truncf %94 : vector<8x32xf32> to vector<8x32xbf16>
    %98 = vector.extract_strided_slice %95 {offsets = [0, 0], sizes = [8, 8], strides = [1, 1]} : vector<8x32xbf16> to vector<8x8xbf16>
    %99 = vector.extract_strided_slice %96 {offsets = [0, 0], sizes = [8, 8], strides = [1, 1]} : vector<8x32xbf16> to vector<8x8xbf16>
    %cst_48 = arith.constant dense<0.000000e+00> : vector<8x8xf32>
    %100 = tpu.matmul %98, %99, %cst_48 {dimension_numbers = #tpu.dot_dimension_numbers<[1], [1], [0], [0], [0, 0, 1, 0], [], []>} : vector<8x8xbf16>, vector<8x8xbf16>, vector<8x8xf32> -> vector<8x8xf32>
    %101 = vector.broadcast %9 : vector<1x8xf32> to vector<8x8xf32>
    %102 = arith.addf %100, %101 : vector<8x8xf32>
    %cst_49 = arith.constant dense<0xFF800000> : vector<8xf32>
    %103 = vector.multi_reduction <maximumf>, %102, %cst_49 [1] : vector<8x8xf32> to vector<8xf32>
    %104 = vector.shape_cast %103 : vector<8xf32> to vector<8x1xf32>
    %105 = vector.broadcast %104 : vector<8x1xf32> to vector<8x8xf32>
    %106 = arith.subf %102, %105 : vector<8x8xf32>
    %107 = math.exp %106 : vector<8x8xf32>
    %cst_50 = arith.constant dense<0.000000e+00> : vector<8xf32>
    %108 = vector.multi_reduction <add>, %107, %cst_50 [1] : vector<8x8xf32> to vector<8xf32>
    %109 = vector.shape_cast %108 : vector<8xf32> to vector<8x1xf32>
    %110 = tpu.reciprocal %109 {approx = true} : vector<8x1xf32> -> vector<8x1xf32>
    %111 = vector.broadcast %110 : vector<8x1xf32> to vector<8x8xf32>
    %112 = arith.mulf %107, %111 : vector<8x8xf32>
    %113 = arith.truncf %112 : vector<8x8xf32> to vector<8x8xbf16>
    %114 = vector.extract_strided_slice %97 {offsets = [0, 0], sizes = [8, 8], strides = [1, 1]} : vector<8x32xbf16> to vector<8x8xbf16>
    %cst_51 = arith.constant dense<0.000000e+00> : vector<8x8xf32>
    %115 = tpu.matmul %113, %114, %cst_51 {dimension_numbers = #tpu.dot_dimension_numbers<[1], [0], [0], [1], [0, 0, 1, 1], [], []>} : vector<8x8xbf16>, vector<8x8xbf16>, vector<8x8xf32> -> vector<8x8xf32>
    %c0_52 = arith.constant 0 : index
    %c0_53 = arith.constant 0 : index
    %116 = vector.load %arg42[%c0_52, %c0_53] : memref<8x32xf32, #tpu.memory_space<vmem>>, vector<8x8xf32>
    tpu.vector_store %arg42[%c0_52, %c0_53], %115 {strides = array<i32>} : memref<8x32xf32, #tpu.memory_space<vmem>>, vector<8x8xf32>,
    %117 = vector.extract_strided_slice %95 {offsets = [0, 8], sizes = [8, 8], strides = [1, 1]} : vector<8x32xbf16> to vector<8x8xbf16>
    %118 = vector.extract_strided_slice %96 {offsets = [0, 8], sizes = [8, 8], strides = [1, 1]} : vector<8x32xbf16> to vector<8x8xbf16>
    %cst_54 = arith.constant dense<0.000000e+00> : vector<8x8xf32>
    %119 = tpu.matmul %117, %118, %cst_54 {dimension_numbers = #tpu.dot_dimension_numbers<[1], [1], [0], [0], [0, 0, 1, 0], [], []>} : vector<8x8xbf16>, vector<8x8xbf16>, vector<8x8xf32> -> vector<8x8xf32>
    %120 = vector.broadcast %9 : vector<1x8xf32> to vector<8x8xf32>
    %121 = arith.addf %119, %120 : vector<8x8xf32>
    %cst_55 = arith.constant dense<0xFF800000> : vector<8xf32>
    %122 = vector.multi_reduction <maximumf>, %121, %cst_55 [1] : vector<8x8xf32> to vector<8xf32>
    %123 = vector.shape_cast %122 : vector<8xf32> to vector<8x1xf32>
    %124 = vector.broadcast %123 : vector<8x1xf32> to vector<8x8xf32>
    %125 = arith.subf %121, %124 : vector<8x8xf32>
    %126 = math.exp %125 : vector<8x8xf32>
    %cst_56 = arith.constant dense<0.000000e+00> : vector<8xf32>
    %127 = vector.multi_reduction <add>, %126, %cst_56 [1] : vector<8x8xf32> to vector<8xf32>
    %128 = vector.shape_cast %127 : vector<8xf32> to vector<8x1xf32>
    %129 = tpu.reciprocal %128 {approx = true} : vector<8x1xf32> -> vector<8x1xf32>
    %130 = vector.broadcast %129 : vector<8x1xf32> to vector<8x8xf32>
    %131 = arith.mulf %126, %130 : vector<8x8xf32>
    %132 = arith.truncf %131 : vector<8x8xf32> to vector<8x8xbf16>
    %133 = vector.extract_strided_slice %97 {offsets = [0, 8], sizes = [8, 8], strides = [1, 1]} : vector<8x32xbf16> to vector<8x8xbf16>
    %cst_57 = arith.constant dense<0.000000e+00> : vector<8x8xf32>
    %134 = tpu.matmul %132, %133, %cst_57 {dimension_numbers = #tpu.dot_dimension_numbers<[1], [0], [0], [1], [0, 0, 1, 1], [], []>} : vector<8x8xbf16>, vector<8x8xbf16>, vector<8x8xf32> -> vector<8x8xf32>
    %c0_58 = arith.constant 0 : index
    %c8 = arith.constant 8 : index
    %135 = vector.load %arg42[%c0_58, %c8] : memref<8x32xf32, #tpu.memory_space<vmem>>, vector<8x8xf32>
    tpu.vector_store %arg42[%c0_58, %c8], %134 {strides = array<i32>} : memref<8x32xf32, #tpu.memory_space<vmem>>, vector<8x8xf32>,
    %136 = vector.extract_strided_slice %95 {offsets = [0, 16], sizes = [8, 8], strides = [1, 1]} : vector<8x32xbf16> to vector<8x8xbf16>
    %137 = vector.extract_strided_slice %96 {offsets = [0, 16], sizes = [8, 8], strides = [1, 1]} : vector<8x32xbf16> to vector<8x8xbf16>
    %cst_59 = arith.constant dense<0.000000e+00> : vector<8x8xf32>
    %138 = tpu.matmul %136, %137, %cst_59 {dimension_numbers = #tpu.dot_dimension_numbers<[1], [1], [0], [0], [0, 0, 1, 0], [], []>} : vector<8x8xbf16>, vector<8x8xbf16>, vector<8x8xf32> -> vector<8x8xf32>
    %139 = vector.broadcast %9 : vector<1x8xf32> to vector<8x8xf32>
    %140 = arith.addf %138, %139 : vector<8x8xf32>
    %cst_60 = arith.constant dense<0xFF800000> : vector<8xf32>
    %141 = vector.multi_reduction <maximumf>, %140, %cst_60 [1] : vector<8x8xf32> to vector<8xf32>
    %142 = vector.shape_cast %141 : vector<8xf32> to vector<8x1xf32>
    %143 = vector.broadcast %142 : vector<8x1xf32> to vector<8x8xf32>
    %144 = arith.subf %140, %143 : vector<8x8xf32>
    %145 = math.exp %144 : vector<8x8xf32>
    %cst_61 = arith.constant dense<0.000000e+00> : vector<8xf32>
    %146 = vector.multi_reduction <add>, %145, %cst_61 [1] : vector<8x8xf32> to vector<8xf32>
    %147 = vector.shape_cast %146 : vector<8xf32> to vector<8x1xf32>
    %148 = tpu.reciprocal %147 {approx = true} : vector<8x1xf32> -> vector<8x1xf32>
    %149 = vector.broadcast %148 : vector<8x1xf32> to vector<8x8xf32>
    %150 = arith.mulf %145, %149 : vector<8x8xf32>
    %151 = arith.truncf %150 : vector<8x8xf32> to vector<8x8xbf16>
    %152 = vector.extract_strided_slice %97 {offsets = [0, 16], sizes = [8, 8], strides = [1, 1]} : vector<8x32xbf16> to vector<8x8xbf16>
    %cst_62 = arith.constant dense<0.000000e+00> : vector<8x8xf32>
    %153 = tpu.matmul %151, %152, %cst_62 {dimension_numbers = #tpu.dot_dimension_numbers<[1], [0], [0], [1], [0, 0, 1, 1], [], []>} : vector<8x8xbf16>, vector<8x8xbf16>, vector<8x8xf32> -> vector<8x8xf32>
    %c0_63 = arith.constant 0 : index
    %c16 = arith.constant 16 : index
    %154 = vector.load %arg42[%c0_63, %c16] : memref<8x32xf32, #tpu.memory_space<vmem>>, vector<8x8xf32>
    tpu.vector_store %arg42[%c0_63, %c16], %153 {strides = array<i32>} : memref<8x32xf32, #tpu.memory_space<vmem>>, vector<8x8xf32>,
    %155 = vector.extract_strided_slice %95 {offsets = [0, 24], sizes = [8, 8], strides = [1, 1]} : vector<8x32xbf16> to vector<8x8xbf16>
    %156 = vector.extract_strided_slice %96 {offsets = [0, 24], sizes = [8, 8], strides = [1, 1]} : vector<8x32xbf16> to vector<8x8xbf16>
    %cst_64 = arith.constant dense<0.000000e+00> : vector<8x8xf32>
    %157 = tpu.matmul %155, %156, %cst_64 {dimension_numbers = #tpu.dot_dimension_numbers<[1], [1], [0], [0], [0, 0, 1, 0], [], []>} : vector<8x8xbf16>, vector<8x8xbf16>, vector<8x8xf32> -> vector<8x8xf32>
    %158 = vector.broadcast %9 : vector<1x8xf32> to vector<8x8xf32>
    %159 = arith.addf %157, %158 : vector<8x8xf32>
    %cst_65 = arith.constant dense<0xFF800000> : vector<8xf32>
    %160 = vector.multi_reduction <maximumf>, %159, %cst_65 [1] : vector<8x8xf32> to vector<8xf32>
    %161 = vector.shape_cast %160 : vector<8xf32> to vector<8x1xf32>
    %162 = vector.broadcast %161 : vector<8x1xf32> to vector<8x8xf32>
    %163 = arith.subf %159, %162 : vector<8x8xf32>
    %164 = math.exp %163 : vector<8x8xf32>
    %cst_66 = arith.constant dense<0.000000e+00> : vector<8xf32>
    %165 = vector.multi_reduction <add>, %164, %cst_66 [1] : vector<8x8xf32> to vector<8xf32>
    %166 = vector.shape_cast %165 : vector<8xf32> to vector<8x1xf32>
    %167 = tpu.reciprocal %166 {approx = true} : vector<8x1xf32> -> vector<8x1xf32>
    %168 = vector.broadcast %167 : vector<8x1xf32> to vector<8x8xf32>
    %169 = arith.mulf %164, %168 : vector<8x8xf32>
    %170 = arith.truncf %169 : vector<8x8xf32> to vector<8x8xbf16>
    %171 = vector.extract_strided_slice %97 {offsets = [0, 24], sizes = [8, 8], strides = [1, 1]} : vector<8x32xbf16> to vector<8x8xbf16>
    %cst_67 = arith.constant dense<0.000000e+00> : vector<8x8xf32>
    %172 = tpu.matmul %170, %171, %cst_67 {dimension_numbers = #tpu.dot_dimension_numbers<[1], [0], [0], [1], [0, 0, 1, 1], [], []>} : vector<8x8xbf16>, vector<8x8xbf16>, vector<8x8xf32> -> vector<8x8xf32>
    %c0_68 = arith.constant 0 : index
    %c24 = arith.constant 24 : index
    %173 = vector.load %arg42[%c0_68, %c24] : memref<8x32xf32, #tpu.memory_space<vmem>>, vector<8x8xf32>
    tpu.vector_store %arg42[%c0_68, %c24], %172 {strides = array<i32>} : memref<8x32xf32, #tpu.memory_space<vmem>>, vector<8x8xf32>,
    %c0_69 = arith.constant 0 : index
    %c0_70 = arith.constant 0 : index
    %174 = vector.load %arg42[%c0_69, %c0_70] : memref<8x32xf32, #tpu.memory_space<vmem>>, vector<8x32xf32>
    %175 = arith.truncf %174 : vector<8x32xf32> to vector<8x32xbf16>
    %c0_71 = arith.constant 0 : index
    %c0_72 = arith.constant 0 : index
    %176 = vector.load %arg17[%c0_71, %c0_72] : memref<32x32xbf16, #tpu.memory_space<vmem>>, vector<32x32xbf16>
    %cst_73 = arith.constant dense<0.000000e+00> : vector<8x32xf32>
    %177 = tpu.matmul %175, %176, %cst_73 {dimension_numbers = #tpu.dot_dimension_numbers<[1], [0], [0], [1], [0, 0, 1, 1], [], []>} : vector<8x32xbf16>, vector<32x32xbf16>, vector<8x32xf32> -> vector<8x32xf32>
    %178 = arith.addf %54, %177 : vector<8x32xf32>
    %c0_74 = arith.constant 0 : index
    %c0_75 = arith.constant 0 : index
    %179 = vector.load %arg18[%c0_74, %c0_75] : memref<1x32xf32, #tpu.memory_space<vmem>>, vector<1x32xf32>
    %180 = vector.broadcast %179 : vector<1x32xf32> to vector<8x32xf32>
    %181 = arith.addf %178, %180 : vector<8x32xf32>
    %c0_76 = arith.constant 0 : index
    %c0_77 = arith.constant 0 : index
    %182 = vector.load %arg19[%c0_76, %c0_77] : memref<1x32xf32, #tpu.memory_space<vmem>>, vector<1x32xf32>
    %c0_78 = arith.constant 0 : index
    %c0_79 = arith.constant 0 : index
    %183 = vector.load %arg20[%c0_78, %c0_79] : memref<1x32xf32, #tpu.memory_space<vmem>>, vector<1x32xf32>
    %cst_80 = arith.constant dense<0.000000e+00> : vector<8xf32>
    %184 = vector.multi_reduction <add>, %181, %cst_80 [1] : vector<8x32xf32> to vector<8xf32>
    %185 = vector.shape_cast %184 : vector<8xf32> to vector<8x1xf32>
    %cst_81 = arith.constant 3.200000e+01 : f32
    %186 = vector.broadcast %cst_81 : f32 to vector<8x1xf32>
    %187 = arith.divf %185, %186 : vector<8x1xf32>
    %188 = vector.broadcast %187 : vector<8x1xf32> to vector<8x32xf32>
    %189 = arith.subf %181, %188 : vector<8x32xf32>
    %190 = arith.mulf %189, %189 : vector<8x32xf32>
    %cst_82 = arith.constant dense<0.000000e+00> : vector<8xf32>
    %191 = vector.multi_reduction <add>, %190, %cst_82 [1] : vector<8x32xf32> to vector<8xf32>
    %192 = vector.shape_cast %191 : vector<8xf32> to vector<8x1xf32>
    %cst_83 = arith.constant 3.200000e+01 : f32
    %193 = vector.broadcast %cst_83 : f32 to vector<8x1xf32>
    %194 = arith.divf %192, %193 : vector<8x1xf32>
    %195 = vector.broadcast %187 : vector<8x1xf32> to vector<8x32xf32>
    %196 = arith.subf %181, %195 : vector<8x32xf32>
    %cst_84 = arith.constant 9.99999974E-6 : f32
    %197 = vector.broadcast %cst_84 : f32 to vector<8x1xf32>
    %198 = arith.addf %194, %197 : vector<8x1xf32>
    %199 = math.rsqrt %198 : vector<8x1xf32>
    %200 = vector.broadcast %199 : vector<8x1xf32> to vector<8x32xf32>
    %201 = arith.mulf %196, %200 : vector<8x32xf32>
    %202 = vector.broadcast %182 : vector<1x32xf32> to vector<8x32xf32>
    %203 = arith.mulf %201, %202 : vector<8x32xf32>
    %204 = vector.broadcast %183 : vector<1x32xf32> to vector<8x32xf32>
    %205 = arith.addf %203, %204 : vector<8x32xf32>
    %206 = arith.truncf %205 : vector<8x32xf32> to vector<8x32xbf16>
    %c0_85 = arith.constant 0 : index
    %c0_86 = arith.constant 0 : index
    %207 = vector.load %arg21[%c0_85, %c0_86] : memref<32x32xbf16, #tpu.memory_space<vmem>>, vector<32x32xbf16>
    %cst_87 = arith.constant dense<0.000000e+00> : vector<8x32xf32>
    %208 = tpu.matmul %206, %207, %cst_87 {dimension_numbers = #tpu.dot_dimension_numbers<[1], [0], [0], [1], [0, 0, 1, 1], [], []>} : vector<8x32xbf16>, vector<32x32xbf16>, vector<8x32xf32> -> vector<8x32xf32>
    %c0_88 = arith.constant 0 : index
    %c0_89 = arith.constant 0 : index
    %209 = vector.load %arg22[%c0_88, %c0_89] : memref<1x32xf32, #tpu.memory_space<vmem>>, vector<1x32xf32>
    %210 = vector.broadcast %209 : vector<1x32xf32> to vector<8x32xf32>
    %211 = arith.addf %208, %210 : vector<8x32xf32>
    %c0_90 = arith.constant 0 : index
    %c0_91 = arith.constant 0 : index
    %212 = vector.load %arg23[%c0_90, %c0_91] : memref<32x32xbf16, #tpu.memory_space<vmem>>, vector<32x32xbf16>
    %cst_92 = arith.constant dense<0.000000e+00> : vector<8x32xf32>
    %213 = tpu.matmul %206, %212, %cst_92 {dimension_numbers = #tpu.dot_dimension_numbers<[1], [0], [0], [1], [0, 0, 1, 1], [], []>} : vector<8x32xbf16>, vector<32x32xbf16>, vector<8x32xf32> -> vector<8x32xf32>
    %c0_93 = arith.constant 0 : index
    %c0_94 = arith.constant 0 : index
    %214 = vector.load %arg24[%c0_93, %c0_94] : memref<1x32xf32, #tpu.memory_space<vmem>>, vector<1x32xf32>
    %215 = vector.broadcast %214 : vector<1x32xf32> to vector<8x32xf32>
    %216 = arith.addf %213, %215 : vector<8x32xf32>
    %217 = arith.negf %216 : vector<8x32xf32>
    %218 = math.exp %217 : vector<8x32xf32>
    %cst_95 = arith.constant 1.000000e+00 : f32
    %219 = vector.broadcast %cst_95 : f32 to vector<8x32xf32>
    %220 = arith.addf %219, %218 : vector<8x32xf32>
    %221 = arith.divf %219, %220 : vector<8x32xf32>
    %222 = arith.mulf %211, %221 : vector<8x32xf32>
    %223 = tpu.iota {dimensions = array<i32: 0>} : vector<8x1xi32>
    %c3 = arith.constant 3 : index
    %c0_96 = arith.constant 0 : index
    %c0_97 = arith.constant 0 : index
    %224 = vector.load %arg25[%c3, %c0_96, %c0_97] : memref<7x1x32xf32, #tpu.memory_space<vmem>>, vector<1x1x32xf32>
    %225 = vector.shape_cast %224 : vector<1x1x32xf32> to vector<1x32xf32>
    %226 = vector.broadcast %225 : vector<1x32xf32> to vector<8x32xf32>
    %227 = arith.mulf %222, %226 : vector<8x32xf32>
    %c3_i32 = arith.constant 3 : i32
    %228 = tpu.dynamic_rotate %222 by %c3_i32 dim 0 : vector<8x32xf32>, i32 -> vector<8x32xf32>
    %c3_i32_98 = arith.constant 3 : i32
    %229 = vector.broadcast %c3_i32_98 : i32 to vector<8x1xi32>
    %230 = arith.cmpi sge, %223, %229 : vector<8x1xi32>
    %c0_99 = arith.constant 0 : index
    %c0_100 = arith.constant 0 : index
    %c0_101 = arith.constant 0 : index
    %231 = vector.load %arg25[%c0_99, %c0_100, %c0_101] : memref<7x1x32xf32, #tpu.memory_space<vmem>>, vector<1x1x32xf32>
    %232 = vector.shape_cast %231 : vector<1x1x32xf32> to vector<1x32xf32>
    %233 = vector.broadcast %232 : vector<1x32xf32> to vector<8x32xf32>
    %234 = arith.mulf %228, %233 : vector<8x32xf32>
    %cst_102 = arith.constant 0.000000e+00 : f32
    %235 = vector.shape_cast %230 : vector<8x1xi1> to vector<8x1xi1>
    %236 = vector.broadcast %235 : vector<8x1xi1> to vector<8x32xi1>
    %237 = vector.broadcast %cst_102 : f32 to vector<8x32xf32>
    %238 = arith.select %236, %234, %237 : vector<8x32xi1>, vector<8x32xf32>
    %239 = arith.addf %227, %238 : vector<8x32xf32>
    %c2_i32 = arith.constant 2 : i32
    %240 = tpu.dynamic_rotate %222 by %c2_i32 dim 0 : vector<8x32xf32>, i32 -> vector<8x32xf32>
    %c2_i32_103 = arith.constant 2 : i32
    %241 = vector.broadcast %c2_i32_103 : i32 to vector<8x1xi32>
    %242 = arith.cmpi sge, %223, %241 : vector<8x1xi32>
    %c1 = arith.constant 1 : index
    %c0_104 = arith.constant 0 : index
    %c0_105 = arith.constant 0 : index
    %243 = vector.load %arg25[%c1, %c0_104, %c0_105] : memref<7x1x32xf32, #tpu.memory_space<vmem>>, vector<1x1x32xf32>
    %244 = vector.shape_cast %243 : vector<1x1x32xf32> to vector<1x32xf32>
    %245 = vector.broadcast %244 : vector<1x32xf32> to vector<8x32xf32>
    %246 = arith.mulf %240, %245 : vector<8x32xf32>
    %cst_106 = arith.constant 0.000000e+00 : f32
    %247 = vector.shape_cast %242 : vector<8x1xi1> to vector<8x1xi1>
    %248 = vector.broadcast %247 : vector<8x1xi1> to vector<8x32xi1>
    %249 = vector.broadcast %cst_106 : f32 to vector<8x32xf32>
    %250 = arith.select %248, %246, %249 : vector<8x32xi1>, vector<8x32xf32>
    %251 = arith.addf %239, %250 : vector<8x32xf32>
    %c1_i32 = arith.constant 1 : i32
    %252 = tpu.dynamic_rotate %222 by %c1_i32 dim 0 : vector<8x32xf32>, i32 -> vector<8x32xf32>
    %c1_i32_107 = arith.constant 1 : i32
    %253 = vector.broadcast %c1_i32_107 : i32 to vector<8x1xi32>
    %254 = arith.cmpi sge, %223, %253 : vector<8x1xi32>
    %c2 = arith.constant 2 : index
    %c0_108 = arith.constant 0 : index
    %c0_109 = arith.constant 0 : index
    %255 = vector.load %arg25[%c2, %c0_108, %c0_109] : memref<7x1x32xf32, #tpu.memory_space<vmem>>, vector<1x1x32xf32>
    %256 = vector.shape_cast %255 : vector<1x1x32xf32> to vector<1x32xf32>
    %257 = vector.broadcast %256 : vector<1x32xf32> to vector<8x32xf32>
    %258 = arith.mulf %252, %257 : vector<8x32xf32>
    %cst_110 = arith.constant 0.000000e+00 : f32
    %259 = vector.shape_cast %254 : vector<8x1xi1> to vector<8x1xi1>
    %260 = vector.broadcast %259 : vector<8x1xi1> to vector<8x32xi1>
    %261 = vector.broadcast %cst_110 : f32 to vector<8x32xf32>
    %262 = arith.select %260, %258, %261 : vector<8x32xi1>, vector<8x32xf32>
    %263 = arith.addf %251, %262 : vector<8x32xf32>
    %c7_i32 = arith.constant 7 : i32
    %264 = tpu.dynamic_rotate %222 by %c7_i32 dim 0 : vector<8x32xf32>, i32 -> vector<8x32xf32>
    %c7_i32_111 = arith.constant 7 : i32
    %265 = vector.broadcast %c7_i32_111 : i32 to vector<8x1xi32>
    %266 = arith.cmpi slt, %223, %265 : vector<8x1xi32>
    %c4 = arith.constant 4 : index
    %c0_112 = arith.constant 0 : index
    %c0_113 = arith.constant 0 : index
    %267 = vector.load %arg25[%c4, %c0_112, %c0_113] : memref<7x1x32xf32, #tpu.memory_space<vmem>>, vector<1x1x32xf32>
    %268 = vector.shape_cast %267 : vector<1x1x32xf32> to vector<1x32xf32>
    %269 = vector.broadcast %268 : vector<1x32xf32> to vector<8x32xf32>
    %270 = arith.mulf %264, %269 : vector<8x32xf32>
    %cst_114 = arith.constant 0.000000e+00 : f32
    %271 = vector.shape_cast %266 : vector<8x1xi1> to vector<8x1xi1>
    %272 = vector.broadcast %271 : vector<8x1xi1> to vector<8x32xi1>
    %273 = vector.broadcast %cst_114 : f32 to vector<8x32xf32>
    %274 = arith.select %272, %270, %273 : vector<8x32xi1>, vector<8x32xf32>
    %275 = arith.addf %263, %274 : vector<8x32xf32>
    %c6_i32 = arith.constant 6 : i32
    %276 = tpu.dynamic_rotate %222 by %c6_i32 dim 0 : vector<8x32xf32>, i32 -> vector<8x32xf32>
    %c6_i32_115 = arith.constant 6 : i32
    %277 = vector.broadcast %c6_i32_115 : i32 to vector<8x1xi32>
    %278 = arith.cmpi slt, %223, %277 : vector<8x1xi32>
    %c5 = arith.constant 5 : index
    %c0_116 = arith.constant 0 : index
    %c0_117 = arith.constant 0 : index
    %279 = vector.load %arg25[%c5, %c0_116, %c0_117] : memref<7x1x32xf32, #tpu.memory_space<vmem>>, vector<1x1x32xf32>
    %280 = vector.shape_cast %279 : vector<1x1x32xf32> to vector<1x32xf32>
    %281 = vector.broadcast %280 : vector<1x32xf32> to vector<8x32xf32>
    %282 = arith.mulf %276, %281 : vector<8x32xf32>
    %cst_118 = arith.constant 0.000000e+00 : f32
    %283 = vector.shape_cast %278 : vector<8x1xi1> to vector<8x1xi1>
    %284 = vector.broadcast %283 : vector<8x1xi1> to vector<8x32xi1>
    %285 = vector.broadcast %cst_118 : f32 to vector<8x32xf32>
    %286 = arith.select %284, %282, %285 : vector<8x32xi1>, vector<8x32xf32>
    %287 = arith.addf %275, %286 : vector<8x32xf32>
    %c5_i32 = arith.constant 5 : i32
    %288 = tpu.dynamic_rotate %222 by %c5_i32 dim 0 : vector<8x32xf32>, i32 -> vector<8x32xf32>
    %c5_i32_119 = arith.constant 5 : i32
    %289 = vector.broadcast %c5_i32_119 : i32 to vector<8x1xi32>
    %290 = arith.cmpi slt, %223, %289 : vector<8x1xi32>
    %c6 = arith.constant 6 : index
    %c0_120 = arith.constant 0 : index
    %c0_121 = arith.constant 0 : index
    %291 = vector.load %arg25[%c6, %c0_120, %c0_121] : memref<7x1x32xf32, #tpu.memory_space<vmem>>, vector<1x1x32xf32>
    %292 = vector.shape_cast %291 : vector<1x1x32xf32> to vector<1x32xf32>
    %293 = vector.broadcast %292 : vector<1x32xf32> to vector<8x32xf32>
    %294 = arith.mulf %288, %293 : vector<8x32xf32>
    %cst_122 = arith.constant 0.000000e+00 : f32
    %295 = vector.shape_cast %290 : vector<8x1xi1> to vector<8x1xi1>
    %296 = vector.broadcast %295 : vector<8x1xi1> to vector<8x32xi1>
    %297 = vector.broadcast %cst_122 : f32 to vector<8x32xf32>
    %298 = arith.select %296, %294, %297 : vector<8x32xi1>, vector<8x32xf32>
    %299 = arith.addf %287, %298 : vector<8x32xf32>
    %c0_123 = arith.constant 0 : index
    %c0_124 = arith.constant 0 : index
    %300 = vector.load %arg26[%c0_123, %c0_124] : memref<1x32xf32, #tpu.memory_space<vmem>>, vector<1x32xf32>
    %301 = vector.broadcast %300 : vector<1x32xf32> to vector<8x32xf32>
    %302 = arith.addf %299, %301 : vector<8x32xf32>
    %c0_125 = arith.constant 0 : index
    %c0_126 = arith.constant 0 : index
    %303 = vector.load %arg29[%c0_125, %c0_126] : memref<1x32xf32, #tpu.memory_space<vmem>>, vector<1x32xf32>
    %304 = vector.broadcast %303 : vector<1x32xf32> to vector<8x32xf32>
    %305 = arith.subf %302, %304 : vector<8x32xf32>
    %c0_127 = arith.constant 0 : index
    %c0_128 = arith.constant 0 : index
    %306 = vector.load %arg30[%c0_127, %c0_128] : memref<1x32xf32, #tpu.memory_space<vmem>>, vector<1x32xf32>
    %cst_129 = arith.constant 9.99999974E-6 : f32
    %307 = vector.broadcast %cst_129 : f32 to vector<1x32xf32>
    %308 = arith.addf %306, %307 : vector<1x32xf32>
    %309 = math.rsqrt %308 : vector<1x32xf32>
    %310 = vector.broadcast %309 : vector<1x32xf32> to vector<8x32xf32>
    %311 = arith.mulf %305, %310 : vector<8x32xf32>
    %c0_130 = arith.constant 0 : index
    %c0_131 = arith.constant 0 : index
    %312 = vector.load %arg27[%c0_130, %c0_131] : memref<1x32xf32, #tpu.memory_space<vmem>>, vector<1x32xf32>
    %313 = vector.broadcast %312 : vector<1x32xf32> to vector<8x32xf32>
    %314 = arith.mulf %311, %313 : vector<8x32xf32>
    %c0_132 = arith.constant 0 : index
    %c0_133 = arith.constant 0 : index
    %315 = vector.load %arg28[%c0_132, %c0_133] : memref<1x32xf32, #tpu.memory_space<vmem>>, vector<1x32xf32>
    %316 = vector.broadcast %315 : vector<1x32xf32> to vector<8x32xf32>
    %317 = arith.addf %314, %316 : vector<8x32xf32>
    %318 = arith.negf %317 : vector<8x32xf32>
    %319 = math.exp %318 : vector<8x32xf32>
    %cst_134 = arith.constant 1.000000e+00 : f32
    %320 = vector.broadcast %cst_134 : f32 to vector<8x32xf32>
    %321 = arith.addf %320, %319 : vector<8x32xf32>
    %322 = arith.divf %320, %321 : vector<8x32xf32>
    %323 = arith.mulf %317, %322 : vector<8x32xf32>
    %324 = arith.truncf %323 : vector<8x32xf32> to vector<8x32xbf16>
    %c0_135 = arith.constant 0 : index
    %c0_136 = arith.constant 0 : index
    %325 = vector.load %arg31[%c0_135, %c0_136] : memref<32x32xbf16, #tpu.memory_space<vmem>>, vector<32x32xbf16>
    %cst_137 = arith.constant dense<0.000000e+00> : vector<8x32xf32>
    %326 = tpu.matmul %324, %325, %cst_137 {dimension_numbers = #tpu.dot_dimension_numbers<[1], [0], [0], [1], [0, 0, 1, 1], [], []>} : vector<8x32xbf16>, vector<32x32xbf16>, vector<8x32xf32> -> vector<8x32xf32>
    %327 = arith.addf %181, %326 : vector<8x32xf32>
    %c0_138 = arith.constant 0 : index
    %c0_139 = arith.constant 0 : index
    %328 = vector.load %arg32[%c0_138, %c0_139] : memref<1x32xf32, #tpu.memory_space<vmem>>, vector<1x32xf32>
    %329 = vector.broadcast %328 : vector<1x32xf32> to vector<8x32xf32>
    %330 = arith.addf %327, %329 : vector<8x32xf32>
    %c0_140 = arith.constant 0 : index
    %c0_141 = arith.constant 0 : index
    %331 = vector.load %arg33[%c0_140, %c0_141] : memref<1x32xf32, #tpu.memory_space<vmem>>, vector<1x32xf32>
    %c0_142 = arith.constant 0 : index
    %c0_143 = arith.constant 0 : index
    %332 = vector.load %arg34[%c0_142, %c0_143] : memref<1x32xf32, #tpu.memory_space<vmem>>, vector<1x32xf32>
    %cst_144 = arith.constant dense<0.000000e+00> : vector<8xf32>
    %333 = vector.multi_reduction <add>, %330, %cst_144 [1] : vector<8x32xf32> to vector<8xf32>
    %334 = vector.shape_cast %333 : vector<8xf32> to vector<8x1xf32>
    %cst_145 = arith.constant 3.200000e+01 : f32
    %335 = vector.broadcast %cst_145 : f32 to vector<8x1xf32>
    %336 = arith.divf %334, %335 : vector<8x1xf32>
    %337 = vector.broadcast %336 : vector<8x1xf32> to vector<8x32xf32>
    %338 = arith.subf %330, %337 : vector<8x32xf32>
    %339 = arith.mulf %338, %338 : vector<8x32xf32>
    %cst_146 = arith.constant dense<0.000000e+00> : vector<8xf32>
    %340 = vector.multi_reduction <add>, %339, %cst_146 [1] : vector<8x32xf32> to vector<8xf32>
    %341 = vector.shape_cast %340 : vector<8xf32> to vector<8x1xf32>
    %cst_147 = arith.constant 3.200000e+01 : f32
    %342 = vector.broadcast %cst_147 : f32 to vector<8x1xf32>
    %343 = arith.divf %341, %342 : vector<8x1xf32>
    %344 = vector.broadcast %336 : vector<8x1xf32> to vector<8x32xf32>
    %345 = arith.subf %330, %344 : vector<8x32xf32>
    %cst_148 = arith.constant 9.99999974E-6 : f32
    %346 = vector.broadcast %cst_148 : f32 to vector<8x1xf32>
    %347 = arith.addf %343, %346 : vector<8x1xf32>
    %348 = math.rsqrt %347 : vector<8x1xf32>
    %349 = vector.broadcast %348 : vector<8x1xf32> to vector<8x32xf32>
    %350 = arith.mulf %345, %349 : vector<8x32xf32>
    %351 = vector.broadcast %331 : vector<1x32xf32> to vector<8x32xf32>
    %352 = arith.mulf %350, %351 : vector<8x32xf32>
    %353 = vector.broadcast %332 : vector<1x32xf32> to vector<8x32xf32>
    %354 = arith.addf %352, %353 : vector<8x32xf32>
    %355 = arith.truncf %354 : vector<8x32xf32> to vector<8x32xbf16>
    %c0_149 = arith.constant 0 : index
    %c0_150 = arith.constant 0 : index
    %356 = vector.load %arg35[%c0_149, %c0_150] : memref<32x64xbf16, #tpu.memory_space<vmem>>, vector<32x64xbf16>
    %cst_151 = arith.constant dense<0.000000e+00> : vector<8x64xf32>
    %357 = tpu.matmul %355, %356, %cst_151 {dimension_numbers = #tpu.dot_dimension_numbers<[1], [0], [0], [1], [0, 0, 1, 1], [], []>} : vector<8x32xbf16>, vector<32x64xbf16>, vector<8x64xf32> -> vector<8x64xf32>
    %c0_152 = arith.constant 0 : index
    %c0_153 = arith.constant 0 : index
    %358 = vector.load %arg36[%c0_152, %c0_153] : memref<1x64xf32, #tpu.memory_space<vmem>>, vector<1x64xf32>
    %359 = vector.broadcast %358 : vector<1x64xf32> to vector<8x64xf32>
    %360 = arith.addf %357, %359 : vector<8x64xf32>
    %361 = arith.negf %360 : vector<8x64xf32>
    %362 = math.exp %361 : vector<8x64xf32>
    %cst_154 = arith.constant 1.000000e+00 : f32
    %363 = vector.broadcast %cst_154 : f32 to vector<8x64xf32>
    %364 = arith.addf %363, %362 : vector<8x64xf32>
    %365 = arith.divf %363, %364 : vector<8x64xf32>
    %366 = arith.mulf %360, %365 : vector<8x64xf32>
    %367 = arith.truncf %366 : vector<8x64xf32> to vector<8x64xbf16>
    %c0_155 = arith.constant 0 : index
    %c0_156 = arith.constant 0 : index
    %368 = vector.load %arg37[%c0_155, %c0_156] : memref<64x32xbf16, #tpu.memory_space<vmem>>, vector<64x32xbf16>
    %cst_157 = arith.constant dense<0.000000e+00> : vector<8x32xf32>
    %369 = tpu.matmul %367, %368, %cst_157 {dimension_numbers = #tpu.dot_dimension_numbers<[1], [0], [0], [1], [0, 0, 1, 1], [], []>} : vector<8x64xbf16>, vector<64x32xbf16>, vector<8x32xf32> -> vector<8x32xf32>
    %c0_158 = arith.constant 0 : index
    %c0_159 = arith.constant 0 : index
    %370 = vector.load %arg38[%c0_158, %c0_159] : memref<1x32xf32, #tpu.memory_space<vmem>>, vector<1x32xf32>
    %371 = vector.broadcast %370 : vector<1x32xf32> to vector<8x32xf32>
    %372 = arith.addf %369, %371 : vector<8x32xf32>
    %cst_160 = arith.constant 5.000000e-01 : f32
    %373 = vector.broadcast %cst_160 : f32 to vector<8x32xf32>
    %374 = arith.mulf %373, %372 : vector<8x32xf32>
    %375 = arith.addf %330, %374 : vector<8x32xf32>
    %c0_161 = arith.constant 0 : index
    %c0_162 = arith.constant 0 : index
    %376 = vector.load %arg39[%c0_161, %c0_162] : memref<1x32xf32, #tpu.memory_space<vmem>>, vector<1x32xf32>
    %c0_163 = arith.constant 0 : index
    %c0_164 = arith.constant 0 : index
    %377 = vector.load %arg40[%c0_163, %c0_164] : memref<1x32xf32, #tpu.memory_space<vmem>>, vector<1x32xf32>
    %cst_165 = arith.constant dense<0.000000e+00> : vector<8xf32>
    %378 = vector.multi_reduction <add>, %375, %cst_165 [1] : vector<8x32xf32> to vector<8xf32>
    %379 = vector.shape_cast %378 : vector<8xf32> to vector<8x1xf32>
    %cst_166 = arith.constant 3.200000e+01 : f32
    %380 = vector.broadcast %cst_166 : f32 to vector<8x1xf32>
    %381 = arith.divf %379, %380 : vector<8x1xf32>
    %382 = vector.broadcast %381 : vector<8x1xf32> to vector<8x32xf32>
    %383 = arith.subf %375, %382 : vector<8x32xf32>
    %384 = arith.mulf %383, %383 : vector<8x32xf32>
    %cst_167 = arith.constant dense<0.000000e+00> : vector<8xf32>
    %385 = vector.multi_reduction <add>, %384, %cst_167 [1] : vector<8x32xf32> to vector<8xf32>
    %386 = vector.shape_cast %385 : vector<8xf32> to vector<8x1xf32>
    %cst_168 = arith.constant 3.200000e+01 : f32
    %387 = vector.broadcast %cst_168 : f32 to vector<8x1xf32>
    %388 = arith.divf %386, %387 : vector<8x1xf32>
    %389 = vector.broadcast %381 : vector<8x1xf32> to vector<8x32xf32>
    %390 = arith.subf %375, %389 : vector<8x32xf32>
    %cst_169 = arith.constant 9.99999974E-6 : f32
    %391 = vector.broadcast %cst_169 : f32 to vector<8x1xf32>
    %392 = arith.addf %388, %391 : vector<8x1xf32>
    %393 = math.rsqrt %392 : vector<8x1xf32>
    %394 = vector.broadcast %393 : vector<8x1xf32> to vector<8x32xf32>
    %395 = arith.mulf %390, %394 : vector<8x32xf32>
    %396 = vector.broadcast %376 : vector<1x32xf32> to vector<8x32xf32>
    %397 = arith.mulf %395, %396 : vector<8x32xf32>
    %398 = vector.broadcast %377 : vector<1x32xf32> to vector<8x32xf32>
    %399 = arith.addf %397, %398 : vector<8x32xf32>
    %c0_170 = arith.constant 0 : index
    %c0_171 = arith.constant 0 : index
    %c0_172 = arith.constant 0 : index
    %400 = vector.load %arg41[%c0_170, %c0_171, %c0_172] : memref<1x8x32xf32, #tpu.memory_space<vmem>>, vector<1x8x32xf32>
    %401 = vector.shape_cast %400 : vector<1x8x32xf32> to vector<8x32xf32>
    %402 = vector.shape_cast %399 : vector<8x32xf32> to vector<1x8x32xf32>
    tpu.vector_store %arg41[%c0_170, %c0_171, %c0_172], %402 {strides = array<i32>} : memref<1x8x32xf32, #tpu.memory_space<vmem>>, vector<1x8x32xf32>,
    return
  }
  func.func @transform_0(%arg0: i32, %arg1: memref<2xi32, #tpu.memory_space<smem>>) -> (i32, i32, i32) {
    %c0_i32 = arith.constant 0 : i32
    %c0_i32_0 = arith.constant 0 : i32
    %c0_i32_1 = arith.constant 0 : i32
    return %arg0, %c0_i32, %c0_i32_0 : i32, i32, i32
  }
  func.func @transform_1(%arg0: i32, %arg1: memref<2xi32, #tpu.memory_space<smem>>) -> (i32, i32) {
    %c0_i32 = arith.constant 0 : i32
    %c0_i32_0 = arith.constant 0 : i32
    %c0_i32_1 = arith.constant 0 : i32
    return %c0_i32, %c0_i32_0 : i32, i32
  }
  func.func @transform_2(%arg0: i32, %arg1: memref<2xi32, #tpu.memory_space<smem>>) -> (i32, i32) {
    %c0_i32 = arith.constant 0 : i32
    %c0_i32_0 = arith.constant 0 : i32
    %c0_i32_1 = arith.constant 0 : i32
    return %c0_i32, %c0_i32_0 : i32, i32
  }
  func.func @transform_3(%arg0: i32, %arg1: memref<2xi32, #tpu.memory_space<smem>>) -> (i32, i32) {
    %c0_i32 = arith.constant 0 : i32
    %c0_i32_0 = arith.constant 0 : i32
    %c0_i32_1 = arith.constant 0 : i32
    return %c0_i32, %c0_i32_0 : i32, i32
  }
  func.func @transform_4(%arg0: i32, %arg1: memref<2xi32, #tpu.memory_space<smem>>) -> (i32, i32) {
    %c0_i32 = arith.constant 0 : i32
    %c0_i32_0 = arith.constant 0 : i32
    %c0_i32_1 = arith.constant 0 : i32
    return %c0_i32, %c0_i32_0 : i32, i32
  }
  func.func @transform_5(%arg0: i32, %arg1: memref<2xi32, #tpu.memory_space<smem>>) -> (i32, i32) {
    %c0_i32 = arith.constant 0 : i32
    %c0_i32_0 = arith.constant 0 : i32
    %c0_i32_1 = arith.constant 0 : i32
    return %c0_i32, %c0_i32_0 : i32, i32
  }
  func.func @transform_6(%arg0: i32, %arg1: memref<2xi32, #tpu.memory_space<smem>>) -> (i32, i32) {
    %c0_i32 = arith.constant 0 : i32
    %c0_i32_0 = arith.constant 0 : i32
    %c0_i32_1 = arith.constant 0 : i32
    return %c0_i32, %c0_i32_0 : i32, i32
  }
  func.func @transform_7(%arg0: i32, %arg1: memref<2xi32, #tpu.memory_space<smem>>) -> (i32, i32) {
    %c0_i32 = arith.constant 0 : i32
    %c0_i32_0 = arith.constant 0 : i32
    %c0_i32_1 = arith.constant 0 : i32
    return %c0_i32, %c0_i32_0 : i32, i32
  }
  func.func @transform_8(%arg0: i32, %arg1: memref<2xi32, #tpu.memory_space<smem>>) -> (i32, i32) {
    %c0_i32 = arith.constant 0 : i32
    %c0_i32_0 = arith.constant 0 : i32
    %c0_i32_1 = arith.constant 0 : i32
    return %c0_i32, %c0_i32_0 : i32, i32
  }
  func.func @transform_9(%arg0: i32, %arg1: memref<2xi32, #tpu.memory_space<smem>>) -> (i32, i32) {
    %c0_i32 = arith.constant 0 : i32
    %c0_i32_0 = arith.constant 0 : i32
    %c0_i32_1 = arith.constant 0 : i32
    return %c0_i32, %c0_i32_0 : i32, i32
  }
  func.func @transform_10(%arg0: i32, %arg1: memref<2xi32, #tpu.memory_space<smem>>) -> (i32, i32) {
    %c0_i32 = arith.constant 0 : i32
    %c0_i32_0 = arith.constant 0 : i32
    %c0_i32_1 = arith.constant 0 : i32
    return %c0_i32, %c0_i32_0 : i32, i32
  }
  func.func @transform_11(%arg0: i32, %arg1: memref<2xi32, #tpu.memory_space<smem>>) -> (i32, i32) {
    %c0_i32 = arith.constant 0 : i32
    %c0_i32_0 = arith.constant 0 : i32
    %c0_i32_1 = arith.constant 0 : i32
    return %c0_i32, %c0_i32_0 : i32, i32
  }
  func.func @transform_12(%arg0: i32, %arg1: memref<2xi32, #tpu.memory_space<smem>>) -> (i32, i32) {
    %c0_i32 = arith.constant 0 : i32
    %c0_i32_0 = arith.constant 0 : i32
    %c0_i32_1 = arith.constant 0 : i32
    return %c0_i32, %c0_i32_0 : i32, i32
  }
  func.func @transform_13(%arg0: i32, %arg1: memref<2xi32, #tpu.memory_space<smem>>) -> (i32, i32) {
    %c0_i32 = arith.constant 0 : i32
    %c0_i32_0 = arith.constant 0 : i32
    %c0_i32_1 = arith.constant 0 : i32
    return %c0_i32, %c0_i32_0 : i32, i32
  }
  func.func @transform_14(%arg0: i32, %arg1: memref<2xi32, #tpu.memory_space<smem>>) -> (i32, i32) {
    %c0_i32 = arith.constant 0 : i32
    %c0_i32_0 = arith.constant 0 : i32
    %c0_i32_1 = arith.constant 0 : i32
    return %c0_i32, %c0_i32_0 : i32, i32
  }
  func.func @transform_15(%arg0: i32, %arg1: memref<2xi32, #tpu.memory_space<smem>>) -> (i32, i32) {
    %c0_i32 = arith.constant 0 : i32
    %c0_i32_0 = arith.constant 0 : i32
    %c0_i32_1 = arith.constant 0 : i32
    return %c0_i32, %c0_i32_0 : i32, i32
  }
  func.func @transform_16(%arg0: i32, %arg1: memref<2xi32, #tpu.memory_space<smem>>) -> (i32, i32) {
    %c0_i32 = arith.constant 0 : i32
    %c0_i32_0 = arith.constant 0 : i32
    %c0_i32_1 = arith.constant 0 : i32
    return %c0_i32, %c0_i32_0 : i32, i32
  }
  func.func @transform_17(%arg0: i32, %arg1: memref<2xi32, #tpu.memory_space<smem>>) -> (i32, i32) {
    %c0_i32 = arith.constant 0 : i32
    %c0_i32_0 = arith.constant 0 : i32
    %c0_i32_1 = arith.constant 0 : i32
    return %c0_i32, %c0_i32_0 : i32, i32
  }
  func.func @transform_18(%arg0: i32, %arg1: memref<2xi32, #tpu.memory_space<smem>>) -> (i32, i32) {
    %c0_i32 = arith.constant 0 : i32
    %c0_i32_0 = arith.constant 0 : i32
    %c0_i32_1 = arith.constant 0 : i32
    return %c0_i32, %c0_i32_0 : i32, i32
  }
  func.func @transform_19(%arg0: i32, %arg1: memref<2xi32, #tpu.memory_space<smem>>) -> (i32, i32) {
    %c0_i32 = arith.constant 0 : i32
    %c0_i32_0 = arith.constant 0 : i32
    %c0_i32_1 = arith.constant 0 : i32
    return %c0_i32, %c0_i32_0 : i32, i32
  }
  func.func @transform_20(%arg0: i32, %arg1: memref<2xi32, #tpu.memory_space<smem>>) -> (i32, i32) {
    %c0_i32 = arith.constant 0 : i32
    %c0_i32_0 = arith.constant 0 : i32
    %c0_i32_1 = arith.constant 0 : i32
    return %c0_i32, %c0_i32_0 : i32, i32
  }
  func.func @transform_21(%arg0: i32, %arg1: memref<2xi32, #tpu.memory_space<smem>>) -> (i32, i32) {
    %c0_i32 = arith.constant 0 : i32
    %c0_i32_0 = arith.constant 0 : i32
    %c0_i32_1 = arith.constant 0 : i32
    return %c0_i32, %c0_i32_0 : i32, i32
  }
  func.func @transform_22(%arg0: i32, %arg1: memref<2xi32, #tpu.memory_space<smem>>) -> (i32, i32) {
    %c0_i32 = arith.constant 0 : i32
    %c0_i32_0 = arith.constant 0 : i32
    %c0_i32_1 = arith.constant 0 : i32
    return %c0_i32, %c0_i32_0 : i32, i32
  }
  func.func @transform_23(%arg0: i32, %arg1: memref<2xi32, #tpu.memory_space<smem>>) -> (i32, i32, i32) {
    %c0_i32 = arith.constant 0 : i32
    %c0_i32_0 = arith.constant 0 : i32
    %c0_i32_1 = arith.constant 0 : i32
    %c0_i32_2 = arith.constant 0 : i32
    return %c0_i32, %c0_i32_0, %c0_i32_1 : i32, i32, i32
  }
  func.func @transform_24(%arg0: i32, %arg1: memref<2xi32, #tpu.memory_space<smem>>) -> (i32, i32) {
    %c0_i32 = arith.constant 0 : i32
    %c0_i32_0 = arith.constant 0 : i32
    %c0_i32_1 = arith.constant 0 : i32
    return %c0_i32, %c0_i32_0 : i32, i32
  }
  func.func @transform_25(%arg0: i32, %arg1: memref<2xi32, #tpu.memory_space<smem>>) -> (i32, i32) {
    %c0_i32 = arith.constant 0 : i32
    %c0_i32_0 = arith.constant 0 : i32
    %c0_i32_1 = arith.constant 0 : i32
    return %c0_i32, %c0_i32_0 : i32, i32
  }
  func.func @transform_26(%arg0: i32, %arg1: memref<2xi32, #tpu.memory_space<smem>>) -> (i32, i32) {
    %c0_i32 = arith.constant 0 : i32
    %c0_i32_0 = arith.constant 0 : i32
    %c0_i32_1 = arith.constant 0 : i32
    return %c0_i32, %c0_i32_0 : i32, i32
  }
  func.func @transform_27(%arg0: i32, %arg1: memref<2xi32, #tpu.memory_space<smem>>) -> (i32, i32) {
    %c0_i32 = arith.constant 0 : i32
    %c0_i32_0 = arith.constant 0 : i32
    %c0_i32_1 = arith.constant 0 : i32
    return %c0_i32, %c0_i32_0 : i32, i32
  }
  func.func @transform_28(%arg0: i32, %arg1: memref<2xi32, #tpu.memory_space<smem>>) -> (i32, i32) {
    %c0_i32 = arith.constant 0 : i32
    %c0_i32_0 = arith.constant 0 : i32
    %c0_i32_1 = arith.constant 0 : i32
    return %c0_i32, %c0_i32_0 : i32, i32
  }
  func.func @transform_29(%arg0: i32, %arg1: memref<2xi32, #tpu.memory_space<smem>>) -> (i32, i32) {
    %c0_i32 = arith.constant 0 : i32
    %c0_i32_0 = arith.constant 0 : i32
    %c0_i32_1 = arith.constant 0 : i32
    return %c0_i32, %c0_i32_0 : i32, i32
  }
  func.func @transform_30(%arg0: i32, %arg1: memref<2xi32, #tpu.memory_space<smem>>) -> (i32, i32) {
    %c0_i32 = arith.constant 0 : i32
    %c0_i32_0 = arith.constant 0 : i32
    %c0_i32_1 = arith.constant 0 : i32
    return %c0_i32, %c0_i32_0 : i32, i32
  }
  func.func @transform_31(%arg0: i32, %arg1: memref<2xi32, #tpu.memory_space<smem>>) -> (i32, i32) {
    %c0_i32 = arith.constant 0 : i32
    %c0_i32_0 = arith.constant 0 : i32
    %c0_i32_1 = arith.constant 0 : i32
    return %c0_i32, %c0_i32_0 : i32, i32
  }
  func.func @transform_32(%arg0: i32, %arg1: memref<2xi32, #tpu.memory_space<smem>>) -> (i32, i32) {
    %c0_i32 = arith.constant 0 : i32
    %c0_i32_0 = arith.constant 0 : i32
    %c0_i32_1 = arith.constant 0 : i32
    return %c0_i32, %c0_i32_0 : i32, i32
  }
  func.func @transform_33(%arg0: i32, %arg1: memref<2xi32, #tpu.memory_space<smem>>) -> (i32, i32) {
    %c0_i32 = arith.constant 0 : i32
    %c0_i32_0 = arith.constant 0 : i32
    %c0_i32_1 = arith.constant 0 : i32
    return %c0_i32, %c0_i32_0 : i32, i32
  }
  func.func @transform_34(%arg0: i32, %arg1: memref<2xi32, #tpu.memory_space<smem>>) -> (i32, i32) {
    %c0_i32 = arith.constant 0 : i32
    %c0_i32_0 = arith.constant 0 : i32
    %c0_i32_1 = arith.constant 0 : i32
    return %c0_i32, %c0_i32_0 : i32, i32
  }
  func.func @transform_35(%arg0: i32, %arg1: memref<2xi32, #tpu.memory_space<smem>>) -> (i32, i32) {
    %c0_i32 = arith.constant 0 : i32
    %c0_i32_0 = arith.constant 0 : i32
    %c0_i32_1 = arith.constant 0 : i32
    return %c0_i32, %c0_i32_0 : i32, i32
  }
  func.func @transform_36(%arg0: i32, %arg1: memref<2xi32, #tpu.memory_space<smem>>) -> (i32, i32) {
    %c0_i32 = arith.constant 0 : i32
    %c0_i32_0 = arith.constant 0 : i32
    %c0_i32_1 = arith.constant 0 : i32
    return %c0_i32, %c0_i32_0 : i32, i32
  }
  func.func @transform_37(%arg0: i32, %arg1: memref<2xi32, #tpu.memory_space<smem>>) -> (i32, i32) {
    %c0_i32 = arith.constant 0 : i32
    %c0_i32_0 = arith.constant 0 : i32
    %c0_i32_1 = arith.constant 0 : i32
    return %c0_i32, %c0_i32_0 : i32, i32
  }
  func.func @transform_38(%arg0: i32, %arg1: memref<2xi32, #tpu.memory_space<smem>>) -> (i32, i32) {
    %c0_i32 = arith.constant 0 : i32
    %c0_i32_0 = arith.constant 0 : i32
    %c0_i32_1 = arith.constant 0 : i32
    return %c0_i32, %c0_i32_0 : i32, i32
  }
  func.func @transform_39(%arg0: i32, %arg1: memref<2xi32, #tpu.memory_space<smem>>) -> (i32, i32, i32) {
    %c0_i32 = arith.constant 0 : i32
    %c0_i32_0 = arith.constant 0 : i32
    %c0_i32_1 = arith.constant 0 : i32
    return %arg0, %c0_i32, %c0_i32_0 : i32, i32, i32
  }
}

</mosaic_0001>

<llo_original>
// kernel: tpu_custom_call.1
$region0: #{tpu_custom_call.1}
  #allocation0 [shape = 'u32[]', space=smem, size = 0x4, offset = 0x4, fixed_abs, tag = 'smem constant byte address 0x4 - core index']
  #allocation1 [shape = 'u32[72,128]{1,0:T(1,128)}', space=vmem, size = 0x9000, scoped, tag = 'internal scratch']
  #allocation2 [shape = 'f32[8,32]{1,0:T(8,128)}', space=vmem, size = 0x1000, scoped, tag = 'scratch operand']
  #allocation3 [shape = 's32[1]{0}', space=sflag, size = 0x4, scoped, tag = 'scoped memory for tpu_custom_call.1']
  #allocation4 [shape = 'u8[512]{0}', space=smem, size = 0x200, scoped, tag = 'prefetched SMEM operand 0']
  %s0 = inlined_call_operand.smem [shape: u32[41], index: -1, kind: input, shape index: {}]
  %s1 = sld [smem:[%s0]]
  %s2 = scalar_lea.smem %s0, 1
  %s3 = sld [smem:[%s2]]
  %s4 = scalar_lea.smem %s0, 2
  %s5 = sld [smem:[%s4]]
  %s6 = scalar_lea.smem %s0, 3
  %s7 = sld [smem:[%s6]]
  %s8 = scalar_lea.smem %s0, 4
  %s9 = sld [smem:[%s8]]
  %s10 = scalar_lea.smem %s0, 5
  %s11 = sld [smem:[%s10]]
  %s12 = scalar_lea.smem %s0, 6
  %s13 = sld [smem:[%s12]]
  %s14 = scalar_lea.smem %s0, 7
  %s15 = sld [smem:[%s14]]
  %s16 = scalar_lea.smem %s0, 8
  %s17 = sld [smem:[%s16]]
  %s18 = scalar_lea.smem %s0, 9
  %s19 = sld [smem:[%s18]]
  %s20 = scalar_lea.smem %s0, 10
  %s21 = sld [smem:[%s20]]
  %s22 = scalar_lea.smem %s0, 11
  %s23 = sld [smem:[%s22]]
  %s24 = scalar_lea.smem %s0, 12
  %s25 = sld [smem:[%s24]]
  %s26 = scalar_lea.smem %s0, 13
  %s27 = sld [smem:[%s26]]
  %s28 = scalar_lea.smem %s0, 14
  %s29 = sld [smem:[%s28]]
  %s30 = scalar_lea.smem %s0, 15
  %s31 = sld [smem:[%s30]]
  %s32 = scalar_lea.smem %s0, 16
  %s33 = sld [smem:[%s32]]
  %s34 = scalar_lea.smem %s0, 17
  %s35 = sld [smem:[%s34]]
  %s36 = scalar_lea.smem %s0, 18
  %s37 = sld [smem:[%s36]]
  %s38 = scalar_lea.smem %s0, 19
  %s39 = sld [smem:[%s38]]
  %s40 = scalar_lea.smem %s0, 20
  %s41 = sld [smem:[%s40]]
  %s42 = scalar_lea.smem %s0, 21
  %s43 = sld [smem:[%s42]]
  %s44 = scalar_lea.smem %s0, 22
  %s45 = sld [smem:[%s44]]
  %s46 = scalar_lea.smem %s0, 23
  %s47 = sld [smem:[%s46]]
  %s48 = scalar_lea.smem %s0, 24
  %s49 = sld [smem:[%s48]]
  %s50 = scalar_lea.smem %s0, 25
  %s51 = sld [smem:[%s50]]
  %s52 = scalar_lea.smem %s0, 26
  %s53 = sld [smem:[%s52]]
  %s54 = scalar_lea.smem %s0, 27
  %s55 = sld [smem:[%s54]]
  %s56 = scalar_lea.smem %s0, 28
  %s57 = sld [smem:[%s56]]
  %s58 = scalar_lea.smem %s0, 29
  %s59 = sld [smem:[%s58]]
  %s60 = scalar_lea.smem %s0, 30
  %s61 = sld [smem:[%s60]]
  %s62 = scalar_lea.smem %s0, 31
  %s63 = sld [smem:[%s62]]
  %s64 = scalar_lea.smem %s0, 32
  %s65 = sld [smem:[%s64]]
  %s66 = scalar_lea.smem %s0, 33
  %s67 = sld [smem:[%s66]]
  %s68 = scalar_lea.smem %s0, 34
  %s69 = sld [smem:[%s68]]
  %s70 = scalar_lea.smem %s0, 35
  %s71 = sld [smem:[%s70]]
  %s72 = scalar_lea.smem %s0, 36
  %s73 = sld [smem:[%s72]]
  %s74 = scalar_lea.smem %s0, 37
  %s75 = sld [smem:[%s74]]
  %s76 = scalar_lea.smem %s0, 38
  %s77 = sld [smem:[%s76]]
  %s78 = scalar_lea.smem %s0, 39
  %s79 = sld [smem:[%s78]]
  %s80 = scalar_lea.smem %s0, 40
  %s81 = sld [smem:[%s80]]
  %s82 = sld [smem:[#allocation0]]
  $region293: #{tpu_custom_call.1} parent=0
    _
  %s84 = ssub.s32 1, %s82
  %s85 = scalar_select 0, %s84, %s82
  %s87 = sshll.u32 %s1, 4
  %s88 = int_to_ptr.hbm [resolvable:$true] %s87
  %90 = dma.hbm_to_smem %s88, 16, [#allocation4], [#allocation3]
  %92 = dma.done [#allocation3], 16
  %93 = sfence
  $region1: #{tpu_custom_call.1} parent=0
    #allocation5 [shape = 'u8[512]{0}', space=vmem, size = 0x400, scoped, tag = 'input window, operand 2, single buffered']
    #allocation6 [shape = 's32[2]{0}', space=sflag, size = 0x8, scoped, tag = 'scoped memory for tpu_custom_call.1']
    #allocation7 [shape = 's32[2]{0}', space=sflag, size = 0x8, scoped, tag = 'scoped memory for tpu_custom_call.1']
    #allocation8 [shape = 'u8[512]{0}', space=vmem, size = 0x400, scoped, tag = 'input window, operand 3, single buffered']
    #allocation9 [shape = 's32[1]{0}', space=sflag, size = 0x4, scoped, tag = 'scoped memory for tpu_custom_call.1']
    #allocation10 [shape = 'u8[512]{0}', space=vmem, size = 0x400, scoped, tag = 'input window, operand 5, single buffered']
    #allocation11 [shape = 'u8[512]{0}', space=vmem, size = 0x400, scoped, tag = 'input window, operand 7, single buffered']
    #allocation12 [shape = 's32[1]{0}', space=sflag, size = 0x4, scoped, tag = 'scoped memory for tpu_custom_call.1']
    #allocation13 [shape = 'u8[512]{0}', space=vmem, size = 0x400, scoped, tag = 'input window, operand 8, single buffered']
    #allocation14 [shape = 'u8[512]{0}', space=vmem, size = 0x400, scoped, tag = 'input window, operand 9, single buffered']
    #allocation15 [shape = 's32[1]{0}', space=sflag, size = 0x4, scoped, tag = 'scoped memory for tpu_custom_call.1']
    #allocation16 [shape = 'u8[512]{0}', space=vmem, size = 0x400, scoped, tag = 'input window, operand 11, single buffered']
    #allocation17 [shape = 'u8[512]{0}', space=vmem, size = 0x400, scoped, tag = 'input window, operand 13, single buffered']
    #allocation18 [shape = 's32[1]{0}', space=sflag, size = 0x4, scoped, tag = 'scoped memory for tpu_custom_call.1']
    #allocation19 [shape = 'u8[512]{0}', space=vmem, size = 0x400, scoped, tag = 'input window, operand 15, single buffered']
    #allocation20 [shape = 'u8[512]{0}', space=vmem, size = 0x400, scoped, tag = 'input window, operand 17, single buffered']
    #allocation21 [shape = 's32[1]{0}', space=sflag, size = 0x4, scoped, tag = 'scoped memory for tpu_custom_call.1']
    #allocation22 [shape = 'u8[512]{0}', space=vmem, size = 0x400, scoped, tag = 'input window, operand 18, single buffered']
    #allocation23 [shape = 'u8[512]{0}', space=vmem, size = 0x400, scoped, tag = 'input window, operand 19, single buffered']
    #allocation24 [shape = 's32[1]{0}', space=sflag, size = 0x4, scoped, tag = 'scoped memory for tpu_custom_call.1']
    #allocation25 [shape = 'u8[512]{0}', space=vmem, size = 0x400, scoped, tag = 'input window, operand 21, single buffered']
    #allocation26 [shape = 'u8[8192]{0}', space=vmem, size = 0x2000, scoped, tag = 'input window, operand 22, single buffered']
    #allocation27 [shape = 's32[1]{0}', space=sflag, size = 0x4, scoped, tag = 'scoped memory for tpu_custom_call.1']
    #allocation28 [shape = 'u8[512]{0}', space=vmem, size = 0x400, scoped, tag = 'input window, operand 23, single buffered']
    #allocation29 [shape = 'u8[3584]{0}', space=vmem, size = 0x1000, scoped, tag = 'input window, operand 24, single buffered']
    #allocation30 [shape = 's32[1]{0}', space=sflag, size = 0x4, scoped, tag = 'scoped memory for tpu_custom_call.1']
    #allocation31 [shape = 'u8[512]{0}', space=vmem, size = 0x400, scoped, tag = 'input window, operand 25, single buffered']
    #allocation32 [shape = 'u8[512]{0}', space=vmem, size = 0x400, scoped, tag = 'input window, operand 26, single buffered']
    #allocation33 [shape = 's32[1]{0}', space=sflag, size = 0x4, scoped, tag = 'scoped memory for tpu_custom_call.1']
    #allocation34 [shape = 'u8[512]{0}', space=vmem, size = 0x400, scoped, tag = 'input window, operand 27, single buffered']
    #allocation35 [shape = 'u8[512]{0}', space=vmem, size = 0x400, scoped, tag = 'input window, operand 28, single buffered']
    #allocation36 [shape = 's32[1]{0}', space=sflag, size = 0x4, scoped, tag = 'scoped memory for tpu_custom_call.1']
    #allocation37 [shape = 'u8[512]{0}', space=vmem, size = 0x400, scoped, tag = 'input window, operand 29, single buffered']
    #allocation38 [shape = 'u8[8192]{0}', space=vmem, size = 0x2000, scoped, tag = 'input window, operand 30, single buffered']
    #allocation39 [shape = 's32[1]{0}', space=sflag, size = 0x4, scoped, tag = 'scoped memory for tpu_custom_call.1']
    #allocation40 [shape = 'u8[512]{0}', space=vmem, size = 0x400, scoped, tag = 'input window, operand 31, single buffered']
    #allocation41 [shape = 'u8[512]{0}', space=vmem, size = 0x400, scoped, tag = 'input window, operand 32, single buffered']
    #allocation42 [shape = 's32[1]{0}', space=sflag, size = 0x4, scoped, tag = 'scoped memory for tpu_custom_call.1']
    #allocation43 [shape = 'u8[512]{0}', space=vmem, size = 0x400, scoped, tag = 'input window, operand 33, single buffered']
    #allocation44 [shape = 'u8[512]{0}', space=vmem, size = 0x400, scoped, tag = 'input window, operand 35, single buffered']
    #allocation45 [shape = 's32[1]{0}', space=sflag, size = 0x4, scoped, tag = 'scoped memory for tpu_custom_call.1']
    #allocation46 [shape = 'u8[8192]{0}', space=vmem, size = 0x2000, scoped, tag = 'output window, operand 0']
    %94 = vsyncpa [#allocation6], 0
    %95 = vsyncpa [#allocation9], 0
    %96 = vsyncpa [#allocation12], 0
    %97 = vsyncpa [#allocation15], 0
    %98 = vsyncpa [#allocation18], 0
    %99 = vsyncpa [#allocation21], 0
    %100 = vsyncpa [#allocation24], 0
    %101 = vsyncpa [#allocation27], 0
    %102 = vsyncpa [#allocation30], 0
    %103 = vsyncpa [#allocation33], 0
    %104 = vsyncpa [#allocation36], 0
    %105 = vsyncpa [#allocation39], 0
    %106 = vsyncpa [#allocation42], 0
    %107 = vsyncpa [#allocation45], 0
    %108 = vsyncpa [#allocation7], 0
    %s109 = scalar_lea.sflag [#allocation7], 1
    %110 = vsyncpa %s109, 0
    loop: start=0, step=1, limit=4
    $region2: #{tpu_custom_call.1} parent=1 // loop_pre_header
      _
    $region3: #{tpu_custom_call.1} parent=1 // loop_header
      %s112 = sphi 0, %s116
      %p113 = scmp.ge.s32.totalorder %s112, 4
      %s122 = sphi 0, %s124
      %s125 = sphi 0, %s122
      %s126 = sphi 0, %s125
      %s142 = sphi 0, %s126
      %s146 = sphi 0, %s146
      %s148 = sphi 0, %s146
      %s149 = sphi 0, %s148
      %s163 = sphi 0, %s149
      %s167 = sphi 0, %s167
      %s169 = sphi 0, %s167
      %s170 = sphi 0, %s169
      %s184 = sphi 0, %s170
      %s188 = sphi 0, %s188
      %s190 = sphi 0, %s188
      %s191 = sphi 0, %s190
      %s205 = sphi 0, %s191
      %s209 = sphi 0, %s209
      %s211 = sphi 0, %s209
      %s212 = sphi 0, %s211
      %s226 = sphi 0, %s212
      %s230 = sphi 0, %s230
      %s232 = sphi 0, %s230
      %s233 = sphi 0, %s232
      %s247 = sphi 0, %s233
      %s251 = sphi 0, %s251
      %s253 = sphi 0, %s251
      %s254 = sphi 0, %s253
      %s268 = sphi 0, %s254
      %s272 = sphi 0, %s272
      %s274 = sphi 0, %s272
      %s275 = sphi 0, %s274
      %s289 = sphi 0, %s275
      %s293 = sphi 0, %s293
      %s295 = sphi 0, %s293
      %s296 = sphi 0, %s295
      %s310 = sphi 0, %s296
      %s314 = sphi 0, %s314
      %s316 = sphi 0, %s314
      %s317 = sphi 0, %s316
      %s331 = sphi 0, %s317
      %s335 = sphi 0, %s335
      %s337 = sphi 0, %s335
      %s338 = sphi 0, %s337
      %s352 = sphi 0, %s338
      %s356 = sphi 0, %s356
      %s358 = sphi 0, %s356
      %s359 = sphi 0, %s358
      %s373 = sphi 0, %s359
      %s377 = sphi 0, %s377
      %s379 = sphi 0, %s377
      %s380 = sphi 0, %s379
      %s394 = sphi 0, %s380
      %s398 = sphi 0, %s398
      %s400 = sphi 0, %s398
      %s401 = sphi 0, %s400
      %s415 = sphi 0, %s401
      %s419 = sphi 0, %s419
      %s421 = sphi 0, %s419
      %s422 = sphi 0, %s421
      %s436 = sphi 0, %s422
      %s440 = sphi 0, %s440
      %s442 = sphi 0, %s440
      %s443 = sphi 0, %s442
      %s457 = sphi 0, %s443
      %s461 = sphi 0, %s461
      %s463 = sphi 0, %s461
      %s464 = sphi 0, %s463
      %s478 = sphi 0, %s464
      %s482 = sphi 0, %s482
      %s484 = sphi 0, %s482
      %s485 = sphi 0, %s484
      %s499 = sphi 0, %s485
      %s503 = sphi 0, %s503
      %s505 = sphi 0, %s503
      %s506 = sphi 0, %s505
      %s520 = sphi 0, %s506
      %s524 = sphi 0, %s524
      %s526 = sphi 0, %s524
      %s527 = sphi 0, %s526
      %s541 = sphi 0, %s527
      %s545 = sphi 0, %s545
      %s547 = sphi 0, %s545
      %s548 = sphi 0, %s547
      %s562 = sphi 0, %s548
      %s566 = sphi 0, %s566
      %s568 = sphi 0, %s566
      %s569 = sphi 0, %s568
      %s583 = sphi 0, %s569
      %s587 = sphi 0, %s587
      %s589 = sphi 0, %s587
      %s590 = sphi 0, %s589
      %s604 = sphi 0, %s590
      %s608 = sphi 0, %s608
      %s610 = sphi 0, %s608
      %s611 = sphi 0, %s610
      %s625 = sphi 0, %s611
      %s629 = sphi 0, %s629
      %s631 = sphi 0, %s629
      %s632 = sphi 0, %s631
      %s646 = sphi 0, %s632
      %s650 = sphi 0, %s650
      %s652 = sphi 0, %s650
      %s653 = sphi 0, %s652
      %s667 = sphi 0, %s653
      %s671 = sphi 0, %s671
      %s673 = sphi 0, %s671
      %s674 = sphi 0, %s673
      %s688 = sphi 0, %s674
      %s692 = sphi 0, %s692
      %s694 = sphi 0, %s692
      %s695 = sphi 0, %s694
      %s709 = sphi 0, %s695
      %s713 = sphi 0, %s713
      %s715 = sphi 0, %s713
      %s716 = sphi 0, %s715
      %s730 = sphi 0, %s716
      %s734 = sphi 0, %s734
      %s736 = sphi 0, %s734
      %s737 = sphi 0, %s736
      %s751 = sphi 0, %s737
      %s755 = sphi 0, %s755
      %s757 = sphi 0, %s755
      %s758 = sphi 0, %s757
      %s772 = sphi 0, %s758
      %s776 = sphi 0, %s776
      %s778 = sphi 0, %s776
      %s779 = sphi 0, %s778
      %s793 = sphi 0, %s779
      %s797 = sphi 0, %s797
      %s799 = sphi 0, %s797
      %s800 = sphi 0, %s799
      %s814 = sphi 0, %s800
      %s818 = sphi 0, %s818
      %s820 = sphi 0, %s818
      %s821 = sphi 0, %s820
      %s835 = sphi 0, %s821
      %s839 = sphi 0, %s839
      %s841 = sphi 0, %s839
      %s842 = sphi 0, %s841
      %s856 = sphi 0, %s842
      %s860 = sphi 0, %s860
      %s862 = sphi 0, %s860
      %s863 = sphi 0, %s862
      %s877 = sphi 0, %s863
      %s881 = sphi 0, %s881
      %s883 = sphi 0, %s881
      %s884 = sphi 0, %s883
      %s898 = sphi 0, %s884
      %s902 = sphi 0, %s902
      %s904 = sphi 0, %s902
      %s905 = sphi 0, %s904
      %s919 = sphi 0, %s905
      %s923 = sphi 0, %s923
      %s925 = sphi 0, %s923
      %s926 = sphi 0, %s925
      %s940 = sphi 0, %s926
      %s946 = sphi 0, %s948
      %s949 = sphi 0, %s946
      %s950 = sphi 0, %s949
      %s966 = sphi 0, %s950
    $region4: #{tpu_custom_call.1} parent=1 // loop_header_branch
      %115 = sbr.rel (%p113) target = $region8
    $region5: #{tpu_custom_call.1} parent=1 // loop_body
      %s117 = ssub.s32 %s112, 1
      %s118 = ssub.s32 %s112, 2
      %s119 = sadd.s32 %s112, 1
      %s120 = ssub.s32 %s112, %s119
      %p121 = scmp.eq.s32.totalorder %s120, 0
      %s123 = sadd.s32 %s122, 1
      %s124 = scalar_select %p121, %s122, %s123
      %p127 = pneg %p121
      %p128 = scmp.eq.s32.totalorder %s112, 1
      %p129 = por %p127, %p128
      %p130 = scmp.ne.s32.totalorder %s122, %s125
      %p131 = scmp.eq.s32.totalorder %s112, 0
      %p132 = por %p130, %p131
      %p133 = scmp.ne.s32.totalorder %s122, %s125
      %p134 = scmp.eq.s32.totalorder %s117, 1
      %p135 = por %p133, %p134
      %p136 = scmp.ne.s32.totalorder %s125, %s126
      %p137 = scmp.eq.s32.totalorder %s117, 0
      %p138 = por %p136, %p137
      %p139 = scmp.ne.s32.totalorder %s125, %s126
      %p140 = scmp.eq.s32.totalorder %s118, 1
      %p141 = por %p139, %p140
      %p143 = scmp.ne.s32.totalorder %s126, %s142
      %p144 = scmp.eq.s32.totalorder %s118, 0
      %p145 = por %p143, %p144
      %s147 = sadd.s32 %s146, 1
      %p150 = scmp.eq.s32.totalorder %s112, 1
      %p151 = scmp.ne.s32.totalorder %s146, %s148
      %p152 = scmp.eq.s32.totalorder %s112, 0
      %p153 = por %p151, %p152
      %p154 = scmp.ne.s32.totalorder %s146, %s148
      %p155 = scmp.eq.s32.totalorder %s117, 1
      %p156 = por %p154, %p155
      %p157 = scmp.ne.s32.totalorder %s148, %s149
      %p158 = scmp.eq.s32.totalorder %s117, 0
      %p159 = por %p157, %p158
      %p160 = scmp.ne.s32.totalorder %s148, %s149
      %p161 = scmp.eq.s32.totalorder %s118, 1
      %p162 = por %p160, %p161
      %p164 = scmp.ne.s32.totalorder %s149, %s163
      %p165 = scmp.eq.s32.totalorder %s118, 0
      %p166 = por %p164, %p165
      %s168 = sadd.s32 %s167, 1
      %p171 = scmp.eq.s32.totalorder %s112, 1
      %p172 = scmp.ne.s32.totalorder %s167, %s169
      %p173 = scmp.eq.s32.totalorder %s112, 0
      %p174 = por %p172, %p173
      %p175 = scmp.ne.s32.totalorder %s167, %s169
      %p176 = scmp.eq.s32.totalorder %s117, 1
      %p177 = por %p175, %p176
      %p178 = scmp.ne.s32.totalorder %s169, %s170
      %p179 = scmp.eq.s32.totalorder %s117, 0
      %p180 = por %p178, %p179
      %p181 = scmp.ne.s32.totalorder %s169, %s170
      %p182 = scmp.eq.s32.totalorder %s118, 1
      %p183 = por %p181, %p182
      %p185 = scmp.ne.s32.totalorder %s170, %s184
      %p186 = scmp.eq.s32.totalorder %s118, 0
      %p187 = por %p185, %p186
      %s189 = sadd.s32 %s188, 1
      %p192 = scmp.eq.s32.totalorder %s112, 1
      %p193 = scmp.ne.s32.totalorder %s188, %s190
      %p194 = scmp.eq.s32.totalorder %s112, 0
      %p195 = por %p193, %p194
      %p196 = scmp.ne.s32.totalorder %s188, %s190
      %p197 = scmp.eq.s32.totalorder %s117, 1
      %p198 = por %p196, %p197
      %p199 = scmp.ne.s32.totalorder %s190, %s191
      %p200 = scmp.eq.s32.totalorder %s117, 0
      %p201 = por %p199, %p200
      %p202 = scmp.ne.s32.totalorder %s190, %s191
      %p203 = scmp.eq.s32.totalorder %s118, 1
      %p204 = por %p202, %p203
      %p206 = scmp.ne.s32.totalorder %s191, %s205
      %p207 = scmp.eq.s32.totalorder %s118, 0
      %p208 = por %p206, %p207
      %s210 = sadd.s32 %s209, 1
      %p213 = scmp.eq.s32.totalorder %s112, 1
      %p214 = scmp.ne.s32.totalorder %s209, %s211
      %p215 = scmp.eq.s32.totalorder %s112, 0
      %p216 = por %p214, %p215
      %p217 = scmp.ne.s32.totalorder %s209, %s211
      %p218 = scmp.eq.s32.totalorder %s117, 1
      %p219 = por %p217, %p218
      %p220 = scmp.ne.s32.totalorder %s211, %s212
      %p221 = scmp.eq.s32.totalorder %s117, 0
      %p222 = por %p220, %p221
      %p223 = scmp.ne.s32.totalorder %s211, %s212
      %p224 = scmp.eq.s32.totalorder %s118, 1
      %p225 = por %p223, %p224
      %p227 = scmp.ne.s32.totalorder %s212, %s226
      %p228 = scmp.eq.s32.totalorder %s118, 0
      %p229 = por %p227, %p228
      %s231 = sadd.s32 %s230, 1
      %p234 = scmp.eq.s32.totalorder %s112, 1
      %p235 = scmp.ne.s32.totalorder %s230, %s232
      %p236 = scmp.eq.s32.totalorder %s112, 0
      %p237 = por %p235, %p236
      %p238 = scmp.ne.s32.totalorder %s230, %s232
      %p239 = scmp.eq.s32.totalorder %s117, 1
      %p240 = por %p238, %p239
      %p241 = scmp.ne.s32.totalorder %s232, %s233
      %p242 = scmp.eq.s32.totalorder %s117, 0
      %p243 = por %p241, %p242
      %p244 = scmp.ne.s32.totalorder %s232, %s233
      %p245 = scmp.eq.s32.totalorder %s118, 1
      %p246 = por %p244, %p245
      %p248 = scmp.ne.s32.totalorder %s233, %s247
      %p249 = scmp.eq.s32.totalorder %s118, 0
      %p250 = por %p248, %p249
      %s252 = sadd.s32 %s251, 1
      %p255 = scmp.eq.s32.totalorder %s112, 1
      %p256 = scmp.ne.s32.totalorder %s251, %s253
      %p257 = scmp.eq.s32.totalorder %s112, 0
      %p258 = por %p256, %p257
      %p259 = scmp.ne.s32.totalorder %s251, %s253
      %p260 = scmp.eq.s32.totalorder %s117, 1
      %p261 = por %p259, %p260
      %p262 = scmp.ne.s32.totalorder %s253, %s254
      %p263 = scmp.eq.s32.totalorder %s117, 0
      %p264 = por %p262, %p263
      %p265 = scmp.ne.s32.totalorder %s253, %s254
      %p266 = scmp.eq.s32.totalorder %s118, 1
      %p267 = por %p265, %p266
      %p269 = scmp.ne.s32.totalorder %s254, %s268
      %p270 = scmp.eq.s32.totalorder %s118, 0
      %p271 = por %p269, %p270
      %s273 = sadd.s32 %s272, 1
      %p276 = scmp.eq.s32.totalorder %s112, 1
      %p277 = scmp.ne.s32.totalorder %s272, %s274
      %p278 = scmp.eq.s32.totalorder %s112, 0
      %p279 = por %p277, %p278
      %p280 = scmp.ne.s32.totalorder %s272, %s274
      %p281 = scmp.eq.s32.totalorder %s117, 1
      %p282 = por %p280, %p281
      %p283 = scmp.ne.s32.totalorder %s274, %s275
      %p284 = scmp.eq.s32.totalorder %s117, 0
      %p285 = por %p283, %p284
      %p286 = scmp.ne.s32.totalorder %s274, %s275
      %p287 = scmp.eq.s32.totalorder %s118, 1
      %p288 = por %p286, %p287
      %p290 = scmp.ne.s32.totalorder %s275, %s289
      %p291 = scmp.eq.s32.totalorder %s118, 0
      %p292 = por %p290, %p291
      %s294 = sadd.s32 %s293, 1
      %p297 = scmp.eq.s32.totalorder %s112, 1
      %p298 = scmp.ne.s32.totalorder %s293, %s295
      %p299 = scmp.eq.s32.totalorder %s112, 0
      %p300 = por %p298, %p299
      %p301 = scmp.ne.s32.totalorder %s293, %s295
      %p302 = scmp.eq.s32.totalorder %s117, 1
      %p303 = por %p301, %p302
      %p304 = scmp.ne.s32.totalorder %s295, %s296
      %p305 = scmp.eq.s32.totalorder %s117, 0
      %p306 = por %p304, %p305
      %p307 = scmp.ne.s32.totalorder %s295, %s296
      %p308 = scmp.eq.s32.totalorder %s118, 1
      %p309 = por %p307, %p308
      %p311 = scmp.ne.s32.totalorder %s296, %s310
      %p312 = scmp.eq.s32.totalorder %s118, 0
      %p313 = por %p311, %p312
      %s315 = sadd.s32 %s314, 1
      %p318 = scmp.eq.s32.totalorder %s112, 1
      %p319 = scmp.ne.s32.totalorder %s314, %s316
      %p320 = scmp.eq.s32.totalorder %s112, 0
      %p321 = por %p319, %p320
      %p322 = scmp.ne.s32.totalorder %s314, %s316
      %p323 = scmp.eq.s32.totalorder %s117, 1
      %p324 = por %p322, %p323
      %p325 = scmp.ne.s32.totalorder %s316, %s317
      %p326 = scmp.eq.s32.totalorder %s117, 0
      %p327 = por %p325, %p326
      %p328 = scmp.ne.s32.totalorder %s316, %s317
      %p329 = scmp.eq.s32.totalorder %s118, 1
      %p330 = por %p328, %p329
      %p332 = scmp.ne.s32.totalorder %s317, %s331
      %p333 = scmp.eq.s32.totalorder %s118, 0
      %p334 = por %p332, %p333
      %s336 = sadd.s32 %s335, 1
      %p339 = scmp.eq.s32.totalorder %s112, 1
      %p340 = scmp.ne.s32.totalorder %s335, %s337
      %p341 = scmp.eq.s32.totalorder %s112, 0
      %p342 = por %p340, %p341
      %p343 = scmp.ne.s32.totalorder %s335, %s337
      %p344 = scmp.eq.s32.totalorder %s117, 1
      %p345 = por %p343, %p344
      %p346 = scmp.ne.s32.totalorder %s337, %s338
      %p347 = scmp.eq.s32.totalorder %s117, 0
      %p348 = por %p346, %p347
      %p349 = scmp.ne.s32.totalorder %s337, %s338
      %p350 = scmp.eq.s32.totalorder %s118, 1
      %p351 = por %p349, %p350
      %p353 = scmp.ne.s32.totalorder %s338, %s352
      %p354 = scmp.eq.s32.totalorder %s118, 0
      %p355 = por %p353, %p354
      %s357 = sadd.s32 %s356, 1
      %p360 = scmp.eq.s32.totalorder %s112, 1
      %p361 = scmp.ne.s32.totalorder %s356, %s358
      %p362 = scmp.eq.s32.totalorder %s112, 0
      %p363 = por %p361, %p362
      %p364 = scmp.ne.s32.totalorder %s356, %s358
      %p365 = scmp.eq.s32.totalorder %s117, 1
      %p366 = por %p364, %p365
      %p367 = scmp.ne.s32.totalorder %s358, %s359
      %p368 = scmp.eq.s32.totalorder %s117, 0
      %p369 = por %p367, %p368
      %p370 = scmp.ne.s32.totalorder %s358, %s359
      %p371 = scmp.eq.s32.totalorder %s118, 1
      %p372 = por %p370, %p371
      %p374 = scmp.ne.s32.totalorder %s359, %s373
      %p375 = scmp.eq.s32.totalorder %s118, 0
      %p376 = por %p374, %p375
      %s378 = sadd.s32 %s377, 1
      %p381 = scmp.eq.s32.totalorder %s112, 1
      %p382 = scmp.ne.s32.totalorder %s377, %s379
      %p383 = scmp.eq.s32.totalorder %s112, 0
      %p384 = por %p382, %p383
      %p385 = scmp.ne.s32.totalorder %s377, %s379
      %p386 = scmp.eq.s32.totalorder %s117, 1
      %p387 = por %p385, %p386
      %p388 = scmp.ne.s32.totalorder %s379, %s380
      %p389 = scmp.eq.s32.totalorder %s117, 0
      %p390 = por %p388, %p389
      %p391 = scmp.ne.s32.totalorder %s379, %s380
      %p392 = scmp.eq.s32.totalorder %s118, 1
      %p393 = por %p391, %p392
      %p395 = scmp.ne.s32.totalorder %s380, %s394
      %p396 = scmp.eq.s32.totalorder %s118, 0
      %p397 = por %p395, %p396
      %s399 = sadd.s32 %s398, 1
      %p402 = scmp.eq.s32.totalorder %s112, 1
      %p403 = scmp.ne.s32.totalorder %s398, %s400
      %p404 = scmp.eq.s32.totalorder %s112, 0
      %p405 = por %p403, %p404
      %p406 = scmp.ne.s32.totalorder %s398, %s400
      %p407 = scmp.eq.s32.totalorder %s117, 1
      %p408 = por %p406, %p407
      %p409 = scmp.ne.s32.totalorder %s400, %s401
      %p410 = scmp.eq.s32.totalorder %s117, 0
      %p411 = por %p409, %p410
      %p412 = scmp.ne.s32.totalorder %s400, %s401
      %p413 = scmp.eq.s32.totalorder %s118, 1
      %p414 = por %p412, %p413
      %p416 = scmp.ne.s32.totalorder %s401, %s415
      %p417 = scmp.eq.s32.totalorder %s118, 0
      %p418 = por %p416, %p417
      %s420 = sadd.s32 %s419, 1
      %p423 = scmp.eq.s32.totalorder %s112, 1
      %p424 = scmp.ne.s32.totalorder %s419, %s421
      %p425 = scmp.eq.s32.totalorder %s112, 0
      %p426 = por %p424, %p425
      %p427 = scmp.ne.s32.totalorder %s419, %s421
      %p428 = scmp.eq.s32.totalorder %s117, 1
      %p429 = por %p427, %p428
      %p430 = scmp.ne.s32.totalorder %s421, %s422
      %p431 = scmp.eq.s32.totalorder %s117, 0
      %p432 = por %p430, %p431
      %p433 = scmp.ne.s32.totalorder %s421, %s422
      %p434 = scmp.eq.s32.totalorder %s118, 1
      %p435 = por %p433, %p434
      %p437 = scmp.ne.s32.totalorder %s422, %s436
      %p438 = scmp.eq.s32.totalorder %s118, 0
      %p439 = por %p437, %p438
      %s441 = sadd.s32 %s440, 1
      %p444 = scmp.eq.s32.totalorder %s112, 1
      %p445 = scmp.ne.s32.totalorder %s440, %s442
      %p446 = scmp.eq.s32.totalorder %s112, 0
      %p447 = por %p445, %p446
      %p448 = scmp.ne.s32.totalorder %s440, %s442
      %p449 = scmp.eq.s32.totalorder %s117, 1
      %p450 = por %p448, %p449
      %p451 = scmp.ne.s32.totalorder %s442, %s443
      %p452 = scmp.eq.s32.totalorder %s117, 0
      %p453 = por %p451, %p452
      %p454 = scmp.ne.s32.totalorder %s442, %s443
      %p455 = scmp.eq.s32.totalorder %s118, 1
      %p456 = por %p454, %p455
      %p458 = scmp.ne.s32.totalorder %s443, %s457
      %p459 = scmp.eq.s32.totalorder %s118, 0
      %p460 = por %p458, %p459
      %s462 = sadd.s32 %s461, 1
      %p465 = scmp.eq.s32.totalorder %s112, 1
      %p466 = scmp.ne.s32.totalorder %s461, %s463
      %p467 = scmp.eq.s32.totalorder %s112, 0
      %p468 = por %p466, %p467
      %p469 = scmp.ne.s32.totalorder %s461, %s463
      %p470 = scmp.eq.s32.totalorder %s117, 1
      %p471 = por %p469, %p470
      %p472 = scmp.ne.s32.totalorder %s463, %s464
      %p473 = scmp.eq.s32.totalorder %s117, 0
      %p474 = por %p472, %p473
      %p475 = scmp.ne.s32.totalorder %s463, %s464
      %p476 = scmp.eq.s32.totalorder %s118, 1
      %p477 = por %p475, %p476
      %p479 = scmp.ne.s32.totalorder %s464, %s478
      %p480 = scmp.eq.s32.totalorder %s118, 0
      %p481 = por %p479, %p480
      %s483 = sadd.s32 %s482, 1
      %p486 = scmp.eq.s32.totalorder %s112, 1
      %p487 = scmp.ne.s32.totalorder %s482, %s484
      %p488 = scmp.eq.s32.totalorder %s112, 0
      %p489 = por %p487, %p488
      %p490 = scmp.ne.s32.totalorder %s482, %s484
      %p491 = scmp.eq.s32.totalorder %s117, 1
      %p492 = por %p490, %p491
      %p493 = scmp.ne.s32.totalorder %s484, %s485
      %p494 = scmp.eq.s32.totalorder %s117, 0
      %p495 = por %p493, %p494
      %p496 = scmp.ne.s32.totalorder %s484, %s485
      %p497 = scmp.eq.s32.totalorder %s118, 1
      %p498 = por %p496, %p497
      %p500 = scmp.ne.s32.totalorder %s485, %s499
      %p501 = scmp.eq.s32.totalorder %s118, 0
      %p502 = por %p500, %p501
      %s504 = sadd.s32 %s503, 1
      %p507 = scmp.eq.s32.totalorder %s112, 1
      %p508 = scmp.ne.s32.totalorder %s503, %s505
      %p509 = scmp.eq.s32.totalorder %s112, 0
      %p510 = por %p508, %p509
      %p511 = scmp.ne.s32.totalorder %s503, %s505
      %p512 = scmp.eq.s32.totalorder %s117, 1
      %p513 = por %p511, %p512
      %p514 = scmp.ne.s32.totalorder %s505, %s506
      %p515 = scmp.eq.s32.totalorder %s117, 0
      %p516 = por %p514, %p515
      %p517 = scmp.ne.s32.totalorder %s505, %s506
      %p518 = scmp.eq.s32.totalorder %s118, 1
      %p519 = por %p517, %p518
      %p521 = scmp.ne.s32.totalorder %s506, %s520
      %p522 = scmp.eq.s32.totalorder %s118, 0
      %p523 = por %p521, %p522
      %s525 = sadd.s32 %s524, 1
      %p528 = scmp.eq.s32.totalorder %s112, 1
      %p529 = scmp.ne.s32.totalorder %s524, %s526
      %p530 = scmp.eq.s32.totalorder %s112, 0
      %p531 = por %p529, %p530
      %p532 = scmp.ne.s32.totalorder %s524, %s526
      %p533 = scmp.eq.s32.totalorder %s117, 1
      %p534 = por %p532, %p533
      %p535 = scmp.ne.s32.totalorder %s526, %s527
      %p536 = scmp.eq.s32.totalorder %s117, 0
      %p537 = por %p535, %p536
      %p538 = scmp.ne.s32.totalorder %s526, %s527
      %p539 = scmp.eq.s32.totalorder %s118, 1
      %p540 = por %p538, %p539
      %p542 = scmp.ne.s32.totalorder %s527, %s541
      %p543 = scmp.eq.s32.totalorder %s118, 0
      %p544 = por %p542, %p543
      %s546 = sadd.s32 %s545, 1
      %p549 = scmp.eq.s32.totalorder %s112, 1
      %p550 = scmp.ne.s32.totalorder %s545, %s547
      %p551 = scmp.eq.s32.totalorder %s112, 0
      %p552 = por %p550, %p551
      %p553 = scmp.ne.s32.totalorder %s545, %s547
      %p554 = scmp.eq.s32.totalorder %s117, 1
      %p555 = por %p553, %p554
      %p556 = scmp.ne.s32.totalorder %s547, %s548
      %p557 = scmp.eq.s32.totalorder %s117, 0
      %p558 = por %p556, %p557
      %p559 = scmp.ne.s32.totalorder %s547, %s548
      %p560 = scmp.eq.s32.totalorder %s118, 1
      %p561 = por %p559, %p560
      %p563 = scmp.ne.s32.totalorder %s548, %s562
      %p564 = scmp.eq.s32.totalorder %s118, 0
      %p565 = por %p563, %p564
      %s567 = sadd.s32 %s566, 1
      %p570 = scmp.eq.s32.totalorder %s112, 1
      %p571 = scmp.ne.s32.totalorder %s566, %s568
      %p572 = scmp.eq.s32.totalorder %s112, 0
      %p573 = por %p571, %p572
      %p574 = scmp.ne.s32.totalorder %s566, %s568
      %p575 = scmp.eq.s32.totalorder %s117, 1
      %p576 = por %p574, %p575
      %p577 = scmp.ne.s32.totalorder %s568, %s569
      %p578 = scmp.eq.s32.totalorder %s117, 0
      %p579 = por %p577, %p578
      %p580 = scmp.ne.s32.totalorder %s568, %s569
      %p581 = scmp.eq.s32.totalorder %s118, 1
      %p582 = por %p580, %p581
      %p584 = scmp.ne.s32.totalorder %s569, %s583
      %p585 = scmp.eq.s32.totalorder %s118, 0
      %p586 = por %p584, %p585
      %s588 = sadd.s32 %s587, 1
      %p591 = scmp.eq.s32.totalorder %s112, 1
      %p592 = scmp.ne.s32.totalorder %s587, %s589
      %p593 = scmp.eq.s32.totalorder %s112, 0
      %p594 = por %p592, %p593
      %p595 = scmp.ne.s32.totalorder %s587, %s589
      %p596 = scmp.eq.s32.totalorder %s117, 1
      %p597 = por %p595, %p596
      %p598 = scmp.ne.s32.totalorder %s589, %s590
      %p599 = scmp.eq.s32.totalorder %s117, 0
      %p600 = por %p598, %p599
      %p601 = scmp.ne.s32.totalorder %s589, %s590
      %p602 = scmp.eq.s32.totalorder %s118, 1
      %p603 = por %p601, %p602
      %p605 = scmp.ne.s32.totalorder %s590, %s604
      %p606 = scmp.eq.s32.totalorder %s118, 0
      %p607 = por %p605, %p606
      %s609 = sadd.s32 %s608, 1
      %p612 = scmp.eq.s32.totalorder %s112, 1
      %p613 = scmp.ne.s32.totalorder %s608, %s610
      %p614 = scmp.eq.s32.totalorder %s112, 0
      %p615 = por %p613, %p614
      %p616 = scmp.ne.s32.totalorder %s608, %s610
      %p617 = scmp.eq.s32.totalorder %s117, 1
      %p618 = por %p616, %p617
      %p619 = scmp.ne.s32.totalorder %s610, %s611
      %p620 = scmp.eq.s32.totalorder %s117, 0
      %p621 = por %p619, %p620
      %p622 = scmp.ne.s32.totalorder %s610, %s611
      %p623 = scmp.eq.s32.totalorder %s118, 1
      %p624 = por %p622, %p623
      %p626 = scmp.ne.s32.totalorder %s611, %s625
      %p627 = scmp.eq.s32.totalorder %s118, 0
      %p628 = por %p626, %p627
      %s630 = sadd.s32 %s629, 1
      %p633 = scmp.eq.s32.totalorder %s112, 1
      %p634 = scmp.ne.s32.totalorder %s629, %s631
      %p635 = scmp.eq.s32.totalorder %s112, 0
      %p636 = por %p634, %p635
      %p637 = scmp.ne.s32.totalorder %s629, %s631
      %p638 = scmp.eq.s32.totalorder %s117, 1
      %p639 = por %p637, %p638
      %p640 = scmp.ne.s32.totalorder %s631, %s632
      %p641 = scmp.eq.s32.totalorder %s117, 0
      %p642 = por %p640, %p641
      %p643 = scmp.ne.s32.totalorder %s631, %s632
      %p644 = scmp.eq.s32.totalorder %s118, 1
      %p645 = por %p643, %p644
      %p647 = scmp.ne.s32.totalorder %s632, %s646
      %p648 = scmp.eq.s32.totalorder %s118, 0
      %p649 = por %p647, %p648
      %s651 = sadd.s32 %s650, 1
      %p654 = scmp.eq.s32.totalorder %s112, 1
      %p655 = scmp.ne.s32.totalorder %s650, %s652
      %p656 = scmp.eq.s32.totalorder %s112, 0
      %p657 = por %p655, %p656
      %p658 = scmp.ne.s32.totalorder %s650, %s652
      %p659 = scmp.eq.s32.totalorder %s117, 1
      %p660 = por %p658, %p659
      %p661 = scmp.ne.s32.totalorder %s652, %s653
      %p662 = scmp.eq.s32.totalorder %s117, 0
      %p663 = por %p661, %p662
      %p664 = scmp.ne.s32.totalorder %s652, %s653
      %p665 = scmp.eq.s32.totalorder %s118, 1
      %p666 = por %p664, %p665
      %p668 = scmp.ne.s32.totalorder %s653, %s667
      %p669 = scmp.eq.s32.totalorder %s118, 0
      %p670 = por %p668, %p669
      %s672 = sadd.s32 %s671, 1
      %p675 = scmp.eq.s32.totalorder %s112, 1
      %p676 = scmp.ne.s32.totalorder %s671, %s673
      %p677 = scmp.eq.s32.totalorder %s112, 0
      %p678 = por %p676, %p677
      %p679 = scmp.ne.s32.totalorder %s671, %s673
      %p680 = scmp.eq.s32.totalorder %s117, 1
      %p681 = por %p679, %p680
      %p682 = scmp.ne.s32.totalorder %s673, %s674
      %p683 = scmp.eq.s32.totalorder %s117, 0
      %p684 = por %p682, %p683
      %p685 = scmp.ne.s32.totalorder %s673, %s674
      %p686 = scmp.eq.s32.totalorder %s118, 1
      %p687 = por %p685, %p686
      %p689 = scmp.ne.s32.totalorder %s674, %s688
      %p690 = scmp.eq.s32.totalorder %s118, 0
      %p691 = por %p689, %p690
      %s693 = sadd.s32 %s692, 1
      %p696 = scmp.eq.s32.totalorder %s112, 1
      %p697 = scmp.ne.s32.totalorder %s692, %s694
      %p698 = scmp.eq.s32.totalorder %s112, 0
      %p699 = por %p697, %p698
      %p700 = scmp.ne.s32.totalorder %s692, %s694
      %p701 = scmp.eq.s32.totalorder %s117, 1
      %p702 = por %p700, %p701
      %p703 = scmp.ne.s32.totalorder %s694, %s695
      %p704 = scmp.eq.s32.totalorder %s117, 0
      %p705 = por %p703, %p704
      %p706 = scmp.ne.s32.totalorder %s694, %s695
      %p707 = scmp.eq.s32.totalorder %s118, 1
      %p708 = por %p706, %p707
      %p710 = scmp.ne.s32.totalorder %s695, %s709
      %p711 = scmp.eq.s32.totalorder %s118, 0
      %p712 = por %p710, %p711
      %s714 = sadd.s32 %s713, 1
      %p717 = scmp.eq.s32.totalorder %s112, 1
      %p718 = scmp.ne.s32.totalorder %s713, %s715
      %p719 = scmp.eq.s32.totalorder %s112, 0
      %p720 = por %p718, %p719
      %p721 = scmp.ne.s32.totalorder %s713, %s715
      %p722 = scmp.eq.s32.totalorder %s117, 1
      %p723 = por %p721, %p722
      %p724 = scmp.ne.s32.totalorder %s715, %s716
      %p725 = scmp.eq.s32.totalorder %s117, 0
      %p726 = por %p724, %p725
      %p727 = scmp.ne.s32.totalorder %s715, %s716
      %p728 = scmp.eq.s32.totalorder %s118, 1
      %p729 = por %p727, %p728
      %p731 = scmp.ne.s32.totalorder %s716, %s730
      %p732 = scmp.eq.s32.totalorder %s118, 0
      %p733 = por %p731, %p732
      %s735 = sadd.s32 %s734, 1
      %p738 = scmp.eq.s32.totalorder %s112, 1
      %p739 = scmp.ne.s32.totalorder %s734, %s736
      %p740 = scmp.eq.s32.totalorder %s112, 0
      %p741 = por %p739, %p740
      %p742 = scmp.ne.s32.totalorder %s734, %s736
      %p743 = scmp.eq.s32.totalorder %s117, 1
      %p744 = por %p742, %p743
      %p745 = scmp.ne.s32.totalorder %s736, %s737
      %p746 = scmp.eq.s32.totalorder %s117, 0
      %p747 = por %p745, %p746
      %p748 = scmp.ne.s32.totalorder %s736, %s737
      %p749 = scmp.eq.s32.totalorder %s118, 1
      %p750 = por %p748, %p749
      %p752 = scmp.ne.s32.totalorder %s737, %s751
      %p753 = scmp.eq.s32.totalorder %s118, 0
      %p754 = por %p752, %p753
      %s756 = sadd.s32 %s755, 1
      %p759 = scmp.eq.s32.totalorder %s112, 1
      %p760 = scmp.ne.s32.totalorder %s755, %s757
      %p761 = scmp.eq.s32.totalorder %s112, 0
      %p762 = por %p760, %p761
      %p763 = scmp.ne.s32.totalorder %s755, %s757
      %p764 = scmp.eq.s32.totalorder %s117, 1
      %p765 = por %p763, %p764
      %p766 = scmp.ne.s32.totalorder %s757, %s758
      %p767 = scmp.eq.s32.totalorder %s117, 0
      %p768 = por %p766, %p767
      %p769 = scmp.ne.s32.totalorder %s757, %s758
      %p770 = scmp.eq.s32.totalorder %s118, 1
      %p771 = por %p769, %p770
      %p773 = scmp.ne.s32.totalorder %s758, %s772
      %p774 = scmp.eq.s32.totalorder %s118, 0
      %p775 = por %p773, %p774
      %s777 = sadd.s32 %s776, 1
      %p780 = scmp.eq.s32.totalorder %s112, 1
      %p781 = scmp.ne.s32.totalorder %s776, %s778
      %p782 = scmp.eq.s32.totalorder %s112, 0
      %p783 = por %p781, %p782
      %p784 = scmp.ne.s32.totalorder %s776, %s778
      %p785 = scmp.eq.s32.totalorder %s117, 1
      %p786 = por %p784, %p785
      %p787 = scmp.ne.s32.totalorder %s778, %s779
      %p788 = scmp.eq.s32.totalorder %s117, 0
      %p789 = por %p787, %p788
      %p790 = scmp.ne.s32.totalorder %s778, %s779
      %p791 = scmp.eq.s32.totalorder %s118, 1
      %p792 = por %p790, %p791
      %p794 = scmp.ne.s32.totalorder %s779, %s793
      %p795 = scmp.eq.s32.totalorder %s118, 0
      %p796 = por %p794, %p795
      %s798 = sadd.s32 %s797, 1
      %p801 = scmp.eq.s32.totalorder %s112, 1
      %p802 = scmp.ne.s32.totalorder %s797, %s799
      %p803 = scmp.eq.s32.totalorder %s112, 0
      %p804 = por %p802, %p803
      %p805 = scmp.ne.s32.totalorder %s797, %s799
      %p806 = scmp.eq.s32.totalorder %s117, 1
      %p807 = por %p805, %p806
      %p808 = scmp.ne.s32.totalorder %s799, %s800
      %p809 = scmp.eq.s32.totalorder %s117, 0
      %p810 = por %p808, %p809
      %p811 = scmp.ne.s32.totalorder %s799, %s800
      %p812 = scmp.eq.s32.totalorder %s118, 1
      %p813 = por %p811, %p812
      %p815 = scmp.ne.s32.totalorder %s800, %s814
      %p816 = scmp.eq.s32.totalorder %s118, 0
      %p817 = por %p815, %p816
      %s819 = sadd.s32 %s818, 1
      %p822 = scmp.eq.s32.totalorder %s112, 1
      %p823 = scmp.ne.s32.totalorder %s818, %s820
      %p824 = scmp.eq.s32.totalorder %s112, 0
      %p825 = por %p823, %p824
      %p826 = scmp.ne.s32.totalorder %s818, %s820
      %p827 = scmp.eq.s32.totalorder %s117, 1
      %p828 = por %p826, %p827
      %p829 = scmp.ne.s32.totalorder %s820, %s821
      %p830 = scmp.eq.s32.totalorder %s117, 0
      %p831 = por %p829, %p830
      %p832 = scmp.ne.s32.totalorder %s820, %s821
      %p833 = scmp.eq.s32.totalorder %s118, 1
      %p834 = por %p832, %p833
      %p836 = scmp.ne.s32.totalorder %s821, %s835
      %p837 = scmp.eq.s32.totalorder %s118, 0
      %p838 = por %p836, %p837
      %s840 = sadd.s32 %s839, 1
      %p843 = scmp.eq.s32.totalorder %s112, 1
      %p844 = scmp.ne.s32.totalorder %s839, %s841
      %p845 = scmp.eq.s32.totalorder %s112, 0
      %p846 = por %p844, %p845
      %p847 = scmp.ne.s32.totalorder %s839, %s841
      %p848 = scmp.eq.s32.totalorder %s117, 1
      %p849 = por %p847, %p848
      %p850 = scmp.ne.s32.totalorder %s841, %s842
      %p851 = scmp.eq.s32.totalorder %s117, 0
      %p852 = por %p850, %p851
      %p853 = scmp.ne.s32.totalorder %s841, %s842
      %p854 = scmp.eq.s32.totalorder %s118, 1
      %p855 = por %p853, %p854
      %p857 = scmp.ne.s32.totalorder %s842, %s856
      %p858 = scmp.eq.s32.totalorder %s118, 0
      %p859 = por %p857, %p858
      %s861 = sadd.s32 %s860, 1
      %p864 = scmp.eq.s32.totalorder %s112, 1
      %p865 = scmp.ne.s32.totalorder %s860, %s862
      %p866 = scmp.eq.s32.totalorder %s112, 0
      %p867 = por %p865, %p866
      %p868 = scmp.ne.s32.totalorder %s860, %s862
      %p869 = scmp.eq.s32.totalorder %s117, 1
      %p870 = por %p868, %p869
      %p871 = scmp.ne.s32.totalorder %s862, %s863
      %p872 = scmp.eq.s32.totalorder %s117, 0
      %p873 = por %p871, %p872
      %p874 = scmp.ne.s32.totalorder %s862, %s863
      %p875 = scmp.eq.s32.totalorder %s118, 1
      %p876 = por %p874, %p875
      %p878 = scmp.ne.s32.totalorder %s863, %s877
      %p879 = scmp.eq.s32.totalorder %s118, 0
      %p880 = por %p878, %p879
      %s882 = sadd.s32 %s881, 1
      %p885 = scmp.eq.s32.totalorder %s112, 1
      %p886 = scmp.ne.s32.totalorder %s881, %s883
      %p887 = scmp.eq.s32.totalorder %s112, 0
      %p888 = por %p886, %p887
      %p889 = scmp.ne.s32.totalorder %s881, %s883
      %p890 = scmp.eq.s32.totalorder %s117, 1
      %p891 = por %p889, %p890
      %p892 = scmp.ne.s32.totalorder %s883, %s884
      %p893 = scmp.eq.s32.totalorder %s117, 0
      %p894 = por %p892, %p893
      %p895 = scmp.ne.s32.totalorder %s883, %s884
      %p896 = scmp.eq.s32.totalorder %s118, 1
      %p897 = por %p895, %p896
      %p899 = scmp.ne.s32.totalorder %s884, %s898
      %p900 = scmp.eq.s32.totalorder %s118, 0
      %p901 = por %p899, %p900
      %s903 = sadd.s32 %s902, 1
      %p906 = scmp.eq.s32.totalorder %s112, 1
      %p907 = scmp.ne.s32.totalorder %s902, %s904
      %p908 = scmp.eq.s32.totalorder %s112, 0
      %p909 = por %p907, %p908
      %p910 = scmp.ne.s32.totalorder %s902, %s904
      %p911 = scmp.eq.s32.totalorder %s117, 1
      %p912 = por %p910, %p911
      %p913 = scmp.ne.s32.totalorder %s904, %s905
      %p914 = scmp.eq.s32.totalorder %s117, 0
      %p915 = por %p913, %p914
      %p916 = scmp.ne.s32.totalorder %s904, %s905
      %p917 = scmp.eq.s32.totalorder %s118, 1
      %p918 = por %p916, %p917
      %p920 = scmp.ne.s32.totalorder %s905, %s919
      %p921 = scmp.eq.s32.totalorder %s118, 0
      %p922 = por %p920, %p921
      %s924 = sadd.s32 %s923, 1
      %p927 = scmp.eq.s32.totalorder %s112, 1
      %p928 = scmp.ne.s32.totalorder %s923, %s925
      %p929 = scmp.eq.s32.totalorder %s112, 0
      %p930 = por %p928, %p929
      %p931 = scmp.ne.s32.totalorder %s923, %s925
      %p932 = scmp.eq.s32.totalorder %s117, 1
      %p933 = por %p931, %p932
      %p934 = scmp.ne.s32.totalorder %s925, %s926
      %p935 = scmp.eq.s32.totalorder %s117, 0
      %p936 = por %p934, %p935
      %p937 = scmp.ne.s32.totalorder %s925, %s926
      %p938 = scmp.eq.s32.totalorder %s118, 1
      %p939 = por %p937, %p938
      %p941 = scmp.ne.s32.totalorder %s926, %s940
      %p942 = scmp.eq.s32.totalorder %s118, 0
      %p943 = por %p941, %p942
      %s944 = ssub.s32 %s112, %s119
      %p945 = scmp.eq.s32.totalorder %s944, 0
      %s947 = sadd.s32 %s946, 1
      %s948 = scalar_select %p945, %s946, %s947
      %p951 = pneg %p945
      %p952 = scmp.eq.s32.totalorder %s112, 1
      %p953 = por %p951, %p952
      %p954 = scmp.ne.s32.totalorder %s946, %s949
      %p955 = scmp.eq.s32.totalorder %s112, 0
      %p956 = por %p954, %p955
      %p957 = scmp.ne.s32.totalorder %s946, %s949
      %p958 = scmp.eq.s32.totalorder %s117, 1
      %p959 = por %p957, %p958
      %p960 = scmp.ne.s32.totalorder %s949, %s950
      %p961 = scmp.eq.s32.totalorder %s117, 0
      %p962 = por %p960, %p961
      %p963 = scmp.ne.s32.totalorder %s949, %s950
      %p964 = scmp.eq.s32.totalorder %s118, 1
      %p965 = por %p963, %p964
      %p967 = scmp.ne.s32.totalorder %s950, %s966
      %p968 = scmp.eq.s32.totalorder %s118, 0
      %p969 = por %p967, %p968
      %p970 = scmp.le.s32.totalorder 1, %s112
      %p971 = scmp.lt.s32.totalorder %s112, 3
      %p972 = pnand %p970, %p971
      %p973 = pneg %p972
      // Predicated region
      $region9: #{tpu_custom_call.1} parent=5 // pred_check
        _
      $region10: #{tpu_custom_call.1} parent=5 // pred_check_branch
        %975 = sbr.rel (%p972) target = $region12
      $region11: #{tpu_custom_call.1} parent=5 // pred_region
        %s976 = ssub.s32 %s112, 1
        // Predicated region
        $region13: #{tpu_custom_call.1} parent=11 // pred_check
          %p977 = pneg %p159
        $region14: #{tpu_custom_call.1} parent=11 // pred_check_branch
          %979 = sbr.rel (%p977) target = $region16
        $region15: #{tpu_custom_call.1} parent=11 // pred_region
          %981 = vsyncadd [#allocation6], 0
          %s983 = sshll.u32 %s5, 4
          %s984 = int_to_ptr.hbm [resolvable:$true] %s983
          %s985 = sshll.u32 [#allocation5], 4
          %s986 = int_to_ptr.vmem [resolvable:$true] %s985
          %988 = dma.hbm_to_vmem [thread:$0]  %s984, 16, %s986, [#allocation6]
        $region16: #{tpu_custom_call.1} parent=11 // pred_fallthru
          _
        // Predicated region
        $region17: #{tpu_custom_call.1} parent=11 // pred_check
          %p989 = pneg %p180
        $region18: #{tpu_custom_call.1} parent=11 // pred_check_branch
          %991 = sbr.rel (%p989) target = $region20
        $region19: #{tpu_custom_call.1} parent=11 // pred_region
          %993 = vsyncadd [#allocation9], 0
          %s995 = sshll.u32 %s7, 4
          %s996 = int_to_ptr.hbm [resolvable:$true] %s995
          %s997 = sshll.u32 [#allocation8], 4
          %s998 = int_to_ptr.vmem [resolvable:$true] %s997
          %1000 = dma.hbm_to_vmem [thread:$0]  %s996, 16, %s998, [#allocation9]
        $region20: #{tpu_custom_call.1} parent=11 // pred_fallthru
          _
        // Predicated region
        $region21: #{tpu_custom_call.1} parent=11 // pred_check
          %p1001 = pneg %p201
        $region22: #{tpu_custom_call.1} parent=11 // pred_check_branch
          %1003 = sbr.rel (%p1001) target = $region24
        $region23: #{tpu_custom_call.1} parent=11 // pred_region
          _
        $region24: #{tpu_custom_call.1} parent=11 // pred_fallthru
          _
        // Predicated region
        $region25: #{tpu_custom_call.1} parent=11 // pred_check
          %p1004 = pneg %p222
        $region26: #{tpu_custom_call.1} parent=11 // pred_check_branch
          %1006 = sbr.rel (%p1004) target = $region28
        $region27: #{tpu_custom_call.1} parent=11 // pred_region
          %1008 = vsyncadd [#allocation9], 0
          %s1010 = sshll.u32 %s11, 4
          %s1011 = int_to_ptr.hbm [resolvable:$true] %s1010
          %s1012 = sshll.u32 [#allocation10], 4
          %s1013 = int_to_ptr.vmem [resolvable:$true] %s1012
          %1015 = dma.hbm_to_vmem [thread:$0]  %s1011, 16, %s1013, [#allocation9]
        $region28: #{tpu_custom_call.1} parent=11 // pred_fallthru
          _
        // Predicated region
        $region29: #{tpu_custom_call.1} parent=11 // pred_check
          %p1016 = pneg %p243
        $region30: #{tpu_custom_call.1} parent=11 // pred_check_branch
          %1018 = sbr.rel (%p1016) target = $region32
        $region31: #{tpu_custom_call.1} parent=11 // pred_region
          _
        $region32: #{tpu_custom_call.1} parent=11 // pred_fallthru
          _
        // Predicated region
        $region33: #{tpu_custom_call.1} parent=11 // pred_check
          %p1019 = pneg %p264
        $region34: #{tpu_custom_call.1} parent=11 // pred_check_branch
          %1021 = sbr.rel (%p1019) target = $region36
        $region35: #{tpu_custom_call.1} parent=11 // pred_region
          %1023 = vsyncadd [#allocation12], 0
          %s1025 = sshll.u32 %s15, 4
          %s1026 = int_to_ptr.hbm [resolvable:$true] %s1025
          %s1027 = sshll.u32 [#allocation11], 4
          %s1028 = int_to_ptr.vmem [resolvable:$true] %s1027
          %1030 = dma.hbm_to_vmem [thread:$0]  %s1026, 16, %s1028, [#allocation12]
        $region36: #{tpu_custom_call.1} parent=11 // pred_fallthru
          _
        // Predicated region
        $region37: #{tpu_custom_call.1} parent=11 // pred_check
          %p1031 = pneg %p285
        $region38: #{tpu_custom_call.1} parent=11 // pred_check_branch
          %1033 = sbr.rel (%p1031) target = $region40
        $region39: #{tpu_custom_call.1} parent=11 // pred_region
          %1035 = vsyncadd [#allocation12], 0
          %s1037 = sshll.u32 %s17, 4
          %s1038 = int_to_ptr.hbm [resolvable:$true] %s1037
          %s1039 = sshll.u32 [#allocation13], 4
          %s1040 = int_to_ptr.vmem [resolvable:$true] %s1039
          %1042 = dma.hbm_to_vmem [thread:$0]  %s1038, 16, %s1040, [#allocation12]
        $region40: #{tpu_custom_call.1} parent=11 // pred_fallthru
          _
        // Predicated region
        $region41: #{tpu_custom_call.1} parent=11 // pred_check
          %p1043 = pneg %p306
        $region42: #{tpu_custom_call.1} parent=11 // pred_check_branch
          %1045 = sbr.rel (%p1043) target = $region44
        $region43: #{tpu_custom_call.1} parent=11 // pred_region
          %1047 = vsyncadd [#allocation15], 0
          %s1049 = sshll.u32 %s19, 4
          %s1050 = int_to_ptr.hbm [resolvable:$true] %s1049
          %s1051 = sshll.u32 [#allocation14], 4
          %s1052 = int_to_ptr.vmem [resolvable:$true] %s1051
          %1054 = dma.hbm_to_vmem [thread:$0]  %s1050, 16, %s1052, [#allocation15]
        $region44: #{tpu_custom_call.1} parent=11 // pred_fallthru
          _
        // Predicated region
        $region45: #{tpu_custom_call.1} parent=11 // pred_check
          %p1055 = pneg %p327
        $region46: #{tpu_custom_call.1} parent=11 // pred_check_branch
          %1057 = sbr.rel (%p1055) target = $region48
        $region47: #{tpu_custom_call.1} parent=11 // pred_region
          _
        $region48: #{tpu_custom_call.1} parent=11 // pred_fallthru
          _
        // Predicated region
        $region49: #{tpu_custom_call.1} parent=11 // pred_check
          %p1058 = pneg %p348
        $region50: #{tpu_custom_call.1} parent=11 // pred_check_branch
          %1060 = sbr.rel (%p1058) target = $region52
        $region51: #{tpu_custom_call.1} parent=11 // pred_region
          %1062 = vsyncadd [#allocation15], 0
          %s1064 = sshll.u32 %s23, 4
          %s1065 = int_to_ptr.hbm [resolvable:$true] %s1064
          %s1066 = sshll.u32 [#allocation16], 4
          %s1067 = int_to_ptr.vmem [resolvable:$true] %s1066
          %1069 = dma.hbm_to_vmem [thread:$0]  %s1065, 16, %s1067, [#allocation15]
        $region52: #{tpu_custom_call.1} parent=11 // pred_fallthru
          _
        // Predicated region
        $region53: #{tpu_custom_call.1} parent=11 // pred_check
          %p1070 = pneg %p369
        $region54: #{tpu_custom_call.1} parent=11 // pred_check_branch
          %1072 = sbr.rel (%p1070) target = $region56
        $region55: #{tpu_custom_call.1} parent=11 // pred_region
          _
        $region56: #{tpu_custom_call.1} parent=11 // pred_fallthru
          _
        // Predicated region
        $region57: #{tpu_custom_call.1} parent=11 // pred_check
          %p1073 = pneg %p390
        $region58: #{tpu_custom_call.1} parent=11 // pred_check_branch
          %1075 = sbr.rel (%p1073) target = $region60
        $region59: #{tpu_custom_call.1} parent=11 // pred_region
          %1077 = vsyncadd [#allocation18], 0
          %s1079 = sshll.u32 %s27, 4
          %s1080 = int_to_ptr.hbm [resolvable:$true] %s1079
          %s1081 = sshll.u32 [#allocation17], 4
          %s1082 = int_to_ptr.vmem [resolvable:$true] %s1081
          %1084 = dma.hbm_to_vmem [thread:$0]  %s1080, 16, %s1082, [#allocation18]
        $region60: #{tpu_custom_call.1} parent=11 // pred_fallthru
          _
        // Predicated region
        $region61: #{tpu_custom_call.1} parent=11 // pred_check
          %p1085 = pneg %p411
        $region62: #{tpu_custom_call.1} parent=11 // pred_check_branch
          %1087 = sbr.rel (%p1085) target = $region64
        $region63: #{tpu_custom_call.1} parent=11 // pred_region
          _
        $region64: #{tpu_custom_call.1} parent=11 // pred_fallthru
          _
        // Predicated region
        $region65: #{tpu_custom_call.1} parent=11 // pred_check
          %p1088 = pneg %p432
        $region66: #{tpu_custom_call.1} parent=11 // pred_check_branch
          %1090 = sbr.rel (%p1088) target = $region68
        $region67: #{tpu_custom_call.1} parent=11 // pred_region
          %1092 = vsyncadd [#allocation18], 0
          %s1094 = sshll.u32 %s31, 4
          %s1095 = int_to_ptr.hbm [resolvable:$true] %s1094
          %s1096 = sshll.u32 [#allocation19], 4
          %s1097 = int_to_ptr.vmem [resolvable:$true] %s1096
          %1099 = dma.hbm_to_vmem [thread:$0]  %s1095, 16, %s1097, [#allocation18]
        $region68: #{tpu_custom_call.1} parent=11 // pred_fallthru
          _
        // Predicated region
        $region69: #{tpu_custom_call.1} parent=11 // pred_check
          %p1100 = pneg %p453
        $region70: #{tpu_custom_call.1} parent=11 // pred_check_branch
          %1102 = sbr.rel (%p1100) target = $region72
        $region71: #{tpu_custom_call.1} parent=11 // pred_region
          _
        $region72: #{tpu_custom_call.1} parent=11 // pred_fallthru
          _
        // Predicated region
        $region73: #{tpu_custom_call.1} parent=11 // pred_check
          %p1103 = pneg %p474
        $region74: #{tpu_custom_call.1} parent=11 // pred_check_branch
          %1105 = sbr.rel (%p1103) target = $region76
        $region75: #{tpu_custom_call.1} parent=11 // pred_region
          %1107 = vsyncadd [#allocation21], 0
          %s1109 = sshll.u32 %s35, 4
          %s1110 = int_to_ptr.hbm [resolvable:$true] %s1109
          %s1111 = sshll.u32 [#allocation20], 4
          %s1112 = int_to_ptr.vmem [resolvable:$true] %s1111
          %1114 = dma.hbm_to_vmem [thread:$0]  %s1110, 16, %s1112, [#allocation21]
        $region76: #{tpu_custom_call.1} parent=11 // pred_fallthru
          _
        // Predicated region
        $region77: #{tpu_custom_call.1} parent=11 // pred_check
          %p1115 = pneg %p495
        $region78: #{tpu_custom_call.1} parent=11 // pred_check_branch
          %1117 = sbr.rel (%p1115) target = $region80
        $region79: #{tpu_custom_call.1} parent=11 // pred_region
          %1119 = vsyncadd [#allocation21], 0
          %s1121 = sshll.u32 %s37, 4
          %s1122 = int_to_ptr.hbm [resolvable:$true] %s1121
          %s1123 = sshll.u32 [#allocation22], 4
          %s1124 = int_to_ptr.vmem [resolvable:$true] %s1123
          %1126 = dma.hbm_to_vmem [thread:$0]  %s1122, 16, %s1124, [#allocation21]
        $region80: #{tpu_custom_call.1} parent=11 // pred_fallthru
          _
        // Predicated region
        $region81: #{tpu_custom_call.1} parent=11 // pred_check
          %p1127 = pneg %p516
        $region82: #{tpu_custom_call.1} parent=11 // pred_check_branch
          %1129 = sbr.rel (%p1127) target = $region84
        $region83: #{tpu_custom_call.1} parent=11 // pred_region
          %1131 = vsyncadd [#allocation24], 0
          %s1133 = sshll.u32 %s39, 4
          %s1134 = int_to_ptr.hbm [resolvable:$true] %s1133
          %s1135 = sshll.u32 [#allocation23], 4
          %s1136 = int_to_ptr.vmem [resolvable:$true] %s1135
          %1138 = dma.hbm_to_vmem [thread:$0]  %s1134, 16, %s1136, [#allocation24]
        $region84: #{tpu_custom_call.1} parent=11 // pred_fallthru
          _
        // Predicated region
        $region85: #{tpu_custom_call.1} parent=11 // pred_check
          %p1139 = pneg %p537
        $region86: #{tpu_custom_call.1} parent=11 // pred_check_branch
          %1141 = sbr.rel (%p1139) target = $region88
        $region87: #{tpu_custom_call.1} parent=11 // pred_region
          _
        $region88: #{tpu_custom_call.1} parent=11 // pred_fallthru
          _
        // Predicated region
        $region89: #{tpu_custom_call.1} parent=11 // pred_check
          %p1142 = pneg %p558
        $region90: #{tpu_custom_call.1} parent=11 // pred_check_branch
          %1144 = sbr.rel (%p1142) target = $region92
        $region91: #{tpu_custom_call.1} parent=11 // pred_region
          %1146 = vsyncadd [#allocation24], 0
          %s1148 = sshll.u32 %s43, 4
          %s1149 = int_to_ptr.hbm [resolvable:$true] %s1148
          %s1150 = sshll.u32 [#allocation25], 4
          %s1151 = int_to_ptr.vmem [resolvable:$true] %s1150
          %1153 = dma.hbm_to_vmem [thread:$0]  %s1149, 16, %s1151, [#allocation24]
        $region92: #{tpu_custom_call.1} parent=11 // pred_fallthru
          _
        // Predicated region
        $region93: #{tpu_custom_call.1} parent=11 // pred_check
          %p1154 = pneg %p579
        $region94: #{tpu_custom_call.1} parent=11 // pred_check_branch
          %1156 = sbr.rel (%p1154) target = $region96
        $region95: #{tpu_custom_call.1} parent=11 // pred_region
          %1158 = vsyncadd [#allocation27], 0
          %s1159 = sshll.u32 %s45, 4
          %s1160 = int_to_ptr.hbm [resolvable:$true] %s1159
          %s1161 = sshll.u32 [#allocation26], 4
          %s1162 = int_to_ptr.vmem [resolvable:$true] %s1161
          %1167 = dma.hbm_to_vmem [thread:$0]  %s1160, 256, %s1162, [#allocation27], 64, 64, 4
        $region96: #{tpu_custom_call.1} parent=11 // pred_fallthru
          _
        // Predicated region
        $region97: #{tpu_custom_call.1} parent=11 // pred_check
          %p1168 = pneg %p600
        $region98: #{tpu_custom_call.1} parent=11 // pred_check_branch
          %1170 = sbr.rel (%p1168) target = $region100
        $region99: #{tpu_custom_call.1} parent=11 // pred_region
          %1172 = vsyncadd [#allocation27], 0
          %s1174 = sshll.u32 %s47, 4
          %s1175 = int_to_ptr.hbm [resolvable:$true] %s1174
          %s1176 = sshll.u32 [#allocation28], 4
          %s1177 = int_to_ptr.vmem [resolvable:$true] %s1176
          %1179 = dma.hbm_to_vmem [thread:$0]  %s1175, 16, %s1177, [#allocation27]
        $region100: #{tpu_custom_call.1} parent=11 // pred_fallthru
          _
        // Predicated region
        $region101: #{tpu_custom_call.1} parent=11 // pred_check
          %p1180 = pneg %p621
        $region102: #{tpu_custom_call.1} parent=11 // pred_check_branch
          %1182 = sbr.rel (%p1180) target = $region104
        $region103: #{tpu_custom_call.1} parent=11 // pred_region
          %1184 = vsyncadd [#allocation30], 0
          %s1185 = sshll.u32 %s49, 4
          %s1186 = int_to_ptr.hbm [resolvable:$true] %s1185
          %s1187 = sshll.u32 [#allocation29], 4
          %s1188 = int_to_ptr.vmem [resolvable:$true] %s1187
          %1193 = dma.hbm_to_vmem [thread:$0]  %s1186, 112, %s1188, [#allocation30], 16, 16, 1
        $region104: #{tpu_custom_call.1} parent=11 // pred_fallthru
          _
        // Predicated region
        $region105: #{tpu_custom_call.1} parent=11 // pred_check
          %p1194 = pneg %p642
        $region106: #{tpu_custom_call.1} parent=11 // pred_check_branch
          %1196 = sbr.rel (%p1194) target = $region108
        $region107: #{tpu_custom_call.1} parent=11 // pred_region
          %1198 = vsyncadd [#allocation30], 0
          %s1200 = sshll.u32 %s51, 4
          %s1201 = int_to_ptr.hbm [resolvable:$true] %s1200
          %s1202 = sshll.u32 [#allocation31], 4
          %s1203 = int_to_ptr.vmem [resolvable:$true] %s1202
          %1205 = dma.hbm_to_vmem [thread:$0]  %s1201, 16, %s1203, [#allocation30]
        $region108: #{tpu_custom_call.1} parent=11 // pred_fallthru
          _
        // Predicated region
        $region109: #{tpu_custom_call.1} parent=11 // pred_check
          %p1206 = pneg %p663
        $region110: #{tpu_custom_call.1} parent=11 // pred_check_branch
          %1208 = sbr.rel (%p1206) target = $region112
        $region111: #{tpu_custom_call.1} parent=11 // pred_region
          %1210 = vsyncadd [#allocation33], 0
          %s1212 = sshll.u32 %s53, 4
          %s1213 = int_to_ptr.hbm [resolvable:$true] %s1212
          %s1214 = sshll.u32 [#allocation32], 4
          %s1215 = int_to_ptr.vmem [resolvable:$true] %s1214
          %1217 = dma.hbm_to_vmem [thread:$0]  %s1213, 16, %s1215, [#allocation33]
        $region112: #{tpu_custom_call.1} parent=11 // pred_fallthru
          _
        // Predicated region
        $region113: #{tpu_custom_call.1} parent=11 // pred_check
          %p1218 = pneg %p684
        $region114: #{tpu_custom_call.1} parent=11 // pred_check_branch
          %1220 = sbr.rel (%p1218) target = $region116
        $region115: #{tpu_custom_call.1} parent=11 // pred_region
          %1222 = vsyncadd [#allocation33], 0
          %s1224 = sshll.u32 %s55, 4
          %s1225 = int_to_ptr.hbm [resolvable:$true] %s1224
          %s1226 = sshll.u32 [#allocation34], 4
          %s1227 = int_to_ptr.vmem [resolvable:$true] %s1226
          %1229 = dma.hbm_to_vmem [thread:$0]  %s1225, 16, %s1227, [#allocation33]
        $region116: #{tpu_custom_call.1} parent=11 // pred_fallthru
          _
        // Predicated region
        $region117: #{tpu_custom_call.1} parent=11 // pred_check
          %p1230 = pneg %p705
        $region118: #{tpu_custom_call.1} parent=11 // pred_check_branch
          %1232 = sbr.rel (%p1230) target = $region120
        $region119: #{tpu_custom_call.1} parent=11 // pred_region
          %1234 = vsyncadd [#allocation36], 0
          %s1236 = sshll.u32 %s57, 4
          %s1237 = int_to_ptr.hbm [resolvable:$true] %s1236
          %s1238 = sshll.u32 [#allocation35], 4
          %s1239 = int_to_ptr.vmem [resolvable:$true] %s1238
          %1241 = dma.hbm_to_vmem [thread:$0]  %s1237, 16, %s1239, [#allocation36]
        $region120: #{tpu_custom_call.1} parent=11 // pred_fallthru
          _
        // Predicated region
        $region121: #{tpu_custom_call.1} parent=11 // pred_check
          %p1242 = pneg %p726
        $region122: #{tpu_custom_call.1} parent=11 // pred_check_branch
          %1244 = sbr.rel (%p1242) target = $region124
        $region123: #{tpu_custom_call.1} parent=11 // pred_region
          %1246 = vsyncadd [#allocation36], 0
          %s1248 = sshll.u32 %s59, 4
          %s1249 = int_to_ptr.hbm [resolvable:$true] %s1248
          %s1250 = sshll.u32 [#allocation37], 4
          %s1251 = int_to_ptr.vmem [resolvable:$true] %s1250
          %1253 = dma.hbm_to_vmem [thread:$0]  %s1249, 16, %s1251, [#allocation36]
        $region124: #{tpu_custom_call.1} parent=11 // pred_fallthru
          _
        // Predicated region
        $region125: #{tpu_custom_call.1} parent=11 // pred_check
          %p1254 = pneg %p747
        $region126: #{tpu_custom_call.1} parent=11 // pred_check_branch
          %1256 = sbr.rel (%p1254) target = $region128
        $region127: #{tpu_custom_call.1} parent=11 // pred_region
          %1258 = vsyncadd [#allocation39], 0
          %s1259 = sshll.u32 %s61, 4
          %s1260 = int_to_ptr.hbm [resolvable:$true] %s1259
          %s1261 = sshll.u32 [#allocation38], 4
          %s1262 = int_to_ptr.vmem [resolvable:$true] %s1261
          %1267 = dma.hbm_to_vmem [thread:$0]  %s1260, 256, %s1262, [#allocation39], 64, 64, 4
        $region128: #{tpu_custom_call.1} parent=11 // pred_fallthru
          _
        // Predicated region
        $region129: #{tpu_custom_call.1} parent=11 // pred_check
          %p1268 = pneg %p768
        $region130: #{tpu_custom_call.1} parent=11 // pred_check_branch
          %1270 = sbr.rel (%p1268) target = $region132
        $region131: #{tpu_custom_call.1} parent=11 // pred_region
          %1272 = vsyncadd [#allocation39], 0
          %s1274 = sshll.u32 %s63, 4
          %s1275 = int_to_ptr.hbm [resolvable:$true] %s1274
          %s1276 = sshll.u32 [#allocation40], 4
          %s1277 = int_to_ptr.vmem [resolvable:$true] %s1276
          %1279 = dma.hbm_to_vmem [thread:$0]  %s1275, 16, %s1277, [#allocation39]
        $region132: #{tpu_custom_call.1} parent=11 // pred_fallthru
          _
        // Predicated region
        $region133: #{tpu_custom_call.1} parent=11 // pred_check
          %p1280 = pneg %p789
        $region134: #{tpu_custom_call.1} parent=11 // pred_check_branch
          %1282 = sbr.rel (%p1280) target = $region136
        $region135: #{tpu_custom_call.1} parent=11 // pred_region
          %1284 = vsyncadd [#allocation42], 0
          %s1286 = sshll.u32 %s65, 4
          %s1287 = int_to_ptr.hbm [resolvable:$true] %s1286
          %s1288 = sshll.u32 [#allocation41], 4
          %s1289 = int_to_ptr.vmem [resolvable:$true] %s1288
          %1291 = dma.hbm_to_vmem [thread:$0]  %s1287, 16, %s1289, [#allocation42]
        $region136: #{tpu_custom_call.1} parent=11 // pred_fallthru
          _
        // Predicated region
        $region137: #{tpu_custom_call.1} parent=11 // pred_check
          %p1292 = pneg %p810
        $region138: #{tpu_custom_call.1} parent=11 // pred_check_branch
          %1294 = sbr.rel (%p1292) target = $region140
        $region139: #{tpu_custom_call.1} parent=11 // pred_region
          %1296 = vsyncadd [#allocation42], 0
          %s1298 = sshll.u32 %s67, 4
          %s1299 = int_to_ptr.hbm [resolvable:$true] %s1298
          %s1300 = sshll.u32 [#allocation43], 4
          %s1301 = int_to_ptr.vmem [resolvable:$true] %s1300
          %1303 = dma.hbm_to_vmem [thread:$0]  %s1299, 16, %s1301, [#allocation42]
        $region140: #{tpu_custom_call.1} parent=11 // pred_fallthru
          _
        // Predicated region
        $region141: #{tpu_custom_call.1} parent=11 // pred_check
          %p1304 = pneg %p831
        $region142: #{tpu_custom_call.1} parent=11 // pred_check_branch
          %1306 = sbr.rel (%p1304) target = $region144
        $region143: #{tpu_custom_call.1} parent=11 // pred_region
          _
        $region144: #{tpu_custom_call.1} parent=11 // pred_fallthru
          _
        // Predicated region
        $region145: #{tpu_custom_call.1} parent=11 // pred_check
          %p1307 = pneg %p852
        $region146: #{tpu_custom_call.1} parent=11 // pred_check_branch
          %1309 = sbr.rel (%p1307) target = $region148
        $region147: #{tpu_custom_call.1} parent=11 // pred_region
          %1311 = vsyncadd [#allocation45], 0
          %s1313 = sshll.u32 %s71, 4
          %s1314 = int_to_ptr.hbm [resolvable:$true] %s1313
          %s1315 = sshll.u32 [#allocation44], 4
          %s1316 = int_to_ptr.vmem [resolvable:$true] %s1315
          %1318 = dma.hbm_to_vmem [thread:$0]  %s1314, 16, %s1316, [#allocation45]
        $region148: #{tpu_custom_call.1} parent=11 // pred_fallthru
          _
        // Predicated region
        $region149: #{tpu_custom_call.1} parent=11 // pred_check
          %p1319 = pneg %p873
        $region150: #{tpu_custom_call.1} parent=11 // pred_check_branch
          %1321 = sbr.rel (%p1319) target = $region152
        $region151: #{tpu_custom_call.1} parent=11 // pred_region
          _
        $region152: #{tpu_custom_call.1} parent=11 // pred_fallthru
          _
        // Predicated region
        $region153: #{tpu_custom_call.1} parent=11 // pred_check
          %p1322 = pneg %p894
        $region154: #{tpu_custom_call.1} parent=11 // pred_check_branch
          %1324 = sbr.rel (%p1322) target = $region156
        $region155: #{tpu_custom_call.1} parent=11 // pred_region
          _
        $region156: #{tpu_custom_call.1} parent=11 // pred_fallthru
          _
        // Predicated region
        $region157: #{tpu_custom_call.1} parent=11 // pred_check
          %p1325 = pneg %p915
        $region158: #{tpu_custom_call.1} parent=11 // pred_check_branch
          %1327 = sbr.rel (%p1325) target = $region160
        $region159: #{tpu_custom_call.1} parent=11 // pred_region
          _
        $region160: #{tpu_custom_call.1} parent=11 // pred_fallthru
          _
        // Predicated region
        $region161: #{tpu_custom_call.1} parent=11 // pred_check
          %p1328 = pneg %p936
        $region162: #{tpu_custom_call.1} parent=11 // pred_check_branch
          %1330 = sbr.rel (%p1328) target = $region164
        $region163: #{tpu_custom_call.1} parent=11 // pred_region
          _
        $region164: #{tpu_custom_call.1} parent=11 // pred_fallthru
          _
      $region12: #{tpu_custom_call.1} parent=5 // pred_fallthru
        _
      %p1331 = scmp.lt.s32.totalorder %s112, 2
      // Predicated region
      $region165: #{tpu_custom_call.1} parent=5 // pred_check
        %p1332 = pneg %p1331
      $region166: #{tpu_custom_call.1} parent=5 // pred_check_branch
        %1334 = sbr.rel (%p1332) target = $region168
      $region167: #{tpu_custom_call.1} parent=5 // pred_region
        // Predicated region
        $region169: #{tpu_custom_call.1} parent=167 // pred_check
          %p1335 = pneg %p132
        $region170: #{tpu_custom_call.1} parent=167 // pred_check_branch
          %1337 = sbr.rel (%p1335) target = $region172
        $region171: #{tpu_custom_call.1} parent=167 // pred_region
          %p1338 = scmp.lt.s32.totalorder %s112, 1
          %s1339 = scalar_select %p1338, %s112, 1
          %s1340 = smul.addr %s1339, 8
          %s1341 = scalar_lea.vmem %s3, %s1340
        $region172: #{tpu_custom_call.1} parent=167 // pred_fallthru
          _
      $region168: #{tpu_custom_call.1} parent=5 // pred_fallthru
        _
      %p1342 = scmp.le.s32.totalorder 1, %s112
      %p1343 = scmp.lt.s32.totalorder %s112, 3
      %p1344 = pnand %p1342, %p1343
      %p1345 = pneg %p1344
      // Predicated region
      $region173: #{tpu_custom_call.1} parent=5 // pred_check
        _
      $region174: #{tpu_custom_call.1} parent=5 // pred_check_branch
        %1347 = sbr.rel (%p1344) target = $region176
      $region175: #{tpu_custom_call.1} parent=5 // pred_region
        %s1348 = ssub.s32 %s112, 1
        // Predicated region
        $region177: #{tpu_custom_call.1} parent=175 // pred_check
          %p1349 = pneg %p159
        $region178: #{tpu_custom_call.1} parent=175 // pred_check_branch
          %1351 = sbr.rel (%p1349) target = $region180
        $region179: #{tpu_custom_call.1} parent=175 // pred_region
          %1353 = dma.done [#allocation6], 16
        $region180: #{tpu_custom_call.1} parent=175 // pred_fallthru
          _
        // Predicated region
        $region181: #{tpu_custom_call.1} parent=175 // pred_check
          %p1354 = pneg %p180
        $region182: #{tpu_custom_call.1} parent=175 // pred_check_branch
          %1356 = sbr.rel (%p1354) target = $region184
        $region183: #{tpu_custom_call.1} parent=175 // pred_region
          %1358 = dma.done [#allocation9], 16
        $region184: #{tpu_custom_call.1} parent=175 // pred_fallthru
          _
        // Predicated region
        $region185: #{tpu_custom_call.1} parent=175 // pred_check
          %p1359 = pneg %p222
        $region186: #{tpu_custom_call.1} parent=175 // pred_check_branch
          %1361 = sbr.rel (%p1359) target = $region188
        $region187: #{tpu_custom_call.1} parent=175 // pred_region
          %1363 = dma.done [#allocation9], 16
        $region188: #{tpu_custom_call.1} parent=175 // pred_fallthru
          _
        // Predicated region
        $region189: #{tpu_custom_call.1} parent=175 // pred_check
          %p1364 = pneg %p264
        $region190: #{tpu_custom_call.1} parent=175 // pred_check_branch
          %1366 = sbr.rel (%p1364) target = $region192
        $region191: #{tpu_custom_call.1} parent=175 // pred_region
          %1368 = dma.done [#allocation12], 16
        $region192: #{tpu_custom_call.1} parent=175 // pred_fallthru
          _
        // Predicated region
        $region193: #{tpu_custom_call.1} parent=175 // pred_check
          %p1369 = pneg %p285
        $region194: #{tpu_custom_call.1} parent=175 // pred_check_branch
          %1371 = sbr.rel (%p1369) target = $region196
        $region195: #{tpu_custom_call.1} parent=175 // pred_region
          %1373 = dma.done [#allocation12], 16
        $region196: #{tpu_custom_call.1} parent=175 // pred_fallthru
          _
        // Predicated region
        $region197: #{tpu_custom_call.1} parent=175 // pred_check
          %p1374 = pneg %p306
        $region198: #{tpu_custom_call.1} parent=175 // pred_check_branch
          %1376 = sbr.rel (%p1374) target = $region200
        $region199: #{tpu_custom_call.1} parent=175 // pred_region
          %1378 = dma.done [#allocation15], 16
        $region200: #{tpu_custom_call.1} parent=175 // pred_fallthru
          _
        // Predicated region
        $region201: #{tpu_custom_call.1} parent=175 // pred_check
          %p1379 = pneg %p348
        $region202: #{tpu_custom_call.1} parent=175 // pred_check_branch
          %1381 = sbr.rel (%p1379) target = $region204
        $region203: #{tpu_custom_call.1} parent=175 // pred_region
          %1383 = dma.done [#allocation15], 16
        $region204: #{tpu_custom_call.1} parent=175 // pred_fallthru
          _
        // Predicated region
        $region205: #{tpu_custom_call.1} parent=175 // pred_check
          %p1384 = pneg %p390
        $region206: #{tpu_custom_call.1} parent=175 // pred_check_branch
          %1386 = sbr.rel (%p1384) target = $region208
        $region207: #{tpu_custom_call.1} parent=175 // pred_region
          %1388 = dma.done [#allocation18], 16
        $region208: #{tpu_custom_call.1} parent=175 // pred_fallthru
          _
        // Predicated region
        $region209: #{tpu_custom_call.1} parent=175 // pred_check
          %p1389 = pneg %p432
        $region210: #{tpu_custom_call.1} parent=175 // pred_check_branch
          %1391 = sbr.rel (%p1389) target = $region212
        $region211: #{tpu_custom_call.1} parent=175 // pred_region
          %1393 = dma.done [#allocation18], 16
        $region212: #{tpu_custom_call.1} parent=175 // pred_fallthru
          _
        // Predicated region
        $region213: #{tpu_custom_call.1} parent=175 // pred_check
          %p1394 = pneg %p474
        $region214: #{tpu_custom_call.1} parent=175 // pred_check_branch
          %1396 = sbr.rel (%p1394) target = $region216
        $region215: #{tpu_custom_call.1} parent=175 // pred_region
          %1398 = dma.done [#allocation21], 16
        $region216: #{tpu_custom_call.1} parent=175 // pred_fallthru
          _
        // Predicated region
        $region217: #{tpu_custom_call.1} parent=175 // pred_check
          %p1399 = pneg %p495
        $region218: #{tpu_custom_call.1} parent=175 // pred_check_branch
          %1401 = sbr.rel (%p1399) target = $region220
        $region219: #{tpu_custom_call.1} parent=175 // pred_region
          %1403 = dma.done [#allocation21], 16
        $region220: #{tpu_custom_call.1} parent=175 // pred_fallthru
          _
        // Predicated region
        $region221: #{tpu_custom_call.1} parent=175 // pred_check
          %p1404 = pneg %p516
        $region222: #{tpu_custom_call.1} parent=175 // pred_check_branch
          %1406 = sbr.rel (%p1404) target = $region224
        $region223: #{tpu_custom_call.1} parent=175 // pred_region
          %1408 = dma.done [#allocation24], 16
        $region224: #{tpu_custom_call.1} parent=175 // pred_fallthru
          _
        // Predicated region
        $region225: #{tpu_custom_call.1} parent=175 // pred_check
          %p1409 = pneg %p558
        $region226: #{tpu_custom_call.1} parent=175 // pred_check_branch
          %1411 = sbr.rel (%p1409) target = $region228
        $region227: #{tpu_custom_call.1} parent=175 // pred_region
          %1413 = dma.done [#allocation24], 16
        $region228: #{tpu_custom_call.1} parent=175 // pred_fallthru
          _
        // Predicated region
        $region229: #{tpu_custom_call.1} parent=175 // pred_check
          %p1414 = pneg %p579
        $region230: #{tpu_custom_call.1} parent=175 // pred_check_branch
          %1416 = sbr.rel (%p1414) target = $region232
        $region231: #{tpu_custom_call.1} parent=175 // pred_region
          %1418 = dma.done [#allocation27], 256
        $region232: #{tpu_custom_call.1} parent=175 // pred_fallthru
          _
        // Predicated region
        $region233: #{tpu_custom_call.1} parent=175 // pred_check
          %p1419 = pneg %p600
        $region234: #{tpu_custom_call.1} parent=175 // pred_check_branch
          %1421 = sbr.rel (%p1419) target = $region236
        $region235: #{tpu_custom_call.1} parent=175 // pred_region
          %1423 = dma.done [#allocation27], 16
        $region236: #{tpu_custom_call.1} parent=175 // pred_fallthru
          _
        // Predicated region
        $region237: #{tpu_custom_call.1} parent=175 // pred_check
          %p1424 = pneg %p621
        $region238: #{tpu_custom_call.1} parent=175 // pred_check_branch
          %1426 = sbr.rel (%p1424) target = $region240
        $region239: #{tpu_custom_call.1} parent=175 // pred_region
          %1428 = dma.done [#allocation30], 112
        $region240: #{tpu_custom_call.1} parent=175 // pred_fallthru
          _
        // Predicated region
        $region241: #{tpu_custom_call.1} parent=175 // pred_check
          %p1429 = pneg %p642
        $region242: #{tpu_custom_call.1} parent=175 // pred_check_branch
          %1431 = sbr.rel (%p1429) target = $region244
        $region243: #{tpu_custom_call.1} parent=175 // pred_region
          %1433 = dma.done [#allocation30], 16
        $region244: #{tpu_custom_call.1} parent=175 // pred_fallthru
          _
        // Predicated region
        $region245: #{tpu_custom_call.1} parent=175 // pred_check
          %p1434 = pneg %p663
        $region246: #{tpu_custom_call.1} parent=175 // pred_check_branch
          %1436 = sbr.rel (%p1434) target = $region248
        $region247: #{tpu_custom_call.1} parent=175 // pred_region
          %1438 = dma.done [#allocation33], 16
        $region248: #{tpu_custom_call.1} parent=175 // pred_fallthru
          _
        // Predicated region
        $region249: #{tpu_custom_call.1} parent=175 // pred_check
          %p1439 = pneg %p684
        $region250: #{tpu_custom_call.1} parent=175 // pred_check_branch
          %1441 = sbr.rel (%p1439) target = $region252
        $region251: #{tpu_custom_call.1} parent=175 // pred_region
          %1443 = dma.done [#allocation33], 16
        $region252: #{tpu_custom_call.1} parent=175 // pred_fallthru
          _
        // Predicated region
        $region253: #{tpu_custom_call.1} parent=175 // pred_check
          %p1444 = pneg %p705
        $region254: #{tpu_custom_call.1} parent=175 // pred_check_branch
          %1446 = sbr.rel (%p1444) target = $region256
        $region255: #{tpu_custom_call.1} parent=175 // pred_region
          %1448 = dma.done [#allocation36], 16
        $region256: #{tpu_custom_call.1} parent=175 // pred_fallthru
          _
        // Predicated region
        $region257: #{tpu_custom_call.1} parent=175 // pred_check
          %p1449 = pneg %p726
        $region258: #{tpu_custom_call.1} parent=175 // pred_check_branch
          %1451 = sbr.rel (%p1449) target = $region260
        $region259: #{tpu_custom_call.1} parent=175 // pred_region
          %1453 = dma.done [#allocation36], 16
        $region260: #{tpu_custom_call.1} parent=175 // pred_fallthru
          _
        // Predicated region
        $region261: #{tpu_custom_call.1} parent=175 // pred_check
          %p1454 = pneg %p747
        $region262: #{tpu_custom_call.1} parent=175 // pred_check_branch
          %1456 = sbr.rel (%p1454) target = $region264
        $region263: #{tpu_custom_call.1} parent=175 // pred_region
          %1458 = dma.done [#allocation39], 256
        $region264: #{tpu_custom_call.1} parent=175 // pred_fallthru
          _
        // Predicated region
        $region265: #{tpu_custom_call.1} parent=175 // pred_check
          %p1459 = pneg %p768
        $region266: #{tpu_custom_call.1} parent=175 // pred_check_branch
          %1461 = sbr.rel (%p1459) target = $region268
        $region267: #{tpu_custom_call.1} parent=175 // pred_region
          %1463 = dma.done [#allocation39], 16
        $region268: #{tpu_custom_call.1} parent=175 // pred_fallthru
          _
        // Predicated region
        $region269: #{tpu_custom_call.1} parent=175 // pred_check
          %p1464 = pneg %p789
        $region270: #{tpu_custom_call.1} parent=175 // pred_check_branch
          %1466 = sbr.rel (%p1464) target = $region272
        $region271: #{tpu_custom_call.1} parent=175 // pred_region
          %1468 = dma.done [#allocation42], 16
        $region272: #{tpu_custom_call.1} parent=175 // pred_fallthru
          _
        // Predicated region
        $region273: #{tpu_custom_call.1} parent=175 // pred_check
          %p1469 = pneg %p810
        $region274: #{tpu_custom_call.1} parent=175 // pred_check_branch
          %1471 = sbr.rel (%p1469) target = $region276
        $region275: #{tpu_custom_call.1} parent=175 // pred_region
          %1473 = dma.done [#allocation42], 16
        $region276: #{tpu_custom_call.1} parent=175 // pred_fallthru
          _
        // Predicated region
        $region277: #{tpu_custom_call.1} parent=175 // pred_check
          %p1474 = pneg %p852
        $region278: #{tpu_custom_call.1} parent=175 // pred_check_branch
          %1476 = sbr.rel (%p1474) target = $region280
        $region279: #{tpu_custom_call.1} parent=175 // pred_region
          %1478 = dma.done [#allocation45], 16
        $region280: #{tpu_custom_call.1} parent=175 // pred_fallthru
          _
        %p1479 = scmp.lt.s32.totalorder %s117, 1
        %s1480 = scalar_select %p1479, %s117, 1
        %s1481 = smul.addr %s1480, 8
        %s1482 = scalar_lea.vmem %s3, %s1481
        %p1483 = pneg %p138
        %p1484 = pneg %p135
        %p1485 = pneg %p159
        %p1486 = pneg %p156
        %p1487 = pneg %p180
        %p1488 = pneg %p177
        %p1489 = pneg %p201
        %p1490 = pneg %p198
        %p1491 = pneg %p222
        %p1492 = pneg %p219
        %p1493 = pneg %p243
        %p1494 = pneg %p240
        %p1495 = pneg %p264
        %p1496 = pneg %p261
        %p1497 = pneg %p285
        %p1498 = pneg %p282
        %p1499 = pneg %p306
        %p1500 = pneg %p303
        %p1501 = pneg %p327
        %p1502 = pneg %p324
        %p1503 = pneg %p348
        %p1504 = pneg %p345
        %p1505 = pneg %p369
        %p1506 = pneg %p366
        %p1507 = pneg %p390
        %p1508 = pneg %p387
        %p1509 = pneg %p411
        %p1510 = pneg %p408
        %p1511 = pneg %p432
        %p1512 = pneg %p429
        %p1513 = pneg %p453
        %p1514 = pneg %p450
        %p1515 = pneg %p474
        %p1516 = pneg %p471
        %p1517 = pneg %p495
        %p1518 = pneg %p492
        %p1519 = pneg %p516
        %p1520 = pneg %p513
        %p1521 = pneg %p537
        %p1522 = pneg %p534
        %p1523 = pneg %p558
        %p1524 = pneg %p555
        %p1525 = pneg %p579
        %p1526 = pneg %p576
        %p1527 = pneg %p600
        %p1528 = pneg %p597
        %p1529 = pneg %p621
        %p1530 = pneg %p618
        %p1531 = pneg %p642
        %p1532 = pneg %p639
        %p1533 = pneg %p663
        %p1534 = pneg %p660
        %p1535 = pneg %p684
        %p1536 = pneg %p681
        %p1537 = pneg %p705
        %p1538 = pneg %p702
        %p1539 = pneg %p726
        %p1540 = pneg %p723
        %p1541 = pneg %p747
        %p1542 = pneg %p744
        %p1543 = pneg %p768
        %p1544 = pneg %p765
        %p1545 = pneg %p789
        %p1546 = pneg %p786
        %p1547 = pneg %p810
        %p1548 = pneg %p807
        %p1549 = pneg %p831
        %p1550 = pneg %p828
        %p1551 = pneg %p852
        %p1552 = pneg %p849
        %p1553 = pneg %p873
        %p1554 = pneg %p870
        %p1555 = pneg %p894
        %p1556 = pneg %p891
        %p1557 = pneg %p915
        %p1558 = pneg %p912
        %p1559 = pneg %p936
        %p1560 = pneg %p933
        %p1561 = pneg %p962
        %p1562 = pneg %p959
        %s1563 = sand.u32 %s949, 1
        %s1564 = scalar_lea.sflag [#allocation7], %s1563
        %s1565 = sand.u32 %s949, 1
        %s1566 = smul.addr %s1565, 8
        %s1567 = scalar_lea.vmem [#allocation46], %s1566
        %p1568 = scmp.lt.s32.totalorder %s117, 1
        %s1569 = scalar_select %p1568, %s117, 1
        %s1570 = smul.addr %s1569, 8
        %s1571 = scalar_lea.vmem %s3, %s1570
        %v1573 = vld [vmem:[%s1571] sm:$0xff]
        %s1574 = sld [smem:[#allocation4 + %s117]]
        %v1575 = vlaneseq
        %v1576 = vand.u32 %v1575, 127
        %v1577 = vstv %s1574
        %vm1578 = vcmp.lt.s32.totalorder %v1576, %v1577
        %v1579 = vsel %vm1578, 0.0, -1e+30
        %v1580 = vld [vmem:[#allocation5] sm:$0x1]
        %v1581 = vld [vmem:[#allocation8] sm:$0x1]
        %vm1582 = vcmask 261120
        %v1583 = vsel %vm1582, %v1573, 0.0
        %1584 = vadd.xlane.f32.xlu0 %v1583
        %v1585 = vpop.xlane.xlu0 %1584
        %v1586 = vrcp.pop 32.0
        %v1587 = vmul.f32 32.0, %v1586
        %v1588 = vsub.f32 1.0, %v1587
        %v1589 = vmul.f32 %v1586, %v1588
        %v1590 = vadd.f32 %v1586, %v1589
        %vm1591 = vweird.f32 %v1586
        %v1592 = vsel %vm1591, %v1586, %v1590
        %v1593 = vmul.f32 %v1585, %v1592
        %v1594 = vsub.f32 %v1573, %v1593
        %v1595 = vmul.f32 %v1594, %v1594
        %v1596 = vsel %vm1582, %v1595, 0.0
        %1597 = vadd.xlane.f32.xlu0 %v1596
        %v1598 = vpop.xlane.xlu0 %1597
        %v1599 = vmul.f32 %v1598, %v1592
        %v1600 = vadd.f32 %v1599, 1e-05
        %v1601 = vrsqrt.pop %v1600
        %v1602 = vmul.f32 %v1601, %v1600
        %v1603 = vmul.f32 %v1602, %v1601
        %v1604 = vmul.f32 0.5, %v1603
        %v1605 = vsub.f32 1.5, %v1604
        %v1606 = vmul.f32 %v1601, %v1605
        %vm1607 = vweird.f32 %v1600
        %vm1608 = vweird.f32 %v1601
        %vm1609 = vmor %vm1607, %vm1608
        %v1610 = vsel %vm1609, %v1601, %v1606
        %v1611 = vmul.f32 %v1594, %v1610
        %v1613 = vperm.slane %v1580, 0
        %v1615 = vmul.f32 %v1611, %v1613
        %v1617 = vperm.slane %v1581, 0
        %v1619 = vadd.f32 %v1615, %v1617
        %v1620 = vpack.c.bf16 %v1619, %v1619
        %v1621 = vld [vmem:[%s9] sm:$0xf]
        %v1622 = vld [vmem:[%s9 + $0x4] sm:$0xf]
        %v1623 = vld [vmem:[%s9 + $0x8] sm:$0xf]
        %v1624 = vld [vmem:[%s9 + $0xc] sm:$0xf]
        %v1625 = vld [vmem:[#allocation10] sm:$0x1]
        %v1627 = vperm.slane %v1625, 0
        %v1633 = vunpack.c.l.b16 %v1621
        %v1634 = vunpack.c.l.b16 %v1622
        %v1635 = vunpack.c.l.b16 %v1623
        %v1636 = vunpack.c.l.b16 %v1624
        %v1637 = vpack.c.b16 %v1634, %v1633
        %v1638 = vpack.c.b16 %v1636, %v1635
        %v1642 = vsel %vm1582, %v1620, 0
        %1644 = vmatpush.bf16.msra.mxu0 0
        %1645 = vmatpush.bf16.msra.mxu0 0
        %1646 = vmatpush.bf16.msra.mxu0 0
        %1647 = vmatpush.bf16.msra.mxu0 0
        %1648 = vmatpush.bf16.msra.mxu0 0
        %1649 = vmatpush.bf16.msra.mxu0 0
        %1650 = vmatpush.bf16.msra.mxu0 %v1638
        %1651 = vmatpush.bf16.msra.mxu0 %v1637
        %1652 = vmatmul.bf16.gmra.mxu0 %v1642
        %v1653 = vpop.f32.mrf.mxu0
        %v1654 = vadd.f32 %v1627, %v1653
        %v1655 = vpop.f32.mrf.mxu0
        %1656 = vdwg.mxu0
        %v1657 = vxor.u32 %v1654, 2147483648
        %v1658 = vmul.f32 %v1657, 1.442695
        %v1659 = vpow.pop %v1658
        %v1660 = vadd.f32 %v1659, 1.0
        %v1661 = vrcp.pop %v1660
        %v1662 = vmul.f32 %v1660, %v1661
        %v1663 = vsub.f32 1.0, %v1662
        %v1664 = vmul.f32 %v1661, %v1663
        %v1665 = vadd.f32 %v1661, %v1664
        %vm1666 = vweird.f32 %v1660
        %vm1667 = vweird.f32 %v1661
        %vm1668 = vmor %vm1666, %vm1667
        %v1669 = vsel %vm1668, %v1661, %v1665
        %v1670 = vand.u32 2147483647, %v1660
        %vm1671 = vcmp.eq.f32.partialorder %v1670, 8.507059e+37
        %v1672 = vand.u32 %v1660, 2147483648
        %v1673 = vor.u32 1.1754944e-38, %v1672
        %v1674 = vsel %vm1671, %v1673, %v1669
        %v1675 = vmul.f32 1.0, %v1674
        %v1676 = vmul.f32 %v1654, %v1675
        %v1677 = vpack.c.bf16 %v1676, %v1676
        %v1678 = vld [vmem:[%s13] sm:$0xf]
        %v1679 = vld [vmem:[%s13 + $0x4] sm:$0xf]
        %v1680 = vld [vmem:[%s13 + $0x8] sm:$0xf]
        %v1681 = vld [vmem:[%s13 + $0xc] sm:$0xf]
        %v1682 = vld [vmem:[%s13 + $0x10] sm:$0xf]
        %v1683 = vld [vmem:[%s13 + $0x14] sm:$0xf]
        %v1684 = vld [vmem:[%s13 + $0x18] sm:$0xf]
        %v1685 = vld [vmem:[%s13 + $0x1c] sm:$0xf]
        %v1686 = vld [vmem:[#allocation11] sm:$0x1]
        %v1688 = vperm.slane %v1686, 0
        %v1698 = vunpack.c.l.b16 %v1678
        %v1699 = vunpack.c.l.b16 %v1679
        %v1700 = vunpack.c.l.b16 %v1680
        %v1701 = vunpack.c.l.b16 %v1681
        %v1702 = vunpack.c.l.b16 %v1682
        %v1703 = vunpack.c.l.b16 %v1683
        %v1704 = vunpack.c.l.b16 %v1684
        %v1705 = vunpack.c.l.b16 %v1685
        %v1706 = vpack.c.b16 %v1699, %v1698
        %v1707 = vpack.c.b16 %v1701, %v1700
        %v1708 = vpack.c.b16 %v1703, %v1702
        %v1709 = vpack.c.b16 %v1705, %v1704
        %vm1714 = vcmask 523264
        %v1716 = vsel %vm1714, %v1677, 0
        %1718 = vmatpush.bf16.msra.mxu0 0
        %1719 = vmatpush.bf16.msra.mxu0 0
        %1720 = vmatpush.bf16.msra.mxu0 0
        %1721 = vmatpush.bf16.msra.mxu0 0
        %1722 = vmatpush.bf16.msra.mxu0 %v1709
        %1723 = vmatpush.bf16.msra.mxu0 %v1708
        %1724 = vmatpush.bf16.msra.mxu0 %v1707
        %1725 = vmatpush.bf16.msra.mxu0 %v1706
        %1726 = vmatmul.bf16.gmra.mxu0 %v1716
        %v1727 = vpop.f32.mrf.mxu0
        %v1728 = vadd.f32 %v1688, %v1727
        %v1729 = vpop.f32.mrf.mxu0
        %1730 = vdwg.mxu0
        %v1731 = vmul.f32 %v1728, 0.5
        %v1732 = vadd.f32 %v1573, %v1731
        %v1733 = vld [vmem:[#allocation13] sm:$0x1]
        %v1734 = vld [vmem:[#allocation14] sm:$0x1]
        %v1735 = vsel %vm1582, %v1732, 0.0
        %1736 = vadd.xlane.f32.xlu0 %v1735
        %v1737 = vpop.xlane.xlu0 %1736
        %v1738 = vmul.f32 %v1737, %v1592
        %v1739 = vsub.f32 %v1732, %v1738
        %v1740 = vmul.f32 %v1739, %v1739
        %v1741 = vsel %vm1582, %v1740, 0.0
        %1742 = vadd.xlane.f32.xlu0 %v1741
        %v1743 = vpop.xlane.xlu0 %1742
        %v1744 = vmul.f32 %v1743, %v1592
        %v1745 = vadd.f32 %v1744, 1e-05
        %v1746 = vrsqrt.pop %v1745
        %v1747 = vmul.f32 %v1746, %v1745
        %v1748 = vmul.f32 %v1747, %v1746
        %v1749 = vmul.f32 0.5, %v1748
        %v1750 = vsub.f32 1.5, %v1749
        %v1751 = vmul.f32 %v1746, %v1750
        %vm1752 = vweird.f32 %v1745
        %vm1753 = vweird.f32 %v1746
        %vm1754 = vmor %vm1752, %vm1753
        %v1755 = vsel %vm1754, %v1746, %v1751
        %v1756 = vmul.f32 %v1739, %v1755
        %v1758 = vperm.slane %v1733, 0
        %v1760 = vmul.f32 %v1756, %v1758
        %v1762 = vperm.slane %v1734, 0
        %v1764 = vadd.f32 %v1760, %v1762
        %v1765 = vpack.c.bf16 %v1764, %v1764
        %v1766 = vld [vmem:[%s21] sm:$0xf]
        %v1767 = vld [vmem:[%s21 + $0x4] sm:$0xf]
        %v1768 = vld [vmem:[%s21 + $0x8] sm:$0xf]
        %v1769 = vld [vmem:[%s21 + $0xc] sm:$0xf]
        %v1770 = vld [vmem:[#allocation16] sm:$0x1]
        %v1772 = vperm.slane %v1770, 0
        %v1778 = vunpack.c.l.b16 %v1766
        %v1779 = vunpack.c.l.b16 %v1767
        %v1780 = vunpack.c.l.b16 %v1768
        %v1781 = vunpack.c.l.b16 %v1769
        %v1782 = vpack.c.b16 %v1779, %v1778
        %v1783 = vpack.c.b16 %v1781, %v1780
        %v1787 = vsel %vm1582, %v1765, 0
        %1789 = vmatpush.bf16.msra.mxu0 0
        %1790 = vmatpush.bf16.msra.mxu0 0
        %1791 = vmatpush.bf16.msra.mxu0 0
        %1792 = vmatpush.bf16.msra.mxu0 0
        %1793 = vmatpush.bf16.msra.mxu0 0
        %1794 = vmatpush.bf16.msra.mxu0 0
        %1795 = vmatpush.bf16.msra.mxu0 %v1783
        %1796 = vmatpush.bf16.msra.mxu0 %v1782
        %1797 = vmatmul.bf16.gmra.mxu0 %v1787
        %v1798 = vpop.f32.mrf.mxu0
        %v1799 = vadd.f32 %v1772, %v1798
        %v1800 = vpop.f32.mrf.mxu0
        %1801 = vdwg.mxu0
        %v1802 = vld [vmem:[%s25] sm:$0xf]
        %v1803 = vld [vmem:[%s25 + $0x4] sm:$0xf]
        %v1804 = vld [vmem:[%s25 + $0x8] sm:$0xf]
        %v1805 = vld [vmem:[%s25 + $0xc] sm:$0xf]
        %v1806 = vld [vmem:[#allocation17] sm:$0x1]
        %v1808 = vperm.slane %v1806, 0
        %v1814 = vunpack.c.l.b16 %v1802
        %v1815 = vunpack.c.l.b16 %v1803
        %v1816 = vunpack.c.l.b16 %v1804
        %v1817 = vunpack.c.l.b16 %v1805
        %v1818 = vpack.c.b16 %v1815, %v1814
        %v1819 = vpack.c.b16 %v1817, %v1816
        %1822 = vmatpush.bf16.msra.mxu0 0
        %1823 = vmatpush.bf16.msra.mxu0 0
        %1824 = vmatpush.bf16.msra.mxu0 0
        %1825 = vmatpush.bf16.msra.mxu0 0
        %1826 = vmatpush.bf16.msra.mxu0 0
        %1827 = vmatpush.bf16.msra.mxu0 0
        %1828 = vmatpush.bf16.msra.mxu0 %v1819
        %1829 = vmatpush.bf16.msra.mxu0 %v1818
        %1830 = vmatmul.bf16.gmra.mxu0 %v1787
        %v1831 = vpop.f32.mrf.mxu0
        %v1832 = vadd.f32 %v1808, %v1831
        %v1833 = vpop.f32.mrf.mxu0
        %1834 = vdwg.mxu0
        %v1835 = vld [vmem:[%s29] sm:$0xf]
        %v1836 = vld [vmem:[%s29 + $0x4] sm:$0xf]
        %v1837 = vld [vmem:[%s29 + $0x8] sm:$0xf]
        %v1838 = vld [vmem:[%s29 + $0xc] sm:$0xf]
        %v1839 = vld [vmem:[#allocation19] sm:$0x1]
        %v1841 = vperm.slane %v1839, 0
        %v1847 = vunpack.c.l.b16 %v1835
        %v1848 = vunpack.c.l.b16 %v1836
        %v1849 = vunpack.c.l.b16 %v1837
        %v1850 = vunpack.c.l.b16 %v1838
        %v1851 = vpack.c.b16 %v1848, %v1847
        %v1852 = vpack.c.b16 %v1850, %v1849
        %1855 = vmatpush.bf16.msra.mxu0 0
        %1856 = vmatpush.bf16.msra.mxu0 0
        %1857 = vmatpush.bf16.msra.mxu0 0
        %1858 = vmatpush.bf16.msra.mxu0 0
        %1859 = vmatpush.bf16.msra.mxu0 0
        %1860 = vmatpush.bf16.msra.mxu0 0
        %1861 = vmatpush.bf16.msra.mxu0 %v1852
        %1862 = vmatpush.bf16.msra.mxu0 %v1851
        %1863 = vmatmul.bf16.gmra.mxu0 %v1787
        %v1864 = vpop.f32.mrf.mxu0
        %v1865 = vadd.f32 %v1841, %v1864
        %v1866 = vpop.f32.mrf.mxu0
        %1867 = vdwg.mxu0
        %v1868 = vpack.c.bf16 %v1799, %v1799
        %v1869 = vpack.c.bf16 %v1832, %v1832
        %v1870 = vpack.c.bf16 %v1865, %v1865
        %vm1871 = vcmask 64512
        %v1873 = vsel %vm1871, %v1868, 0
        %v1876 = vsel %vm1871, %v1869, 0
        %1878 = vmatpush.bf16.xpose.msra.mxu0 0
        %1879 = vmatpush.bf16.xpose.msra.mxu0 0
        %1880 = vmatpush.bf16.xpose.msra.mxu0 0
        %1881 = vmatpush.bf16.xpose.msra.mxu0 0
        %1882 = vmatpush.bf16.xpose.msra.mxu0 0
        %1883 = vmatpush.bf16.xpose.msra.mxu0 0
        %1884 = vmatpush.bf16.xpose.msra.mxu0 0
        %1885 = vmatpush.bf16.xpose.msra.mxu0 %v1876
        %1886 = vmatmul.bf16.gmra.mxu0 %v1873
        %v1887 = vpop.f32.mrf.mxu0
        %v1888 = vadd.f32 %v1579, %v1887
        %v1889 = vpop.f32.mrf.mxu0
        %1890 = vdwg.mxu0
        %v1891 = vsel %vm1871, %v1888, -inf
        %1892 = vmax.xlane.f32.xlu0 %v1891
        %v1893 = vpop.xlane.xlu0 %1892
        %v1894 = vsub.f32 %v1888, %v1893
        %v1895 = vmul.f32 %v1894, 1.442695
        %v1896 = vpow.pop %v1895
        %v1897 = vsel %vm1871, %v1896, 0.0
        %1898 = vadd.xlane.f32.xlu0 %v1897
        %v1899 = vpop.xlane.xlu0 %1898
        %v1900 = vrcp.pop %v1899
        %v1901 = vmul.f32 %v1896, %v1900
        %v1902 = vpack.c.bf16 %v1901, %v1901
        %v1904 = vsel %vm1871, %v1902, 0
        %vm1906 = vcmask 1043456
        %v1908 = vsel %vm1906, %v1870, 0
        %1910 = vmatpush.bf16.msra.mxu0 0
        %1911 = vmatpush.bf16.msra.mxu0 0
        %1912 = vmatpush.bf16.msra.mxu0 0
        %1913 = vmatpush.bf16.msra.mxu0 0
        %1914 = vmatpush.bf16.msra.mxu0 0
        %1915 = vmatpush.bf16.msra.mxu0 0
        %1916 = vmatpush.bf16.msra.mxu0 0
        %1917 = vmatpush.bf16.msra.mxu0 %v1908
        %1918 = vmatmul.bf16.gmra.mxu0 %v1904
        %v1919 = vpop.f32.mrf.mxu0
        %v1920 = vadd.f32 0.0, %v1919
        %v1921 = vpop.f32.mrf.mxu0
        %1922 = vdwg.mxu0
        %1923 = vst.msk [vmem:[#allocation2] sm:$0xff] %vm1871, %v1920
        %v1925 = vunpack.c.l.b16 %v1868
        %v1926 = vpack.c.b16 %v1925, %v1925
        %1927 = vrot.lane.b32.xlu0 %v1926, 120
        %v1928 = vpop.permute.xlu0 %1927
        %v1930 = vunpack.c.l.b16 %v1869
        %v1931 = vpack.c.b16 %v1930, %v1930
        %1932 = vrot.lane.b32.xlu0 %v1931, 120
        %v1933 = vpop.permute.xlu0 %1932
        %v1935 = vsel %vm1871, %v1928, 0
        %v1938 = vsel %vm1871, %v1933, 0
        %1940 = vmatpush.bf16.xpose.msra.mxu0 0
        %1941 = vmatpush.bf16.xpose.msra.mxu0 0
        %1942 = vmatpush.bf16.xpose.msra.mxu0 0
        %1943 = vmatpush.bf16.xpose.msra.mxu0 0
        %1944 = vmatpush.bf16.xpose.msra.mxu0 0
        %1945 = vmatpush.bf16.xpose.msra.mxu0 0
        %1946 = vmatpush.bf16.xpose.msra.mxu0 0
        %1947 = vmatpush.bf16.xpose.msra.mxu0 %v1938
        %1948 = vmatmul.bf16.gmra.mxu0 %v1935
        %v1949 = vpop.f32.mrf.mxu0
        %v1950 = vadd.f32 %v1579, %v1949
        %v1951 = vpop.f32.mrf.mxu0
        %1952 = vdwg.mxu0
        %v1953 = vsel %vm1871, %v1950, -inf
        %1954 = vmax.xlane.f32.xlu0 %v1953
        %v1955 = vpop.xlane.xlu0 %1954
        %v1956 = vsub.f32 %v1950, %v1955
        %v1957 = vmul.f32 %v1956, 1.442695
        %v1958 = vpow.pop %v1957
        %v1959 = vsel %vm1871, %v1958, 0.0
        %1960 = vadd.xlane.f32.xlu0 %v1959
        %v1961 = vpop.xlane.xlu0 %1960
        %v1962 = vrcp.pop %v1961
        %v1963 = vmul.f32 %v1958, %v1962
        %v1964 = vpack.c.bf16 %v1963, %v1963
        %v1966 = vunpack.c.l.b16 %v1870
        %v1967 = vpack.c.b16 %v1966, %v1966
        %1968 = vrot.lane.b32.xlu0 %v1967, 120
        %v1969 = vpop.permute.xlu0 %1968
        %v1971 = vsel %vm1871, %v1964, 0
        %v1974 = vsel %vm1906, %v1969, 0
        %1976 = vmatpush.bf16.msra.mxu0 0
        %1977 = vmatpush.bf16.msra.mxu0 0
        %1978 = vmatpush.bf16.msra.mxu0 0
        %1979 = vmatpush.bf16.msra.mxu0 0
        %1980 = vmatpush.bf16.msra.mxu0 0
        %1981 = vmatpush.bf16.msra.mxu0 0
        %1982 = vmatpush.bf16.msra.mxu0 0
        %1983 = vmatpush.bf16.msra.mxu0 %v1974
        %1984 = vmatmul.bf16.gmra.mxu0 %v1971
        %v1985 = vpop.f32.mrf.mxu0
        %v1986 = vadd.f32 0.0, %v1985
        %v1987 = vpop.f32.mrf.mxu0
        %1988 = vdwg.mxu0
        %1990 = vrot.lane.b32.xlu0 %v1986, 8
        %v1991 = vpop.permute.xlu0 %1990
        %vm1993 = vcmask 130112
        %1994 = vst.msk [vmem:[#allocation2] sm:$0xff] %vm1993, %v1991
        %1995 = vrot.lane.b32.xlu0 %v1926, 112
        %v1996 = vpop.permute.xlu0 %1995
        %1997 = vrot.lane.b32.xlu0 %v1931, 112
        %v1998 = vpop.permute.xlu0 %1997
        %v2000 = vsel %vm1871, %v1996, 0
        %v2003 = vsel %vm1871, %v1998, 0
        %2005 = vmatpush.bf16.xpose.msra.mxu0 0
        %2006 = vmatpush.bf16.xpose.msra.mxu0 0
        %2007 = vmatpush.bf16.xpose.msra.mxu0 0
        %2008 = vmatpush.bf16.xpose.msra.mxu0 0
        %2009 = vmatpush.bf16.xpose.msra.mxu0 0
        %2010 = vmatpush.bf16.xpose.msra.mxu0 0
        %2011 = vmatpush.bf16.xpose.msra.mxu0 0
        %2012 = vmatpush.bf16.xpose.msra.mxu0 %v2003
        %2013 = vmatmul.bf16.gmra.mxu0 %v2000
        %v2014 = vpop.f32.mrf.mxu0
        %v2015 = vadd.f32 %v1579, %v2014
        %v2016 = vpop.f32.mrf.mxu0
        %2017 = vdwg.mxu0
        %v2018 = vsel %vm1871, %v2015, -inf
        %2019 = vmax.xlane.f32.xlu0 %v2018
        %v2020 = vpop.xlane.xlu0 %2019
        %v2021 = vsub.f32 %v2015, %v2020
        %v2022 = vmul.f32 %v2021, 1.442695
        %v2023 = vpow.pop %v2022
        %v2024 = vsel %vm1871, %v2023, 0.0
        %2025 = vadd.xlane.f32.xlu0 %v2024
        %v2026 = vpop.xlane.xlu0 %2025
        %v2027 = vrcp.pop %v2026
        %v2028 = vmul.f32 %v2023, %v2027
        %v2029 = vpack.c.bf16 %v2028, %v2028
        %2030 = vrot.lane.b32.xlu0 %v1967, 112
        %v2031 = vpop.permute.xlu0 %2030
        %v2033 = vsel %vm1871, %v2029, 0
        %v2036 = vsel %vm1906, %v2031, 0
        %2038 = vmatpush.bf16.msra.mxu0 0
        %2039 = vmatpush.bf16.msra.mxu0 0
        %2040 = vmatpush.bf16.msra.mxu0 0
        %2041 = vmatpush.bf16.msra.mxu0 0
        %2042 = vmatpush.bf16.msra.mxu0 0
        %2043 = vmatpush.bf16.msra.mxu0 0
        %2044 = vmatpush.bf16.msra.mxu0 0
        %2045 = vmatpush.bf16.msra.mxu0 %v2036
        %2046 = vmatmul.bf16.gmra.mxu0 %v2033
        %v2047 = vpop.f32.mrf.mxu0
        %v2048 = vadd.f32 0.0, %v2047
        %v2049 = vpop.f32.mrf.mxu0
        %2050 = vdwg.mxu0
        %2052 = vrot.lane.b32.xlu0 %v2048, 16
        %v2053 = vpop.permute.xlu0 %2052
        %vm2055 = vcmask 195712
        %2056 = vst.msk [vmem:[#allocation2] sm:$0xff] %vm2055, %v2053
        %2057 = vrot.lane.b32.xlu0 %v1926, 104
        %v2058 = vpop.permute.xlu0 %2057
        %2059 = vrot.lane.b32.xlu0 %v1931, 104
        %v2060 = vpop.permute.xlu0 %2059
        %v2062 = vsel %vm1871, %v2058, 0
        %v2065 = vsel %vm1871, %v2060, 0
        %2067 = vmatpush.bf16.xpose.msra.mxu0 0
        %2068 = vmatpush.bf16.xpose.msra.mxu0 0
        %2069 = vmatpush.bf16.xpose.msra.mxu0 0
        %2070 = vmatpush.bf16.xpose.msra.mxu0 0
        %2071 = vmatpush.bf16.xpose.msra.mxu0 0
        %2072 = vmatpush.bf16.xpose.msra.mxu0 0
        %2073 = vmatpush.bf16.xpose.msra.mxu0 0
        %2074 = vmatpush.bf16.xpose.msra.mxu0 %v2065
        %2075 = vmatmul.bf16.gmra.mxu0 %v2062
        %v2076 = vpop.f32.mrf.mxu0
        %v2077 = vadd.f32 %v1579, %v2076
        %v2078 = vpop.f32.mrf.mxu0
        %2079 = vdwg.mxu0
        %v2080 = vsel %vm1871, %v2077, -inf
        %2081 = vmax.xlane.f32.xlu0 %v2080
        %v2082 = vpop.xlane.xlu0 %2081
        %v2083 = vsub.f32 %v2077, %v2082
        %v2084 = vmul.f32 %v2083, 1.442695
        %v2085 = vpow.pop %v2084
        %v2086 = vsel %vm1871, %v2085, 0.0
        %2087 = vadd.xlane.f32.xlu0 %v2086
        %v2088 = vpop.xlane.xlu0 %2087
        %v2089 = vrcp.pop %v2088
        %v2090 = vmul.f32 %v2085, %v2089
        %v2091 = vpack.c.bf16 %v2090, %v2090
        %2092 = vrot.lane.b32.xlu0 %v1967, 104
        %v2093 = vpop.permute.xlu0 %2092
        %v2095 = vsel %vm1871, %v2091, 0
        %v2098 = vsel %vm1906, %v2093, 0
        %2100 = vmatpush.bf16.msra.mxu0 0
        %2101 = vmatpush.bf16.msra.mxu0 0
        %2102 = vmatpush.bf16.msra.mxu0 0
        %2103 = vmatpush.bf16.msra.mxu0 0
        %2104 = vmatpush.bf16.msra.mxu0 0
        %2105 = vmatpush.bf16.msra.mxu0 0
        %2106 = vmatpush.bf16.msra.mxu0 0
        %2107 = vmatpush.bf16.msra.mxu0 %v2098
        %2108 = vmatmul.bf16.gmra.mxu0 %v2095
        %v2109 = vpop.f32.mrf.mxu0
        %v2110 = vadd.f32 0.0, %v2109
        %v2111 = vpop.f32.mrf.mxu0
        %2112 = vdwg.mxu0
        %2114 = vrot.lane.b32.xlu0 %v2110, 24
        %v2115 = vpop.permute.xlu0 %2114
        %vm2117 = vcmask 261312
        %2118 = vst.msk [vmem:[#allocation2] sm:$0xff] %vm2117, %v2115
        %v2119 = vld [vmem:[#allocation2] sm:$0xff]
        %v2120 = vpack.c.bf16 %v2119, %v2119
        %v2121 = vld [vmem:[%s33] sm:$0xf]
        %v2122 = vld [vmem:[%s33 + $0x4] sm:$0xf]
        %v2123 = vld [vmem:[%s33 + $0x8] sm:$0xf]
        %v2124 = vld [vmem:[%s33 + $0xc] sm:$0xf]
        %v2129 = vunpack.c.l.b16 %v2121
        %v2130 = vunpack.c.l.b16 %v2122
        %v2131 = vunpack.c.l.b16 %v2123
        %v2132 = vunpack.c.l.b16 %v2124
        %v2133 = vpack.c.b16 %v2130, %v2129
        %v2134 = vpack.c.b16 %v2132, %v2131
        %v2138 = vsel %vm1582, %v2120, 0
        %2140 = vmatpush.bf16.msra.mxu0 0
        %2141 = vmatpush.bf16.msra.mxu0 0
        %2142 = vmatpush.bf16.msra.mxu0 0
        %2143 = vmatpush.bf16.msra.mxu0 0
        %2144 = vmatpush.bf16.msra.mxu0 0
        %2145 = vmatpush.bf16.msra.mxu0 0
        %2146 = vmatpush.bf16.msra.mxu0 %v2134
        %2147 = vmatpush.bf16.msra.mxu0 %v2133
        %2148 = vmatmul.bf16.gmra.mxu0 %v2138
        %v2149 = vpop.f32.mrf.mxu0
        %v2150 = vadd.f32 0.0, %v2149
        %v2151 = vpop.f32.mrf.mxu0
        %2152 = vdwg.mxu0
        %v2153 = vadd.f32 %v1732, %v2150
        %v2154 = vld [vmem:[#allocation20] sm:$0x1]
        %v2156 = vperm.slane %v2154, 0
        %v2158 = vadd.f32 %v2153, %v2156
        %v2159 = vld [vmem:[#allocation22] sm:$0x1]
        %v2160 = vld [vmem:[#allocation23] sm:$0x1]
        %v2161 = vsel %vm1582, %v2158, 0.0
        %2162 = vadd.xlane.f32.xlu0 %v2161
        %v2163 = vpop.xlane.xlu0 %2162
        %v2164 = vmul.f32 %v2163, %v1592
        %v2165 = vsub.f32 %v2158, %v2164
        %v2166 = vmul.f32 %v2165, %v2165
        %v2167 = vsel %vm1582, %v2166, 0.0
        %2168 = vadd.xlane.f32.xlu0 %v2167
        %v2169 = vpop.xlane.xlu0 %2168
        %v2170 = vmul.f32 %v2169, %v1592
        %v2171 = vadd.f32 %v2170, 1e-05
        %v2172 = vrsqrt.pop %v2171
        %v2173 = vmul.f32 %v2172, %v2171
        %v2174 = vmul.f32 %v2173, %v2172
        %v2175 = vmul.f32 0.5, %v2174
        %v2176 = vsub.f32 1.5, %v2175
        %v2177 = vmul.f32 %v2172, %v2176
        %vm2178 = vweird.f32 %v2171
        %vm2179 = vweird.f32 %v2172
        %vm2180 = vmor %vm2178, %vm2179
        %v2181 = vsel %vm2180, %v2172, %v2177
        %v2182 = vmul.f32 %v2165, %v2181
        %v2184 = vperm.slane %v2159, 0
        %v2186 = vmul.f32 %v2182, %v2184
        %v2188 = vperm.slane %v2160, 0
        %v2190 = vadd.f32 %v2186, %v2188
        %v2191 = vpack.c.bf16 %v2190, %v2190
        %v2192 = vld [vmem:[%s41] sm:$0xf]
        %v2193 = vld [vmem:[%s41 + $0x4] sm:$0xf]
        %v2194 = vld [vmem:[%s41 + $0x8] sm:$0xf]
        %v2195 = vld [vmem:[%s41 + $0xc] sm:$0xf]
        %v2196 = vld [vmem:[#allocation25] sm:$0x1]
        %v2198 = vperm.slane %v2196, 0
        %v2204 = vunpack.c.l.b16 %v2192
        %v2205 = vunpack.c.l.b16 %v2193
        %v2206 = vunpack.c.l.b16 %v2194
        %v2207 = vunpack.c.l.b16 %v2195
        %v2208 = vpack.c.b16 %v2205, %v2204
        %v2209 = vpack.c.b16 %v2207, %v2206
        %v2213 = vsel %vm1582, %v2191, 0
        %2215 = vmatpush.bf16.msra.mxu0 0
        %2216 = vmatpush.bf16.msra.mxu0 0
        %2217 = vmatpush.bf16.msra.mxu0 0
        %2218 = vmatpush.bf16.msra.mxu0 0
        %2219 = vmatpush.bf16.msra.mxu0 0
        %2220 = vmatpush.bf16.msra.mxu0 0
        %2221 = vmatpush.bf16.msra.mxu0 %v2209
        %2222 = vmatpush.bf16.msra.mxu0 %v2208
        %2223 = vmatmul.bf16.gmra.mxu0 %v2213
        %v2224 = vpop.f32.mrf.mxu0
        %v2225 = vadd.f32 %v2198, %v2224
        %v2226 = vpop.f32.mrf.mxu0
        %2227 = vdwg.mxu0
        %v2228 = vld [vmem:[#allocation26] sm:$0xf]
        %v2229 = vld [vmem:[#allocation26 + $0x4] sm:$0xf]
        %v2230 = vld [vmem:[#allocation26 + $0x8] sm:$0xf]
        %v2231 = vld [vmem:[#allocation26 + $0xc] sm:$0xf]
        %v2232 = vld [vmem:[#allocation28] sm:$0x1]
        %v2234 = vperm.slane %v2232, 0
        %v2240 = vunpack.c.l.b16 %v2228
        %v2241 = vunpack.c.l.b16 %v2229
        %v2242 = vunpack.c.l.b16 %v2230
        %v2243 = vunpack.c.l.b16 %v2231
        %v2244 = vpack.c.b16 %v2241, %v2240
        %v2245 = vpack.c.b16 %v2243, %v2242
        %2248 = vmatpush.bf16.msra.mxu0 0
        %2249 = vmatpush.bf16.msra.mxu0 0
        %2250 = vmatpush.bf16.msra.mxu0 0
        %2251 = vmatpush.bf16.msra.mxu0 0
        %2252 = vmatpush.bf16.msra.mxu0 0
        %2253 = vmatpush.bf16.msra.mxu0 0
        %2254 = vmatpush.bf16.msra.mxu0 %v2245
        %2255 = vmatpush.bf16.msra.mxu0 %v2244
        %2256 = vmatmul.bf16.gmra.mxu0 %v2213
        %v2257 = vpop.f32.mrf.mxu0
        %v2258 = vadd.f32 %v2234, %v2257
        %v2259 = vpop.f32.mrf.mxu0
        %2260 = vdwg.mxu0
        %v2261 = vxor.u32 %v2258, 2147483648
        %v2262 = vmul.f32 %v2261, 1.442695
        %v2263 = vpow.pop %v2262
        %v2264 = vadd.f32 %v2263, 1.0
        %v2265 = vrcp.pop %v2264
        %v2266 = vmul.f32 %v2264, %v2265
        %v2267 = vsub.f32 1.0, %v2266
        %v2268 = vmul.f32 %v2265, %v2267
        %v2269 = vadd.f32 %v2265, %v2268
        %vm2270 = vweird.f32 %v2264
        %vm2271 = vweird.f32 %v2265
        %vm2272 = vmor %vm2270, %vm2271
        %v2273 = vsel %vm2272, %v2265, %v2269
        %v2274 = vand.u32 2147483647, %v2264
        %vm2275 = vcmp.eq.f32.partialorder %v2274, 8.507059e+37
        %v2276 = vand.u32 %v2264, 2147483648
        %v2277 = vor.u32 1.1754944e-38, %v2276
        %v2278 = vsel %vm2275, %v2277, %v2273
        %v2279 = vmul.f32 1.0, %v2278
        %v2280 = vmul.f32 %v2225, %v2279
        %v2281 = vlaneseq
        %v2282 = vshrl.u32 %v2281, 7
        %s2283 = scalar_lea.vmem [#allocation29], 3
        %v2284 = vld [vmem:[%s2283] sm:$0x1]
        %v2286 = vperm.slane %v2284, 0
        %v2288 = vmul.f32 %v2280, %v2286
        %v2289 = vrot.slane %v2280, 5
        %vm2290 = vcmp.ge.s32.totalorder %v2282, 3
        %v2291 = vld [vmem:[#allocation29] sm:$0x1]
        %v2293 = vperm.slane %v2291, 0
        %v2295 = vmul.f32 %v2289, %v2293
        %v2296 = vsel %vm2290, 1, 0
        %vm2297 = vcmp.eq.s32.totalorder %v2296, 1
        %v2298 = vsel %vm2297, %v2295, 0.0
        %v2299 = vadd.f32 %v2288, %v2298
        %v2300 = vrot.slane %v2280, 6
        %vm2301 = vcmp.ge.s32.totalorder %v2282, 2
        %s2302 = scalar_lea.vmem [#allocation29], 1
        %v2303 = vld [vmem:[%s2302] sm:$0x1]
        %v2305 = vperm.slane %v2303, 0
        %v2307 = vmul.f32 %v2300, %v2305
        %v2308 = vsel %vm2301, 1, 0
        %vm2309 = vcmp.eq.s32.totalorder %v2308, 1
        %v2310 = vsel %vm2309, %v2307, 0.0
        %v2311 = vadd.f32 %v2299, %v2310
        %v2312 = vrot.slane %v2280, 7
        %vm2313 = vcmp.ge.s32.totalorder %v2282, 1
        %s2314 = scalar_lea.vmem [#allocation29], 2
        %v2315 = vld [vmem:[%s2314] sm:$0x1]
        %v2317 = vperm.slane %v2315, 0
        %v2319 = vmul.f32 %v2312, %v2317
        %v2320 = vsel %vm2313, 1, 0
        %vm2321 = vcmp.eq.s32.totalorder %v2320, 1
        %v2322 = vsel %vm2321, %v2319, 0.0
        %v2323 = vadd.f32 %v2311, %v2322
        %v2324 = vrot.slane %v2280, 1
        %vm2325 = vcmp.lt.s32.totalorder %v2282, 7
        %s2326 = scalar_lea.vmem [#allocation29], 4
        %v2327 = vld [vmem:[%s2326] sm:$0x1]
        %v2329 = vperm.slane %v2327, 0
        %v2331 = vmul.f32 %v2324, %v2329
        %v2332 = vsel %vm2325, 1, 0
        %vm2333 = vcmp.eq.s32.totalorder %v2332, 1
        %v2334 = vsel %vm2333, %v2331, 0.0
        %v2335 = vadd.f32 %v2323, %v2334
        %v2336 = vrot.slane %v2280, 2
        %vm2337 = vcmp.lt.s32.totalorder %v2282, 6
        %s2338 = scalar_lea.vmem [#allocation29], 5
        %v2339 = vld [vmem:[%s2338] sm:$0x1]
        %v2341 = vperm.slane %v2339, 0
        %v2343 = vmul.f32 %v2336, %v2341
        %v2344 = vsel %vm2337, 1, 0
        %vm2345 = vcmp.eq.s32.totalorder %v2344, 1
        %v2346 = vsel %vm2345, %v2343, 0.0
        %v2347 = vadd.f32 %v2335, %v2346
        %v2348 = vrot.slane %v2280, 3
        %vm2349 = vcmp.lt.s32.totalorder %v2282, 5
        %s2350 = scalar_lea.vmem [#allocation29], 6
        %v2351 = vld [vmem:[%s2350] sm:$0x1]
        %v2353 = vperm.slane %v2351, 0
        %v2355 = vmul.f32 %v2348, %v2353
        %v2356 = vsel %vm2349, 1, 0
        %vm2357 = vcmp.eq.s32.totalorder %v2356, 1
        %v2358 = vsel %vm2357, %v2355, 0.0
        %v2359 = vadd.f32 %v2347, %v2358
        %v2360 = vld [vmem:[#allocation31] sm:$0x1]
        %v2362 = vperm.slane %v2360, 0
        %v2364 = vadd.f32 %v2359, %v2362
        %v2365 = vld [vmem:[#allocation35] sm:$0x1]
        %v2367 = vperm.slane %v2365, 0
        %v2369 = vsub.f32 %v2364, %v2367
        %v2370 = vld [vmem:[#allocation37] sm:$0x1]
        %v2371 = vadd.f32 %v2370, 1e-05
        %v2372 = vrsqrt.pop %v2371
        %v2373 = vmul.f32 %v2372, %v2371
        %v2374 = vmul.f32 %v2373, %v2372
        %v2375 = vmul.f32 0.5, %v2374
        %v2376 = vsub.f32 1.5, %v2375
        %v2377 = vmul.f32 %v2372, %v2376
        %vm2378 = vweird.f32 %v2371
        %vm2379 = vweird.f32 %v2372
        %vm2380 = vmor %vm2378, %vm2379
        %v2381 = vsel %vm2380, %v2372, %v2377
        %v2383 = vperm.slane %v2381, 0
        %v2385 = vmul.f32 %v2369, %v2383
        %v2386 = vld [vmem:[#allocation32] sm:$0x1]
        %v2388 = vperm.slane %v2386, 0
        %v2390 = vmul.f32 %v2385, %v2388
        %v2391 = vld [vmem:[#allocation34] sm:$0x1]
        %v2393 = vperm.slane %v2391, 0
        %v2395 = vadd.f32 %v2390, %v2393
        %v2396 = vxor.u32 %v2395, 2147483648
        %v2397 = vmul.f32 %v2396, 1.442695
        %v2398 = vpow.pop %v2397
        %v2399 = vadd.f32 %v2398, 1.0
        %v2400 = vrcp.pop %v2399
        %v2401 = vmul.f32 %v2399, %v2400
        %v2402 = vsub.f32 1.0, %v2401
        %v2403 = vmul.f32 %v2400, %v2402
        %v2404 = vadd.f32 %v2400, %v2403
        %vm2405 = vweird.f32 %v2399
        %vm2406 = vweird.f32 %v2400
        %vm2407 = vmor %vm2405, %vm2406
        %v2408 = vsel %vm2407, %v2400, %v2404
        %v2409 = vand.u32 2147483647, %v2399
        %vm2410 = vcmp.eq.f32.partialorder %v2409, 8.507059e+37
        %v2411 = vand.u32 %v2399, 2147483648
        %v2412 = vor.u32 1.1754944e-38, %v2411
        %v2413 = vsel %vm2410, %v2412, %v2408
        %v2414 = vmul.f32 1.0, %v2413
        %v2415 = vmul.f32 %v2395, %v2414
        %v2416 = vpack.c.bf16 %v2415, %v2415
        %v2417 = vld [vmem:[#allocation38] sm:$0xf]
        %v2418 = vld [vmem:[#allocation38 + $0x4] sm:$0xf]
        %v2419 = vld [vmem:[#allocation38 + $0x8] sm:$0xf]
        %v2420 = vld [vmem:[#allocation38 + $0xc] sm:$0xf]
        %v2425 = vunpack.c.l.b16 %v2417
        %v2426 = vunpack.c.l.b16 %v2418
        %v2427 = vunpack.c.l.b16 %v2419
        %v2428 = vunpack.c.l.b16 %v2420
        %v2429 = vpack.c.b16 %v2426, %v2425
        %v2430 = vpack.c.b16 %v2428, %v2427
        %v2434 = vsel %vm1582, %v2416, 0
        %2436 = vmatpush.bf16.msra.mxu0 0
        %2437 = vmatpush.bf16.msra.mxu0 0
        %2438 = vmatpush.bf16.msra.mxu0 0
        %2439 = vmatpush.bf16.msra.mxu0 0
        %2440 = vmatpush.bf16.msra.mxu0 0
        %2441 = vmatpush.bf16.msra.mxu0 0
        %2442 = vmatpush.bf16.msra.mxu0 %v2430
        %2443 = vmatpush.bf16.msra.mxu0 %v2429
        %2444 = vmatmul.bf16.gmra.mxu0 %v2434
        %v2445 = vpop.f32.mrf.mxu0
        %v2446 = vadd.f32 0.0, %v2445
        %v2447 = vpop.f32.mrf.mxu0
        %2448 = vdwg.mxu0
        %v2449 = vadd.f32 %v2158, %v2446
        %v2450 = vld [vmem:[#allocation40] sm:$0x1]
        %v2452 = vperm.slane %v2450, 0
        %v2454 = vadd.f32 %v2449, %v2452
        %v2455 = vld [vmem:[#allocation41] sm:$0x1]
        %v2456 = vld [vmem:[#allocation43] sm:$0x1]
        %v2457 = vsel %vm1582, %v2454, 0.0
        %2458 = vadd.xlane.f32.xlu0 %v2457
        %v2459 = vpop.xlane.xlu0 %2458
        %v2460 = vmul.f32 %v2459, %v1592
        %v2461 = vsub.f32 %v2454, %v2460
        %v2462 = vmul.f32 %v2461, %v2461
        %v2463 = vsel %vm1582, %v2462, 0.0
        %2464 = vadd.xlane.f32.xlu0 %v2463
        %v2465 = vpop.xlane.xlu0 %2464
        %v2466 = vmul.f32 %v2465, %v1592
        %v2467 = vadd.f32 %v2466, 1e-05
        %v2468 = vrsqrt.pop %v2467
        %v2469 = vmul.f32 %v2468, %v2467
        %v2470 = vmul.f32 %v2469, %v2468
        %v2471 = vmul.f32 0.5, %v2470
        %v2472 = vsub.f32 1.5, %v2471
        %v2473 = vmul.f32 %v2468, %v2472
        %vm2474 = vweird.f32 %v2467
        %vm2475 = vweird.f32 %v2468
        %vm2476 = vmor %vm2474, %vm2475
        %v2477 = vsel %vm2476, %v2468, %v2473
        %v2478 = vmul.f32 %v2461, %v2477
        %v2480 = vperm.slane %v2455, 0
        %v2482 = vmul.f32 %v2478, %v2480
        %v2484 = vperm.slane %v2456, 0
        %v2486 = vadd.f32 %v2482, %v2484
        %v2487 = vpack.c.bf16 %v2486, %v2486
        %v2488 = vld [vmem:[%s69] sm:$0xf]
        %v2489 = vld [vmem:[%s69 + $0x4] sm:$0xf]
        %v2490 = vld [vmem:[%s69 + $0x8] sm:$0xf]
        %v2491 = vld [vmem:[%s69 + $0xc] sm:$0xf]
        %v2492 = vld [vmem:[#allocation44] sm:$0x1]
        %v2494 = vperm.slane %v2492, 0
        %v2500 = vunpack.c.l.b16 %v2488
        %v2501 = vunpack.c.l.b16 %v2489
        %v2502 = vunpack.c.l.b16 %v2490
        %v2503 = vunpack.c.l.b16 %v2491
        %v2504 = vpack.c.b16 %v2501, %v2500
        %v2505 = vpack.c.b16 %v2503, %v2502
        %v2509 = vsel %vm1582, %v2487, 0
        %2511 = vmatpush.bf16.msra.mxu0 0
        %2512 = vmatpush.bf16.msra.mxu0 0
        %2513 = vmatpush.bf16.msra.mxu0 0
        %2514 = vmatpush.bf16.msra.mxu0 0
        %2515 = vmatpush.bf16.msra.mxu0 0
        %2516 = vmatpush.bf16.msra.mxu0 0
        %2517 = vmatpush.bf16.msra.mxu0 %v2505
        %2518 = vmatpush.bf16.msra.mxu0 %v2504
        %2519 = vmatmul.bf16.gmra.mxu0 %v2509
        %v2520 = vpop.f32.mrf.mxu0
        %v2521 = vadd.f32 %v2494, %v2520
        %v2522 = vpop.f32.mrf.mxu0
        %2523 = vdwg.mxu0
        %v2524 = vxor.u32 %v2521, 2147483648
        %v2525 = vmul.f32 %v2524, 1.442695
        %v2526 = vpow.pop %v2525
        %v2527 = vadd.f32 %v2526, 1.0
        %v2528 = vrcp.pop %v2527
        %v2529 = vmul.f32 %v2527, %v2528
        %v2530 = vsub.f32 1.0, %v2529
        %v2531 = vmul.f32 %v2528, %v2530
        %v2532 = vadd.f32 %v2528, %v2531
        %vm2533 = vweird.f32 %v2527
        %vm2534 = vweird.f32 %v2528
        %vm2535 = vmor %vm2533, %vm2534
        %v2536 = vsel %vm2535, %v2528, %v2532
        %v2537 = vand.u32 2147483647, %v2527
        %vm2538 = vcmp.eq.f32.partialorder %v2537, 8.507059e+37
        %v2539 = vand.u32 %v2527, 2147483648
        %v2540 = vor.u32 1.1754944e-38, %v2539
        %v2541 = vsel %vm2538, %v2540, %v2536
        %v2542 = vmul.f32 1.0, %v2541
        %v2543 = vmul.f32 %v2521, %v2542
        %v2544 = vpack.c.bf16 %v2543, %v2543
        %v2545 = vld [vmem:[%s73] sm:$0xf]
        %v2546 = vld [vmem:[%s73 + $0x4] sm:$0xf]
        %v2547 = vld [vmem:[%s73 + $0x8] sm:$0xf]
        %v2548 = vld [vmem:[%s73 + $0xc] sm:$0xf]
        %v2549 = vld [vmem:[%s73 + $0x10] sm:$0xf]
        %v2550 = vld [vmem:[%s73 + $0x14] sm:$0xf]
        %v2551 = vld [vmem:[%s73 + $0x18] sm:$0xf]
        %v2552 = vld [vmem:[%s73 + $0x1c] sm:$0xf]
        %v2553 = vld [vmem:[%s75] sm:$0x1]
        %v2555 = vperm.slane %v2553, 0
        %v2565 = vunpack.c.l.b16 %v2545
        %v2566 = vunpack.c.l.b16 %v2546
        %v2567 = vunpack.c.l.b16 %v2547
        %v2568 = vunpack.c.l.b16 %v2548
        %v2569 = vunpack.c.l.b16 %v2549
        %v2570 = vunpack.c.l.b16 %v2550
        %v2571 = vunpack.c.l.b16 %v2551
        %v2572 = vunpack.c.l.b16 %v2552
        %v2573 = vpack.c.b16 %v2566, %v2565
        %v2574 = vpack.c.b16 %v2568, %v2567
        %v2575 = vpack.c.b16 %v2570, %v2569
        %v2576 = vpack.c.b16 %v2572, %v2571
        %v2582 = vsel %vm1714, %v2544, 0
        %2584 = vmatpush.bf16.msra.mxu0 0
        %2585 = vmatpush.bf16.msra.mxu0 0
        %2586 = vmatpush.bf16.msra.mxu0 0
        %2587 = vmatpush.bf16.msra.mxu0 0
        %2588 = vmatpush.bf16.msra.mxu0 %v2576
        %2589 = vmatpush.bf16.msra.mxu0 %v2575
        %2590 = vmatpush.bf16.msra.mxu0 %v2574
        %2591 = vmatpush.bf16.msra.mxu0 %v2573
        %2592 = vmatmul.bf16.gmra.mxu0 %v2582
        %v2593 = vpop.f32.mrf.mxu0
        %v2594 = vadd.f32 %v2555, %v2593
        %v2595 = vpop.f32.mrf.mxu0
        %2596 = vdwg.mxu0
        %v2597 = vmul.f32 %v2594, 0.5
        %v2598 = vadd.f32 %v2454, %v2597
        %v2599 = vld [vmem:[%s77] sm:$0x1]
        %v2600 = vld [vmem:[%s79] sm:$0x1]
        %v2601 = vsel %vm1582, %v2598, 0.0
        %2602 = vadd.xlane.f32.xlu0 %v2601
        %v2603 = vpop.xlane.xlu0 %2602
        %v2604 = vmul.f32 %v2603, %v1592
        %v2605 = vsub.f32 %v2598, %v2604
        %v2606 = vmul.f32 %v2605, %v2605
        %v2607 = vsel %vm1582, %v2606, 0.0
        %2608 = vadd.xlane.f32.xlu0 %v2607
        %v2609 = vpop.xlane.xlu0 %2608
        %v2610 = vmul.f32 %v2609, %v1592
        %v2611 = vadd.f32 %v2610, 1e-05
        %v2612 = vrsqrt.pop %v2611
        %v2613 = vmul.f32 %v2612, %v2611
        %v2614 = vmul.f32 %v2613, %v2612
        %v2615 = vmul.f32 0.5, %v2614
        %v2616 = vsub.f32 1.5, %v2615
        %v2617 = vmul.f32 %v2612, %v2616
        %vm2618 = vweird.f32 %v2611
        %vm2619 = vweird.f32 %v2612
        %vm2620 = vmor %vm2618, %vm2619
        %v2621 = vsel %vm2620, %v2612, %v2617
        %v2622 = vmul.f32 %v2605, %v2621
        %v2624 = vperm.slane %v2599, 0
        %v2626 = vmul.f32 %v2622, %v2624
        %v2628 = vperm.slane %v2600, 0
        %v2630 = vadd.f32 %v2626, %v2628
        %2631 = vst.msk [vmem:[%s1567] sm:$0xff] %vm1582, %v2630
        %s2632 = sand.u32 %s949, 1
        %s2633 = scalar_lea.sflag [#allocation7], %s2632
        %s2634 = sand.u32 %s949, 1
        %s2635 = smul.addr %s2634, 8
        %s2636 = scalar_lea.vmem [#allocation46], %s2635
        // Predicated region
        $region281: #{tpu_custom_call.1} parent=175 // pred_check
          %p2637 = pneg %p959
        $region282: #{tpu_custom_call.1} parent=175 // pred_check_branch
          %2639 = sbr.rel (%p2637) target = $region284
        $region283: #{tpu_custom_call.1} parent=175 // pred_region
          %2641 = vsyncadd %s2633, 0
          %s2642 = smul.addr %s117, 8
          %s2643 = scalar_lea.hbm %s81, %s2642
          %s2645 = sshll.u32 %s2636, 4
          %s2646 = int_to_ptr.vmem [resolvable:$true] %s2645
          %s2647 = sshll.u32 %s2643, 4
          %s2648 = int_to_ptr.hbm [resolvable:$true] %s2647
          %2650 = dma.vmem_to_hbm [thread:$0]  %s2646, 128, %s2648, %s2633
        $region284: #{tpu_custom_call.1} parent=175 // pred_fallthru
          _
      $region176: #{tpu_custom_call.1} parent=5 // pred_fallthru
        _
      %p2651 = scmp.le.s32.totalorder 2, %s112
      // Predicated region
      $region285: #{tpu_custom_call.1} parent=5 // pred_check
        %p2652 = pneg %p2651
      $region286: #{tpu_custom_call.1} parent=5 // pred_check_branch
        %2654 = sbr.rel (%p2652) target = $region288
      $region287: #{tpu_custom_call.1} parent=5 // pred_region
        %s2655 = ssub.s32 %s112, 2
        // Predicated region
        $region289: #{tpu_custom_call.1} parent=287 // pred_check
          %p2656 = pneg %p965
        $region290: #{tpu_custom_call.1} parent=287 // pred_check_branch
          %2658 = sbr.rel (%p2656) target = $region292
        $region291: #{tpu_custom_call.1} parent=287 // pred_region
          %s2659 = sand.u32 %s950, 1
          %s2660 = scalar_lea.sflag [#allocation7], %s2659
          %s2661 = sand.u32 %s950, 1
          %s2662 = smul.addr %s2661, 8
          %s2663 = scalar_lea.vmem [#allocation46], %s2662
          %2665 = dma.done %s2660, 128
        $region292: #{tpu_custom_call.1} parent=287 // pred_fallthru
          _
      $region288: #{tpu_custom_call.1} parent=5 // pred_fallthru
        _
    $region6: #{tpu_custom_call.1} parent=1 // loop_footer
      %s116 = sadd.s32 1, %s112
    $region7: #{tpu_custom_call.1} parent=1 // loop_footer_branch
      %111 = sbr.rel target = $region3
    $region8: #{tpu_custom_call.1} parent=1 // loop_exit
      _
    %2666 = vsyncpa [#allocation6], 1
    %s2667 = scalar_lea.sflag [#allocation6], 1
    %2668 = vsyncpa %s2667, 1
    %2669 = vsyncpa [#allocation9], 1
    %2670 = vsyncpa [#allocation12], 1
    %2671 = vsyncpa [#allocation15], 1
    %2672 = vsyncpa [#allocation18], 1
    %2673 = vsyncpa [#allocation21], 1
    %2674 = vsyncpa [#allocation24], 1
    %2675 = vsyncpa [#allocation27], 1
    %2676 = vsyncpa [#allocation30], 1
    %2677 = vsyncpa [#allocation33], 1
    %2678 = vsyncpa [#allocation36], 1
    %2679 = vsyncpa [#allocation39], 1
    %2680 = vsyncpa [#allocation42], 1
    %2681 = vsyncpa [#allocation45], 1
    %2682 = vsyncpa [#allocation7], 1
    %s2683 = scalar_lea.sflag [#allocation7], 1
    %2684 = vsyncpa %s2683, 1

// kernel: tpu_custom_call.1
$region0: #{tpu_custom_call.1}
  #allocation0 [shape = 'u32[]', space=smem, size = 0x4, offset = 0x4, fixed_abs, tag = 'smem constant byte address 0x4 - core index']
  #allocation1 [shape = 'u32[72,128]{1,0:T(1,128)}', space=vmem, size = 0x9000, scoped, tag = 'internal scratch']
  #allocation2 [shape = 'f32[8,32]{1,0:T(8,128)}', space=vmem, size = 0x1000, scoped, tag = 'scratch operand']
  #allocation3 [shape = 's32[1]{0}', space=sflag, size = 0x4, scoped, tag = 'scoped memory for tpu_custom_call.1']
  #allocation4 [shape = 'u8[512]{0}', space=smem, size = 0x200, scoped, tag = 'prefetched SMEM operand 0']
  %s0 = inlined_call_operand.smem [shape: u32[41], index: -1, kind: input, shape index: {}]
  %s1 = sld [smem:[%s0]]
  %s2 = scalar_lea.smem %s0, 1
  %s3 = sld [smem:[%s2]]
  %s4 = scalar_lea.smem %s0, 2
  %s5 = sld [smem:[%s4]]
  %s6 = scalar_lea.smem %s0, 3
  %s7 = sld [smem:[%s6]]
  %s8 = scalar_lea.smem %s0, 4
  %s9 = sld [smem:[%s8]]
  %s10 = scalar_lea.smem %s0, 5
  %s11 = sld [smem:[%s10]]
  %s12 = scalar_lea.smem %s0, 6
  %s13 = sld [smem:[%s12]]
  %s14 = scalar_lea.smem %s0, 7
  %s15 = sld [smem:[%s14]]
  %s16 = scalar_lea.smem %s0, 8
  %s17 = sld [smem:[%s16]]
  %s18 = scalar_lea.smem %s0, 9
  %s19 = sld [smem:[%s18]]
  %s20 = scalar_lea.smem %s0, 10
  %s21 = sld [smem:[%s20]]
  %s22 = scalar_lea.smem %s0, 11
  %s23 = sld [smem:[%s22]]
  %s24 = scalar_lea.smem %s0, 12
  %s25 = sld [smem:[%s24]]
  %s26 = scalar_lea.smem %s0, 13
  %s27 = sld [smem:[%s26]]
  %s28 = scalar_lea.smem %s0, 14
  %s29 = sld [smem:[%s28]]
  %s30 = scalar_lea.smem %s0, 15
  %s31 = sld [smem:[%s30]]
  %s32 = scalar_lea.smem %s0, 16
  %s33 = sld [smem:[%s32]]
  %s34 = scalar_lea.smem %s0, 17
  %s35 = sld [smem:[%s34]]
  %s36 = scalar_lea.smem %s0, 18
  %s37 = sld [smem:[%s36]]
  %s38 = scalar_lea.smem %s0, 19
  %s39 = sld [smem:[%s38]]
  %s40 = scalar_lea.smem %s0, 20
  %s41 = sld [smem:[%s40]]
  %s42 = scalar_lea.smem %s0, 21
  %s43 = sld [smem:[%s42]]
  %s44 = scalar_lea.smem %s0, 22
  %s45 = sld [smem:[%s44]]
  %s46 = scalar_lea.smem %s0, 23
  %s47 = sld [smem:[%s46]]
  %s48 = scalar_lea.smem %s0, 24
  %s49 = sld [smem:[%s48]]
  %s50 = scalar_lea.smem %s0, 25
  %s51 = sld [smem:[%s50]]
  %s52 = scalar_lea.smem %s0, 26
  %s53 = sld [smem:[%s52]]
  %s54 = scalar_lea.smem %s0, 27
  %s55 = sld [smem:[%s54]]
  %s56 = scalar_lea.smem %s0, 28
  %s57 = sld [smem:[%s56]]
  %s58 = scalar_lea.smem %s0, 29
  %s59 = sld [smem:[%s58]]
  %s60 = scalar_lea.smem %s0, 30
  %s61 = sld [smem:[%s60]]
  %s62 = scalar_lea.smem %s0, 31
  %s63 = sld [smem:[%s62]]
  %s64 = scalar_lea.smem %s0, 32
  %s65 = sld [smem:[%s64]]
  %s66 = scalar_lea.smem %s0, 33
  %s67 = sld [smem:[%s66]]
  %s68 = scalar_lea.smem %s0, 34
  %s69 = sld [smem:[%s68]]
  %s70 = scalar_lea.smem %s0, 35
  %s71 = sld [smem:[%s70]]
  %s72 = scalar_lea.smem %s0, 36
  %s73 = sld [smem:[%s72]]
  %s74 = scalar_lea.smem %s0, 37
  %s75 = sld [smem:[%s74]]
  %s76 = scalar_lea.smem %s0, 38
  %s77 = sld [smem:[%s76]]
  %s78 = scalar_lea.smem %s0, 39
  %s79 = sld [smem:[%s78]]
  %s80 = scalar_lea.smem %s0, 40
  %s81 = sld [smem:[%s80]]
  %s82 = sld [smem:[#allocation0]]
  $region293: #{tpu_custom_call.1} parent=0
    _
  %s84 = ssub.s32 1, %s82
  %s85 = scalar_select 0, %s84, %s82
  %s87 = sshll.u32 %s1, 4
  %s88 = int_to_ptr.hbm [resolvable:$true] %s87
  %90 = dma.hbm_to_smem %s88, 16, [#allocation4], [#allocation3]
  %92 = dma.done [#allocation3], 16
  %93 = sfence
  $region1: #{tpu_custom_call.1} parent=0
    #allocation5 [shape = 'u8[512]{0}', space=vmem, size = 0x400, scoped, tag = 'input window, operand 2, single buffered']
    #allocation6 [shape = 's32[2]{0}', space=sflag, size = 0x8, scoped, tag = 'scoped memory for tpu_custom_call.1']
    #allocation7 [shape = 's32[2]{0}', space=sflag, size = 0x8, scoped, tag = 'scoped memory for tpu_custom_call.1']
    #allocation8 [shape = 'u8[512]{0}', space=vmem, size = 0x400, scoped, tag = 'input window, operand 3, single buffered']
    #allocation9 [shape = 's32[1]{0}', space=sflag, size = 0x4, scoped, tag = 'scoped memory for tpu_custom_call.1']
    #allocation10 [shape = 'u8[512]{0}', space=vmem, size = 0x400, scoped, tag = 'input window, operand 5, single buffered']
    #allocation11 [shape = 'u8[512]{0}', space=vmem, size = 0x400, scoped, tag = 'input window, operand 7, single buffered']
    #allocation12 [shape = 's32[1]{0}', space=sflag, size = 0x4, scoped, tag = 'scoped memory for tpu_custom_call.1']
    #allocation13 [shape = 'u8[512]{0}', space=vmem, size = 0x400, scoped, tag = 'input window, operand 8, single buffered']
    #allocation14 [shape = 'u8[512]{0}', space=vmem, size = 0x400, scoped, tag = 'input window, operand 9, single buffered']
    #allocation15 [shape = 's32[1]{0}', space=sflag, size = 0x4, scoped, tag = 'scoped memory for tpu_custom_call.1']
    #allocation16 [shape = 'u8[512]{0}', space=vmem, size = 0x400, scoped, tag = 'input window, operand 11, single buffered']
    #allocation17 [shape = 'u8[512]{0}', space=vmem, size = 0x400, scoped, tag = 'input window, operand 13, single buffered']
    #allocation18 [shape = 's32[1]{0}', space=sflag, size = 0x4, scoped, tag = 'scoped memory for tpu_custom_call.1']
    #allocation19 [shape = 'u8[512]{0}', space=vmem, size = 0x400, scoped, tag = 'input window, operand 15, single buffered']
    #allocation20 [shape = 'u8[512]{0}', space=vmem, size = 0x400, scoped, tag = 'input window, operand 17, single buffered']
    #allocation21 [shape = 's32[1]{0}', space=sflag, size = 0x4, scoped, tag = 'scoped memory for tpu_custom_call.1']
    #allocation22 [shape = 'u8[512]{0}', space=vmem, size = 0x400, scoped, tag = 'input window, operand 18, single buffered']
    #allocation23 [shape = 'u8[512]{0}', space=vmem, size = 0x400, scoped, tag = 'input window, operand 19, single buffered']
    #allocation24 [shape = 's32[1]{0}', space=sflag, size = 0x4, scoped, tag = 'scoped memory for tpu_custom_call.1']
    #allocation25 [shape = 'u8[512]{0}', space=vmem, size = 0x400, scoped, tag = 'input window, operand 21, single buffered']
    #allocation26 [shape = 'u8[8192]{0}', space=vmem, size = 0x2000, scoped, tag = 'input window, operand 22, single buffered']
    #allocation27 [shape = 's32[1]{0}', space=sflag, size = 0x4, scoped, tag = 'scoped memory for tpu_custom_call.1']
    #allocation28 [shape = 'u8[512]{0}', space=vmem, size = 0x400, scoped, tag = 'input window, operand 23, single buffered']
    #allocation29 [shape = 'u8[3584]{0}', space=vmem, size = 0x1000, scoped, tag = 'input window, operand 24, single buffered']
    #allocation30 [shape = 's32[1]{0}', space=sflag, size = 0x4, scoped, tag = 'scoped memory for tpu_custom_call.1']
    #allocation31 [shape = 'u8[512]{0}', space=vmem, size = 0x400, scoped, tag = 'input window, operand 25, single buffered']
    #allocation32 [shape = 'u8[512]{0}', space=vmem, size = 0x400, scoped, tag = 'input window, operand 26, single buffered']
    #allocation33 [shape = 's32[1]{0}', space=sflag, size = 0x4, scoped, tag = 'scoped memory for tpu_custom_call.1']
    #allocation34 [shape = 'u8[512]{0}', space=vmem, size = 0x400, scoped, tag = 'input window, operand 27, single buffered']
    #allocation35 [shape = 'u8[512]{0}', space=vmem, size = 0x400, scoped, tag = 'input window, operand 28, single buffered']
    #allocation36 [shape = 's32[1]{0}', space=sflag, size = 0x4, scoped, tag = 'scoped memory for tpu_custom_call.1']
    #allocation37 [shape = 'u8[512]{0}', space=vmem, size = 0x400, scoped, tag = 'input window, operand 29, single buffered']
    #allocation38 [shape = 'u8[8192]{0}', space=vmem, size = 0x2000, scoped, tag = 'input window, operand 30, single buffered']
    #allocation39 [shape = 's32[1]{0}', space=sflag, size = 0x4, scoped, tag = 'scoped memory for tpu_custom_call.1']
    #allocation40 [shape = 'u8[512]{0}', space=vmem, size = 0x400, scoped, tag = 'input window, operand 31, single buffered']
    #allocation41 [shape = 'u8[512]{0}', space=vmem, size = 0x400, scoped, tag = 'input window, operand 32, single buffered']
    #allocation42 [shape = 's32[1]{0}', space=sflag, size = 0x4, scoped, tag = 'scoped memory for tpu_custom_call.1']
    #allocation43 [shape = 'u8[512]{0}', space=vmem, size = 0x400, scoped, tag = 'input window, operand 33, single buffered']
    #allocation44 [shape = 'u8[512]{0}', space=vmem, size = 0x400, scoped, tag = 'input window, operand 35, single buffered']
    #allocation45 [shape = 's32[1]{0}', space=sflag, size = 0x4, scoped, tag = 'scoped memory for tpu_custom_call.1']
    #allocation46 [shape = 'u8[8192]{0}', space=vmem, size = 0x2000, scoped, tag = 'output window, operand 0']
    %94 = vsyncpa [#allocation6], 0
    %95 = vsyncpa [#allocation9], 0
    %96 = vsyncpa [#allocation12], 0
    %97 = vsyncpa [#allocation15], 0
    %98 = vsyncpa [#allocation18], 0
    %99 = vsyncpa [#allocation21], 0
    %100 = vsyncpa [#allocation24], 0
    %101 = vsyncpa [#allocation27], 0
    %102 = vsyncpa [#allocation30], 0
    %103 = vsyncpa [#allocation33], 0
    %104 = vsyncpa [#allocation36], 0
    %105 = vsyncpa [#allocation39], 0
    %106 = vsyncpa [#allocation42], 0
    %107 = vsyncpa [#allocation45], 0
    %108 = vsyncpa [#allocation7], 0
    %s109 = scalar_lea.sflag [#allocation7], 1
    %110 = vsyncpa %s109, 0
    loop: start=0, step=1, limit=4
    $region2: #{tpu_custom_call.1} parent=1 // loop_pre_header
      _
    $region3: #{tpu_custom_call.1} parent=1 // loop_header
      %s112 = sphi 0, %s116
      %p113 = scmp.ge.s32.totalorder %s112, 4
      %s122 = sphi 0, %s124
      %s125 = sphi 0, %s122
      %s126 = sphi 0, %s125
      %s142 = sphi 0, %s126
      %s146 = sphi 0, %s146
      %s148 = sphi 0, %s146
      %s149 = sphi 0, %s148
      %s163 = sphi 0, %s149
      %s167 = sphi 0, %s167
      %s169 = sphi 0, %s167
      %s170 = sphi 0, %s169
      %s184 = sphi 0, %s170
      %s188 = sphi 0, %s188
      %s190 = sphi 0, %s188
      %s191 = sphi 0, %s190
      %s205 = sphi 0, %s191
      %s209 = sphi 0, %s209
      %s211 = sphi 0, %s209
      %s212 = sphi 0, %s211
      %s226 = sphi 0, %s212
      %s230 = sphi 0, %s230
      %s232 = sphi 0, %s230
      %s233 = sphi 0, %s232
      %s247 = sphi 0, %s233
      %s251 = sphi 0, %s251
      %s253 = sphi 0, %s251
      %s254 = sphi 0, %s253
      %s268 = sphi 0, %s254
      %s272 = sphi 0, %s272
      %s274 = sphi 0, %s272
      %s275 = sphi 0, %s274
      %s289 = sphi 0, %s275
      %s293 = sphi 0, %s293
      %s295 = sphi 0, %s293
      %s296 = sphi 0, %s295
      %s310 = sphi 0, %s296
      %s314 = sphi 0, %s314
      %s316 = sphi 0, %s314
      %s317 = sphi 0, %s316
      %s331 = sphi 0, %s317
      %s335 = sphi 0, %s335
      %s337 = sphi 0, %s335
      %s338 = sphi 0, %s337
      %s352 = sphi 0, %s338
      %s356 = sphi 0, %s356
      %s358 = sphi 0, %s356
      %s359 = sphi 0, %s358
      %s373 = sphi 0, %s359
      %s377 = sphi 0, %s377
      %s379 = sphi 0, %s377
      %s380 = sphi 0, %s379
      %s394 = sphi 0, %s380
      %s398 = sphi 0, %s398
      %s400 = sphi 0, %s398
      %s401 = sphi 0, %s400
      %s415 = sphi 0, %s401
      %s419 = sphi 0, %s419
      %s421 = sphi 0, %s419
      %s422 = sphi 0, %s421
      %s436 = sphi 0, %s422
      %s440 = sphi 0, %s440
      %s442 = sphi 0, %s440
      %s443 = sphi 0, %s442
      %s457 = sphi 0, %s443
      %s461 = sphi 0, %s461
      %s463 = sphi 0, %s461
      %s464 = sphi 0, %s463
      %s478 = sphi 0, %s464
      %s482 = sphi 0, %s482
      %s484 = sphi 0, %s482
      %s485 = sphi 0, %s484
      %s499 = sphi 0, %s485
      %s503 = sphi 0, %s503
      %s505 = sphi 0, %s503
      %s506 = sphi 0, %s505
      %s520 = sphi 0, %s506
      %s524 = sphi 0, %s524
      %s526 = sphi 0, %s524
      %s527 = sphi 0, %s526
      %s541 = sphi 0, %s527
      %s545 = sphi 0, %s545
      %s547 = sphi 0, %s545
      %s548 = sphi 0, %s547
      %s562 = sphi 0, %s548
      %s566 = sphi 0, %s566
      %s568 = sphi 0, %s566
      %s569 = sphi 0, %s568
      %s583 = sphi 0, %s569
      %s587 = sphi 0, %s587
      %s589 = sphi 0, %s587
      %s590 = sphi 0, %s589
      %s604 = sphi 0, %s590
      %s608 = sphi 0, %s608
      %s610 = sphi 0, %s608
      %s611 = sphi 0, %s610
      %s625 = sphi 0, %s611
      %s629 = sphi 0, %s629
      %s631 = sphi 0, %s629
      %s632 = sphi 0, %s631
      %s646 = sphi 0, %s632
      %s650 = sphi 0, %s650
      %s652 = sphi 0, %s650
      %s653 = sphi 0, %s652
      %s667 = sphi 0, %s653
      %s671 = sphi 0, %s671
      %s673 = sphi 0, %s671
      %s674 = sphi 0, %s673
      %s688 = sphi 0, %s674
      %s692 = sphi 0, %s692
      %s694 = sphi 0, %s692
      %s695 = sphi 0, %s694
      %s709 = sphi 0, %s695
      %s713 = sphi 0, %s713
      %s715 = sphi 0, %s713
      %s716 = sphi 0, %s715
      %s730 = sphi 0, %s716
      %s734 = sphi 0, %s734
      %s736 = sphi 0, %s734
      %s737 = sphi 0, %s736
      %s751 = sphi 0, %s737
      %s755 = sphi 0, %s755
      %s757 = sphi 0, %s755
      %s758 = sphi 0, %s757
      %s772 = sphi 0, %s758
      %s776 = sphi 0, %s776
      %s778 = sphi 0, %s776
      %s779 = sphi 0, %s778
      %s793 = sphi 0, %s779
      %s797 = sphi 0, %s797
      %s799 = sphi 0, %s797
      %s800 = sphi 0, %s799
      %s814 = sphi 0, %s800
      %s818 = sphi 0, %s818
      %s820 = sphi 0, %s818
      %s821 = sphi 0, %s820
      %s835 = sphi 0, %s821
      %s839 = sphi 0, %s839
      %s841 = sphi 0, %s839
      %s842 = sphi 0, %s841
      %s856 = sphi 0, %s842
      %s860 = sphi 0, %s860
      %s862 = sphi 0, %s860
      %s863 = sphi 0, %s862
      %s877 = sphi 0, %s863
      %s881 = sphi 0, %s881
      %s883 = sphi 0, %s881
      %s884 = sphi 0, %s883
      %s898 = sphi 0, %s884
      %s902 = sphi 0, %s902
      %s904 = sphi 0, %s902
      %s905 = sphi 0, %s904
      %s919 = sphi 0, %s905
      %s923 = sphi 0, %s923
      %s925 = sphi 0, %s923
      %s926 = sphi 0, %s925
      %s940 = sphi 0, %s926
      %s946 = sphi 0, %s948
      %s949 = sphi 0, %s946
      %s950 = sphi 0, %s949
      %s966 = sphi 0, %s950
    $region4: #{tpu_custom_call.1} parent=1 // loop_header_branch
      %115 = sbr.rel (%p113) target = $region8
    $region5: #{tpu_custom_call.1} parent=1 // loop_body
      %s117 = ssub.s32 %s112, 1
      %s118 = ssub.s32 %s112, 2
      %s119 = sadd.s32 %s112, 1
      %s120 = ssub.s32 %s112, %s119
      %p121 = scmp.eq.s32.totalorder %s120, 0
      %s123 = sadd.s32 %s122, 1
      %s124 = scalar_select %p121, %s122, %s123
      %p127 = pneg %p121
      %p128 = scmp.eq.s32.totalorder %s112, 1
      %p129 = por %p127, %p128
      %p130 = scmp.ne.s32.totalorder %s122, %s125
      %p131 = scmp.eq.s32.totalorder %s112, 0
      %p132 = por %p130, %p131
      %p133 = scmp.ne.s32.totalorder %s122, %s125
      %p134 = scmp.eq.s32.totalorder %s117, 1
      %p135 = por %p133, %p134
      %p136 = scmp.ne.s32.totalorder %s125, %s126
      %p137 = scmp.eq.s32.totalorder %s117, 0
      %p138 = por %p136, %p137
      %p139 = scmp.ne.s32.totalorder %s125, %s126
      %p140 = scmp.eq.s32.totalorder %s118, 1
      %p141 = por %p139, %p140
      %p143 = scmp.ne.s32.totalorder %s126, %s142
      %p144 = scmp.eq.s32.totalorder %s118, 0
      %p145 = por %p143, %p144
      %s147 = sadd.s32 %s146, 1
      %p150 = scmp.eq.s32.totalorder %s112, 1
      %p151 = scmp.ne.s32.totalorder %s146, %s148
      %p152 = scmp.eq.s32.totalorder %s112, 0
      %p153 = por %p151, %p152
      %p154 = scmp.ne.s32.totalorder %s146, %s148
      %p155 = scmp.eq.s32.totalorder %s117, 1
      %p156 = por %p154, %p155
      %p157 = scmp.ne.s32.totalorder %s148, %s149
      %p158 = scmp.eq.s32.totalorder %s117, 0
      %p159 = por %p157, %p158
      %p160 = scmp.ne.s32.totalorder %s148, %s149
      %p161 = scmp.eq.s32.totalorder %s118, 1
      %p162 = por %p160, %p161
      %p164 = scmp.ne.s32.totalorder %s149, %s163
      %p165 = scmp.eq.s32.totalorder %s118, 0
      %p166 = por %p164, %p165
      %s168 = sadd.s32 %s167, 1
      %p171 = scmp.eq.s32.totalorder %s112, 1
      %p172 = scmp.ne.s32.totalorder %s167, %s169
      %p173 = scmp.eq.s32.totalorder %s112, 0
      %p174 = por %p172, %p173
      %p175 = scmp.ne.s32.totalorder %s167, %s169
      %p176 = scmp.eq.s32.totalorder %s117, 1
      %p177 = por %p175, %p176
      %p178 = scmp.ne.s32.totalorder %s169, %s170
      %p179 = scmp.eq.s32.totalorder %s117, 0
      %p180 = por %p178, %p179
      %p181 = scmp.ne.s32.totalorder %s169, %s170
      %p182 = scmp.eq.s32.totalorder %s118, 1
      %p183 = por %p181, %p182
      %p185 = scmp.ne.s32.totalorder %s170, %s184
      %p186 = scmp.eq.s32.totalorder %s118, 0
      %p187 = por %p185, %p186
      %s189 = sadd.s32 %s188, 1
      %p192 = scmp.eq.s32.totalorder %s112, 1
      %p193 = scmp.ne.s32.totalorder %s188, %s190
      %p194 = scmp.eq.s32.totalorder %s112, 0
      %p195 = por %p193, %p194
      %p196 = scmp.ne.s32.totalorder %s188, %s190
      %p197 = scmp.eq.s32.totalorder %s117, 1
      %p198 = por %p196, %p197
      %p199 = scmp.ne.s32.totalorder %s190, %s191
      %p200 = scmp.eq.s32.totalorder %s117, 0
      %p201 = por %p199, %p200
      %p202 = scmp.ne.s32.totalorder %s190, %s191
      %p203 = scmp.eq.s32.totalorder %s118, 1
      %p204 = por %p202, %p203
      %p206 = scmp.ne.s32.totalorder %s191, %s205
      %p207 = scmp.eq.s32.totalorder %s118, 0
      %p208 = por %p206, %p207
      %s210 = sadd.s32 %s209, 1
      %p213 = scmp.eq.s32.totalorder %s112, 1
      %p214 = scmp.ne.s32.totalorder %s209, %s211
      %p215 = scmp.eq.s32.totalorder %s112, 0
      %p216 = por %p214, %p215
      %p217 = scmp.ne.s32.totalorder %s209, %s211
      %p218 = scmp.eq.s32.totalorder %s117, 1
      %p219 = por %p217, %p218
      %p220 = scmp.ne.s32.totalorder %s211, %s212
      %p221 = scmp.eq.s32.totalorder %s117, 0
      %p222 = por %p220, %p221
      %p223 = scmp.ne.s32.totalorder %s211, %s212
      %p224 = scmp.eq.s32.totalorder %s118, 1
      %p225 = por %p223, %p224
      %p227 = scmp.ne.s32.totalorder %s212, %s226
      %p228 = scmp.eq.s32.totalorder %s118, 0
      %p229 = por %p227, %p228
      %s231 = sadd.s32 %s230, 1
      %p234 = scmp.eq.s32.totalorder %s112, 1
      %p235 = scmp.ne.s32.totalorder %s230, %s232
      %p236 = scmp.eq.s32.totalorder %s112, 0
      %p237 = por %p235, %p236
      %p238 = scmp.ne.s32.totalorder %s230, %s232
      %p239 = scmp.eq.s32.totalorder %s117, 1
      %p240 = por %p238, %p239
      %p241 = scmp.ne.s32.totalorder %s232, %s233
      %p242 = scmp.eq.s32.totalorder %s117, 0
      %p243 = por %p241, %p242
      %p244 = scmp.ne.s32.totalorder %s232, %s233
      %p245 = scmp.eq.s32.totalorder %s118, 1
      %p246 = por %p244, %p245
      %p248 = scmp.ne.s32.totalorder %s233, %s247
      %p249 = scmp.eq.s32.totalorder %s118, 0
      %p250 = por %p248, %p249
      %s252 = sadd.s32 %s251, 1
      %p255 = scmp.eq.s32.totalorder %s112, 1
      %p256 = scmp.ne.s32.totalorder %s251, %s253
      %p257 = scmp.eq.s32.totalorder %s112, 0
      %p258 = por %p256, %p257
      %p259 = scmp.ne.s32.totalorder %s251, %s253
      %p260 = scmp.eq.s32.totalorder %s117, 1
      %p261 = por %p259, %p260
      %p262 = scmp.ne.s32.totalorder %s253, %s254
      %p263 = scmp.eq.s32.totalorder %s117, 0
      %p264 = por %p262, %p263
      %p265 = scmp.ne.s32.totalorder %s253, %s254
      %p266 = scmp.eq.s32.totalorder %s118, 1
      %p267 = por %p265, %p266
      %p269 = scmp.ne.s32.totalorder %s254, %s268
      %p270 = scmp.eq.s32.totalorder %s118, 0
      %p271 = por %p269, %p270
      %s273 = sadd.s32 %s272, 1
      %p276 = scmp.eq.s32.totalorder %s112, 1
      %p277 = scmp.ne.s32.totalorder %s272, %s274
      %p278 = scmp.eq.s32.totalorder %s112, 0
      %p279 = por %p277, %p278
      %p280 = scmp.ne.s32.totalorder %s272, %s274
      %p281 = scmp.eq.s32.totalorder %s117, 1
      %p282 = por %p280, %p281
      %p283 = scmp.ne.s32.totalorder %s274, %s275
      %p284 = scmp.eq.s32.totalorder %s117, 0
      %p285 = por %p283, %p284
      %p286 = scmp.ne.s32.totalorder %s274, %s275
      %p287 = scmp.eq.s32.totalorder %s118, 1
      %p288 = por %p286, %p287
      %p290 = scmp.ne.s32.totalorder %s275, %s289
      %p291 = scmp.eq.s32.totalorder %s118, 0
      %p292 = por %p290, %p291
      %s294 = sadd.s32 %s293, 1
      %p297 = scmp.eq.s32.totalorder %s112, 1
      %p298 = scmp.ne.s32.totalorder %s293, %s295
      %p299 = scmp.eq.s32.totalorder %s112, 0
      %p300 = por %p298, %p299
      %p301 = scmp.ne.s32.totalorder %s293, %s295
      %p302 = scmp.eq.s32.totalorder %s117, 1
      %p303 = por %p301, %p302
      %p304 = scmp.ne.s32.totalorder %s295, %s296
      %p305 = scmp.eq.s32.totalorder %s117, 0
      %p306 = por %p304, %p305
      %p307 = scmp.ne.s32.totalorder %s295, %s296
      %p308 = scmp.eq.s32.totalorder %s118, 1
      %p309 = por %p307, %p308
      %p311 = scmp.ne.s32.totalorder %s296, %s310
      %p312 = scmp.eq.s32.totalorder %s118, 0
      %p313 = por %p311, %p312
      %s315 = sadd.s32 %s314, 1
      %p318 = scmp.eq.s32.totalorder %s112, 1
      %p319 = scmp.ne.s32.totalorder %s314, %s316
      %p320 = scmp.eq.s32.totalorder %s112, 0
      %p321 = por %p319, %p320
      %p322 = scmp.ne.s32.totalorder %s314, %s316
      %p323 = scmp.eq.s32.totalorder %s117, 1
      %p324 = por %p322, %p323
      %p325 = scmp.ne.s32.totalorder %s316, %s317
      %p326 = scmp.eq.s32.totalorder %s117, 0
      %p327 = por %p325, %p326
      %p328 = scmp.ne.s32.totalorder %s316, %s317
      %p329 = scmp.eq.s32.totalorder %s118, 1
      %p330 = por %p328, %p329
      %p332 = scmp.ne.s32.totalorder %s317, %s331
      %p333 = scmp.eq.s32.totalorder %s118, 0
      %p334 = por %p332, %p333
      %s336 = sadd.s32 %s335, 1
      %p339 = scmp.eq.s32.totalorder %s112, 1
      %p340 = scmp.ne.s32.totalorder %s335, %s337
      %p341 = scmp.eq.s32.totalorder %s112, 0
      %p342 = por %p340, %p341
      %p343 = scmp.ne.s32.totalorder %s335, %s337
      %p344 = scmp.eq.s32.totalorder %s117, 1
      %p345 = por %p343, %p344
      %p346 = scmp.ne.s32.totalorder %s337, %s338
      %p347 = scmp.eq.s32.totalorder %s117, 0
      %p348 = por %p346, %p347
      %p349 = scmp.ne.s32.totalorder %s337, %s338
      %p350 = scmp.eq.s32.totalorder %s118, 1
      %p351 = por %p349, %p350
      %p353 = scmp.ne.s32.totalorder %s338, %s352
      %p354 = scmp.eq.s32.totalorder %s118, 0
      %p355 = por %p353, %p354
      %s357 = sadd.s32 %s356, 1
      %p360 = scmp.eq.s32.totalorder %s112, 1
      %p361 = scmp.ne.s32.totalorder %s356, %s358
      %p362 = scmp.eq.s32.totalorder %s112, 0
      %p363 = por %p361, %p362
      %p364 = scmp.ne.s32.totalorder %s356, %s358
      %p365 = scmp.eq.s32.totalorder %s117, 1
      %p366 = por %p364, %p365
      %p367 = scmp.ne.s32.totalorder %s358, %s359
      %p368 = scmp.eq.s32.totalorder %s117, 0
      %p369 = por %p367, %p368
      %p370 = scmp.ne.s32.totalorder %s358, %s359
      %p371 = scmp.eq.s32.totalorder %s118, 1
      %p372 = por %p370, %p371
      %p374 = scmp.ne.s32.totalorder %s359, %s373
      %p375 = scmp.eq.s32.totalorder %s118, 0
      %p376 = por %p374, %p375
      %s378 = sadd.s32 %s377, 1
      %p381 = scmp.eq.s32.totalorder %s112, 1
      %p382 = scmp.ne.s32.totalorder %s377, %s379
      %p383 = scmp.eq.s32.totalorder %s112, 0
      %p384 = por %p382, %p383
      %p385 = scmp.ne.s32.totalorder %s377, %s379
      %p386 = scmp.eq.s32.totalorder %s117, 1
      %p387 = por %p385, %p386
      %p388 = scmp.ne.s32.totalorder %s379, %s380
      %p389 = scmp.eq.s32.totalorder %s117, 0
      %p390 = por %p388, %p389
      %p391 = scmp.ne.s32.totalorder %s379, %s380
      %p392 = scmp.eq.s32.totalorder %s118, 1
      %p393 = por %p391, %p392
      %p395 = scmp.ne.s32.totalorder %s380, %s394
      %p396 = scmp.eq.s32.totalorder %s118, 0
      %p397 = por %p395, %p396
      %s399 = sadd.s32 %s398, 1
      %p402 = scmp.eq.s32.totalorder %s112, 1
      %p403 = scmp.ne.s32.totalorder %s398, %s400
      %p404 = scmp.eq.s32.totalorder %s112, 0
      %p405 = por %p403, %p404
      %p406 = scmp.ne.s32.totalorder %s398, %s400
      %p407 = scmp.eq.s32.totalorder %s117, 1
      %p408 = por %p406, %p407
      %p409 = scmp.ne.s32.totalorder %s400, %s401
      %p410 = scmp.eq.s32.totalorder %s117, 0
      %p411 = por %p409, %p410
      %p412 = scmp.ne.s32.totalorder %s400, %s401
      %p413 = scmp.eq.s32.totalorder %s118, 1
      %p414 = por %p412, %p413
      %p416 = scmp.ne.s32.totalorder %s401, %s415
      %p417 = scmp.eq.s32.totalorder %s118, 0
      %p418 = por %p416, %p417
      %s420 = sadd.s32 %s419, 1
      %p423 = scmp.eq.s32.totalorder %s112, 1
      %p424 = scmp.ne.s32.totalorder %s419, %s421
      %p425 = scmp.eq.s32.totalorder %s112, 0
      %p426 = por %p424, %p425
      %p427 = scmp.ne.s32.totalorder %s419, %s421
      %p428 = scmp.eq.s32.totalorder %s117, 1
      %p429 = por %p427, %p428
      %p430 = scmp.ne.s32.totalorder %s421, %s422
      %p431 = scmp.eq.s32.totalorder %s117, 0
      %p432 = por %p430, %p431
      %p433 = scmp.ne.s32.totalorder %s421, %s422
      %p434 = scmp.eq.s32.totalorder %s118, 1
      %p435 = por %p433, %p434
      %p437 = scmp.ne.s32.totalorder %s422, %s436
      %p438 = scmp.eq.s32.totalorder %s118, 0
      %p439 = por %p437, %p438
      %s441 = sadd.s32 %s440, 1
      %p444 = scmp.eq.s32.totalorder %s112, 1
      %p445 = scmp.ne.s32.totalorder %s440, %s442
      %p446 = scmp.eq.s32.totalorder %s112, 0
      %p447 = por %p445, %p446
      %p448 = scmp.ne.s32.totalorder %s440, %s442
      %p449 = scmp.eq.s32.totalorder %s117, 1
      %p450 = por %p448, %p449
      %p451 = scmp.ne.s32.totalorder %s442, %s443
      %p452 = scmp.eq.s32.totalorder %s117, 0
      %p453 = por %p451, %p452
      %p454 = scmp.ne.s32.totalorder %s442, %s443
      %p455 = scmp.eq.s32.totalorder %s118, 1
      %p456 = por %p454, %p455
      %p458 = scmp.ne.s32.totalorder %s443, %s457
      %p459 = scmp.eq.s32.totalorder %s118, 0
      %p460 = por %p458, %p459
      %s462 = sadd.s32 %s461, 1
      %p465 = scmp.eq.s32.totalorder %s112, 1
      %p466 = scmp.ne.s32.totalorder %s461, %s463
      %p467 = scmp.eq.s32.totalorder %s112, 0
      %p468 = por %p466, %p467
      %p469 = scmp.ne.s32.totalorder %s461, %s463
      %p470 = scmp.eq.s32.totalorder %s117, 1
      %p471 = por %p469, %p470
      %p472 = scmp.ne.s32.totalorder %s463, %s464
      %p473 = scmp.eq.s32.totalorder %s117, 0
      %p474 = por %p472, %p473
      %p475 = scmp.ne.s32.totalorder %s463, %s464
      %p476 = scmp.eq.s32.totalorder %s118, 1
      %p477 = por %p475, %p476
      %p479 = scmp.ne.s32.totalorder %s464, %s478
      %p480 = scmp.eq.s32.totalorder %s118, 0
      %p481 = por %p479, %p480
      %s483 = sadd.s32 %s482, 1
      %p486 = scmp.eq.s32.totalorder %s112, 1
      %p487 = scmp.ne.s32.totalorder %s482, %s484
      %p488 = scmp.eq.s32.totalorder %s112, 0
      %p489 = por %p487, %p488
      %p490 = scmp.ne.s32.totalorder %s482, %s484
      %p491 = scmp.eq.s32.totalorder %s117, 1
      %p492 = por %p490, %p491
      %p493 = scmp.ne.s32.totalorder %s484, %s485
      %p494 = scmp.eq.s32.totalorder %s117, 0
      %p495 = por %p493, %p494
      %p496 = scmp.ne.s32.totalorder %s484, %s485
      %p497 = scmp.eq.s32.totalorder %s118, 1
      %p498 = por %p496, %p497
      %p500 = scmp.ne.s32.totalorder %s485, %s499
      %p501 = scmp.eq.s32.totalorder %s118, 0
      %p502 = por %p500, %p501
      %s504 = sadd.s32 %s503, 1
      %p507 = scmp.eq.s32.totalorder %s112, 1
      %p508 = scmp.ne.s32.totalorder %s503, %s505
      %p509 = scmp.eq.s32.totalorder %s112, 0
      %p510 = por %p508, %p509
      %p511 = scmp.ne.s32.totalorder %s503, %s505
      %p512 = scmp.eq.s32.totalorder %s117, 1
      %p513 = por %p511, %p512
      %p514 = scmp.ne.s32.totalorder %s505, %s506
      %p515 = scmp.eq.s32.totalorder %s117, 0
      %p516 = por %p514, %p515
      %p517 = scmp.ne.s32.totalorder %s505, %s506
      %p518 = scmp.eq.s32.totalorder %s118, 1
      %p519 = por %p517, %p518
      %p521 = scmp.ne.s32.totalorder %s506, %s520
      %p522 = scmp.eq.s32.totalorder %s118, 0
      %p523 = por %p521, %p522
      %s525 = sadd.s32 %s524, 1
      %p528 = scmp.eq.s32.totalorder %s112, 1
      %p529 = scmp.ne.s32.totalorder %s524, %s526
      %p530 = scmp.eq.s32.totalorder %s112, 0
      %p531 = por %p529, %p530
      %p532 = scmp.ne.s32.totalorder %s524, %s526
      %p533 = scmp.eq.s32.totalorder %s117, 1
      %p534 = por %p532, %p533
      %p535 = scmp.ne.s32.totalorder %s526, %s527
      %p536 = scmp.eq.s32.totalorder %s117, 0
      %p537 = por %p535, %p536
      %p538 = scmp.ne.s32.totalorder %s526, %s527
      %p539 = scmp.eq.s32.totalorder %s118, 1
      %p540 = por %p538, %p539
      %p542 = scmp.ne.s32.totalorder %s527, %s541
      %p543 = scmp.eq.s32.totalorder %s118, 0
      %p544 = por %p542, %p543
      %s546 = sadd.s32 %s545, 1
      %p549 = scmp.eq.s32.totalorder %s112, 1
      %p550 = scmp.ne.s32.totalorder %s545, %s547
      %p551 = scmp.eq.s32.totalorder %s112, 0
      %p552 = por %p550, %p551
      %p553 = scmp.ne.s32.totalorder %s545, %s547
      %p554 = scmp.eq.s32.totalorder %s117, 1
      %p555 = por %p553, %p554
      %p556 = scmp.ne.s32.totalorder %s547, %s548
      %p557 = scmp.eq.s32.totalorder %s117, 0
      %p558 = por %p556, %p557
      %p559 = scmp.ne.s32.totalorder %s547, %s548
      %p560 = scmp.eq.s32.totalorder %s118, 1
      %p561 = por %p559, %p560
      %p563 = scmp.ne.s32.totalorder %s548, %s562
      %p564 = scmp.eq.s32.totalorder %s118, 0
      %p565 = por %p563, %p564
      %s567 = sadd.s32 %s566, 1
      %p570 = scmp.eq.s32.totalorder %s112, 1
      %p571 = scmp.ne.s32.totalorder %s566, %s568
      %p572 = scmp.eq.s32.totalorder %s112, 0
      %p573 = por %p571, %p572
      %p574 = scmp.ne.s32.totalorder %s566, %s568
      %p575 = scmp.eq.s32.totalorder %s117, 1
      %p576 = por %p574, %p575
      %p577 = scmp.ne.s32.totalorder %s568, %s569
      %p578 = scmp.eq.s32.totalorder %s117, 0
      %p579 = por %p577, %p578
      %p580 = scmp.ne.s32.totalorder %s568, %s569
      %p581 = scmp.eq.s32.totalorder %s118, 1
      %p582 = por %p580, %p581
      %p584 = scmp.ne.s32.totalorder %s569, %s583
      %p585 = scmp.eq.s32.totalorder %s118, 0
      %p586 = por %p584, %p585
      %s588 = sadd.s32 %s587, 1
      %p591 = scmp.eq.s32.totalorder %s112, 1
      %p592 = scmp.ne.s32.totalorder %s587, %s589
      %p593 = scmp.eq.s32.totalorder %s112, 0
      %p594 = por %p592, %p593
      %p595 = scmp.ne.s32.totalorder %s587, %s589
      %p596 = scmp.eq.s32.totalorder %s117, 1
      %p597 = por %p595, %p596
      %p598 = scmp.ne.s32.totalorder %s589, %s590
      %p599 = scmp.eq.s32.totalorder %s117, 0
      %p600 = por %p598, %p599
      %p601 = scmp.ne.s32.totalorder %s589, %s590
      %p602 = scmp.eq.s32.totalorder %s118, 1
      %p603 = por %p601, %p602
      %p605 = scmp.ne.s32.totalorder %s590, %s604
      %p606 = scmp.eq.s32.totalorder %s118, 0
      %p607 = por %p605, %p606
      %s609 = sadd.s32 %s608, 1
      %p612 = scmp.eq.s32.totalorder %s112, 1
      %p613 = scmp.ne.s32.totalorder %s608, %s610
      %p614 = scmp.eq.s32.totalorder %s112, 0
      %p615 = por %p613, %p614
      %p616 = scmp.ne.s32.totalorder %s608, %s610
      %p617 = scmp.eq.s32.totalorder %s117, 1
      %p618 = por %p616, %p617
      %p619 = scmp.ne.s32.totalorder %s610, %s611
      %p620 = scmp.eq.s32.totalorder %s117, 0
      %p621 = por %p619, %p620
      %p622 = scmp.ne.s32.totalorder %s610, %s611
      %p623 = scmp.eq.s32.totalorder %s118, 1
      %p624 = por %p622, %p623
      %p626 = scmp.ne.s32.totalorder %s611, %s625
      %p627 = scmp.eq.s32.totalorder %s118, 0
      %p628 = por %p626, %p627
      %s630 = sadd.s32 %s629, 1
      %p633 = scmp.eq.s32.totalorder %s112, 1
      %p634 = scmp.ne.s32.totalorder %s629, %s631
      %p635 = scmp.eq.s32.totalorder %s112, 0
      %p636 = por %p634, %p635
      %p637 = scmp.ne.s32.totalorder %s629, %s631
      %p638 = scmp.eq.s32.totalorder %s117, 1
      %p639 = por %p637, %p638
      %p640 = scmp.ne.s32.totalorder %s631, %s632
      %p641 = scmp.eq.s32.totalorder %s117, 0
      %p642 = por %p640, %p641
      %p643 = scmp.ne.s32.totalorder %s631, %s632
      %p644 = scmp.eq.s32.totalorder %s118, 1
      %p645 = por %p643, %p644
      %p647 = scmp.ne.s32.totalorder %s632, %s646
      %p648 = scmp.eq.s32.totalorder %s118, 0
      %p649 = por %p647, %p648
      %s651 = sadd.s32 %s650, 1
      %p654 = scmp.eq.s32.totalorder %s112, 1
      %p655 = scmp.ne.s32.totalorder %s650, %s652
      %p656 = scmp.eq.s32.totalorder %s112, 0
      %p657 = por %p655, %p656
      %p658 = scmp.ne.s32.totalorder %s650, %s652
      %p659 = scmp.eq.s32.totalorder %s117, 1
      %p660 = por %p658, %p659
      %p661 = scmp.ne.s32.totalorder %s652, %s653
      %p662 = scmp.eq.s32.totalorder %s117, 0
      %p663 = por %p661, %p662
      %p664 = scmp.ne.s32.totalorder %s652, %s653
      %p665 = scmp.eq.s32.totalorder %s118, 1
      %p666 = por %p664, %p665
      %p668 = scmp.ne.s32.totalorder %s653, %s667
      %p669 = scmp.eq.s32.totalorder %s118, 0
      %p670 = por %p668, %p669
      %s672 = sadd.s32 %s671, 1
      %p675 = scmp.eq.s32.totalorder %s112, 1
      %p676 = scmp.ne.s32.totalorder %s671, %s673
      %p677 = scmp.eq.s32.totalorder %s112, 0
      %p678 = por %p676, %p677
      %p679 = scmp.ne.s32.totalorder %s671, %s673
      %p680 = scmp.eq.s32.totalorder %s117, 1
      %p681 = por %p679, %p680
      %p682 = scmp.ne.s32.totalorder %s673, %s674
      %p683 = scmp.eq.s32.totalorder %s117, 0
      %p684 = por %p682, %p683
      %p685 = scmp.ne.s32.totalorder %s673, %s674
      %p686 = scmp.eq.s32.totalorder %s118, 1
      %p687 = por %p685, %p686
      %p689 = scmp.ne.s32.totalorder %s674, %s688
      %p690 = scmp.eq.s32.totalorder %s118, 0
      %p691 = por %p689, %p690
      %s693 = sadd.s32 %s692, 1
      %p696 = scmp.eq.s32.totalorder %s112, 1
      %p697 = scmp.ne.s32.totalorder %s692, %s694
      %p698 = scmp.eq.s32.totalorder %s112, 0
      %p699 = por %p697, %p698
      %p700 = scmp.ne.s32.totalorder %s692, %s694
      %p701 = scmp.eq.s32.totalorder %s117, 1
      %p702 = por %p700, %p701
      %p703 = scmp.ne.s32.totalorder %s694, %s695
      %p704 = scmp.eq.s32.totalorder %s117, 0
      %p705 = por %p703, %p704
      %p706 = scmp.ne.s32.totalorder %s694, %s695
      %p707 = scmp.eq.s32.totalorder %s118, 1
      %p708 = por %p706, %p707
      %p710 = scmp.ne.s32.totalorder %s695, %s709
      %p711 = scmp.eq.s32.totalorder %s118, 0
      %p712 = por %p710, %p711
      %s714 = sadd.s32 %s713, 1
      %p717 = scmp.eq.s32.totalorder %s112, 1
      %p718 = scmp.ne.s32.totalorder %s713, %s715
      %p719 = scmp.eq.s32.totalorder %s112, 0
      %p720 = por %p718, %p719
      %p721 = scmp.ne.s32.totalorder %s713, %s715
      %p722 = scmp.eq.s32.totalorder %s117, 1
      %p723 = por %p721, %p722
      %p724 = scmp.ne.s32.totalorder %s715, %s716
      %p725 = scmp.eq.s32.totalorder %s117, 0
      %p726 = por %p724, %p725
      %p727 = scmp.ne.s32.totalorder %s715, %s716
      %p728 = scmp.eq.s32.totalorder %s118, 1
      %p729 = por %p727, %p728
      %p731 = scmp.ne.s32.totalorder %s716, %s730
      %p732 = scmp.eq.s32.totalorder %s118, 0
      %p733 = por %p731, %p732
      %s735 = sadd.s32 %s734, 1
      %p738 = scmp.eq.s32.totalorder %s112, 1
      %p739 = scmp.ne.s32.totalorder %s734, %s736
      %p740 = scmp.eq.s32.totalorder %s112, 0
      %p741 = por %p739, %p740
      %p742 = scmp.ne.s32.totalorder %s734, %s736
      %p743 = scmp.eq.s32.totalorder %s117, 1
      %p744 = por %p742, %p743
      %p745 = scmp.ne.s32.totalorder %s736, %s737
      %p746 = scmp.eq.s32.totalorder %s117, 0
      %p747 = por %p745, %p746
      %p748 = scmp.ne.s32.totalorder %s736, %s737
      %p749 = scmp.eq.s32.totalorder %s118, 1
      %p750 = por %p748, %p749
      %p752 = scmp.ne.s32.totalorder %s737, %s751
      %p753 = scmp.eq.s32.totalorder %s118, 0
      %p754 = por %p752, %p753
      %s756 = sadd.s32 %s755, 1
      %p759 = scmp.eq.s32.totalorder %s112, 1
      %p760 = scmp.ne.s32.totalorder %s755, %s757
      %p761 = scmp.eq.s32.totalorder %s112, 0
      %p762 = por %p760, %p761
      %p763 = scmp.ne.s32.totalorder %s755, %s757
      %p764 = scmp.eq.s32.totalorder %s117, 1
      %p765 = por %p763, %p764
      %p766 = scmp.ne.s32.totalorder %s757, %s758
      %p767 = scmp.eq.s32.totalorder %s117, 0
      %p768 = por %p766, %p767
      %p769 = scmp.ne.s32.totalorder %s757, %s758
      %p770 = scmp.eq.s32.totalorder %s118, 1
      %p771 = por %p769, %p770
      %p773 = scmp.ne.s32.totalorder %s758, %s772
      %p774 = scmp.eq.s32.totalorder %s118, 0
      %p775 = por %p773, %p774
      %s777 = sadd.s32 %s776, 1
      %p780 = scmp.eq.s32.totalorder %s112, 1
      %p781 = scmp.ne.s32.totalorder %s776, %s778
      %p782 = scmp.eq.s32.totalorder %s112, 0
      %p783 = por %p781, %p782
      %p784 = scmp.ne.s32.totalorder %s776, %s778
      %p785 = scmp.eq.s32.totalorder %s117, 1
      %p786 = por %p784, %p785
      %p787 = scmp.ne.s32.totalorder %s778, %s779
      %p788 = scmp.eq.s32.totalorder %s117, 0
      %p789 = por %p787, %p788
      %p790 = scmp.ne.s32.totalorder %s778, %s779
      %p791 = scmp.eq.s32.totalorder %s118, 1
      %p792 = por %p790, %p791
      %p794 = scmp.ne.s32.totalorder %s779, %s793
      %p795 = scmp.eq.s32.totalorder %s118, 0
      %p796 = por %p794, %p795
      %s798 = sadd.s32 %s797, 1
      %p801 = scmp.eq.s32.totalorder %s112, 1
      %p802 = scmp.ne.s32.totalorder %s797, %s799
      %p803 = scmp.eq.s32.totalorder %s112, 0
      %p804 = por %p802, %p803
      %p805 = scmp.ne.s32.totalorder %s797, %s799
      %p806 = scmp.eq.s32.totalorder %s117, 1
      %p807 = por %p805, %p806
      %p808 = scmp.ne.s32.totalorder %s799, %s800
      %p809 = scmp.eq.s32.totalorder %s117, 0
      %p810 = por %p808, %p809
      %p811 = scmp.ne.s32.totalorder %s799, %s800
      %p812 = scmp.eq.s32.totalorder %s118, 1
      %p813 = por %p811, %p812
      %p815 = scmp.ne.s32.totalorder %s800, %s814
      %p816 = scmp.eq.s32.totalorder %s118, 0
      %p817 = por %p815, %p816
      %s819 = sadd.s32 %s818, 1
      %p822 = scmp.eq.s32.totalorder %s112, 1
      %p823 = scmp.ne.s32.totalorder %s818, %s820
      %p824 = scmp.eq.s32.totalorder %s112, 0
      %p825 = por %p823, %p824
      %p826 = scmp.ne.s32.totalorder %s818, %s820
      %p827 = scmp.eq.s32.totalorder %s117, 1
      %p828 = por %p826, %p827
      %p829 = scmp.ne.s32.totalorder %s820, %s821
      %p830 = scmp.eq.s32.totalorder %s117, 0
      %p831 = por %p829, %p830
      %p832 = scmp.ne.s32.totalorder %s820, %s821
      %p833 = scmp.eq.s32.totalorder %s118, 1
      %p834 = por %p832, %p833
      %p836 = scmp.ne.s32.totalorder %s821, %s835
      %p837 = scmp.eq.s32.totalorder %s118, 0
      %p838 = por %p836, %p837
      %s840 = sadd.s32 %s839, 1
      %p843 = scmp.eq.s32.totalorder %s112, 1
      %p844 = scmp.ne.s32.totalorder %s839, %s841
      %p845 = scmp.eq.s32.totalorder %s112, 0
      %p846 = por %p844, %p845
      %p847 = scmp.ne.s32.totalorder %s839, %s841
      %p848 = scmp.eq.s32.totalorder %s117, 1
      %p849 = por %p847, %p848
      %p850 = scmp.ne.s32.totalorder %s841, %s842
      %p851 = scmp.eq.s32.totalorder %s117, 0
      %p852 = por %p850, %p851
      %p853 = scmp.ne.s32.totalorder %s841, %s842
      %p854 = scmp.eq.s32.totalorder %s118, 1
      %p855 = por %p853, %p854
      %p857 = scmp.ne.s32.totalorder %s842, %s856
      %p858 = scmp.eq.s32.totalorder %s118, 0
      %p859 = por %p857, %p858
      %s861 = sadd.s32 %s860, 1
      %p864 = scmp.eq.s32.totalorder %s112, 1
      %p865 = scmp.ne.s32.totalorder %s860, %s862
      %p866 = scmp.eq.s32.totalorder %s112, 0
      %p867 = por %p865, %p866
      %p868 = scmp.ne.s32.totalorder %s860, %s862
      %p869 = scmp.eq.s32.totalorder %s117, 1
      %p870 = por %p868, %p869
      %p871 = scmp.ne.s32.totalorder %s862, %s863
      %p872 = scmp.eq.s32.totalorder %s117, 0
      %p873 = por %p871, %p872
      %p874 = scmp.ne.s32.totalorder %s862, %s863
      %p875 = scmp.eq.s32.totalorder %s118, 1
      %p876 = por %p874, %p875
      %p878 = scmp.ne.s32.totalorder %s863, %s877
      %p879 = scmp.eq.s32.totalorder %s118, 0
      %p880 = por %p878, %p879
      %s882 = sadd.s32 %s881, 1
      %p885 = scmp.eq.s32.totalorder %s112, 1
      %p886 = scmp.ne.s32.totalorder %s881, %s883
      %p887 = scmp.eq.s32.totalorder %s112, 0
      %p888 = por %p886, %p887
      %p889 = scmp.ne.s32.totalorder %s881, %s883
      %p890 = scmp.eq.s32.totalorder %s117, 1
      %p891 = por %p889, %p890
      %p892 = scmp.ne.s32.totalorder %s883, %s884
      %p893 = scmp.eq.s32.totalorder %s117, 0
      %p894 = por %p892, %p893
      %p895 = scmp.ne.s32.totalorder %s883, %s884
      %p896 = scmp.eq.s32.totalorder %s118, 1
      %p897 = por %p895, %p896
      %p899 = scmp.ne.s32.totalorder %s884, %s898
      %p900 = scmp.eq.s32.totalorder %s118, 0
      %p901 = por %p899, %p900
      %s903 = sadd.s32 %s902, 1
      %p906 = scmp.eq.s32.totalorder %s112, 1
      %p907 = scmp.ne.s32.totalorder %s902, %s904
      %p908 = scmp.eq.s32.totalorder %s112, 0
      %p909 = por %p907, %p908
      %p910 = scmp.ne.s32.totalorder %s902, %s904
      %p911 = scmp.eq.s32.totalorder %s117, 1
      %p912 = por %p910, %p911
      %p913 = scmp.ne.s32.totalorder %s904, %s905
      %p914 = scmp.eq.s32.totalorder %s117, 0
      %p915 = por %p913, %p914
      %p916 = scmp.ne.s32.totalorder %s904, %s905
      %p917 = scmp.eq.s32.totalorder %s118, 1
      %p918 = por %p916, %p917
      %p920 = scmp.ne.s32.totalorder %s905, %s919
      %p921 = scmp.eq.s32.totalorder %s118, 0
      %p922 = por %p920, %p921
      %s924 = sadd.s32 %s923, 1
      %p927 = scmp.eq.s32.totalorder %s112, 1
      %p928 = scmp.ne.s32.totalorder %s923, %s925
      %p929 = scmp.eq.s32.totalorder %s112, 0
      %p930 = por %p928, %p929
      %p931 = scmp.ne.s32.totalorder %s923, %s925
      %p932 = scmp.eq.s32.totalorder %s117, 1
      %p933 = por %p931, %p932
      %p934 = scmp.ne.s32.totalorder %s925, %s926
      %p935 = scmp.eq.s32.totalorder %s117, 0
      %p936 = por %p934, %p935
      %p937 = scmp.ne.s32.totalorder %s925, %s926
      %p938 = scmp.eq.s32.totalorder %s118, 1
      %p939 = por %p937, %p938
      %p941 = scmp.ne.s32.totalorder %s926, %s940
      %p942 = scmp.eq.s32.totalorder %s118, 0
      %p943 = por %p941, %p942
      %s944 = ssub.s32 %s112, %s119
      %p945 = scmp.eq.s32.totalorder %s944, 0
      %s947 = sadd.s32 %s946, 1
      %s948 = scalar_select %p945, %s946, %s947
      %p951 = pneg %p945
      %p952 = scmp.eq.s32.totalorder %s112, 1
      %p953 = por %p951, %p952
      %p954 = scmp.ne.s32.totalorder %s946, %s949
      %p955 = scmp.eq.s32.totalorder %s112, 0
      %p956 = por %p954, %p955
      %p957 = scmp.ne.s32.totalorder %s946, %s949
      %p958 = scmp.eq.s32.totalorder %s117, 1
      %p959 = por %p957, %p958
      %p960 = scmp.ne.s32.totalorder %s949, %s950
      %p961 = scmp.eq.s32.totalorder %s117, 0
      %p962 = por %p960, %p961
      %p963 = scmp.ne.s32.totalorder %s949, %s950
      %p964 = scmp.eq.s32.totalorder %s118, 1
      %p965 = por %p963, %p964
      %p967 = scmp.ne.s32.totalorder %s950, %s966
      %p968 = scmp.eq.s32.totalorder %s118, 0
      %p969 = por %p967, %p968
      %p970 = scmp.le.s32.totalorder 1, %s112
      %p971 = scmp.lt.s32.totalorder %s112, 3
      %p972 = pnand %p970, %p971
      %p973 = pneg %p972
      // Predicated region
      $region9: #{tpu_custom_call.1} parent=5 // pred_check
        _
      $region10: #{tpu_custom_call.1} parent=5 // pred_check_branch
        %975 = sbr.rel (%p972) target = $region12
      $region11: #{tpu_custom_call.1} parent=5 // pred_region
        %s976 = ssub.s32 %s112, 1
        // Predicated region
        $region13: #{tpu_custom_call.1} parent=11 // pred_check
          %p977 = pneg %p159
        $region14: #{tpu_custom_call.1} parent=11 // pred_check_branch
          %979 = sbr.rel (%p977) target = $region16
        $region15: #{tpu_custom_call.1} parent=11 // pred_region
          %981 = vsyncadd [#allocation6], 0
          %s983 = sshll.u32 %s5, 4
          %s984 = int_to_ptr.hbm [resolvable:$true] %s983
          %s985 = sshll.u32 [#allocation5], 4
          %s986 = int_to_ptr.vmem [resolvable:$true] %s985
          %988 = dma.hbm_to_vmem [thread:$0]  %s984, 16, %s986, [#allocation6]
        $region16: #{tpu_custom_call.1} parent=11 // pred_fallthru
          _
        // Predicated region
        $region17: #{tpu_custom_call.1} parent=11 // pred_check
          %p989 = pneg %p180
        $region18: #{tpu_custom_call.1} parent=11 // pred_check_branch
          %991 = sbr.rel (%p989) target = $region20
        $region19: #{tpu_custom_call.1} parent=11 // pred_region
          %993 = vsyncadd [#allocation9], 0
          %s995 = sshll.u32 %s7, 4
          %s996 = int_to_ptr.hbm [resolvable:$true] %s995
          %s997 = sshll.u32 [#allocation8], 4
          %s998 = int_to_ptr.vmem [resolvable:$true] %s997
          %1000 = dma.hbm_to_vmem [thread:$0]  %s996, 16, %s998, [#allocation9]
        $region20: #{tpu_custom_call.1} parent=11 // pred_fallthru
          _
        // Predicated region
        $region21: #{tpu_custom_call.1} parent=11 // pred_check
          %p1001 = pneg %p201
        $region22: #{tpu_custom_call.1} parent=11 // pred_check_branch
          %1003 = sbr.rel (%p1001) target = $region24
        $region23: #{tpu_custom_call.1} parent=11 // pred_region
          _
        $region24: #{tpu_custom_call.1} parent=11 // pred_fallthru
          _
        // Predicated region
        $region25: #{tpu_custom_call.1} parent=11 // pred_check
          %p1004 = pneg %p222
        $region26: #{tpu_custom_call.1} parent=11 // pred_check_branch
          %1006 = sbr.rel (%p1004) target = $region28
        $region27: #{tpu_custom_call.1} parent=11 // pred_region
          %1008 = vsyncadd [#allocation9], 0
          %s1010 = sshll.u32 %s11, 4
          %s1011 = int_to_ptr.hbm [resolvable:$true] %s1010
          %s1012 = sshll.u32 [#allocation10], 4
          %s1013 = int_to_ptr.vmem [resolvable:$true] %s1012
          %1015 = dma.hbm_to_vmem [thread:$0]  %s1011, 16, %s1013, [#allocation9]
        $region28: #{tpu_custom_call.1} parent=11 // pred_fallthru
          _
        // Predicated region
        $region29: #{tpu_custom_call.1} parent=11 // pred_check
          %p1016 = pneg %p243
        $region30: #{tpu_custom_call.1} parent=11 // pred_check_branch
          %1018 = sbr.rel (%p1016) target = $region32
        $region31: #{tpu_custom_call.1} parent=11 // pred_region
          _
        $region32: #{tpu_custom_call.1} parent=11 // pred_fallthru
          _
        // Predicated region
        $region33: #{tpu_custom_call.1} parent=11 // pred_check
          %p1019 = pneg %p264
        $region34: #{tpu_custom_call.1} parent=11 // pred_check_branch
          %1021 = sbr.rel (%p1019) target = $region36
        $region35: #{tpu_custom_call.1} parent=11 // pred_region
          %1023 = vsyncadd [#allocation12], 0
          %s1025 = sshll.u32 %s15, 4
          %s1026 = int_to_ptr.hbm [resolvable:$true] %s1025
          %s1027 = sshll.u32 [#allocation11], 4
          %s1028 = int_to_ptr.vmem [resolvable:$true] %s1027
          %1030 = dma.hbm_to_vmem [thread:$0]  %s1026, 16, %s1028, [#allocation12]
        $region36: #{tpu_custom_call.1} parent=11 // pred_fallthru
          _
        // Predicated region
        $region37: #{tpu_custom_call.1} parent=11 // pred_check
          %p1031 = pneg %p285
        $region38: #{tpu_custom_call.1} parent=11 // pred_check_branch
          %1033 = sbr.rel (%p1031) target = $region40
        $region39: #{tpu_custom_call.1} parent=11 // pred_region
          %1035 = vsyncadd [#allocation12], 0
          %s1037 = sshll.u32 %s17, 4
          %s1038 = int_to_ptr.hbm [resolvable:$true] %s1037
          %s1039 = sshll.u32 [#allocation13], 4
          %s1040 = int_to_ptr.vmem [resolvable:$true] %s1039
          %1042 = dma.hbm_to_vmem [thread:$0]  %s1038, 16, %s1040, [#allocation12]
        $region40: #{tpu_custom_call.1} parent=11 // pred_fallthru
          _
        // Predicated region
        $region41: #{tpu_custom_call.1} parent=11 // pred_check
          %p1043 = pneg %p306
        $region42: #{tpu_custom_call.1} parent=11 // pred_check_branch
          %1045 = sbr.rel (%p1043) target = $region44
        $region43: #{tpu_custom_call.1} parent=11 // pred_region
          %1047 = vsyncadd [#allocation15], 0
          %s1049 = sshll.u32 %s19, 4
          %s1050 = int_to_ptr.hbm [resolvable:$true] %s1049
          %s1051 = sshll.u32 [#allocation14], 4
          %s1052 = int_to_ptr.vmem [resolvable:$true] %s1051
          %1054 = dma.hbm_to_vmem [thread:$0]  %s1050, 16, %s1052, [#allocation15]
        $region44: #{tpu_custom_call.1} parent=11 // pred_fallthru
          _
        // Predicated region
        $region45: #{tpu_custom_call.1} parent=11 // pred_check
          %p1055 = pneg %p327
        $region46: #{tpu_custom_call.1} parent=11 // pred_check_branch
          %1057 = sbr.rel (%p1055) target = $region48
        $region47: #{tpu_custom_call.1} parent=11 // pred_region
          _
        $region48: #{tpu_custom_call.1} parent=11 // pred_fallthru
          _
        // Predicated region
        $region49: #{tpu_custom_call.1} parent=11 // pred_check
          %p1058 = pneg %p348
        $region50: #{tpu_custom_call.1} parent=11 // pred_check_branch
          %1060 = sbr.rel (%p1058) target = $region52
        $region51: #{tpu_custom_call.1} parent=11 // pred_region
          %1062 = vsyncadd [#allocation15], 0
          %s1064 = sshll.u32 %s23, 4
          %s1065 = int_to_ptr.hbm [resolvable:$true] %s1064
          %s1066 = sshll.u32 [#allocation16], 4
          %s1067 = int_to_ptr.vmem [resolvable:$true] %s1066
          %1069 = dma.hbm_to_vmem [thread:$0]  %s1065, 16, %s1067, [#allocation15]
        $region52: #{tpu_custom_call.1} parent=11 // pred_fallthru
          _
        // Predicated region
        $region53: #{tpu_custom_call.1} parent=11 // pred_check
          %p1070 = pneg %p369
        $region54: #{tpu_custom_call.1} parent=11 // pred_check_branch
          %1072 = sbr.rel (%p1070) target = $region56
        $region55: #{tpu_custom_call.1} parent=11 // pred_region
          _
        $region56: #{tpu_custom_call.1} parent=11 // pred_fallthru
          _
        // Predicated region
        $region57: #{tpu_custom_call.1} parent=11 // pred_check
          %p1073 = pneg %p390
        $region58: #{tpu_custom_call.1} parent=11 // pred_check_branch
          %1075 = sbr.rel (%p1073) target = $region60
        $region59: #{tpu_custom_call.1} parent=11 // pred_region
          %1077 = vsyncadd [#allocation18], 0
          %s1079 = sshll.u32 %s27, 4
          %s1080 = int_to_ptr.hbm [resolvable:$true] %s1079
          %s1081 = sshll.u32 [#allocation17], 4
          %s1082 = int_to_ptr.vmem [resolvable:$true] %s1081
          %1084 = dma.hbm_to_vmem [thread:$0]  %s1080, 16, %s1082, [#allocation18]
        $region60: #{tpu_custom_call.1} parent=11 // pred_fallthru
          _
        // Predicated region
        $region61: #{tpu_custom_call.1} parent=11 // pred_check
          %p1085 = pneg %p411
        $region62: #{tpu_custom_call.1} parent=11 // pred_check_branch
          %1087 = sbr.rel (%p1085) target = $region64
        $region63: #{tpu_custom_call.1} parent=11 // pred_region
          _
        $region64: #{tpu_custom_call.1} parent=11 // pred_fallthru
          _
        // Predicated region
        $region65: #{tpu_custom_call.1} parent=11 // pred_check
          %p1088 = pneg %p432
        $region66: #{tpu_custom_call.1} parent=11 // pred_check_branch
          %1090 = sbr.rel (%p1088) target = $region68
        $region67: #{tpu_custom_call.1} parent=11 // pred_region
          %1092 = vsyncadd [#allocation18], 0
          %s1094 = sshll.u32 %s31, 4
          %s1095 = int_to_ptr.hbm [resolvable:$true] %s1094
          %s1096 = sshll.u32 [#allocation19], 4
          %s1097 = int_to_ptr.vmem [resolvable:$true] %s1096
          %1099 = dma.hbm_to_vmem [thread:$0]  %s1095, 16, %s1097, [#allocation18]
        $region68: #{tpu_custom_call.1} parent=11 // pred_fallthru
          _
        // Predicated region
        $region69: #{tpu_custom_call.1} parent=11 // pred_check
          %p1100 = pneg %p453
        $region70: #{tpu_custom_call.1} parent=11 // pred_check_branch
          %1102 = sbr.rel (%p1100) target = $region72
        $region71: #{tpu_custom_call.1} parent=11 // pred_region
          _
        $region72: #{tpu_custom_call.1} parent=11 // pred_fallthru
          _
        // Predicated region
        $region73: #{tpu_custom_call.1} parent=11 // pred_check
          %p1103 = pneg %p474
        $region74: #{tpu_custom_call.1} parent=11 // pred_check_branch
          %1105 = sbr.rel (%p1103) target = $region76
        $region75: #{tpu_custom_call.1} parent=11 // pred_region
          %1107 = vsyncadd [#allocation21], 0
          %s1109 = sshll.u32 %s35, 4
          %s1110 = int_to_ptr.hbm [resolvable:$true] %s1109
          %s1111 = sshll.u32 [#allocation20], 4
          %s1112 = int_to_ptr.vmem [resolvable:$true] %s1111
          %1114 = dma.hbm_to_vmem [thread:$0]  %s1110, 16, %s1112, [#allocation21]
        $region76: #{tpu_custom_call.1} parent=11 // pred_fallthru
          _
        // Predicated region
        $region77: #{tpu_custom_call.1} parent=11 // pred_check
          %p1115 = pneg %p495
        $region78: #{tpu_custom_call.1} parent=11 // pred_check_branch
          %1117 = sbr.rel (%p1115) target = $region80
        $region79: #{tpu_custom_call.1} parent=11 // pred_region
          %1119 = vsyncadd [#allocation21], 0
          %s1121 = sshll.u32 %s37, 4
          %s1122 = int_to_ptr.hbm [resolvable:$true] %s1121
          %s1123 = sshll.u32 [#allocation22], 4
          %s1124 = int_to_ptr.vmem [resolvable:$true] %s1123
          %1126 = dma.hbm_to_vmem [thread:$0]  %s1122, 16, %s1124, [#allocation21]
        $region80: #{tpu_custom_call.1} parent=11 // pred_fallthru
          _
        // Predicated region
        $region81: #{tpu_custom_call.1} parent=11 // pred_check
          %p1127 = pneg %p516
        $region82: #{tpu_custom_call.1} parent=11 // pred_check_branch
          %1129 = sbr.rel (%p1127) target = $region84
        $region83: #{tpu_custom_call.1} parent=11 // pred_region
          %1131 = vsyncadd [#allocation24], 0
          %s1133 = sshll.u32 %s39, 4
          %s1134 = int_to_ptr.hbm [resolvable:$true] %s1133
          %s1135 = sshll.u32 [#allocation23], 4
          %s1136 = int_to_ptr.vmem [resolvable:$true] %s1135
          %1138 = dma.hbm_to_vmem [thread:$0]  %s1134, 16, %s1136, [#allocation24]
        $region84: #{tpu_custom_call.1} parent=11 // pred_fallthru
          _
        // Predicated region
        $region85: #{tpu_custom_call.1} parent=11 // pred_check
          %p1139 = pneg %p537
        $region86: #{tpu_custom_call.1} parent=11 // pred_check_branch
          %1141 = sbr.rel (%p1139) target = $region88
        $region87: #{tpu_custom_call.1} parent=11 // pred_region
          _
        $region88: #{tpu_custom_call.1} parent=11 // pred_fallthru
          _
        // Predicated region
        $region89: #{tpu_custom_call.1} parent=11 // pred_check
          %p1142 = pneg %p558
        $region90: #{tpu_custom_call.1} parent=11 // pred_check_branch
          %1144 = sbr.rel (%p1142) target = $region92
        $region91: #{tpu_custom_call.1} parent=11 // pred_region
          %1146 = vsyncadd [#allocation24], 0
          %s1148 = sshll.u32 %s43, 4
          %s1149 = int_to_ptr.hbm [resolvable:$true] %s1148
          %s1150 = sshll.u32 [#allocation25], 4
          %s1151 = int_to_ptr.vmem [resolvable:$true] %s1150
          %1153 = dma.hbm_to_vmem [thread:$0]  %s1149, 16, %s1151, [#allocation24]
        $region92: #{tpu_custom_call.1} parent=11 // pred_fallthru
          _
        // Predicated region
        $region93: #{tpu_custom_call.1} parent=11 // pred_check
          %p1154 = pneg %p579
        $region94: #{tpu_custom_call.1} parent=11 // pred_check_branch
          %1156 = sbr.rel (%p1154) target = $region96
        $region95: #{tpu_custom_call.1} parent=11 // pred_region
          %1158 = vsyncadd [#allocation27], 0
          %s1159 = sshll.u32 %s45, 4
          %s1160 = int_to_ptr.hbm [resolvable:$true] %s1159
          %s1161 = sshll.u32 [#allocation26], 4
          %s1162 = int_to_ptr.vmem [resolvable:$true] %s1161
          %1167 = dma.hbm_to_vmem [thread:$0]  %s1160, 256, %s1162, [#allocation27], 64, 64, 4
        $region96: #{tpu_custom_call.1} parent=11 // pred_fallthru
          _
        // Predicated region
        $region97: #{tpu_custom_call.1} parent=11 // pred_check
          %p1168 = pneg %p600
        $region98: #{tpu_custom_call.1} parent=11 // pred_check_branch
          %1170 = sbr.rel (%p1168) target = $region100
        $region99: #{tpu_custom_call.1} parent=11 // pred_region
          %1172 = vsyncadd [#allocation27], 0
          %s1174 = sshll.u32 %s47, 4
          %s1175 = int_to_ptr.hbm [resolvable:$true] %s1174
          %s1176 = sshll.u32 [#allocation28], 4
          %s1177 = int_to_ptr.vmem [resolvable:$true] %s1176
          %1179 = dma.hbm_to_vmem [thread:$0]  %s1175, 16, %s1177, [#allocation27]
        $region100: #{tpu_custom_call.1} parent=11 // pred_fallthru
          _
        // Predicated region
        $region101: #{tpu_custom_call.1} parent=11 // pred_check
          %p1180 = pneg %p621
        $region102: #{tpu_custom_call.1} parent=11 // pred_check_branch
          %1182 = sbr.rel (%p1180) target = $region104
        $region103: #{tpu_custom_call.1} parent=11 // pred_region
          %1184 = vsyncadd [#allocation30], 0
          %s1185 = sshll.u32 %s49, 4
          %s1186 = int_to_ptr.hbm [resolvable:$true] %s1185
          %s1187 = sshll.u32 [#allocation29], 4
          %s1188 = int_to_ptr.vmem [resolvable:$true] %s1187
          %1193 = dma.hbm_to_vmem [thread:$0]  %s1186, 112, %s1188, [#allocation30], 16, 16, 1
        $region104: #{tpu_custom_call.1} parent=11 // pred_fallthru
          _
        // Predicated region
        $region105: #{tpu_custom_call.1} parent=11 // pred_check
          %p1194 = pneg %p642
        $region106: #{tpu_custom_call.1} parent=11 // pred_check_branch
          %1196 = sbr.rel (%p1194) target = $region108
        $region107: #{tpu_custom_call.1} parent=11 // pred_region
          %1198 = vsyncadd [#allocation30], 0
          %s1200 = sshll.u32 %s51, 4
          %s1201 = int_to_ptr.hbm [resolvable:$true] %s1200
          %s1202 = sshll.u32 [#allocation31], 4
          %s1203 = int_to_ptr.vmem [resolvable:$true] %s1202
          %1205 = dma.hbm_to_vmem [thread:$0]  %s1201, 16, %s1203, [#allocation30]
        $region108: #{tpu_custom_call.1} parent=11 // pred_fallthru
          _
        // Predicated region
        $region109: #{tpu_custom_call.1} parent=11 // pred_check
          %p1206 = pneg %p663
        $region110: #{tpu_custom_call.1} parent=11 // pred_check_branch
          %1208 = sbr.rel (%p1206) target = $region112
        $region111: #{tpu_custom_call.1} parent=11 // pred_region
          %1210 = vsyncadd [#allocation33], 0
          %s1212 = sshll.u32 %s53, 4
          %s1213 = int_to_ptr.hbm [resolvable:$true] %s1212
          %s1214 = sshll.u32 [#allocation32], 4
          %s1215 = int_to_ptr.vmem [resolvable:$true] %s1214
          %1217 = dma.hbm_to_vmem [thread:$0]  %s1213, 16, %s1215, [#allocation33]
        $region112: #{tpu_custom_call.1} parent=11 // pred_fallthru
          _
        // Predicated region
        $region113: #{tpu_custom_call.1} parent=11 // pred_check
          %p1218 = pneg %p684
        $region114: #{tpu_custom_call.1} parent=11 // pred_check_branch
          %1220 = sbr.rel (%p1218) target = $region116
        $region115: #{tpu_custom_call.1} parent=11 // pred_region
          %1222 = vsyncadd [#allocation33], 0
          %s1224 = sshll.u32 %s55, 4
          %s1225 = int_to_ptr.hbm [resolvable:$true] %s1224
          %s1226 = sshll.u32 [#allocation34], 4
          %s1227 = int_to_ptr.vmem [resolvable:$true] %s1226
          %1229 = dma.hbm_to_vmem [thread:$0]  %s1225, 16, %s1227, [#allocation33]
        $region116: #{tpu_custom_call.1} parent=11 // pred_fallthru
          _
        // Predicated region
        $region117: #{tpu_custom_call.1} parent=11 // pred_check
          %p1230 = pneg %p705
        $region118: #{tpu_custom_call.1} parent=11 // pred_check_branch
          %1232 = sbr.rel (%p1230) target = $region120
        $region119: #{tpu_custom_call.1} parent=11 // pred_region
          %1234 = vsyncadd [#allocation36], 0
          %s1236 = sshll.u32 %s57, 4
          %s1237 = int_to_ptr.hbm [resolvable:$true] %s1236
          %s1238 = sshll.u32 [#allocation35], 4
          %s1239 = int_to_ptr.vmem [resolvable:$true] %s1238
          %1241 = dma.hbm_to_vmem [thread:$0]  %s1237, 16, %s1239, [#allocation36]
        $region120: #{tpu_custom_call.1} parent=11 // pred_fallthru
          _
        // Predicated region
        $region121: #{tpu_custom_call.1} parent=11 // pred_check
          %p1242 = pneg %p726
        $region122: #{tpu_custom_call.1} parent=11 // pred_check_branch
          %1244 = sbr.rel (%p1242) target = $region124
        $region123: #{tpu_custom_call.1} parent=11 // pred_region
          %1246 = vsyncadd [#allocation36], 0
          %s1248 = sshll.u32 %s59, 4
          %s1249 = int_to_ptr.hbm [resolvable:$true] %s1248
          %s1250 = sshll.u32 [#allocation37], 4
          %s1251 = int_to_ptr.vmem [resolvable:$true] %s1250
          %1253 = dma.hbm_to_vmem [thread:$0]  %s1249, 16, %s1251, [#allocation36]
        $region124: #{tpu_custom_call.1} parent=11 // pred_fallthru
          _
        // Predicated region
        $region125: #{tpu_custom_call.1} parent=11 // pred_check
          %p1254 = pneg %p747
        $region126: #{tpu_custom_call.1} parent=11 // pred_check_branch
          %1256 = sbr.rel (%p1254) target = $region128
        $region127: #{tpu_custom_call.1} parent=11 // pred_region
          %1258 = vsyncadd [#allocation39], 0
          %s1259 = sshll.u32 %s61, 4
          %s1260 = int_to_ptr.hbm [resolvable:$true] %s1259
          %s1261 = sshll.u32 [#allocation38], 4
          %s1262 = int_to_ptr.vmem [resolvable:$true] %s1261
          %1267 = dma.hbm_to_vmem [thread:$0]  %s1260, 256, %s1262, [#allocation39], 64, 64, 4
        $region128: #{tpu_custom_call.1} parent=11 // pred_fallthru
          _
        // Predicated region
        $region129: #{tpu_custom_call.1} parent=11 // pred_check
          %p1268 = pneg %p768
        $region130: #{tpu_custom_call.1} parent=11 // pred_check_branch
          %1270 = sbr.rel (%p1268) target = $region132
        $region131: #{tpu_custom_call.1} parent=11 // pred_region
          %1272 = vsyncadd [#allocation39], 0
          %s1274 = sshll.u32 %s63, 4
          %s1275 = int_to_ptr.hbm [resolvable:$true] %s1274
          %s1276 = sshll.u32 [#allocation40], 4
          %s1277 = int_to_ptr.vmem [resolvable:$true] %s1276
          %1279 = dma.hbm_to_vmem [thread:$0]  %s1275, 16, %s1277, [#allocation39]
        $region132: #{tpu_custom_call.1} parent=11 // pred_fallthru
          _
        // Predicated region
        $region133: #{tpu_custom_call.1} parent=11 // pred_check
          %p1280 = pneg %p789
        $region134: #{tpu_custom_call.1} parent=11 // pred_check_branch
          %1282 = sbr.rel (%p1280) target = $region136
        $region135: #{tpu_custom_call.1} parent=11 // pred_region
          %1284 = vsyncadd [#allocation42], 0
          %s1286 = sshll.u32 %s65, 4
          %s1287 = int_to_ptr.hbm [resolvable:$true] %s1286
          %s1288 = sshll.u32 [#allocation41], 4
          %s1289 = int_to_ptr.vmem [resolvable:$true] %s1288
          %1291 = dma.hbm_to_vmem [thread:$0]  %s1287, 16, %s1289, [#allocation42]
        $region136: #{tpu_custom_call.1} parent=11 // pred_fallthru
          _
        // Predicated region
        $region137: #{tpu_custom_call.1} parent=11 // pred_check
          %p1292 = pneg %p810
        $region138: #{tpu_custom_call.1} parent=11 // pred_check_branch
          %1294 = sbr.rel (%p1292) target = $region140
        $region139: #{tpu_custom_call.1} parent=11 // pred_region
          %1296 = vsyncadd [#allocation42], 0
          %s1298 = sshll.u32 %s67, 4
          %s1299 = int_to_ptr.hbm [resolvable:$true] %s1298
          %s1300 = sshll.u32 [#allocation43], 4
          %s1301 = int_to_ptr.vmem [resolvable:$true] %s1300
          %1303 = dma.hbm_to_vmem [thread:$0]  %s1299, 16, %s1301, [#allocation42]
        $region140: #{tpu_custom_call.1} parent=11 // pred_fallthru
          _
        // Predicated region
        $region141: #{tpu_custom_call.1} parent=11 // pred_check
          %p1304 = pneg %p831
        $region142: #{tpu_custom_call.1} parent=11 // pred_check_branch
          %1306 = sbr.rel (%p1304) target = $region144
        $region143: #{tpu_custom_call.1} parent=11 // pred_region
          _
        $region144: #{tpu_custom_call.1} parent=11 // pred_fallthru
          _
        // Predicated region
        $region145: #{tpu_custom_call.1} parent=11 // pred_check
          %p1307 = pneg %p852
        $region146: #{tpu_custom_call.1} parent=11 // pred_check_branch
          %1309 = sbr.rel (%p1307) target = $region148
        $region147: #{tpu_custom_call.1} parent=11 // pred_region
          %1311 = vsyncadd [#allocation45], 0
          %s1313 = sshll.u32 %s71, 4
          %s1314 = int_to_ptr.hbm [resolvable:$true] %s1313
          %s1315 = sshll.u32 [#allocation44], 4
          %s1316 = int_to_ptr.vmem [resolvable:$true] %s1315
          %1318 = dma.hbm_to_vmem [thread:$0]  %s1314, 16, %s1316, [#allocation45]
        $region148: #{tpu_custom_call.1} parent=11 // pred_fallthru
          _
        // Predicated region
        $region149: #{tpu_custom_call.1} parent=11 // pred_check
          %p1319 = pneg %p873
        $region150: #{tpu_custom_call.1} parent=11 // pred_check_branch
          %1321 = sbr.rel (%p1319) target = $region152
        $region151: #{tpu_custom_call.1} parent=11 // pred_region
          _
        $region152: #{tpu_custom_call.1} parent=11 // pred_fallthru
          _
        // Predicated region
        $region153: #{tpu_custom_call.1} parent=11 // pred_check
          %p1322 = pneg %p894
        $region154: #{tpu_custom_call.1} parent=11 // pred_check_branch
          %1324 = sbr.rel (%p1322) target = $region156
        $region155: #{tpu_custom_call.1} parent=11 // pred_region
          _
        $region156: #{tpu_custom_call.1} parent=11 // pred_fallthru
          _
        // Predicated region
        $region157: #{tpu_custom_call.1} parent=11 // pred_check
          %p1325 = pneg %p915
        $region158: #{tpu_custom_call.1} parent=11 // pred_check_branch
          %1327 = sbr.rel (%p1325) target = $region160
        $region159: #{tpu_custom_call.1} parent=11 // pred_region
          _
        $region160: #{tpu_custom_call.1} parent=11 // pred_fallthru
          _
        // Predicated region
        $region161: #{tpu_custom_call.1} parent=11 // pred_check
          %p1328 = pneg %p936
        $region162: #{tpu_custom_call.1} parent=11 // pred_check_branch
          %1330 = sbr.rel (%p1328) target = $region164
        $region163: #{tpu_custom_call.1} parent=11 // pred_region
          _
        $region164: #{tpu_custom_call.1} parent=11 // pred_fallthru
          _
      $region12: #{tpu_custom_call.1} parent=5 // pred_fallthru
        _
      %p1331 = scmp.lt.s32.totalorder %s112, 2
      // Predicated region
      $region165: #{tpu_custom_call.1} parent=5 // pred_check
        %p1332 = pneg %p1331
      $region166: #{tpu_custom_call.1} parent=5 // pred_check_branch
        %1334 = sbr.rel (%p1332) target = $region168
      $region167: #{tpu_custom_call.1} parent=5 // pred_region
        // Predicated region
        $region169: #{tpu_custom_call.1} parent=167 // pred_check
          %p1335 = pneg %p132
        $region170: #{tpu_custom_call.1} parent=167 // pred_check_branch
          %1337 = sbr.rel (%p1335) target = $region172
        $region171: #{tpu_custom_call.1} parent=167 // pred_region
          %p1338 = scmp.lt.s32.totalorder %s112, 1
          %s1339 = scalar_select %p1338, %s112, 1
          %s1340 = smul.addr %s1339, 8
          %s1341 = scalar_lea.vmem %s3, %s1340
        $region172: #{tpu_custom_call.1} parent=167 // pred_fallthru
          _
      $region168: #{tpu_custom_call.1} parent=5 // pred_fallthru
        _
      %p1342 = scmp.le.s32.totalorder 1, %s112
      %p1343 = scmp.lt.s32.totalorder %s112, 3
      %p1344 = pnand %p1342, %p1343
      %p1345 = pneg %p1344
      // Predicated region
      $region173: #{tpu_custom_call.1} parent=5 // pred_check
        _
      $region174: #{tpu_custom_call.1} parent=5 // pred_check_branch
        %1347 = sbr.rel (%p1344) target = $region176
      $region175: #{tpu_custom_call.1} parent=5 // pred_region
        %s1348 = ssub.s32 %s112, 1
        // Predicated region
        $region177: #{tpu_custom_call.1} parent=175 // pred_check
          %p1349 = pneg %p159
        $region178: #{tpu_custom_call.1} parent=175 // pred_check_branch
          %1351 = sbr.rel (%p1349) target = $region180
        $region179: #{tpu_custom_call.1} parent=175 // pred_region
          %1353 = dma.done [#allocation6], 16
        $region180: #{tpu_custom_call.1} parent=175 // pred_fallthru
          _
        // Predicated region
        $region181: #{tpu_custom_call.1} parent=175 // pred_check
          %p1354 = pneg %p180
        $region182: #{tpu_custom_call.1} parent=175 // pred_check_branch
          %1356 = sbr.rel (%p1354) target = $region184
        $region183: #{tpu_custom_call.1} parent=175 // pred_region
          %1358 = dma.done [#allocation9], 16
        $region184: #{tpu_custom_call.1} parent=175 // pred_fallthru
          _
        // Predicated region
        $region185: #{tpu_custom_call.1} parent=175 // pred_check
          %p1359 = pneg %p222
        $region186: #{tpu_custom_call.1} parent=175 // pred_check_branch
          %1361 = sbr.rel (%p1359) target = $region188
        $region187: #{tpu_custom_call.1} parent=175 // pred_region
          %1363 = dma.done [#allocation9], 16
        $region188: #{tpu_custom_call.1} parent=175 // pred_fallthru
          _
        // Predicated region
        $region189: #{tpu_custom_call.1} parent=175 // pred_check
          %p1364 = pneg %p264
        $region190: #{tpu_custom_call.1} parent=175 // pred_check_branch
          %1366 = sbr.rel (%p1364) target = $region192
        $region191: #{tpu_custom_call.1} parent=175 // pred_region
          %1368 = dma.done [#allocation12], 16
        $region192: #{tpu_custom_call.1} parent=175 // pred_fallthru
          _
        // Predicated region
        $region193: #{tpu_custom_call.1} parent=175 // pred_check
          %p1369 = pneg %p285
        $region194: #{tpu_custom_call.1} parent=175 // pred_check_branch
          %1371 = sbr.rel (%p1369) target = $region196
        $region195: #{tpu_custom_call.1} parent=175 // pred_region
          %1373 = dma.done [#allocation12], 16
        $region196: #{tpu_custom_call.1} parent=175 // pred_fallthru
          _
        // Predicated region
        $region197: #{tpu_custom_call.1} parent=175 // pred_check
          %p1374 = pneg %p306
        $region198: #{tpu_custom_call.1} parent=175 // pred_check_branch
          %1376 = sbr.rel (%p1374) target = $region200
        $region199: #{tpu_custom_call.1} parent=175 // pred_region
          %1378 = dma.done [#allocation15], 16
        $region200: #{tpu_custom_call.1} parent=175 // pred_fallthru
          _
        // Predicated region
        $region201: #{tpu_custom_call.1} parent=175 // pred_check
          %p1379 = pneg %p348
        $region202: #{tpu_custom_call.1} parent=175 // pred_check_branch
          %1381 = sbr.rel (%p1379) target = $region204
        $region203: #{tpu_custom_call.1} parent=175 // pred_region
          %1383 = dma.done [#allocation15], 16
        $region204: #{tpu_custom_call.1} parent=175 // pred_fallthru
          _
        // Predicated region
        $region205: #{tpu_custom_call.1} parent=175 // pred_check
          %p1384 = pneg %p390
        $region206: #{tpu_custom_call.1} parent=175 // pred_check_branch
          %1386 = sbr.rel (%p1384) target = $region208
        $region207: #{tpu_custom_call.1} parent=175 // pred_region
          %1388 = dma.done [#allocation18], 16
        $region208: #{tpu_custom_call.1} parent=175 // pred_fallthru
          _
        // Predicated region
        $region209: #{tpu_custom_call.1} parent=175 // pred_check
          %p1389 = pneg %p432
        $region210: #{tpu_custom_call.1} parent=175 // pred_check_branch
          %1391 = sbr.rel (%p1389) target = $region212
        $region211: #{tpu_custom_call.1} parent=175 // pred_region
          %1393 = dma.done [#allocation18], 16
        $region212: #{tpu_custom_call.1} parent=175 // pred_fallthru
          _
        // Predicated region
        $region213: #{tpu_custom_call.1} parent=175 // pred_check
          %p1394 = pneg %p474
        $region214: #{tpu_custom_call.1} parent=175 // pred_check_branch
          %1396 = sbr.rel (%p1394) target = $region216
        $region215: #{tpu_custom_call.1} parent=175 // pred_region
          %1398 = dma.done [#allocation21], 16
        $region216: #{tpu_custom_call.1} parent=175 // pred_fallthru
          _
        // Predicated region
        $region217: #{tpu_custom_call.1} parent=175 // pred_check
          %p1399 = pneg %p495
        $region218: #{tpu_custom_call.1} parent=175 // pred_check_branch
          %1401 = sbr.rel (%p1399) target = $region220
        $region219: #{tpu_custom_call.1} parent=175 // pred_region
          %1403 = dma.done [#allocation21], 16
        $region220: #{tpu_custom_call.1} parent=175 // pred_fallthru
          _
        // Predicated region
        $region221: #{tpu_custom_call.1} parent=175 // pred_check
          %p1404 = pneg %p516
        $region222: #{tpu_custom_call.1} parent=175 // pred_check_branch
          %1406 = sbr.rel (%p1404) target = $region224
        $region223: #{tpu_custom_call.1} parent=175 // pred_region
          %1408 = dma.done [#allocation24], 16
        $region224: #{tpu_custom_call.1} parent=175 // pred_fallthru
          _
        // Predicated region
        $region225: #{tpu_custom_call.1} parent=175 // pred_check
          %p1409 = pneg %p558
        $region226: #{tpu_custom_call.1} parent=175 // pred_check_branch
          %1411 = sbr.rel (%p1409) target = $region228
        $region227: #{tpu_custom_call.1} parent=175 // pred_region
          %1413 = dma.done [#allocation24], 16
        $region228: #{tpu_custom_call.1} parent=175 // pred_fallthru
          _
        // Predicated region
        $region229: #{tpu_custom_call.1} parent=175 // pred_check
          %p1414 = pneg %p579
        $region230: #{tpu_custom_call.1} parent=175 // pred_check_branch
          %1416 = sbr.rel (%p1414) target = $region232
        $region231: #{tpu_custom_call.1} parent=175 // pred_region
          %1418 = dma.done [#allocation27], 256
        $region232: #{tpu_custom_call.1} parent=175 // pred_fallthru
          _
        // Predicated region
        $region233: #{tpu_custom_call.1} parent=175 // pred_check
          %p1419 = pneg %p600
        $region234: #{tpu_custom_call.1} parent=175 // pred_check_branch
          %1421 = sbr.rel (%p1419) target = $region236
        $region235: #{tpu_custom_call.1} parent=175 // pred_region
          %1423 = dma.done [#allocation27], 16
        $region236: #{tpu_custom_call.1} parent=175 // pred_fallthru
          _
        // Predicated region
        $region237: #{tpu_custom_call.1} parent=175 // pred_check
          %p1424 = pneg %p621
        $region238: #{tpu_custom_call.1} parent=175 // pred_check_branch
          %1426 = sbr.rel (%p1424) target = $region240
        $region239: #{tpu_custom_call.1} parent=175 // pred_region
          %1428 = dma.done [#allocation30], 112
        $region240: #{tpu_custom_call.1} parent=175 // pred_fallthru
          _
        // Predicated region
        $region241: #{tpu_custom_call.1} parent=175 // pred_check
          %p1429 = pneg %p642
        $region242: #{tpu_custom_call.1} parent=175 // pred_check_branch
          %1431 = sbr.rel (%p1429) target = $region244
        $region243: #{tpu_custom_call.1} parent=175 // pred_region
          %1433 = dma.done [#allocation30], 16
        $region244: #{tpu_custom_call.1} parent=175 // pred_fallthru
          _
        // Predicated region
        $region245: #{tpu_custom_call.1} parent=175 // pred_check
          %p1434 = pneg %p663
        $region246: #{tpu_custom_call.1} parent=175 // pred_check_branch
          %1436 = sbr.rel (%p1434) target = $region248
        $region247: #{tpu_custom_call.1} parent=175 // pred_region
          %1438 = dma.done [#allocation33], 16
        $region248: #{tpu_custom_call.1} parent=175 // pred_fallthru
          _
        // Predicated region
        $region249: #{tpu_custom_call.1} parent=175 // pred_check
          %p1439 = pneg %p684
        $region250: #{tpu_custom_call.1} parent=175 // pred_check_branch
          %1441 = sbr.rel (%p1439) target = $region252
        $region251: #{tpu_custom_call.1} parent=175 // pred_region
          %1443 = dma.done [#allocation33], 16
        $region252: #{tpu_custom_call.1} parent=175 // pred_fallthru
          _
        // Predicated region
        $region253: #{tpu_custom_call.1} parent=175 // pred_check
          %p1444 = pneg %p705
        $region254: #{tpu_custom_call.1} parent=175 // pred_check_branch
          %1446 = sbr.rel (%p1444) target = $region256
        $region255: #{tpu_custom_call.1} parent=175 // pred_region
          %1448 = dma.done [#allocation36], 16
        $region256: #{tpu_custom_call.1} parent=175 // pred_fallthru
          _
        // Predicated region
        $region257: #{tpu_custom_call.1} parent=175 // pred_check
          %p1449 = pneg %p726
        $region258: #{tpu_custom_call.1} parent=175 // pred_check_branch
          %1451 = sbr.rel (%p1449) target = $region260
        $region259: #{tpu_custom_call.1} parent=175 // pred_region
          %1453 = dma.done [#allocation36], 16
        $region260: #{tpu_custom_call.1} parent=175 // pred_fallthru
          _
        // Predicated region
        $region261: #{tpu_custom_call.1} parent=175 // pred_check
          %p1454 = pneg %p747
        $region262: #{tpu_custom_call.1} parent=175 // pred_check_branch
          %1456 = sbr.rel (%p1454) target = $region264
        $region263: #{tpu_custom_call.1} parent=175 // pred_region
          %1458 = dma.done [#allocation39], 256
        $region264: #{tpu_custom_call.1} parent=175 // pred_fallthru
          _
        // Predicated region
        $region265: #{tpu_custom_call.1} parent=175 // pred_check
          %p1459 = pneg %p768
        $region266: #{tpu_custom_call.1} parent=175 // pred_check_branch
          %1461 = sbr.rel (%p1459) target = $region268
        $region267: #{tpu_custom_call.1} parent=175 // pred_region
          %1463 = dma.done [#allocation39], 16
        $region268: #{tpu_custom_call.1} parent=175 // pred_fallthru
          _
        // Predicated region
        $region269: #{tpu_custom_call.1} parent=175 // pred_check
          %p1464 = pneg %p789
        $region270: #{tpu_custom_call.1} parent=175 // pred_check_branch
          %1466 = sbr.rel (%p1464) target = $region272
        $region271: #{tpu_custom_call.1} parent=175 // pred_region
          %1468 = dma.done [#allocation42], 16
        $region272: #{tpu_custom_call.1} parent=175 // pred_fallthru
          _
        // Predicated region
        $region273: #{tpu_custom_call.1} parent=175 // pred_check
          %p1469 = pneg %p810
        $region274: #{tpu_custom_call.1} parent=175 // pred_check_branch
          %1471 = sbr.rel (%p1469) target = $region276
        $region275: #{tpu_custom_call.1} parent=175 // pred_region
          %1473 = dma.done [#allocation42], 16
        $region276: #{tpu_custom_call.1} parent=175 // pred_fallthru
          _
        // Predicated region
        $region277: #{tpu_custom_call.1} parent=175 // pred_check
          %p1474 = pneg %p852
        $region278: #{tpu_custom_call.1} parent=175 // pred_check_branch
          %1476 = sbr.rel (%p1474) target = $region280
        $region279: #{tpu_custom_call.1} parent=175 // pred_region
          %1478 = dma.done [#allocation45], 16
        $region280: #{tpu_custom_call.1} parent=175 // pred_fallthru
          _
        %p1479 = scmp.lt.s32.totalorder %s117, 1
        %s1480 = scalar_select %p1479, %s117, 1
        %s1481 = smul.addr %s1480, 8
        %s1482 = scalar_lea.vmem %s3, %s1481
        %p1483 = pneg %p138
        %p1484 = pneg %p135
        %p1485 = pneg %p159
        %p1486 = pneg %p156
        %p1487 = pneg %p180
        %p1488 = pneg %p177
        %p1489 = pneg %p201
        %p1490 = pneg %p198
        %p1491 = pneg %p222
        %p1492 = pneg %p219
        %p1493 = pneg %p243
        %p1494 = pneg %p240
        %p1495 = pneg %p264
        %p1496 = pneg %p261
        %p1497 = pneg %p285
        %p1498 = pneg %p282
        %p1499 = pneg %p306
        %p1500 = pneg %p303
        %p1501 = pneg %p327
        %p1502 = pneg %p324
        %p1503 = pneg %p348
        %p1504 = pneg %p345
        %p1505 = pneg %p369
        %p1506 = pneg %p366
        %p1507 = pneg %p390
        %p1508 = pneg %p387
        %p1509 = pneg %p411
        %p1510 = pneg %p408
        %p1511 = pneg %p432
        %p1512 = pneg %p429
        %p1513 = pneg %p453
        %p1514 = pneg %p450
        %p1515 = pneg %p474
        %p1516 = pneg %p471
        %p1517 = pneg %p495
        %p1518 = pneg %p492
        %p1519 = pneg %p516
        %p1520 = pneg %p513
        %p1521 = pneg %p537
        %p1522 = pneg %p534
        %p1523 = pneg %p558
        %p1524 = pneg %p555
        %p1525 = pneg %p579
        %p1526 = pneg %p576
        %p1527 = pneg %p600
        %p1528 = pneg %p597
        %p1529 = pneg %p621
        %p1530 = pneg %p618
        %p1531 = pneg %p642
        %p1532 = pneg %p639
        %p1533 = pneg %p663
        %p1534 = pneg %p660
        %p1535 = pneg %p684
        %p1536 = pneg %p681
        %p1537 = pneg %p705
        %p1538 = pneg %p702
        %p1539 = pneg %p726
        %p1540 = pneg %p723
        %p1541 = pneg %p747
        %p1542 = pneg %p744
        %p1543 = pneg %p768
        %p1544 = pneg %p765
        %p1545 = pneg %p789
        %p1546 = pneg %p786
        %p1547 = pneg %p810
        %p1548 = pneg %p807
        %p1549 = pneg %p831
        %p1550 = pneg %p828
        %p1551 = pneg %p852
        %p1552 = pneg %p849
        %p1553 = pneg %p873
        %p1554 = pneg %p870
        %p1555 = pneg %p894
        %p1556 = pneg %p891
        %p1557 = pneg %p915
        %p1558 = pneg %p912
        %p1559 = pneg %p936
        %p1560 = pneg %p933
        %p1561 = pneg %p962
        %p1562 = pneg %p959
        %s1563 = sand.u32 %s949, 1
        %s1564 = scalar_lea.sflag [#allocation7], %s1563
        %s1565 = sand.u32 %s949, 1
        %s1566 = smul.addr %s1565, 8
        %s1567 = scalar_lea.vmem [#allocation46], %s1566
        %p1568 = scmp.lt.s32.totalorder %s117, 1
        %s1569 = scalar_select %p1568, %s117, 1
        %s1570 = smul.addr %s1569, 8
        %s1571 = scalar_lea.vmem %s3, %s1570
        %v1573 = vld [vmem:[%s1571] sm:$0xff]
        %s1574 = sld [smem:[#allocation4 + %s117]]
        %v1575 = vlaneseq
        %v1576 = vand.u32 %v1575, 127
        %v1577 = vstv %s1574
        %vm1578 = vcmp.lt.s32.totalorder %v1576, %v1577
        %v1579 = vsel %vm1578, 0.0, -1e+30
        %v1580 = vld [vmem:[#allocation5] sm:$0x1]
        %v1581 = vld [vmem:[#allocation8] sm:$0x1]
        %vm1582 = vcmask 261120
        %v1583 = vsel %vm1582, %v1573, 0.0
        %1584 = vadd.xlane.f32.xlu0 %v1583
        %v1585 = vpop.xlane.xlu0 %1584
        %v1586 = vrcp.pop 32.0
        %v1587 = vmul.f32 32.0, %v1586
        %v1588 = vsub.f32 1.0, %v1587
        %v1589 = vmul.f32 %v1586, %v1588
        %v1590 = vadd.f32 %v1586, %v1589
        %vm1591 = vweird.f32 %v1586
        %v1592 = vsel %vm1591, %v1586, %v1590
        %v1593 = vmul.f32 %v1585, %v1592
        %v1594 = vsub.f32 %v1573, %v1593
        %v1595 = vmul.f32 %v1594, %v1594
        %v1596 = vsel %vm1582, %v1595, 0.0
        %1597 = vadd.xlane.f32.xlu0 %v1596
        %v1598 = vpop.xlane.xlu0 %1597
        %v1599 = vmul.f32 %v1598, %v1592
        %v1600 = vadd.f32 %v1599, 1e-05
        %v1601 = vrsqrt.pop %v1600
        %v1602 = vmul.f32 %v1601, %v1600
        %v1603 = vmul.f32 %v1602, %v1601
        %v1604 = vmul.f32 0.5, %v1603
        %v1605 = vsub.f32 1.5, %v1604
        %v1606 = vmul.f32 %v1601, %v1605
        %vm1607 = vweird.f32 %v1600
        %vm1608 = vweird.f32 %v1601
        %vm1609 = vmor %vm1607, %vm1608
        %v1610 = vsel %vm1609, %v1601, %v1606
        %v1611 = vmul.f32 %v1594, %v1610
        %v1613 = vperm.slane %v1580, 0
        %v1615 = vmul.f32 %v1611, %v1613
        %v1617 = vperm.slane %v1581, 0
        %v1619 = vadd.f32 %v1615, %v1617
        %v1620 = vpack.c.bf16 %v1619, %v1619
        %v1621 = vld [vmem:[%s9] sm:$0xf]
        %v1622 = vld [vmem:[%s9 + $0x4] sm:$0xf]
        %v1623 = vld [vmem:[%s9 + $0x8] sm:$0xf]
        %v1624 = vld [vmem:[%s9 + $0xc] sm:$0xf]
        %v1625 = vld [vmem:[#allocation10] sm:$0x1]
        %v1627 = vperm.slane %v1625, 0
        %v1633 = vunpack.c.l.b16 %v1621
        %v1634 = vunpack.c.l.b16 %v1622
        %v1635 = vunpack.c.l.b16 %v1623
        %v1636 = vunpack.c.l.b16 %v1624
        %v1637 = vpack.c.b16 %v1634, %v1633
        %v1638 = vpack.c.b16 %v1636, %v1635
        %v1642 = vsel %vm1582, %v1620, 0
        %1644 = vmatpush.bf16.msra.mxu0 0
        %1645 = vmatpush.bf16.msra.mxu0 0
        %1646 = vmatpush.bf16.msra.mxu0 0
        %1647 = vmatpush.bf16.msra.mxu0 0
        %1648 = vmatpush.bf16.msra.mxu0 0
        %1649 = vmatpush.bf16.msra.mxu0 0
        %1650 = vmatpush.bf16.msra.mxu0 %v1638
        %1651 = vmatpush.bf16.msra.mxu0 %v1637
        %1652 = vmatmul.bf16.gmra.mxu0 %v1642
        %v1653 = vpop.f32.mrf.mxu0
        %v1654 = vadd.f32 %v1627, %v1653
        %v1655 = vpop.f32.mrf.mxu0
        %1656 = vdwg.mxu0
        %v1657 = vxor.u32 %v1654, 2147483648
        %v1658 = vmul.f32 %v1657, 1.442695
        %v1659 = vpow.pop %v1658
        %v1660 = vadd.f32 %v1659, 1.0
        %v1661 = vrcp.pop %v1660
        %v1662 = vmul.f32 %v1660, %v1661
        %v1663 = vsub.f32 1.0, %v1662
        %v1664 = vmul.f32 %v1661, %v1663
        %v1665 = vadd.f32 %v1661, %v1664
        %vm1666 = vweird.f32 %v1660
        %vm1667 = vweird.f32 %v1661
        %vm1668 = vmor %vm1666, %vm1667
        %v1669 = vsel %vm1668, %v1661, %v1665
        %v1670 = vand.u32 2147483647, %v1660
        %vm1671 = vcmp.eq.f32.partialorder %v1670, 8.507059e+37
        %v1672 = vand.u32 %v1660, 2147483648
        %v1673 = vor.u32 1.1754944e-38, %v1672
        %v1674 = vsel %vm1671, %v1673, %v1669
        %v1675 = vmul.f32 1.0, %v1674
        %v1676 = vmul.f32 %v1654, %v1675
        %v1677 = vpack.c.bf16 %v1676, %v1676
        %v1678 = vld [vmem:[%s13] sm:$0xf]
        %v1679 = vld [vmem:[%s13 + $0x4] sm:$0xf]
        %v1680 = vld [vmem:[%s13 + $0x8] sm:$0xf]
        %v1681 = vld [vmem:[%s13 + $0xc] sm:$0xf]
        %v1682 = vld [vmem:[%s13 + $0x10] sm:$0xf]
        %v1683 = vld [vmem:[%s13 + $0x14] sm:$0xf]
        %v1684 = vld [vmem:[%s13 + $0x18] sm:$0xf]
        %v1685 = vld [vmem:[%s13 + $0x1c] sm:$0xf]
        %v1686 = vld [vmem:[#allocation11] sm:$0x1]
        %v1688 = vperm.slane %v1686, 0
        %v1698 = vunpack.c.l.b16 %v1678
        %v1699 = vunpack.c.l.b16 %v1679
        %v1700 = vunpack.c.l.b16 %v1680
        %v1701 = vunpack.c.l.b16 %v1681
        %v1702 = vunpack.c.l.b16 %v1682
        %v1703 = vunpack.c.l.b16 %v1683
        %v1704 = vunpack.c.l.b16 %v1684
        %v1705 = vunpack.c.l.b16 %v1685
        %v1706 = vpack.c.b16 %v1699, %v1698
        %v1707 = vpack.c.b16 %v1701, %v1700
        %v1708 = vpack.c.b16 %v1703, %v1702
        %v1709 = vpack.c.b16 %v1705, %v1704
        %vm1714 = vcmask 523264
        %v1716 = vsel %vm1714, %v1677, 0
        %1718 = vmatpush.bf16.msra.mxu0 0
        %1719 = vmatpush.bf16.msra.mxu0 0
        %1720 = vmatpush.bf16.msra.mxu0 0
        %1721 = vmatpush.bf16.msra.mxu0 0
        %1722 = vmatpush.bf16.msra.mxu0 %v1709
        %1723 = vmatpush.bf16.msra.mxu0 %v1708
        %1724 = vmatpush.bf16.msra.mxu0 %v1707
        %1725 = vmatpush.bf16.msra.mxu0 %v1706
        %1726 = vmatmul.bf16.gmra.mxu0 %v1716
        %v1727 = vpop.f32.mrf.mxu0
        %v1728 = vadd.f32 %v1688, %v1727
        %v1729 = vpop.f32.mrf.mxu0
        %1730 = vdwg.mxu0
        %v1731 = vmul.f32 %v1728, 0.5
        %v1732 = vadd.f32 %v1573, %v1731
        %v1733 = vld [vmem:[#allocation13] sm:$0x1]
        %v1734 = vld [vmem:[#allocation14] sm:$0x1]
        %v1735 = vsel %vm1582, %v1732, 0.0
        %1736 = vadd.xlane.f32.xlu0 %v1735
        %v1737 = vpop.xlane.xlu0 %1736
        %v1738 = vmul.f32 %v1737, %v1592
        %v1739 = vsub.f32 %v1732, %v1738
        %v1740 = vmul.f32 %v1739, %v1739
        %v1741 = vsel %vm1582, %v1740, 0.0
        %1742 = vadd.xlane.f32.xlu0 %v1741
        %v1743 = vpop.xlane.xlu0 %1742
        %v1744 = vmul.f32 %v1743, %v1592
        %v1745 = vadd.f32 %v1744, 1e-05
        %v1746 = vrsqrt.pop %v1745
        %v1747 = vmul.f32 %v1746, %v1745
        %v1748 = vmul.f32 %v1747, %v1746
        %v1749 = vmul.f32 0.5, %v1748
        %v1750 = vsub.f32 1.5, %v1749
        %v1751 = vmul.f32 %v1746, %v1750
        %vm1752 = vweird.f32 %v1745
        %vm1753 = vweird.f32 %v1746
        %vm1754 = vmor %vm1752, %vm1753
        %v1755 = vsel %vm1754, %v1746, %v1751
        %v1756 = vmul.f32 %v1739, %v1755
        %v1758 = vperm.slane %v1733, 0
        %v1760 = vmul.f32 %v1756, %v1758
        %v1762 = vperm.slane %v1734, 0
        %v1764 = vadd.f32 %v1760, %v1762
        %v1765 = vpack.c.bf16 %v1764, %v1764
        %v1766 = vld [vmem:[%s21] sm:$0xf]
        %v1767 = vld [vmem:[%s21 + $0x4] sm:$0xf]
        %v1768 = vld [vmem:[%s21 + $0x8] sm:$0xf]
        %v1769 = vld [vmem:[%s21 + $0xc] sm:$0xf]
        %v1770 = vld [vmem:[#allocation16] sm:$0x1]
        %v1772 = vperm.slane %v1770, 0
        %v1778 = vunpack.c.l.b16 %v1766
        %v1779 = vunpack.c.l.b16 %v1767
        %v1780 = vunpack.c.l.b16 %v1768
        %v1781 = vunpack.c.l.b16 %v1769
        %v1782 = vpack.c.b16 %v1779, %v1778
        %v1783 = vpack.c.b16 %v1781, %v1780
        %v1787 = vsel %vm1582, %v1765, 0
        %1789 = vmatpush.bf16.msra.mxu0 0
        %1790 = vmatpush.bf16.msra.mxu0 0
        %1791 = vmatpush.bf16.msra.mxu0 0
        %1792 = vmatpush.bf16.msra.mxu0 0
        %1793 = vmatpush.bf16.msra.mxu0 0
        %1794 = vmatpush.bf16.msra.mxu0 0
        %1795 = vmatpush.bf16.msra.mxu0 %v1783
        %1796 = vmatpush.bf16.msra.mxu0 %v1782
        %1797 = vmatmul.bf16.gmra.mxu0 %v1787
        %v1798 = vpop.f32.mrf.mxu0
        %v1799 = vadd.f32 %v1772, %v1798
        %v1800 = vpop.f32.mrf.mxu0
        %1801 = vdwg.mxu0
        %v1802 = vld [vmem:[%s25] sm:$0xf]
        %v1803 = vld [vmem:[%s25 + $0x4] sm:$0xf]
        %v1804 = vld [vmem:[%s25 + $0x8] sm:$0xf]
        %v1805 = vld [vmem:[%s25 + $0xc] sm:$0xf]
        %v1806 = vld [vmem:[#allocation17] sm:$0x1]
        %v1808 = vperm.slane %v1806, 0
        %v1814 = vunpack.c.l.b16 %v1802
        %v1815 = vunpack.c.l.b16 %v1803
        %v1816 = vunpack.c.l.b16 %v1804
        %v1817 = vunpack.c.l.b16 %v1805
        %v1818 = vpack.c.b16 %v1815, %v1814
        %v1819 = vpack.c.b16 %v1817, %v1816
        %1822 = vmatpush.bf16.msra.mxu0 0
        %1823 = vmatpush.bf16.msra.mxu0 0
        %1824 = vmatpush.bf16.msra.mxu0 0
        %1825 = vmatpush.bf16.msra.mxu0 0
        %1826 = vmatpush.bf16.msra.mxu0 0
        %1827 = vmatpush.bf16.msra.mxu0 0
        %1828 = vmatpush.bf16.msra.mxu0 %v1819
        %1829 = vmatpush.bf16.msra.mxu0 %v1818
        %1830 = vmatmul.bf16.gmra.mxu0 %v1787
        %v1831 = vpop.f32.mrf.mxu0
        %v1832 = vadd.f32 %v1808, %v1831
        %v1833 = vpop.f32.mrf.mxu0
        %1834 = vdwg.mxu0
        %v1835 = vld [vmem:[%s29] sm:$0xf]
        %v1836 = vld [vmem:[%s29 + $0x4] sm:$0xf]
        %v1837 = vld [vmem:[%s29 + $0x8] sm:$0xf]
        %v1838 = vld [vmem:[%s29 + $0xc] sm:$0xf]
        %v1839 = vld [vmem:[#allocation19] sm:$0x1]
        %v1841 = vperm.slane %v1839, 0
        %v1847 = vunpack.c.l.b16 %v1835
        %v1848 = vunpack.c.l.b16 %v1836
        %v1849 = vunpack.c.l.b16 %v1837
        %v1850 = vunpack.c.l.b16 %v1838
        %v1851 = vpack.c.b16 %v1848, %v1847
        %v1852 = vpack.c.b16 %v1850, %v1849
        %1855 = vmatpush.bf16.msra.mxu0 0
        %1856 = vmatpush.bf16.msra.mxu0 0
        %1857 = vmatpush.bf16.msra.mxu0 0
        %1858 = vmatpush.bf16.msra.mxu0 0
        %1859 = vmatpush.bf16.msra.mxu0 0
        %1860 = vmatpush.bf16.msra.mxu0 0
        %1861 = vmatpush.bf16.msra.mxu0 %v1852
        %1862 = vmatpush.bf16.msra.mxu0 %v1851
        %1863 = vmatmul.bf16.gmra.mxu0 %v1787
        %v1864 = vpop.f32.mrf.mxu0
        %v1865 = vadd.f32 %v1841, %v1864
        %v1866 = vpop.f32.mrf.mxu0
        %1867 = vdwg.mxu0
        %v1868 = vpack.c.bf16 %v1799, %v1799
        %v1869 = vpack.c.bf16 %v1832, %v1832
        %v1870 = vpack.c.bf16 %v1865, %v1865
        %vm1871 = vcmask 64512
        %v1873 = vsel %vm1871, %v1868, 0
        %v1876 = vsel %vm1871, %v1869, 0
        %1878 = vmatpush.bf16.xpose.msra.mxu0 0
        %1879 = vmatpush.bf16.xpose.msra.mxu0 0
        %1880 = vmatpush.bf16.xpose.msra.mxu0 0
        %1881 = vmatpush.bf16.xpose.msra.mxu0 0
        %1882 = vmatpush.bf16.xpose.msra.mxu0 0
        %1883 = vmatpush.bf16.xpose.msra.mxu0 0
        %1884 = vmatpush.bf16.xpose.msra.mxu0 0
        %1885 = vmatpush.bf16.xpose.msra.mxu0 %v1876
        %1886 = vmatmul.bf16.gmra.mxu0 %v1873
        %v1887 = vpop.f32.mrf.mxu0
        %v1888 = vadd.f32 %v1579, %v1887
        %v1889 = vpop.f32.mrf.mxu0
        %1890 = vdwg.mxu0
        %v1891 = vsel %vm1871, %v1888, -inf
        %1892 = vmax.xlane.f32.xlu0 %v1891
        %v1893 = vpop.xlane.xlu0 %1892
        %v1894 = vsub.f32 %v1888, %v1893
        %v1895 = vmul.f32 %v1894, 1.442695
        %v1896 = vpow.pop %v1895
        %v1897 = vsel %vm1871, %v1896, 0.0
        %1898 = vadd.xlane.f32.xlu0 %v1897
        %v1899 = vpop.xlane.xlu0 %1898
        %v1900 = vrcp.pop %v1899
        %v1901 = vmul.f32 %v1896, %v1900
        %v1902 = vpack.c.bf16 %v1901, %v1901
        %v1904 = vsel %vm1871, %v1902, 0
        %vm1906 = vcmask 1043456
        %v1908 = vsel %vm1906, %v1870, 0
        %1910 = vmatpush.bf16.msra.mxu0 0
        %1911 = vmatpush.bf16.msra.mxu0 0
        %1912 = vmatpush.bf16.msra.mxu0 0
        %1913 = vmatpush.bf16.msra.mxu0 0
        %1914 = vmatpush.bf16.msra.mxu0 0
        %1915 = vmatpush.bf16.msra.mxu0 0
        %1916 = vmatpush.bf16.msra.mxu0 0
        %1917 = vmatpush.bf16.msra.mxu0 %v1908
        %1918 = vmatmul.bf16.gmra.mxu0 %v1904
        %v1919 = vpop.f32.mrf.mxu0
        %v1920 = vadd.f32 0.0, %v1919
        %v1921 = vpop.f32.mrf.mxu0
        %1922 = vdwg.mxu0
        %1923 = vst.msk [vmem:[#allocation2] sm:$0xff] %vm1871, %v1920
        %v1925 = vunpack.c.l.b16 %v1868
        %v1926 = vpack.c.b16 %v1925, %v1925
        %1927 = vrot.lane.b32.xlu0 %v1926, 120
        %v1928 = vpop.permute.xlu0 %1927
        %v1930 = vunpack.c.l.b16 %v1869
        %v1931 = vpack.c.b16 %v1930, %v1930
        %1932 = vrot.lane.b32.xlu0 %v1931, 120
        %v1933 = vpop.permute.xlu0 %1932
        %v1935 = vsel %vm1871, %v1928, 0
        %v1938 = vsel %vm1871, %v1933, 0
        %1940 = vmatpush.bf16.xpose.msra.mxu0 0
        %1941 = vmatpush.bf16.xpose.msra.mxu0 0
        %1942 = vmatpush.bf16.xpose.msra.mxu0 0
        %1943 = vmatpush.bf16.xpose.msra.mxu0 0
        %1944 = vmatpush.bf16.xpose.msra.mxu0 0
        %1945 = vmatpush.bf16.xpose.msra.mxu0 0
        %1946 = vmatpush.bf16.xpose.msra.mxu0 0
        %1947 = vmatpush.bf16.xpose.msra.mxu0 %v1938
        %1948 = vmatmul.bf16.gmra.mxu0 %v1935
        %v1949 = vpop.f32.mrf.mxu0
        %v1950 = vadd.f32 %v1579, %v1949
        %v1951 = vpop.f32.mrf.mxu0
        %1952 = vdwg.mxu0
        %v1953 = vsel %vm1871, %v1950, -inf
        %1954 = vmax.xlane.f32.xlu0 %v1953
        %v1955 = vpop.xlane.xlu0 %1954
        %v1956 = vsub.f32 %v1950, %v1955
        %v1957 = vmul.f32 %v1956, 1.442695
        %v1958 = vpow.pop %v1957
        %v1959 = vsel %vm1871, %v1958, 0.0
        %1960 = vadd.xlane.f32.xlu0 %v1959
        %v1961 = vpop.xlane.xlu0 %1960
        %v1962 = vrcp.pop %v1961
        %v1963 = vmul.f32 %v1958, %v1962
        %v1964 = vpack.c.bf16 %v1963, %v1963
        %v1966 = vunpack.c.l.b16 %v1870
        %v1967 = vpack.c.b16 %v1966, %v1966
        %1968 = vrot.lane.b32.xlu0 %v1967, 120
        %v1969 = vpop.permute.xlu0 %1968
        %v1971 = vsel %vm1871, %v1964, 0
        %v1974 = vsel %vm1906, %v1969, 0
        %1976 = vmatpush.bf16.msra.mxu0 0
        %1977 = vmatpush.bf16.msra.mxu0 0
        %1978 = vmatpush.bf16.msra.mxu0 0
        %1979 = vmatpush.bf16.msra.mxu0 0
        %1980 = vmatpush.bf16.msra.mxu0 0
        %1981 = vmatpush.bf16.msra.mxu0 0
        %1982 = vmatpush.bf16.msra.mxu0 0
        %1983 = vmatpush.bf16.msra.mxu0 %v1974
        %1984 = vmatmul.bf16.gmra.mxu0 %v1971
        %v1985 = vpop.f32.mrf.mxu0
        %v1986 = vadd.f32 0.0, %v1985
        %v1987 = vpop.f32.mrf.mxu0
        %1988 = vdwg.mxu0
        %1990 = vrot.lane.b32.xlu0 %v1986, 8
        %v1991 = vpop.permute.xlu0 %1990
        %vm1993 = vcmask 130112
        %1994 = vst.msk [vmem:[#allocation2] sm:$0xff] %vm1993, %v1991
        %1995 = vrot.lane.b32.xlu0 %v1926, 112
        %v1996 = vpop.permute.xlu0 %1995
        %1997 = vrot.lane.b32.xlu0 %v1931, 112
        %v1998 = vpop.permute.xlu0 %1997
        %v2000 = vsel %vm1871, %v1996, 0
        %v2003 = vsel %vm1871, %v1998, 0
        %2005 = vmatpush.bf16.xpose.msra.mxu0 0
        %2006 = vmatpush.bf16.xpose.msra.mxu0 0
        %2007 = vmatpush.bf16.xpose.msra.mxu0 0
        %2008 = vmatpush.bf16.xpose.msra.mxu0 0
        %2009 = vmatpush.bf16.xpose.msra.mxu0 0
        %2010 = vmatpush.bf16.xpose.msra.mxu0 0
        %2011 = vmatpush.bf16.xpose.msra.mxu0 0
        %2012 = vmatpush.bf16.xpose.msra.mxu0 %v2003
        %2013 = vmatmul.bf16.gmra.mxu0 %v2000
        %v2014 = vpop.f32.mrf.mxu0
        %v2015 = vadd.f32 %v1579, %v2014
        %v2016 = vpop.f32.mrf.mxu0
        %2017 = vdwg.mxu0
        %v2018 = vsel %vm1871, %v2015, -inf
        %2019 = vmax.xlane.f32.xlu0 %v2018
        %v2020 = vpop.xlane.xlu0 %2019
        %v2021 = vsub.f32 %v2015, %v2020
        %v2022 = vmul.f32 %v2021, 1.442695
        %v2023 = vpow.pop %v2022
        %v2024 = vsel %vm1871, %v2023, 0.0
        %2025 = vadd.xlane.f32.xlu0 %v2024
        %v2026 = vpop.xlane.xlu0 %2025
        %v2027 = vrcp.pop %v2026
        %v2028 = vmul.f32 %v2023, %v2027
        %v2029 = vpack.c.bf16 %v2028, %v2028
        %2030 = vrot.lane.b32.xlu0 %v1967, 112
        %v2031 = vpop.permute.xlu0 %2030
        %v2033 = vsel %vm1871, %v2029, 0
        %v2036 = vsel %vm1906, %v2031, 0
        %2038 = vmatpush.bf16.msra.mxu0 0
        %2039 = vmatpush.bf16.msra.mxu0 0
        %2040 = vmatpush.bf16.msra.mxu0 0
        %2041 = vmatpush.bf16.msra.mxu0 0
        %2042 = vmatpush.bf16.msra.mxu0 0
        %2043 = vmatpush.bf16.msra.mxu0 0
        %2044 = vmatpush.bf16.msra.mxu0 0
        %2045 = vmatpush.bf16.msra.mxu0 %v2036
        %2046 = vmatmul.bf16.gmra.mxu0 %v2033
        %v2047 = vpop.f32.mrf.mxu0
        %v2048 = vadd.f32 0.0, %v2047
        %v2049 = vpop.f32.mrf.mxu0
        %2050 = vdwg.mxu0
        %2052 = vrot.lane.b32.xlu0 %v2048, 16
        %v2053 = vpop.permute.xlu0 %2052
        %vm2055 = vcmask 195712
        %2056 = vst.msk [vmem:[#allocation2] sm:$0xff] %vm2055, %v2053
        %2057 = vrot.lane.b32.xlu0 %v1926, 104
        %v2058 = vpop.permute.xlu0 %2057
        %2059 = vrot.lane.b32.xlu0 %v1931, 104
        %v2060 = vpop.permute.xlu0 %2059
        %v2062 = vsel %vm1871, %v2058, 0
        %v2065 = vsel %vm1871, %v2060, 0
        %2067 = vmatpush.bf16.xpose.msra.mxu0 0
        %2068 = vmatpush.bf16.xpose.msra.mxu0 0
        %2069 = vmatpush.bf16.xpose.msra.mxu0 0
        %2070 = vmatpush.bf16.xpose.msra.mxu0 0
        %2071 = vmatpush.bf16.xpose.msra.mxu0 0
        %2072 = vmatpush.bf16.xpose.msra.mxu0 0
        %2073 = vmatpush.bf16.xpose.msra.mxu0 0
        %2074 = vmatpush.bf16.xpose.msra.mxu0 %v2065
        %2075 = vmatmul.bf16.gmra.mxu0 %v2062
        %v2076 = vpop.f32.mrf.mxu0
        %v2077 = vadd.f32 %v1579, %v2076
        %v2078 = vpop.f32.mrf.mxu0
        %2079 = vdwg.mxu0
        %v2080 = vsel %vm1871, %v2077, -inf
        %2081 = vmax.xlane.f32.xlu0 %v2080
        %v2082 = vpop.xlane.xlu0 %2081
        %v2083 = vsub.f32 %v2077, %v2082
        %v2084 = vmul.f32 %v2083, 1.442695
        %v2085 = vpow.pop %v2084
        %v2086 = vsel %vm1871, %v2085, 0.0
        %2087 = vadd.xlane.f32.xlu0 %v2086
        %v2088 = vpop.xlane.xlu0 %2087
        %v2089 = vrcp.pop %v2088
        %v2090 = vmul.f32 %v2085, %v2089
        %v2091 = vpack.c.bf16 %v2090, %v2090
        %2092 = vrot.lane.b32.xlu0 %v1967, 104
        %v2093 = vpop.permute.xlu0 %2092
        %v2095 = vsel %vm1871, %v2091, 0
        %v2098 = vsel %vm1906, %v2093, 0
        %2100 = vmatpush.bf16.msra.mxu0 0
        %2101 = vmatpush.bf16.msra.mxu0 0
        %2102 = vmatpush.bf16.msra.mxu0 0
        %2103 = vmatpush.bf16.msra.mxu0 0
        %2104 = vmatpush.bf16.msra.mxu0 0
        %2105 = vmatpush.bf16.msra.mxu0 0
        %2106 = vmatpush.bf16.msra.mxu0 0
        %2107 = vmatpush.bf16.msra.mxu0 %v2098
        %2108 = vmatmul.bf16.gmra.mxu0 %v2095
        %v2109 = vpop.f32.mrf.mxu0
        %v2110 = vadd.f32 0.0, %v2109
        %v2111 = vpop.f32.mrf.mxu0
        %2112 = vdwg.mxu0
        %2114 = vrot.lane.b32.xlu0 %v2110, 24
        %v2115 = vpop.permute.xlu0 %2114
        %vm2117 = vcmask 261312
        %2118 = vst.msk [vmem:[#allocation2] sm:$0xff] %vm2117, %v2115
        %v2119 = vld [vmem:[#allocation2] sm:$0xff]
        %v2120 = vpack.c.bf16 %v2119, %v2119
        %v2121 = vld [vmem:[%s33] sm:$0xf]
        %v2122 = vld [vmem:[%s33 + $0x4] sm:$0xf]
        %v2123 = vld [vmem:[%s33 + $0x8] sm:$0xf]
        %v2124 = vld [vmem:[%s33 + $0xc] sm:$0xf]
        %v2129 = vunpack.c.l.b16 %v2121
        %v2130 = vunpack.c.l.b16 %v2122
        %v2131 = vunpack.c.l.b16 %v2123
        %v2132 = vunpack.c.l.b16 %v2124
        %v2133 = vpack.c.b16 %v2130, %v2129
        %v2134 = vpack.c.b16 %v2132, %v2131
        %v2138 = vsel %vm1582, %v2120, 0
        %2140 = vmatpush.bf16.msra.mxu0 0
        %2141 = vmatpush.bf16.msra.mxu0 0
        %2142 = vmatpush.bf16.msra.mxu0 0
        %2143 = vmatpush.bf16.msra.mxu0 0
        %2144 = vmatpush.bf16.msra.mxu0 0
        %2145 = vmatpush.bf16.msra.mxu0 0
        %2146 = vmatpush.bf16.msra.mxu0 %v2134
        %2147 = vmatpush.bf16.msra.mxu0 %v2133
        %2148 = vmatmul.bf16.gmra.mxu0 %v2138
        %v2149 = vpop.f32.mrf.mxu0
        %v2150 = vadd.f32 0.0, %v2149
        %v2151 = vpop.f32.mrf.mxu0
        %2152 = vdwg.mxu0
        %v2153 = vadd.f32 %v1732, %v2150
        %v2154 = vld [vmem:[#allocation20] sm:$0x1]
        %v2156 = vperm.slane %v2154, 0
        %v2158 = vadd.f32 %v2153, %v2156
        %v2159 = vld [vmem:[#allocation22] sm:$0x1]
        %v2160 = vld [vmem:[#allocation23] sm:$0x1]
        %v2161 = vsel %vm1582, %v2158, 0.0
        %2162 = vadd.xlane.f32.xlu0 %v2161
        %v2163 = vpop.xlane.xlu0 %2162
        %v2164 = vmul.f32 %v2163, %v1592
        %v2165 = vsub.f32 %v2158, %v2164
        %v2166 = vmul.f32 %v2165, %v2165
        %v2167 = vsel %vm1582, %v2166, 0.0
        %2168 = vadd.xlane.f32.xlu0 %v2167
        %v2169 = vpop.xlane.xlu0 %2168
        %v2170 = vmul.f32 %v2169, %v1592
        %v2171 = vadd.f32 %v2170, 1e-05
        %v2172 = vrsqrt.pop %v2171
        %v2173 = vmul.f32 %v2172, %v2171
        %v2174 = vmul.f32 %v2173, %v2172
        %v2175 = vmul.f32 0.5, %v2174
        %v2176 = vsub.f32 1.5, %v2175
        %v2177 = vmul.f32 %v2172, %v2176
        %vm2178 = vweird.f32 %v2171
        %vm2179 = vweird.f32 %v2172
        %vm2180 = vmor %vm2178, %vm2179
        %v2181 = vsel %vm2180, %v2172, %v2177
        %v2182 = vmul.f32 %v2165, %v2181
        %v2184 = vperm.slane %v2159, 0
        %v2186 = vmul.f32 %v2182, %v2184
        %v2188 = vperm.slane %v2160, 0
        %v2190 = vadd.f32 %v2186, %v2188
        %v2191 = vpack.c.bf16 %v2190, %v2190
        %v2192 = vld [vmem:[%s41] sm:$0xf]
        %v2193 = vld [vmem:[%s41 + $0x4] sm:$0xf]
        %v2194 = vld [vmem:[%s41 + $0x8] sm:$0xf]
        %v2195 = vld [vmem:[%s41 + $0xc] sm:$0xf]
        %v2196 = vld [vmem:[#allocation25] sm:$0x1]
        %v2198 = vperm.slane %v2196, 0
        %v2204 = vunpack.c.l.b16 %v2192
        %v2205 = vunpack.c.l.b16 %v2193
        %v2206 = vunpack.c.l.b16 %v2194
        %v2207 = vunpack.c.l.b16 %v2195
        %v2208 = vpack.c.b16 %v2205, %v2204
        %v2209 = vpack.c.b16 %v2207, %v2206
        %v2213 = vsel %vm1582, %v2191, 0
        %2215 = vmatpush.bf16.msra.mxu0 0
        %2216 = vmatpush.bf16.msra.mxu0 0
        %2217 = vmatpush.bf16.msra.mxu0 0
        %2218 = vmatpush.bf16.msra.mxu0 0
        %2219 = vmatpush.bf16.msra.mxu0 0
        %2220 = vmatpush.bf16.msra.mxu0 0
        %2221 = vmatpush.bf16.msra.mxu0 %v2209
        %2222 = vmatpush.bf16.msra.mxu0 %v2208
        %2223 = vmatmul.bf16.gmra.mxu0 %v2213
        %v2224 = vpop.f32.mrf.mxu0
        %v2225 = vadd.f32 %v2198, %v2224
        %v2226 = vpop.f32.mrf.mxu0
        %2227 = vdwg.mxu0
        %v2228 = vld [vmem:[#allocation26] sm:$0xf]
        %v2229 = vld [vmem:[#allocation26 + $0x4] sm:$0xf]
        %v2230 = vld [vmem:[#allocation26 + $0x8] sm:$0xf]
        %v2231 = vld [vmem:[#allocation26 + $0xc] sm:$0xf]
        %v2232 = vld [vmem:[#allocation28] sm:$0x1]
        %v2234 = vperm.slane %v2232, 0
        %v2240 = vunpack.c.l.b16 %v2228
        %v2241 = vunpack.c.l.b16 %v2229
        %v2242 = vunpack.c.l.b16 %v2230
        %v2243 = vunpack.c.l.b16 %v2231
        %v2244 = vpack.c.b16 %v2241, %v2240
        %v2245 = vpack.c.b16 %v2243, %v2242
        %2248 = vmatpush.bf16.msra.mxu0 0
        %2249 = vmatpush.bf16.msra.mxu0 0
        %2250 = vmatpush.bf16.msra.mxu0 0
        %2251 = vmatpush.bf16.msra.mxu0 0
        %2252 = vmatpush.bf16.msra.mxu0 0
        %2253 = vmatpush.bf16.msra.mxu0 0
        %2254 = vmatpush.bf16.msra.mxu0 %v2245
        %2255 = vmatpush.bf16.msra.mxu0 %v2244
        %2256 = vmatmul.bf16.gmra.mxu0 %v2213
        %v2257 = vpop.f32.mrf.mxu0
        %v2258 = vadd.f32 %v2234, %v2257
        %v2259 = vpop.f32.mrf.mxu0
        %2260 = vdwg.mxu0
        %v2261 = vxor.u32 %v2258, 2147483648
        %v2262 = vmul.f32 %v2261, 1.442695
        %v2263 = vpow.pop %v2262
        %v2264 = vadd.f32 %v2263, 1.0
        %v2265 = vrcp.pop %v2264
        %v2266 = vmul.f32 %v2264, %v2265
        %v2267 = vsub.f32 1.0, %v2266
        %v2268 = vmul.f32 %v2265, %v2267
        %v2269 = vadd.f32 %v2265, %v2268
        %vm2270 = vweird.f32 %v2264
        %vm2271 = vweird.f32 %v2265
        %vm2272 = vmor %vm2270, %vm2271
        %v2273 = vsel %vm2272, %v2265, %v2269
        %v2274 = vand.u32 2147483647, %v2264
        %vm2275 = vcmp.eq.f32.partialorder %v2274, 8.507059e+37
        %v2276 = vand.u32 %v2264, 2147483648
        %v2277 = vor.u32 1.1754944e-38, %v2276
        %v2278 = vsel %vm2275, %v2277, %v2273
        %v2279 = vmul.f32 1.0, %v2278
        %v2280 = vmul.f32 %v2225, %v2279
        %v2281 = vlaneseq
        %v2282 = vshrl.u32 %v2281, 7
        %s2283 = scalar_lea.vmem [#allocation29], 3
        %v2284 = vld [vmem:[%s2283] sm:$0x1]
        %v2286 = vperm.slane %v2284, 0
        %v2288 = vmul.f32 %v2280, %v2286
        %v2289 = vrot.slane %v2280, 5
        %vm2290 = vcmp.ge.s32.totalorder %v2282, 3
        %v2291 = vld [vmem:[#allocation29] sm:$0x1]
        %v2293 = vperm.slane %v2291, 0
        %v2295 = vmul.f32 %v2289, %v2293
        %v2296 = vsel %vm2290, 1, 0
        %vm2297 = vcmp.eq.s32.totalorder %v2296, 1
        %v2298 = vsel %vm2297, %v2295, 0.0
        %v2299 = vadd.f32 %v2288, %v2298
        %v2300 = vrot.slane %v2280, 6
        %vm2301 = vcmp.ge.s32.totalorder %v2282, 2
        %s2302 = scalar_lea.vmem [#allocation29], 1
        %v2303 = vld [vmem:[%s2302] sm:$0x1]
        %v2305 = vperm.slane %v2303, 0
        %v2307 = vmul.f32 %v2300, %v2305
        %v2308 = vsel %vm2301, 1, 0
        %vm2309 = vcmp.eq.s32.totalorder %v2308, 1
        %v2310 = vsel %vm2309, %v2307, 0.0
        %v2311 = vadd.f32 %v2299, %v2310
        %v2312 = vrot.slane %v2280, 7
        %vm2313 = vcmp.ge.s32.totalorder %v2282, 1
        %s2314 = scalar_lea.vmem [#allocation29], 2
        %v2315 = vld [vmem:[%s2314] sm:$0x1]
        %v2317 = vperm.slane %v2315, 0
        %v2319 = vmul.f32 %v2312, %v2317
        %v2320 = vsel %vm2313, 1, 0
        %vm2321 = vcmp.eq.s32.totalorder %v2320, 1
        %v2322 = vsel %vm2321, %v2319, 0.0
        %v2323 = vadd.f32 %v2311, %v2322
        %v2324 = vrot.slane %v2280, 1
        %vm2325 = vcmp.lt.s32.totalorder %v2282, 7
        %s2326 = scalar_lea.vmem [#allocation29], 4
        %v2327 = vld [vmem:[%s2326] sm:$0x1]
        %v2329 = vperm.slane %v2327, 0
        %v2331 = vmul.f32 %v2324, %v2329
        %v2332 = vsel %vm2325, 1, 0
        %vm2333 = vcmp.eq.s32.totalorder %v2332, 1
        %v2334 = vsel %vm2333, %v2331, 0.0
        %v2335 = vadd.f32 %v2323, %v2334
        %v2336 = vrot.slane %v2280, 2
        %vm2337 = vcmp.lt.s32.totalorder %v2282, 6
        %s2338 = scalar_lea.vmem [#allocation29], 5
        %v2339 = vld [vmem:[%s2338] sm:$0x1]
        %v2341 = vperm.slane %v2339, 0
        %v2343 = vmul.f32 %v2336, %v2341
        %v2344 = vsel %vm2337, 1, 0
        %vm2345 = vcmp.eq.s32.totalorder %v2344, 1
        %v2346 = vsel %vm2345, %v2343, 0.0
        %v2347 = vadd.f32 %v2335, %v2346
        %v2348 = vrot.slane %v2280, 3
        %vm2349 = vcmp.lt.s32.totalorder %v2282, 5
        %s2350 = scalar_lea.vmem [#allocation29], 6
        %v2351 = vld [vmem:[%s2350] sm:$0x1]
        %v2353 = vperm.slane %v2351, 0
        %v2355 = vmul.f32 %v2348, %v2353
        %v2356 = vsel %vm2349, 1, 0
        %vm2357 = vcmp.eq.s32.totalorder %v2356, 1
        %v2358 = vsel %vm2357, %v2355, 0.0
        %v2359 = vadd.f32 %v2347, %v2358
        %v2360 = vld [vmem:[#allocation31] sm:$0x1]
        %v2362 = vperm.slane %v2360, 0
        %v2364 = vadd.f32 %v2359, %v2362
        %v2365 = vld [vmem:[#allocation35] sm:$0x1]
        %v2367 = vperm.slane %v2365, 0
        %v2369 = vsub.f32 %v2364, %v2367
        %v2370 = vld [vmem:[#allocation37] sm:$0x1]
        %v2371 = vadd.f32 %v2370, 1e-05
        %v2372 = vrsqrt.pop %v2371
        %v2373 = vmul.f32 %v2372, %v2371
        %v2374 = vmul.f32 %v2373, %v2372
        %v2375 = vmul.f32 0.5, %v2374
        %v2376 = vsub.f32 1.5, %v2375
        %v2377 = vmul.f32 %v2372, %v2376
        %vm2378 = vweird.f32 %v2371
        %vm2379 = vweird.f32 %v2372
        %vm2380 = vmor %vm2378, %vm2379
        %v2381 = vsel %vm2380, %v2372, %v2377
        %v2383 = vperm.slane %v2381, 0
        %v2385 = vmul.f32 %v2369, %v2383
        %v2386 = vld [vmem:[#allocation32] sm:$0x1]
        %v2388 = vperm.slane %v2386, 0
        %v2390 = vmul.f32 %v2385, %v2388
        %v2391 = vld [vmem:[#allocation34] sm:$0x1]
        %v2393 = vperm.slane %v2391, 0
        %v2395 = vadd.f32 %v2390, %v2393
        %v2396 = vxor.u32 %v2395, 2147483648
        %v2397 = vmul.f32 %v2396, 1.442695
        %v2398 = vpow.pop %v2397
        %v2399 = vadd.f32 %v2398, 1.0
        %v2400 = vrcp.pop %v2399
        %v2401 = vmul.f32 %v2399, %v2400
        %v2402 = vsub.f32 1.0, %v2401
        %v2403 = vmul.f32 %v2400, %v2402
        %v2404 = vadd.f32 %v2400, %v2403
        %vm2405 = vweird.f32 %v2399
        %vm2406 = vweird.f32 %v2400
        %vm2407 = vmor %vm2405, %vm2406
        %v2408 = vsel %vm2407, %v2400, %v2404
        %v2409 = vand.u32 2147483647, %v2399
        %vm2410 = vcmp.eq.f32.partialorder %v2409, 8.507059e+37
        %v2411 = vand.u32 %v2399, 2147483648
        %v2412 = vor.u32 1.1754944e-38, %v2411
        %v2413 = vsel %vm2410, %v2412, %v2408
        %v2414 = vmul.f32 1.0, %v2413
        %v2415 = vmul.f32 %v2395, %v2414
        %v2416 = vpack.c.bf16 %v2415, %v2415
        %v2417 = vld [vmem:[#allocation38] sm:$0xf]
        %v2418 = vld [vmem:[#allocation38 + $0x4] sm:$0xf]
        %v2419 = vld [vmem:[#allocation38 + $0x8] sm:$0xf]
        %v2420 = vld [vmem:[#allocation38 + $0xc] sm:$0xf]
        %v2425 = vunpack.c.l.b16 %v2417
        %v2426 = vunpack.c.l.b16 %v2418
        %v2427 = vunpack.c.l.b16 %v2419
        %v2428 = vunpack.c.l.b16 %v2420
        %v2429 = vpack.c.b16 %v2426, %v2425
        %v2430 = vpack.c.b16 %v2428, %v2427
        %v2434 = vsel %vm1582, %v2416, 0
        %2436 = vmatpush.bf16.msra.mxu0 0
        %2437 = vmatpush.bf16.msra.mxu0 0
        %2438 = vmatpush.bf16.msra.mxu0 0
        %2439 = vmatpush.bf16.msra.mxu0 0
        %2440 = vmatpush.bf16.msra.mxu0 0
        %2441 = vmatpush.bf16.msra.mxu0 0
        %2442 = vmatpush.bf16.msra.mxu0 %v2430
        %2443 = vmatpush.bf16.msra.mxu0 %v2429
        %2444 = vmatmul.bf16.gmra.mxu0 %v2434
        %v2445 = vpop.f32.mrf.mxu0
        %v2446 = vadd.f32 0.0, %v2445
        %v2447 = vpop.f32.mrf.mxu0
        %2448 = vdwg.mxu0
        %v2449 = vadd.f32 %v2158, %v2446
        %v2450 = vld [vmem:[#allocation40] sm:$0x1]
        %v2452 = vperm.slane %v2450, 0
        %v2454 = vadd.f32 %v2449, %v2452
        %v2455 = vld [vmem:[#allocation41] sm:$0x1]
        %v2456 = vld [vmem:[#allocation43] sm:$0x1]
        %v2457 = vsel %vm1582, %v2454, 0.0
        %2458 = vadd.xlane.f32.xlu0 %v2457
        %v2459 = vpop.xlane.xlu0 %2458
        %v2460 = vmul.f32 %v2459, %v1592
        %v2461 = vsub.f32 %v2454, %v2460
        %v2462 = vmul.f32 %v2461, %v2461
        %v2463 = vsel %vm1582, %v2462, 0.0
        %2464 = vadd.xlane.f32.xlu0 %v2463
        %v2465 = vpop.xlane.xlu0 %2464
        %v2466 = vmul.f32 %v2465, %v1592
        %v2467 = vadd.f32 %v2466, 1e-05
        %v2468 = vrsqrt.pop %v2467
        %v2469 = vmul.f32 %v2468, %v2467
        %v2470 = vmul.f32 %v2469, %v2468
        %v2471 = vmul.f32 0.5, %v2470
        %v2472 = vsub.f32 1.5, %v2471
        %v2473 = vmul.f32 %v2468, %v2472
        %vm2474 = vweird.f32 %v2467
        %vm2475 = vweird.f32 %v2468
        %vm2476 = vmor %vm2474, %vm2475
        %v2477 = vsel %vm2476, %v2468, %v2473
        %v2478 = vmul.f32 %v2461, %v2477
        %v2480 = vperm.slane %v2455, 0
        %v2482 = vmul.f32 %v2478, %v2480
        %v2484 = vperm.slane %v2456, 0
        %v2486 = vadd.f32 %v2482, %v2484
        %v2487 = vpack.c.bf16 %v2486, %v2486
        %v2488 = vld [vmem:[%s69] sm:$0xf]
        %v2489 = vld [vmem:[%s69 + $0x4] sm:$0xf]
        %v2490 = vld [vmem:[%s69 + $0x8] sm:$0xf]
        %v2491 = vld [vmem:[%s69 + $0xc] sm:$0xf]
        %v2492 = vld [vmem:[#allocation44] sm:$0x1]
        %v2494 = vperm.slane %v2492, 0
        %v2500 = vunpack.c.l.b16 %v2488
        %v2501 = vunpack.c.l.b16 %v2489
        %v2502 = vunpack.c.l.b16 %v2490
        %v2503 = vunpack.c.l.b16 %v2491
        %v2504 = vpack.c.b16 %v2501, %v2500
        %v2505 = vpack.c.b16 %v2503, %v2502
        %v2509 = vsel %vm1582, %v2487, 0
        %2511 = vmatpush.bf16.msra.mxu0 0
        %2512 = vmatpush.bf16.msra.mxu0 0
        %2513 = vmatpush.bf16.msra.mxu0 0
        %2514 = vmatpush.bf16.msra.mxu0 0
        %2515 = vmatpush.bf16.msra.mxu0 0
        %2516 = vmatpush.bf16.msra.mxu0 0
        %2517 = vmatpush.bf16.msra.mxu0 %v2505
        %2518 = vmatpush.bf16.msra.mxu0 %v2504
        %2519 = vmatmul.bf16.gmra.mxu0 %v2509
        %v2520 = vpop.f32.mrf.mxu0
        %v2521 = vadd.f32 %v2494, %v2520
        %v2522 = vpop.f32.mrf.mxu0
        %2523 = vdwg.mxu0
        %v2524 = vxor.u32 %v2521, 2147483648
        %v2525 = vmul.f32 %v2524, 1.442695
        %v2526 = vpow.pop %v2525
        %v2527 = vadd.f32 %v2526, 1.0
        %v2528 = vrcp.pop %v2527
        %v2529 = vmul.f32 %v2527, %v2528
        %v2530 = vsub.f32 1.0, %v2529
        %v2531 = vmul.f32 %v2528, %v2530
        %v2532 = vadd.f32 %v2528, %v2531
        %vm2533 = vweird.f32 %v2527
        %vm2534 = vweird.f32 %v2528
        %vm2535 = vmor %vm2533, %vm2534
        %v2536 = vsel %vm2535, %v2528, %v2532
        %v2537 = vand.u32 2147483647, %v2527
        %vm2538 = vcmp.eq.f32.partialorder %v2537, 8.507059e+37
        %v2539 = vand.u32 %v2527, 2147483648
        %v2540 = vor.u32 1.1754944e-38, %v2539
        %v2541 = vsel %vm2538, %v2540, %v2536
        %v2542 = vmul.f32 1.0, %v2541
        %v2543 = vmul.f32 %v2521, %v2542
        %v2544 = vpack.c.bf16 %v2543, %v2543
        %v2545 = vld [vmem:[%s73] sm:$0xf]
        %v2546 = vld [vmem:[%s73 + $0x4] sm:$0xf]
        %v2547 = vld [vmem:[%s73 + $0x8] sm:$0xf]
        %v2548 = vld [vmem:[%s73 + $0xc] sm:$0xf]
        %v2549 = vld [vmem:[%s73 + $0x10] sm:$0xf]
        %v2550 = vld [vmem:[%s73 + $0x14] sm:$0xf]
        %v2551 = vld [vmem:[%s73 + $0x18] sm:$0xf]
        %v2552 = vld [vmem:[%s73 + $0x1c] sm:$0xf]
        %v2553 = vld [vmem:[%s75] sm:$0x1]
        %v2555 = vperm.slane %v2553, 0
        %v2565 = vunpack.c.l.b16 %v2545
        %v2566 = vunpack.c.l.b16 %v2546
        %v2567 = vunpack.c.l.b16 %v2547
        %v2568 = vunpack.c.l.b16 %v2548
        %v2569 = vunpack.c.l.b16 %v2549
        %v2570 = vunpack.c.l.b16 %v2550
        %v2571 = vunpack.c.l.b16 %v2551
        %v2572 = vunpack.c.l.b16 %v2552
        %v2573 = vpack.c.b16 %v2566, %v2565
        %v2574 = vpack.c.b16 %v2568, %v2567
        %v2575 = vpack.c.b16 %v2570, %v2569
        %v2576 = vpack.c.b16 %v2572, %v2571
        %v2582 = vsel %vm1714, %v2544, 0
        %2584 = vmatpush.bf16.msra.mxu0 0
        %2585 = vmatpush.bf16.msra.mxu0 0
        %2586 = vmatpush.bf16.msra.mxu0 0
        %2587 = vmatpush.bf16.msra.mxu0 0
        %2588 = vmatpush.bf16.msra.mxu0 %v2576
        %2589 = vmatpush.bf16.msra.mxu0 %v2575
        %2590 = vmatpush.bf16.msra.mxu0 %v2574
        %2591 = vmatpush.bf16.msra.mxu0 %v2573
        %2592 = vmatmul.bf16.gmra.mxu0 %v2582
        %v2593 = vpop.f32.mrf.mxu0
        %v2594 = vadd.f32 %v2555, %v2593
        %v2595 = vpop.f32.mrf.mxu0
        %2596 = vdwg.mxu0
        %v2597 = vmul.f32 %v2594, 0.5
        %v2598 = vadd.f32 %v2454, %v2597
        %v2599 = vld [vmem:[%s77] sm:$0x1]
        %v2600 = vld [vmem:[%s79] sm:$0x1]
        %v2601 = vsel %vm1582, %v2598, 0.0
        %2602 = vadd.xlane.f32.xlu0 %v2601
        %v2603 = vpop.xlane.xlu0 %2602
        %v2604 = vmul.f32 %v2603, %v1592
        %v2605 = vsub.f32 %v2598, %v2604
        %v2606 = vmul.f32 %v2605, %v2605
        %v2607 = vsel %vm1582, %v2606, 0.0
        %2608 = vadd.xlane.f32.xlu0 %v2607
        %v2609 = vpop.xlane.xlu0 %2608
        %v2610 = vmul.f32 %v2609, %v1592
        %v2611 = vadd.f32 %v2610, 1e-05
        %v2612 = vrsqrt.pop %v2611
        %v2613 = vmul.f32 %v2612, %v2611
        %v2614 = vmul.f32 %v2613, %v2612
        %v2615 = vmul.f32 0.5, %v2614
        %v2616 = vsub.f32 1.5, %v2615
        %v2617 = vmul.f32 %v2612, %v2616
        %vm2618 = vweird.f32 %v2611
        %vm2619 = vweird.f32 %v2612
        %vm2620 = vmor %vm2618, %vm2619
        %v2621 = vsel %vm2620, %v2612, %v2617
        %v2622 = vmul.f32 %v2605, %v2621
        %v2624 = vperm.slane %v2599, 0
        %v2626 = vmul.f32 %v2622, %v2624
        %v2628 = vperm.slane %v2600, 0
        %v2630 = vadd.f32 %v2626, %v2628
        %2631 = vst.msk [vmem:[%s1567] sm:$0xff] %vm1582, %v2630
        %s2632 = sand.u32 %s949, 1
        %s2633 = scalar_lea.sflag [#allocation7], %s2632
        %s2634 = sand.u32 %s949, 1
        %s2635 = smul.addr %s2634, 8
        %s2636 = scalar_lea.vmem [#allocation46], %s2635
        // Predicated region
        $region281: #{tpu_custom_call.1} parent=175 // pred_check
          %p2637 = pneg %p959
        $region282: #{tpu_custom_call.1} parent=175 // pred_check_branch
          %2639 = sbr.rel (%p2637) target = $region284
        $region283: #{tpu_custom_call.1} parent=175 // pred_region
          %2641 = vsyncadd %s2633, 0
          %s2642 = smul.addr %s117, 8
          %s2643 = scalar_lea.hbm %s81, %s2642
          %s2645 = sshll.u32 %s2636, 4
          %s2646 = int_to_ptr.vmem [resolvable:$true] %s2645
          %s2647 = sshll.u32 %s2643, 4
          %s2648 = int_to_ptr.hbm [resolvable:$true] %s2647
          %2650 = dma.vmem_to_hbm [thread:$0]  %s2646, 128, %s2648, %s2633
        $region284: #{tpu_custom_call.1} parent=175 // pred_fallthru
          _
      $region176: #{tpu_custom_call.1} parent=5 // pred_fallthru
        _
      %p2651 = scmp.le.s32.totalorder 2, %s112
      // Predicated region
      $region285: #{tpu_custom_call.1} parent=5 // pred_check
        %p2652 = pneg %p2651
      $region286: #{tpu_custom_call.1} parent=5 // pred_check_branch
        %2654 = sbr.rel (%p2652) target = $region288
      $region287: #{tpu_custom_call.1} parent=5 // pred_region
        %s2655 = ssub.s32 %s112, 2
        // Predicated region
        $region289: #{tpu_custom_call.1} parent=287 // pred_check
          %p2656 = pneg %p965
        $region290: #{tpu_custom_call.1} parent=287 // pred_check_branch
          %2658 = sbr.rel (%p2656) target = $region292
        $region291: #{tpu_custom_call.1} parent=287 // pred_region
          %s2659 = sand.u32 %s950, 1
          %s2660 = scalar_lea.sflag [#allocation7], %s2659
          %s2661 = sand.u32 %s950, 1
          %s2662 = smul.addr %s2661, 8
          %s2663 = scalar_lea.vmem [#allocation46], %s2662
          %2665 = dma.done %s2660, 128
        $region292: #{tpu_custom_call.1} parent=287 // pred_fallthru
          _
      $region288: #{tpu_custom_call.1} parent=5 // pred_fallthru
        _
    $region6: #{tpu_custom_call.1} parent=1 // loop_footer
      %s116 = sadd.s32 1, %s112
    $region7: #{tpu_custom_call.1} parent=1 // loop_footer_branch
      %111 = sbr.rel target = $region3
    $region8: #{tpu_custom_call.1} parent=1 // loop_exit
      _
    %2666 = vsyncpa [#allocation6], 1
    %s2667 = scalar_lea.sflag [#allocation6], 1
    %2668 = vsyncpa %s2667, 1
    %2669 = vsyncpa [#allocation9], 1
    %2670 = vsyncpa [#allocation12], 1
    %2671 = vsyncpa [#allocation15], 1
    %2672 = vsyncpa [#allocation18], 1
    %2673 = vsyncpa [#allocation21], 1
    %2674 = vsyncpa [#allocation24], 1
    %2675 = vsyncpa [#allocation27], 1
    %2676 = vsyncpa [#allocation30], 1
    %2677 = vsyncpa [#allocation33], 1
    %2678 = vsyncpa [#allocation36], 1
    %2679 = vsyncpa [#allocation39], 1
    %2680 = vsyncpa [#allocation42], 1
    %2681 = vsyncpa [#allocation45], 1
    %2682 = vsyncpa [#allocation7], 1
    %s2683 = scalar_lea.sflag [#allocation7], 1
    %2684 = vsyncpa %s2683, 1

</llo_original>
